<compile_context>
chip_gen: v7x
topology: tpu7x:2x2x1
jax: 0.10.0
libtpu: 0.0.40
codegen_flags: <defaults>
</compile_context>

<pallas_src>
import jax
import jax.numpy as jnp
from jax.experimental import pallas as pl
from jax.experimental.pallas import tpu as pltpu

NEG_SLOPE = 0.01   # nn.LeakyReLU default negative_slope
HIDDEN = 768
OUT_DIM = 6
OUT_PAD = 128      # lane-dense padded output width


def _leaky(h):
    # max(h, 0.01*h) == LeakyReLU(h) for slope in (0,1); 2 VALU ops vs 3 for where.
    return jnp.maximum(h, NEG_SLOPE * h)


def mlp_head_kernel(x_ref,
                    w1_ref, b1_ref,
                    w2_ref, b2_ref,
                    w3_ref, b3_ref,
                    w4_ref, b4_ref,
                    o_ref):
    """Fused 4-layer MLP head: (tm, 768) bf16 -> (tm, 128) bf16 (cols 6..127 pad)."""
    x = x_ref[...]                                                    # bf16
    h = jnp.dot(x, w1_ref[...], preferred_element_type=jnp.float32) + b1_ref[...]
    h = _leaky(h)                                                     # f32 elementwise
    h = jnp.dot(h.astype(jnp.bfloat16), w2_ref[...],
                preferred_element_type=jnp.float32) + b2_ref[...]
    h = _leaky(h)
    h = jnp.dot(h.astype(jnp.bfloat16), w3_ref[...],
                preferred_element_type=jnp.float32) + b3_ref[...]
    h = _leaky(h)
    h = jnp.dot(h.astype(jnp.bfloat16), w4_ref[...],
                preferred_element_type=jnp.float32) + b4_ref[...]
    o_ref[...] = jnp.tanh(h).astype(jnp.bfloat16)                     # bf16 store


def prepare_params(params):
    """One-time: lane-pad the last layer (6 -> 128) and cast weights to bf16."""
    (w1, b1), (w2, b2), (w3, b3), (w4, b4) = params
    w4p = jnp.pad(w4, ((0, 0), (0, OUT_PAD - w4.shape[1])))
    b4p = jnp.pad(b4, ((0, 0), (0, OUT_PAD - b4.shape[1])))
    return (
        (w1.astype(jnp.bfloat16), b1),
        (w2.astype(jnp.bfloat16), b2),
        (w3.astype(jnp.bfloat16), b3),
        (w4p.astype(jnp.bfloat16), b4p),
    )


def _mlp_head_padded(xb, params_b, *, tm):
    """xb: (n_pad, 768) bf16 with n_pad % tm == 0.  Returns (n_pad, 128) bf16."""
    (w1, b1), (w2, b2), (w3, b3), (w4, b4) = params_b
    n_pad, d = xb.shape
    assert d == HIDDEN and n_pad % tm == 0

    def resident(shape):
        # full-array block, same tile every grid step (weights stay in VMEM)
        return pl.BlockSpec(shape, lambda i: (0,) * len(shape))

    grid_spec = pltpu.PrefetchScalarGridSpec(
        num_scalar_prefetch=0,
        grid=(n_pad // tm,),
        in_specs=[
            pl.BlockSpec((tm, HIDDEN), lambda i: (i, 0)),
            resident(w1.shape), resident(b1.shape),
            resident(w2.shape), resident(b2.shape),
            resident(w3.shape), resident(b3.shape),
            resident(w4.shape), resident(b4.shape),
        ],
        out_specs=pl.BlockSpec((tm, OUT_PAD), lambda i: (i, 0)),
    )

    return pl.pallas_call(
        mlp_head_kernel,
        out_shape=jax.ShapeDtypeStruct((n_pad, OUT_PAD), jnp.bfloat16),
        grid_spec=grid_spec,
        compiler_params=pltpu.CompilerParams(
            dimension_semantics=("parallel",),
            vmem_limit_bytes=32 << 20,   # safe on v7x; ~10 MiB actual at tm=512
        ),
    )(xb, w1, b1, w2, b2, w3, b3, w4, b4)


def generator_forward(data, emb_table, params, *, tm=512):
    """data: (B, 3, S) int32 token ids.  Returns (B, 3*S, 6) float32."""
    B, C, S = data.shape
    assert C == 3
    N = B * 3 * S
    n_pad = pl.cdiv(N, tm) * tm

    # Pad at the token-id level (4 B/row) instead of padding (N,768) activations.
    ids = data.reshape(N)
    if n_pad != N:
        ids = jnp.pad(ids, (0, n_pad - N))

    # BERT stand-in: deterministic embedding lookup from a bf16 table so the
    # gather emits bf16 rows directly (no separate f32->bf16 cast pass).
    # cat([bert(d[:,0]), bert(d[:,1]), bert(d[:,2])], 1) == lookup of the
    # columns laid out back-to-back, i.e. data.reshape(B, 3*S).
    xb = jnp.take(emb_table.astype(jnp.bfloat16), ids, axis=0)   # (n_pad, 768) bf16

    params_b = prepare_params(params)
    out = _mlp_head_padded(xb, params_b, tm=tm)                  # (n_pad, 128) bf16
    # TODO(synk): remaining headroom is fusing the gather into the kernel via
    # scalar-prefetched ids + manual DMA (per-row 1.5 KB copies may be
    # descriptor-bound; needs a benchmark before committing).
    return out[:N, :OUT_DIM].astype(jnp.float32).reshape(B, 3 * S, OUT_DIM)


def _make_params(keys):
    def lin(kw, kb, din, dout):
        w = jax.random.normal(kw, (din, dout), jnp.float32) / jnp.sqrt(jnp.float32(din))
        b = 0.01 * jax.random.normal(kb, (1, dout), jnp.float32)
        return w, b
    return (
        lin(keys[0], keys[1], 768, 256),
        lin(keys[2], keys[3], 256, 512),
        lin(keys[4], keys[5], 512, 1024),
        lin(keys[6], keys[7], 1024, 6),
    )


def _reference(data, emb_table, params):
    (w1, b1), (w2, b2), (w3, b3), (w4, b4) = params
    B, _, S = data.shape
    x = jnp.take(emb_table, data.reshape(B, 3 * S), axis=0)
    def leaky(h):
        return jnp.where(h > 0, h, NEG_SLOPE * h)
    h = leaky(x @ w1 + b1)
    h = leaky(h @ w2 + b2)
    h = leaky(h @ w3 + b3)
    return jnp.tanh(h @ w4 + b4)


if __name__ == "__main__":
    key = jax.random.PRNGKey(0)
    keys = jax.random.split(key, 10)

    B, S, VOCAB = 2, 8, 128          # small shapes: 3 columns of 8 tokens each
    emb_table = 0.02 * jax.random.normal(keys[8], (VOCAB, HIDDEN), jnp.float32)
    params = _make_params(keys[:8])
    data = jax.random.randint(keys[9], (B, 3, S), 0, VOCAB, dtype=jnp.int32)

    out = generator_forward(data, emb_table, params)
    out = jax.block_until_ready(out)

    ref = _reference(data, emb_table, params)
    assert out.shape == (B, 3 * S, OUT_DIM)
    # bf16 matmul inputs/output (f32 accumulation) vs. pure-f32 reference.
    assert jnp.allclose(out, ref, atol=3e-2, rtol=3e-2)

    print("KERNEL_OK")
</pallas_src>

<mosaic_0001>
module attributes {stable_mosaic.version = 11 : i64} {
  func.func @mlp_head_kernel(%arg0: i32, %arg1: memref<512x768xbf16, #tpu.memory_space<vmem>>, %arg2: memref<768x256xbf16, #tpu.memory_space<vmem>>, %arg3: memref<1x256xf32, #tpu.memory_space<vmem>>, %arg4: memref<256x512xbf16, #tpu.memory_space<vmem>>, %arg5: memref<1x512xf32, #tpu.memory_space<vmem>>, %arg6: memref<512x1024xbf16, #tpu.memory_space<vmem>>, %arg7: memref<1x1024xf32, #tpu.memory_space<vmem>>, %arg8: memref<1024x128xbf16, #tpu.memory_space<vmem>>, %arg9: memref<1x128xf32, #tpu.memory_space<vmem>>, %arg10: memref<512x128xbf16, #tpu.memory_space<vmem>>) attributes {dimension_semantics = [#tpu.dimension_semantics<parallel>], iteration_bounds = array<i64: 1>, scalar_prefetch = 0 : i64, scratch_operands = 0 : i64, tpu.core_type = #tpu.core_type<tc>, window_params = [{transform_indices = @transform_0, window_bounds = array<i64: 512, 768>}, {pipeline_mode = #tpu.pipeline_mode<synchronous>, transform_indices = @transform_1, window_bounds = array<i64: 768, 256>}, {pipeline_mode = #tpu.pipeline_mode<synchronous>, transform_indices = @transform_2, window_bounds = array<i64: 1, 256>}, {pipeline_mode = #tpu.pipeline_mode<synchronous>, transform_indices = @transform_3, window_bounds = array<i64: 256, 512>}, {pipeline_mode = #tpu.pipeline_mode<synchronous>, transform_indices = @transform_4, window_bounds = array<i64: 1, 512>}, {pipeline_mode = #tpu.pipeline_mode<synchronous>, transform_indices = @transform_5, window_bounds = array<i64: 512, 1024>}, {pipeline_mode = #tpu.pipeline_mode<synchronous>, transform_indices = @transform_6, window_bounds = array<i64: 1, 1024>}, {pipeline_mode = #tpu.pipeline_mode<synchronous>, transform_indices = @transform_7, window_bounds = array<i64: 1024, 128>}, {pipeline_mode = #tpu.pipeline_mode<synchronous>, transform_indices = @transform_8, window_bounds = array<i64: 1, 128>}, {transform_indices = @transform_9, window_bounds = array<i64: 512, 128>}]} {
    %c0 = arith.constant 0 : index
    %c0_0 = arith.constant 0 : index
    %0 = vector.load %arg1[%c0, %c0_0] : memref<512x768xbf16, #tpu.memory_space<vmem>>, vector<512x768xbf16>
    %c0_1 = arith.constant 0 : index
    %c0_2 = arith.constant 0 : index
    %1 = vector.load %arg2[%c0_1, %c0_2] : memref<768x256xbf16, #tpu.memory_space<vmem>>, vector<768x256xbf16>
    %cst = arith.constant dense<0.000000e+00> : vector<512x256xf32>
    %2 = tpu.matmul %0, %1, %cst {dimension_numbers = #tpu.dot_dimension_numbers<[1], [0], [0], [1], [0, 0, 1, 1], [], []>} : vector<512x768xbf16>, vector<768x256xbf16>, vector<512x256xf32> -> vector<512x256xf32>
    %c0_3 = arith.constant 0 : index
    %c0_4 = arith.constant 0 : index
    %3 = vector.load %arg3[%c0_3, %c0_4] : memref<1x256xf32, #tpu.memory_space<vmem>>, vector<1x256xf32>
    %4 = vector.broadcast %3 : vector<1x256xf32> to vector<512x256xf32>
    %5 = arith.addf %2, %4 : vector<512x256xf32>
    %cst_5 = arith.constant 0.00999999977 : f32
    %6 = vector.broadcast %cst_5 : f32 to vector<512x256xf32>
    %7 = arith.mulf %6, %5 : vector<512x256xf32>
    %8 = arith.maximumf %5, %7 : vector<512x256xf32>
    %9 = arith.truncf %8 : vector<512x256xf32> to vector<512x256xbf16>
    %c0_6 = arith.constant 0 : index
    %c0_7 = arith.constant 0 : index
    %10 = vector.load %arg4[%c0_6, %c0_7] : memref<256x512xbf16, #tpu.memory_space<vmem>>, vector<256x512xbf16>
    %cst_8 = arith.constant dense<0.000000e+00> : vector<512x512xf32>
    %11 = tpu.matmul %9, %10, %cst_8 {dimension_numbers = #tpu.dot_dimension_numbers<[1], [0], [0], [1], [0, 0, 1, 1], [], []>} : vector<512x256xbf16>, vector<256x512xbf16>, vector<512x512xf32> -> vector<512x512xf32>
    %c0_9 = arith.constant 0 : index
    %c0_10 = arith.constant 0 : index
    %12 = vector.load %arg5[%c0_9, %c0_10] : memref<1x512xf32, #tpu.memory_space<vmem>>, vector<1x512xf32>
    %13 = vector.broadcast %12 : vector<1x512xf32> to vector<512x512xf32>
    %14 = arith.addf %11, %13 : vector<512x512xf32>
    %cst_11 = arith.constant 0.00999999977 : f32
    %15 = vector.broadcast %cst_11 : f32 to vector<512x512xf32>
    %16 = arith.mulf %15, %14 : vector<512x512xf32>
    %17 = arith.maximumf %14, %16 : vector<512x512xf32>
    %18 = arith.truncf %17 : vector<512x512xf32> to vector<512x512xbf16>
    %c0_12 = arith.constant 0 : index
    %c0_13 = arith.constant 0 : index
    %19 = vector.load %arg6[%c0_12, %c0_13] : memref<512x1024xbf16, #tpu.memory_space<vmem>>, vector<512x1024xbf16>
    %cst_14 = arith.constant dense<0.000000e+00> : vector<512x1024xf32>
    %20 = tpu.matmul %18, %19, %cst_14 {dimension_numbers = #tpu.dot_dimension_numbers<[1], [0], [0], [1], [0, 0, 1, 1], [], []>} : vector<512x512xbf16>, vector<512x1024xbf16>, vector<512x1024xf32> -> vector<512x1024xf32>
    %c0_15 = arith.constant 0 : index
    %c0_16 = arith.constant 0 : index
    %21 = vector.load %arg7[%c0_15, %c0_16] : memref<1x1024xf32, #tpu.memory_space<vmem>>, vector<1x1024xf32>
    %22 = vector.broadcast %21 : vector<1x1024xf32> to vector<512x1024xf32>
    %23 = arith.addf %20, %22 : vector<512x1024xf32>
    %cst_17 = arith.constant 0.00999999977 : f32
    %24 = vector.broadcast %cst_17 : f32 to vector<512x1024xf32>
    %25 = arith.mulf %24, %23 : vector<512x1024xf32>
    %26 = arith.maximumf %23, %25 : vector<512x1024xf32>
    %27 = arith.truncf %26 : vector<512x1024xf32> to vector<512x1024xbf16>
    %c0_18 = arith.constant 0 : index
    %c0_19 = arith.constant 0 : index
    %28 = vector.load %arg8[%c0_18, %c0_19] : memref<1024x128xbf16, #tpu.memory_space<vmem>>, vector<1024x128xbf16>
    %cst_20 = arith.constant dense<0.000000e+00> : vector<512x128xf32>
    %29 = tpu.matmul %27, %28, %cst_20 {dimension_numbers = #tpu.dot_dimension_numbers<[1], [0], [0], [1], [0, 0, 1, 1], [], []>} : vector<512x1024xbf16>, vector<1024x128xbf16>, vector<512x128xf32> -> vector<512x128xf32>
    %c0_21 = arith.constant 0 : index
    %c0_22 = arith.constant 0 : index
    %30 = vector.load %arg9[%c0_21, %c0_22] : memref<1x128xf32, #tpu.memory_space<vmem>>, vector<1x128xf32>
    %31 = vector.broadcast %30 : vector<1x128xf32> to vector<512x128xf32>
    %32 = arith.addf %29, %31 : vector<512x128xf32>
    %33 = math.tanh %32 : vector<512x128xf32>
    %34 = arith.truncf %33 : vector<512x128xf32> to vector<512x128xbf16>
    %c0_23 = arith.constant 0 : index
    %c0_24 = arith.constant 0 : index
    %35 = vector.load %arg10[%c0_23, %c0_24] : memref<512x128xbf16, #tpu.memory_space<vmem>>, vector<512x128xbf16>
    tpu.vector_store %arg10[%c0_23, %c0_24], %34 {strides = array<i32>} : memref<512x128xbf16, #tpu.memory_space<vmem>>, vector<512x128xbf16>,
    return
  }
  func.func @transform_0(%arg0: i32) -> (i32, i32) {
    %c0_i32 = arith.constant 0 : i32
    %c0_i32_0 = arith.constant 0 : i32
    return %arg0, %c0_i32 : i32, i32
  }
  func.func @transform_1(%arg0: i32) -> (i32, i32) {
    %c0_i32 = arith.constant 0 : i32
    %c0_i32_0 = arith.constant 0 : i32
    %c0_i32_1 = arith.constant 0 : i32
    return %c0_i32, %c0_i32_0 : i32, i32
  }
  func.func @transform_2(%arg0: i32) -> (i32, i32) {
    %c0_i32 = arith.constant 0 : i32
    %c0_i32_0 = arith.constant 0 : i32
    %c0_i32_1 = arith.constant 0 : i32
    return %c0_i32, %c0_i32_0 : i32, i32
  }
  func.func @transform_3(%arg0: i32) -> (i32, i32) {
    %c0_i32 = arith.constant 0 : i32
    %c0_i32_0 = arith.constant 0 : i32
    %c0_i32_1 = arith.constant 0 : i32
    return %c0_i32, %c0_i32_0 : i32, i32
  }
  func.func @transform_4(%arg0: i32) -> (i32, i32) {
    %c0_i32 = arith.constant 0 : i32
    %c0_i32_0 = arith.constant 0 : i32
    %c0_i32_1 = arith.constant 0 : i32
    return %c0_i32, %c0_i32_0 : i32, i32
  }
  func.func @transform_5(%arg0: i32) -> (i32, i32) {
    %c0_i32 = arith.constant 0 : i32
    %c0_i32_0 = arith.constant 0 : i32
    %c0_i32_1 = arith.constant 0 : i32
    return %c0_i32, %c0_i32_0 : i32, i32
  }
  func.func @transform_6(%arg0: i32) -> (i32, i32) {
    %c0_i32 = arith.constant 0 : i32
    %c0_i32_0 = arith.constant 0 : i32
    %c0_i32_1 = arith.constant 0 : i32
    return %c0_i32, %c0_i32_0 : i32, i32
  }
  func.func @transform_7(%arg0: i32) -> (i32, i32) {
    %c0_i32 = arith.constant 0 : i32
    %c0_i32_0 = arith.constant 0 : i32
    %c0_i32_1 = arith.constant 0 : i32
    return %c0_i32, %c0_i32_0 : i32, i32
  }
  func.func @transform_8(%arg0: i32) -> (i32, i32) {
    %c0_i32 = arith.constant 0 : i32
    %c0_i32_0 = arith.constant 0 : i32
    %c0_i32_1 = arith.constant 0 : i32
    return %c0_i32, %c0_i32_0 : i32, i32
  }
  func.func @transform_9(%arg0: i32) -> (i32, i32) {
    %c0_i32 = arith.constant 0 : i32
    %c0_i32_0 = arith.constant 0 : i32
    return %arg0, %c0_i32 : i32, i32
  }
}

</mosaic_0001>

<llo_original>
// kernel: tpu_custom_call.1
$region0: #{tpu_custom_call.1}
  #allocation0 [shape = 'u32[]', space=smem, size = 0x4, offset = 0x4, fixed_abs, tag = 'smem constant byte address 0x4 - core index']
  #allocation1 [shape = 'u32[144,128]{1,0:T(1,128)}', space=vmem, size = 0x12000, scoped, tag = 'internal scratch']
  %s0 = inlined_call_operand.hbm [shape: bf16[512,768], index: 0, kind: input, shape index: {}]
  %s1 = inlined_call_operand.hbm [shape: bf16[768,256], index: 1, kind: input, shape index: {}]
  %s2 = inlined_call_operand.vmem [shape: f32[1,256], index: 2, kind: input, shape index: {}]
  %s3 = inlined_call_operand.hbm [shape: bf16[256,512], index: 3, kind: input, shape index: {}]
  %s4 = inlined_call_operand.vmem [shape: f32[1,512], index: 4, kind: input, shape index: {}]
  %s5 = inlined_call_operand.hbm [shape: bf16[512,1024], index: 5, kind: input, shape index: {}]
  %s6 = inlined_call_operand.vmem [shape: f32[1,1024], index: 6, kind: input, shape index: {}]
  %s7 = inlined_call_operand.hbm [shape: bf16[1024,128], index: 7, kind: input, shape index: {}]
  %s8 = inlined_call_operand.vmem [shape: f32[1,128], index: 8, kind: input, shape index: {}]
  %s9 = inlined_call_operand.hbm [shape: bf16[512,128], index: 9, kind: output, shape index: {}]
  %s10 = sld [smem:[#allocation0]]
  $region66: #{tpu_custom_call.1} parent=0
    _
  %s12 = ssub.s32 1, %s10
  %s13 = scalar_select 0, %s12, %s10
  $region1: #{tpu_custom_call.1} parent=0
    #allocation2 [shape = 'u8[786432]{0}', space=vmem, size = 0xc0000, scoped, tag = 'input window, operand 0, single buffered']
    #allocation3 [shape = 's32[1]{0}', space=sflag, size = 0x4, scoped, tag = 'scoped memory for tpu_custom_call.1']
    #allocation4 [shape = 's32[1]{0}', space=sflag, size = 0x4, scoped, tag = 'scoped memory for tpu_custom_call.1']
    #allocation5 [shape = 'u8[393216]{0}', space=vmem, size = 0x60000, scoped, tag = 'input window, operand 1, single buffered']
    #allocation6 [shape = 's32[1]{0}', space=sflag, size = 0x4, scoped, tag = 'scoped memory for tpu_custom_call.1']
    #allocation7 [shape = 'u8[262144]{0}', space=vmem, size = 0x40000, scoped, tag = 'input window, operand 3, single buffered']
    #allocation8 [shape = 'u8[1048576]{0}', space=vmem, size = 0x100000, scoped, tag = 'input window, operand 5, single buffered']
    #allocation9 [shape = 's32[1]{0}', space=sflag, size = 0x4, scoped, tag = 'scoped memory for tpu_custom_call.1']
    #allocation10 [shape = 'u8[262144]{0}', space=vmem, size = 0x40000, scoped, tag = 'input window, operand 7, single buffered']
    #allocation11 [shape = 'u8[131072]{0}', space=vmem, size = 0x20000, scoped, tag = 'output window, operand 0, single buffered']
    %14 = vsyncpa [#allocation3], 0
    %15 = vsyncpa [#allocation6], 0
    %16 = vsyncpa [#allocation9], 0
    %17 = vsyncpa [#allocation4], 0
    // Predicated region
    $region2: #{tpu_custom_call.1} parent=1 // pred_check
      _
    $region3: #{tpu_custom_call.1} parent=1 // pred_check_branch
      %19 = sbr.rel (0) target = $region5
    $region4: #{tpu_custom_call.1} parent=1 // pred_region
      %s21 = ssub.s32 24576, 24576
      %22 = vsyncadd [#allocation3], %s21
      %s23 = sshll.u32 [#allocation2], 4
      %s24 = int_to_ptr.vmem [resolvable:$true] %s23
      %29 = dma.hbm_to_vmem [thread:$0]  %s0, 24576, %s24, [#allocation3], 384, 384, 24
    $region5: #{tpu_custom_call.1} parent=1 // pred_fallthru
      _
    // Predicated region
    $region6: #{tpu_custom_call.1} parent=1 // pred_check
      _
    $region7: #{tpu_custom_call.1} parent=1 // pred_check_branch
      %31 = sbr.rel (0) target = $region9
    $region8: #{tpu_custom_call.1} parent=1 // pred_region
      %s33 = ssub.s32 12288, 12288
      %34 = vsyncadd [#allocation6], %s33
      %s35 = sshll.u32 [#allocation5], 4
      %s36 = int_to_ptr.vmem [resolvable:$true] %s35
      %41 = dma.hbm_to_vmem [thread:$0]  %s1, 12288, %s36, [#allocation6], 128, 128, 8
    $region9: #{tpu_custom_call.1} parent=1 // pred_fallthru
      _
    // Predicated region
    $region10: #{tpu_custom_call.1} parent=1 // pred_check
      _
    $region11: #{tpu_custom_call.1} parent=1 // pred_check_branch
      %43 = sbr.rel (0) target = $region13
    $region12: #{tpu_custom_call.1} parent=1 // pred_region
      _
    $region13: #{tpu_custom_call.1} parent=1 // pred_fallthru
      _
    // Predicated region
    $region14: #{tpu_custom_call.1} parent=1 // pred_check
      _
    $region15: #{tpu_custom_call.1} parent=1 // pred_check_branch
      %45 = sbr.rel (0) target = $region17
    $region16: #{tpu_custom_call.1} parent=1 // pred_region
      %s47 = ssub.s32 8192, 8192
      %48 = vsyncadd [#allocation6], %s47
      %s49 = sshll.u32 [#allocation7], 4
      %s50 = int_to_ptr.vmem [resolvable:$true] %s49
      %55 = dma.hbm_to_vmem [thread:$0]  %s3, 8192, %s50, [#allocation6], 256, 256, 16
    $region17: #{tpu_custom_call.1} parent=1 // pred_fallthru
      _
    // Predicated region
    $region18: #{tpu_custom_call.1} parent=1 // pred_check
      _
    $region19: #{tpu_custom_call.1} parent=1 // pred_check_branch
      %57 = sbr.rel (0) target = $region21
    $region20: #{tpu_custom_call.1} parent=1 // pred_region
      _
    $region21: #{tpu_custom_call.1} parent=1 // pred_fallthru
      _
    // Predicated region
    $region22: #{tpu_custom_call.1} parent=1 // pred_check
      _
    $region23: #{tpu_custom_call.1} parent=1 // pred_check_branch
      %59 = sbr.rel (0) target = $region25
    $region24: #{tpu_custom_call.1} parent=1 // pred_region
      %s61 = ssub.s32 32768, 32768
      %62 = vsyncadd [#allocation9], %s61
      %s63 = sshll.u32 [#allocation8], 4
      %s64 = int_to_ptr.vmem [resolvable:$true] %s63
      %69 = dma.hbm_to_vmem [thread:$0]  %s5, 32768, %s64, [#allocation9], 512, 512, 32
    $region25: #{tpu_custom_call.1} parent=1 // pred_fallthru
      _
    // Predicated region
    $region26: #{tpu_custom_call.1} parent=1 // pred_check
      _
    $region27: #{tpu_custom_call.1} parent=1 // pred_check_branch
      %71 = sbr.rel (0) target = $region29
    $region28: #{tpu_custom_call.1} parent=1 // pred_region
      _
    $region29: #{tpu_custom_call.1} parent=1 // pred_fallthru
      _
    // Predicated region
    $region30: #{tpu_custom_call.1} parent=1 // pred_check
      _
    $region31: #{tpu_custom_call.1} parent=1 // pred_check_branch
      %73 = sbr.rel (0) target = $region33
    $region32: #{tpu_custom_call.1} parent=1 // pred_region
      %s75 = ssub.s32 8192, 8192
      %76 = vsyncadd [#allocation9], %s75
      %s77 = sshll.u32 [#allocation10], 4
      %s78 = int_to_ptr.vmem [resolvable:$true] %s77
      %83 = dma.hbm_to_vmem [thread:$0]  %s7, 8192, %s78, [#allocation9], 64, 64, 4
    $region33: #{tpu_custom_call.1} parent=1 // pred_fallthru
      _
    // Predicated region
    $region34: #{tpu_custom_call.1} parent=1 // pred_check
      _
    $region35: #{tpu_custom_call.1} parent=1 // pred_check_branch
      %85 = sbr.rel (0) target = $region37
    $region36: #{tpu_custom_call.1} parent=1 // pred_region
      _
    $region37: #{tpu_custom_call.1} parent=1 // pred_fallthru
      _
    // Predicated region
    $region38: #{tpu_custom_call.1} parent=1 // pred_check
      _
    $region39: #{tpu_custom_call.1} parent=1 // pred_check_branch
      %87 = sbr.rel (0) target = $region41
    $region40: #{tpu_custom_call.1} parent=1 // pred_region
      %88 = dma.done [#allocation3], 24576
    $region41: #{tpu_custom_call.1} parent=1 // pred_fallthru
      _
    // Predicated region
    $region42: #{tpu_custom_call.1} parent=1 // pred_check
      _
    $region43: #{tpu_custom_call.1} parent=1 // pred_check_branch
      %90 = sbr.rel (0) target = $region45
    $region44: #{tpu_custom_call.1} parent=1 // pred_region
      %91 = dma.done [#allocation6], 12288
    $region45: #{tpu_custom_call.1} parent=1 // pred_fallthru
      _
    // Predicated region
    $region46: #{tpu_custom_call.1} parent=1 // pred_check
      _
    $region47: #{tpu_custom_call.1} parent=1 // pred_check_branch
      %93 = sbr.rel (0) target = $region49
    $region48: #{tpu_custom_call.1} parent=1 // pred_region
      %94 = dma.done [#allocation6], 8192
    $region49: #{tpu_custom_call.1} parent=1 // pred_fallthru
      _
    // Predicated region
    $region50: #{tpu_custom_call.1} parent=1 // pred_check
      _
    $region51: #{tpu_custom_call.1} parent=1 // pred_check_branch
      %96 = sbr.rel (0) target = $region53
    $region52: #{tpu_custom_call.1} parent=1 // pred_region
      %97 = dma.done [#allocation9], 32768
    $region53: #{tpu_custom_call.1} parent=1 // pred_fallthru
      _
    // Predicated region
    $region54: #{tpu_custom_call.1} parent=1 // pred_check
      _
    $region55: #{tpu_custom_call.1} parent=1 // pred_check_branch
      %99 = sbr.rel (0) target = $region57
    $region56: #{tpu_custom_call.1} parent=1 // pred_region
      %100 = dma.done [#allocation9], 8192
    $region57: #{tpu_custom_call.1} parent=1 // pred_fallthru
      _
    %v102 = vld [vmem:[#allocation2] sm:$0xff]
    %v103 = vld [vmem:[#allocation2 + $0x8] sm:$0xff]
    %v104 = vld [vmem:[#allocation2 + $0x10] sm:$0xff]
    %v105 = vld [vmem:[#allocation2 + $0x18] sm:$0xff]
    %v106 = vld [vmem:[#allocation2 + $0x20] sm:$0xff]
    %v107 = vld [vmem:[#allocation2 + $0x28] sm:$0xff]
    %v108 = vld [vmem:[#allocation2 + $0x30] sm:$0xff]
    %v109 = vld [vmem:[#allocation2 + $0x38] sm:$0xff]
    %v110 = vld [vmem:[#allocation2 + $0x40] sm:$0xff]
    %v111 = vld [vmem:[#allocation2 + $0x48] sm:$0xff]
    %v112 = vld [vmem:[#allocation2 + $0x50] sm:$0xff]
    %v113 = vld [vmem:[#allocation2 + $0x58] sm:$0xff]
    %v114 = vld [vmem:[#allocation2 + $0x60] sm:$0xff]
    %v115 = vld [vmem:[#allocation2 + $0x68] sm:$0xff]
    %v116 = vld [vmem:[#allocation2 + $0x70] sm:$0xff]
    %v117 = vld [vmem:[#allocation2 + $0x78] sm:$0xff]
    %v118 = vld [vmem:[#allocation2 + $0x80] sm:$0xff]
    %v119 = vld [vmem:[#allocation2 + $0x88] sm:$0xff]
    %v120 = vld [vmem:[#allocation2 + $0x90] sm:$0xff]
    %v121 = vld [vmem:[#allocation2 + $0x98] sm:$0xff]
    %v122 = vld [vmem:[#allocation2 + $0xa0] sm:$0xff]
    %v123 = vld [vmem:[#allocation2 + $0xa8] sm:$0xff]
    %v124 = vld [vmem:[#allocation2 + $0xb0] sm:$0xff]
    %v125 = vld [vmem:[#allocation2 + $0xb8] sm:$0xff]
    %v126 = vld [vmem:[#allocation2 + $0xc0] sm:$0xff]
    %v127 = vld [vmem:[#allocation2 + $0xc8] sm:$0xff]
    %v128 = vld [vmem:[#allocation2 + $0xd0] sm:$0xff]
    %v129 = vld [vmem:[#allocation2 + $0xd8] sm:$0xff]
    %v130 = vld [vmem:[#allocation2 + $0xe0] sm:$0xff]
    %v131 = vld [vmem:[#allocation2 + $0xe8] sm:$0xff]
    %v132 = vld [vmem:[#allocation2 + $0xf0] sm:$0xff]
    %v133 = vld [vmem:[#allocation2 + $0xf8] sm:$0xff]
    %v134 = vld [vmem:[#allocation2 + $0x100] sm:$0xff]
    %v135 = vld [vmem:[#allocation2 + $0x108] sm:$0xff]
    %v136 = vld [vmem:[#allocation2 + $0x110] sm:$0xff]
    %v137 = vld [vmem:[#allocation2 + $0x118] sm:$0xff]
    %v138 = vld [vmem:[#allocation2 + $0x120] sm:$0xff]
    %v139 = vld [vmem:[#allocation2 + $0x128] sm:$0xff]
    %v140 = vld [vmem:[#allocation2 + $0x130] sm:$0xff]
    %v141 = vld [vmem:[#allocation2 + $0x138] sm:$0xff]
    %v142 = vld [vmem:[#allocation2 + $0x140] sm:$0xff]
    %v143 = vld [vmem:[#allocation2 + $0x148] sm:$0xff]
    %v144 = vld [vmem:[#allocation2 + $0x150] sm:$0xff]
    %v145 = vld [vmem:[#allocation2 + $0x158] sm:$0xff]
    %v146 = vld [vmem:[#allocation2 + $0x160] sm:$0xff]
    %v147 = vld [vmem:[#allocation2 + $0x168] sm:$0xff]
    %v148 = vld [vmem:[#allocation2 + $0x170] sm:$0xff]
    %v149 = vld [vmem:[#allocation2 + $0x178] sm:$0xff]
    %v150 = vld [vmem:[#allocation2 + $0x180] sm:$0xff]
    %v151 = vld [vmem:[#allocation2 + $0x188] sm:$0xff]
    %v152 = vld [vmem:[#allocation2 + $0x190] sm:$0xff]
    %v153 = vld [vmem:[#allocation2 + $0x198] sm:$0xff]
    %v154 = vld [vmem:[#allocation2 + $0x1a0] sm:$0xff]
    %v155 = vld [vmem:[#allocation2 + $0x1a8] sm:$0xff]
    %v156 = vld [vmem:[#allocation2 + $0x1b0] sm:$0xff]
    %v157 = vld [vmem:[#allocation2 + $0x1b8] sm:$0xff]
    %v158 = vld [vmem:[#allocation2 + $0x1c0] sm:$0xff]
    %v159 = vld [vmem:[#allocation2 + $0x1c8] sm:$0xff]
    %v160 = vld [vmem:[#allocation2 + $0x1d0] sm:$0xff]
    %v161 = vld [vmem:[#allocation2 + $0x1d8] sm:$0xff]
    %v162 = vld [vmem:[#allocation2 + $0x1e0] sm:$0xff]
    %v163 = vld [vmem:[#allocation2 + $0x1e8] sm:$0xff]
    %v164 = vld [vmem:[#allocation2 + $0x1f0] sm:$0xff]
    %v165 = vld [vmem:[#allocation2 + $0x1f8] sm:$0xff]
    %v166 = vld [vmem:[#allocation2 + $0x200] sm:$0xff]
    %v167 = vld [vmem:[#allocation2 + $0x208] sm:$0xff]
    %v168 = vld [vmem:[#allocation2 + $0x210] sm:$0xff]
    %v169 = vld [vmem:[#allocation2 + $0x218] sm:$0xff]
    %v170 = vld [vmem:[#allocation2 + $0x220] sm:$0xff]
    %v171 = vld [vmem:[#allocation2 + $0x228] sm:$0xff]
    %v172 = vld [vmem:[#allocation2 + $0x230] sm:$0xff]
    %v173 = vld [vmem:[#allocation2 + $0x238] sm:$0xff]
    %v174 = vld [vmem:[#allocation2 + $0x240] sm:$0xff]
    %v175 = vld [vmem:[#allocation2 + $0x248] sm:$0xff]
    %v176 = vld [vmem:[#allocation2 + $0x250] sm:$0xff]
    %v177 = vld [vmem:[#allocation2 + $0x258] sm:$0xff]
    %v178 = vld [vmem:[#allocation2 + $0x260] sm:$0xff]
    %v179 = vld [vmem:[#allocation2 + $0x268] sm:$0xff]
    %v180 = vld [vmem:[#allocation2 + $0x270] sm:$0xff]
    %v181 = vld [vmem:[#allocation2 + $0x278] sm:$0xff]
    %v182 = vld [vmem:[#allocation2 + $0x280] sm:$0xff]
    %v183 = vld [vmem:[#allocation2 + $0x288] sm:$0xff]
    %v184 = vld [vmem:[#allocation2 + $0x290] sm:$0xff]
    %v185 = vld [vmem:[#allocation2 + $0x298] sm:$0xff]
    %v186 = vld [vmem:[#allocation2 + $0x2a0] sm:$0xff]
    %v187 = vld [vmem:[#allocation2 + $0x2a8] sm:$0xff]
    %v188 = vld [vmem:[#allocation2 + $0x2b0] sm:$0xff]
    %v189 = vld [vmem:[#allocation2 + $0x2b8] sm:$0xff]
    %v190 = vld [vmem:[#allocation2 + $0x2c0] sm:$0xff]
    %v191 = vld [vmem:[#allocation2 + $0x2c8] sm:$0xff]
    %v192 = vld [vmem:[#allocation2 + $0x2d0] sm:$0xff]
    %v193 = vld [vmem:[#allocation2 + $0x2d8] sm:$0xff]
    %v194 = vld [vmem:[#allocation2 + $0x2e0] sm:$0xff]
    %v195 = vld [vmem:[#allocation2 + $0x2e8] sm:$0xff]
    %v196 = vld [vmem:[#allocation2 + $0x2f0] sm:$0xff]
    %v197 = vld [vmem:[#allocation2 + $0x2f8] sm:$0xff]
    %v198 = vld [vmem:[#allocation2 + $0x300] sm:$0xff]
    %v199 = vld [vmem:[#allocation2 + $0x308] sm:$0xff]
    %v200 = vld [vmem:[#allocation2 + $0x310] sm:$0xff]
    %v201 = vld [vmem:[#allocation2 + $0x318] sm:$0xff]
    %v202 = vld [vmem:[#allocation2 + $0x320] sm:$0xff]
    %v203 = vld [vmem:[#allocation2 + $0x328] sm:$0xff]
    %v204 = vld [vmem:[#allocation2 + $0x330] sm:$0xff]
    %v205 = vld [vmem:[#allocation2 + $0x338] sm:$0xff]
    %v206 = vld [vmem:[#allocation2 + $0x340] sm:$0xff]
    %v207 = vld [vmem:[#allocation2 + $0x348] sm:$0xff]
    %v208 = vld [vmem:[#allocation2 + $0x350] sm:$0xff]
    %v209 = vld [vmem:[#allocation2 + $0x358] sm:$0xff]
    %v210 = vld [vmem:[#allocation2 + $0x360] sm:$0xff]
    %v211 = vld [vmem:[#allocation2 + $0x368] sm:$0xff]
    %v212 = vld [vmem:[#allocation2 + $0x370] sm:$0xff]
    %v213 = vld [vmem:[#allocation2 + $0x378] sm:$0xff]
    %v214 = vld [vmem:[#allocation2 + $0x380] sm:$0xff]
    %v215 = vld [vmem:[#allocation2 + $0x388] sm:$0xff]
    %v216 = vld [vmem:[#allocation2 + $0x390] sm:$0xff]
    %v217 = vld [vmem:[#allocation2 + $0x398] sm:$0xff]
    %v218 = vld [vmem:[#allocation2 + $0x3a0] sm:$0xff]
    %v219 = vld [vmem:[#allocation2 + $0x3a8] sm:$0xff]
    %v220 = vld [vmem:[#allocation2 + $0x3b0] sm:$0xff]
    %v221 = vld [vmem:[#allocation2 + $0x3b8] sm:$0xff]
    %v222 = vld [vmem:[#allocation2 + $0x3c0] sm:$0xff]
    %v223 = vld [vmem:[#allocation2 + $0x3c8] sm:$0xff]
    %v224 = vld [vmem:[#allocation2 + $0x3d0] sm:$0xff]
    %v225 = vld [vmem:[#allocation2 + $0x3d8] sm:$0xff]
    %v226 = vld [vmem:[#allocation2 + $0x3e0] sm:$0xff]
    %v227 = vld [vmem:[#allocation2 + $0x3e8] sm:$0xff]
    %v228 = vld [vmem:[#allocation2 + $0x3f0] sm:$0xff]
    %v229 = vld [vmem:[#allocation2 + $0x3f8] sm:$0xff]
    %v230 = vld [vmem:[#allocation2 + $0x400] sm:$0xff]
    %v231 = vld [vmem:[#allocation2 + $0x408] sm:$0xff]
    %v232 = vld [vmem:[#allocation2 + $0x410] sm:$0xff]
    %v233 = vld [vmem:[#allocation2 + $0x418] sm:$0xff]
    %v234 = vld [vmem:[#allocation2 + $0x420] sm:$0xff]
    %v235 = vld [vmem:[#allocation2 + $0x428] sm:$0xff]
    %v236 = vld [vmem:[#allocation2 + $0x430] sm:$0xff]
    %v237 = vld [vmem:[#allocation2 + $0x438] sm:$0xff]
    %v238 = vld [vmem:[#allocation2 + $0x440] sm:$0xff]
    %v239 = vld [vmem:[#allocation2 + $0x448] sm:$0xff]
    %v240 = vld [vmem:[#allocation2 + $0x450] sm:$0xff]
    %v241 = vld [vmem:[#allocation2 + $0x458] sm:$0xff]
    %v242 = vld [vmem:[#allocation2 + $0x460] sm:$0xff]
    %v243 = vld [vmem:[#allocation2 + $0x468] sm:$0xff]
    %v244 = vld [vmem:[#allocation2 + $0x470] sm:$0xff]
    %v245 = vld [vmem:[#allocation2 + $0x478] sm:$0xff]
    %v246 = vld [vmem:[#allocation2 + $0x480] sm:$0xff]
    %v247 = vld [vmem:[#allocation2 + $0x488] sm:$0xff]
    %v248 = vld [vmem:[#allocation2 + $0x490] sm:$0xff]
    %v249 = vld [vmem:[#allocation2 + $0x498] sm:$0xff]
    %v250 = vld [vmem:[#allocation2 + $0x4a0] sm:$0xff]
    %v251 = vld [vmem:[#allocation2 + $0x4a8] sm:$0xff]
    %v252 = vld [vmem:[#allocation2 + $0x4b0] sm:$0xff]
    %v253 = vld [vmem:[#allocation2 + $0x4b8] sm:$0xff]
    %v254 = vld [vmem:[#allocation2 + $0x4c0] sm:$0xff]
    %v255 = vld [vmem:[#allocation2 + $0x4c8] sm:$0xff]
    %v256 = vld [vmem:[#allocation2 + $0x4d0] sm:$0xff]
    %v257 = vld [vmem:[#allocation2 + $0x4d8] sm:$0xff]
    %v258 = vld [vmem:[#allocation2 + $0x4e0] sm:$0xff]
    %v259 = vld [vmem:[#allocation2 + $0x4e8] sm:$0xff]
    %v260 = vld [vmem:[#allocation2 + $0x4f0] sm:$0xff]
    %v261 = vld [vmem:[#allocation2 + $0x4f8] sm:$0xff]
    %v262 = vld [vmem:[#allocation2 + $0x500] sm:$0xff]
    %v263 = vld [vmem:[#allocation2 + $0x508] sm:$0xff]
    %v264 = vld [vmem:[#allocation2 + $0x510] sm:$0xff]
    %v265 = vld [vmem:[#allocation2 + $0x518] sm:$0xff]
    %v266 = vld [vmem:[#allocation2 + $0x520] sm:$0xff]
    %v267 = vld [vmem:[#allocation2 + $0x528] sm:$0xff]
    %v268 = vld [vmem:[#allocation2 + $0x530] sm:$0xff]
    %v269 = vld [vmem:[#allocation2 + $0x538] sm:$0xff]
    %v270 = vld [vmem:[#allocation2 + $0x540] sm:$0xff]
    %v271 = vld [vmem:[#allocation2 + $0x548] sm:$0xff]
    %v272 = vld [vmem:[#allocation2 + $0x550] sm:$0xff]
    %v273 = vld [vmem:[#allocation2 + $0x558] sm:$0xff]
    %v274 = vld [vmem:[#allocation2 + $0x560] sm:$0xff]
    %v275 = vld [vmem:[#allocation2 + $0x568] sm:$0xff]
    %v276 = vld [vmem:[#allocation2 + $0x570] sm:$0xff]
    %v277 = vld [vmem:[#allocation2 + $0x578] sm:$0xff]
    %v278 = vld [vmem:[#allocation2 + $0x580] sm:$0xff]
    %v279 = vld [vmem:[#allocation2 + $0x588] sm:$0xff]
    %v280 = vld [vmem:[#allocation2 + $0x590] sm:$0xff]
    %v281 = vld [vmem:[#allocation2 + $0x598] sm:$0xff]
    %v282 = vld [vmem:[#allocation2 + $0x5a0] sm:$0xff]
    %v283 = vld [vmem:[#allocation2 + $0x5a8] sm:$0xff]
    %v284 = vld [vmem:[#allocation2 + $0x5b0] sm:$0xff]
    %v285 = vld [vmem:[#allocation2 + $0x5b8] sm:$0xff]
    %v286 = vld [vmem:[#allocation2 + $0x5c0] sm:$0xff]
    %v287 = vld [vmem:[#allocation2 + $0x5c8] sm:$0xff]
    %v288 = vld [vmem:[#allocation2 + $0x5d0] sm:$0xff]
    %v289 = vld [vmem:[#allocation2 + $0x5d8] sm:$0xff]
    %v290 = vld [vmem:[#allocation2 + $0x5e0] sm:$0xff]
    %v291 = vld [vmem:[#allocation2 + $0x5e8] sm:$0xff]
    %v292 = vld [vmem:[#allocation2 + $0x5f0] sm:$0xff]
    %v293 = vld [vmem:[#allocation2 + $0x5f8] sm:$0xff]
    %v294 = vld [vmem:[#allocation5] sm:$0xff]
    %v295 = vld [vmem:[#allocation5 + $0x8] sm:$0xff]
    %v296 = vld [vmem:[#allocation5 + $0x10] sm:$0xff]
    %v297 = vld [vmem:[#allocation5 + $0x18] sm:$0xff]
    %v298 = vld [vmem:[#allocation5 + $0x20] sm:$0xff]
    %v299 = vld [vmem:[#allocation5 + $0x28] sm:$0xff]
    %v300 = vld [vmem:[#allocation5 + $0x30] sm:$0xff]
    %v301 = vld [vmem:[#allocation5 + $0x38] sm:$0xff]
    %v302 = vld [vmem:[#allocation5 + $0x40] sm:$0xff]
    %v303 = vld [vmem:[#allocation5 + $0x48] sm:$0xff]
    %v304 = vld [vmem:[#allocation5 + $0x50] sm:$0xff]
    %v305 = vld [vmem:[#allocation5 + $0x58] sm:$0xff]
    %v306 = vld [vmem:[#allocation5 + $0x60] sm:$0xff]
    %v307 = vld [vmem:[#allocation5 + $0x68] sm:$0xff]
    %v308 = vld [vmem:[#allocation5 + $0x70] sm:$0xff]
    %v309 = vld [vmem:[#allocation5 + $0x78] sm:$0xff]
    %v310 = vld [vmem:[#allocation5 + $0x80] sm:$0xff]
    %v311 = vld [vmem:[#allocation5 + $0x88] sm:$0xff]
    %v312 = vld [vmem:[#allocation5 + $0x90] sm:$0xff]
    %v313 = vld [vmem:[#allocation5 + $0x98] sm:$0xff]
    %v314 = vld [vmem:[#allocation5 + $0xa0] sm:$0xff]
    %v315 = vld [vmem:[#allocation5 + $0xa8] sm:$0xff]
    %v316 = vld [vmem:[#allocation5 + $0xb0] sm:$0xff]
    %v317 = vld [vmem:[#allocation5 + $0xb8] sm:$0xff]
    %v318 = vld [vmem:[#allocation5 + $0xc0] sm:$0xff]
    %v319 = vld [vmem:[#allocation5 + $0xc8] sm:$0xff]
    %v320 = vld [vmem:[#allocation5 + $0xd0] sm:$0xff]
    %v321 = vld [vmem:[#allocation5 + $0xd8] sm:$0xff]
    %v322 = vld [vmem:[#allocation5 + $0xe0] sm:$0xff]
    %v323 = vld [vmem:[#allocation5 + $0xe8] sm:$0xff]
    %v324 = vld [vmem:[#allocation5 + $0xf0] sm:$0xff]
    %v325 = vld [vmem:[#allocation5 + $0xf8] sm:$0xff]
    %v326 = vld [vmem:[#allocation5 + $0x100] sm:$0xff]
    %v327 = vld [vmem:[#allocation5 + $0x108] sm:$0xff]
    %v328 = vld [vmem:[#allocation5 + $0x110] sm:$0xff]
    %v329 = vld [vmem:[#allocation5 + $0x118] sm:$0xff]
    %v330 = vld [vmem:[#allocation5 + $0x120] sm:$0xff]
    %v331 = vld [vmem:[#allocation5 + $0x128] sm:$0xff]
    %v332 = vld [vmem:[#allocation5 + $0x130] sm:$0xff]
    %v333 = vld [vmem:[#allocation5 + $0x138] sm:$0xff]
    %v334 = vld [vmem:[#allocation5 + $0x140] sm:$0xff]
    %v335 = vld [vmem:[#allocation5 + $0x148] sm:$0xff]
    %v336 = vld [vmem:[#allocation5 + $0x150] sm:$0xff]
    %v337 = vld [vmem:[#allocation5 + $0x158] sm:$0xff]
    %v338 = vld [vmem:[#allocation5 + $0x160] sm:$0xff]
    %v339 = vld [vmem:[#allocation5 + $0x168] sm:$0xff]
    %v340 = vld [vmem:[#allocation5 + $0x170] sm:$0xff]
    %v341 = vld [vmem:[#allocation5 + $0x178] sm:$0xff]
    %v342 = vld [vmem:[#allocation5 + $0x180] sm:$0xff]
    %v343 = vld [vmem:[#allocation5 + $0x188] sm:$0xff]
    %v344 = vld [vmem:[#allocation5 + $0x190] sm:$0xff]
    %v345 = vld [vmem:[#allocation5 + $0x198] sm:$0xff]
    %v346 = vld [vmem:[#allocation5 + $0x1a0] sm:$0xff]
    %v347 = vld [vmem:[#allocation5 + $0x1a8] sm:$0xff]
    %v348 = vld [vmem:[#allocation5 + $0x1b0] sm:$0xff]
    %v349 = vld [vmem:[#allocation5 + $0x1b8] sm:$0xff]
    %v350 = vld [vmem:[#allocation5 + $0x1c0] sm:$0xff]
    %v351 = vld [vmem:[#allocation5 + $0x1c8] sm:$0xff]
    %v352 = vld [vmem:[#allocation5 + $0x1d0] sm:$0xff]
    %v353 = vld [vmem:[#allocation5 + $0x1d8] sm:$0xff]
    %v354 = vld [vmem:[#allocation5 + $0x1e0] sm:$0xff]
    %v355 = vld [vmem:[#allocation5 + $0x1e8] sm:$0xff]
    %v356 = vld [vmem:[#allocation5 + $0x1f0] sm:$0xff]
    %v357 = vld [vmem:[#allocation5 + $0x1f8] sm:$0xff]
    %v358 = vld [vmem:[#allocation5 + $0x200] sm:$0xff]
    %v359 = vld [vmem:[#allocation5 + $0x208] sm:$0xff]
    %v360 = vld [vmem:[#allocation5 + $0x210] sm:$0xff]
    %v361 = vld [vmem:[#allocation5 + $0x218] sm:$0xff]
    %v362 = vld [vmem:[#allocation5 + $0x220] sm:$0xff]
    %v363 = vld [vmem:[#allocation5 + $0x228] sm:$0xff]
    %v364 = vld [vmem:[#allocation5 + $0x230] sm:$0xff]
    %v365 = vld [vmem:[#allocation5 + $0x238] sm:$0xff]
    %v366 = vld [vmem:[#allocation5 + $0x240] sm:$0xff]
    %v367 = vld [vmem:[#allocation5 + $0x248] sm:$0xff]
    %v368 = vld [vmem:[#allocation5 + $0x250] sm:$0xff]
    %v369 = vld [vmem:[#allocation5 + $0x258] sm:$0xff]
    %v370 = vld [vmem:[#allocation5 + $0x260] sm:$0xff]
    %v371 = vld [vmem:[#allocation5 + $0x268] sm:$0xff]
    %v372 = vld [vmem:[#allocation5 + $0x270] sm:$0xff]
    %v373 = vld [vmem:[#allocation5 + $0x278] sm:$0xff]
    %v374 = vld [vmem:[#allocation5 + $0x280] sm:$0xff]
    %v375 = vld [vmem:[#allocation5 + $0x288] sm:$0xff]
    %v376 = vld [vmem:[#allocation5 + $0x290] sm:$0xff]
    %v377 = vld [vmem:[#allocation5 + $0x298] sm:$0xff]
    %v378 = vld [vmem:[#allocation5 + $0x2a0] sm:$0xff]
    %v379 = vld [vmem:[#allocation5 + $0x2a8] sm:$0xff]
    %v380 = vld [vmem:[#allocation5 + $0x2b0] sm:$0xff]
    %v381 = vld [vmem:[#allocation5 + $0x2b8] sm:$0xff]
    %v382 = vld [vmem:[#allocation5 + $0x2c0] sm:$0xff]
    %v383 = vld [vmem:[#allocation5 + $0x2c8] sm:$0xff]
    %v384 = vld [vmem:[#allocation5 + $0x2d0] sm:$0xff]
    %v385 = vld [vmem:[#allocation5 + $0x2d8] sm:$0xff]
    %v386 = vld [vmem:[#allocation5 + $0x2e0] sm:$0xff]
    %v387 = vld [vmem:[#allocation5 + $0x2e8] sm:$0xff]
    %v388 = vld [vmem:[#allocation5 + $0x2f0] sm:$0xff]
    %v389 = vld [vmem:[#allocation5 + $0x2f8] sm:$0xff]
    %v390 = vld [vmem:[%s2] sm:$0x3]
    %v392 = vlaneseq
    %v393 = vshrl.u32 %v392, 7
    %v394 = vsub.s32 0, %v393
    %v395 = vrot.slane %v390, %v394
    %v396 = vlaneseq
    %v397 = vshrl.u32 %v396, 7
    %v398 = vsub.s32 1, %v397
    %v399 = vrot.slane %v390, %v398
    %v594 = vunpack.c.l.b16 %v102
    %v595 = vunpack.c.h.b16 %v102
    %v596 = vunpack.c.l.b16 %v103
    %v597 = vunpack.c.h.b16 %v103
    %v598 = vunpack.c.l.b16 %v104
    %v599 = vunpack.c.h.b16 %v104
    %v600 = vunpack.c.l.b16 %v105
    %v601 = vunpack.c.h.b16 %v105
    %v602 = vunpack.c.l.b16 %v106
    %v603 = vunpack.c.h.b16 %v106
    %v604 = vunpack.c.l.b16 %v107
    %v605 = vunpack.c.h.b16 %v107
    %v606 = vunpack.c.l.b16 %v108
    %v607 = vunpack.c.h.b16 %v108
    %v608 = vunpack.c.l.b16 %v109
    %v609 = vunpack.c.h.b16 %v109
    %v610 = vunpack.c.l.b16 %v110
    %v611 = vunpack.c.h.b16 %v110
    %v612 = vunpack.c.l.b16 %v111
    %v613 = vunpack.c.h.b16 %v111
    %v614 = vunpack.c.l.b16 %v112
    %v615 = vunpack.c.h.b16 %v112
    %v616 = vunpack.c.l.b16 %v113
    %v617 = vunpack.c.h.b16 %v113
    %v618 = vunpack.c.l.b16 %v114
    %v619 = vunpack.c.h.b16 %v114
    %v620 = vunpack.c.l.b16 %v115
    %v621 = vunpack.c.h.b16 %v115
    %v622 = vunpack.c.l.b16 %v116
    %v623 = vunpack.c.h.b16 %v116
    %v624 = vunpack.c.l.b16 %v117
    %v625 = vunpack.c.h.b16 %v117
    %v626 = vunpack.c.l.b16 %v118
    %v627 = vunpack.c.h.b16 %v118
    %v628 = vunpack.c.l.b16 %v119
    %v629 = vunpack.c.h.b16 %v119
    %v630 = vunpack.c.l.b16 %v120
    %v631 = vunpack.c.h.b16 %v120
    %v632 = vunpack.c.l.b16 %v121
    %v633 = vunpack.c.h.b16 %v121
    %v634 = vunpack.c.l.b16 %v122
    %v635 = vunpack.c.h.b16 %v122
    %v636 = vunpack.c.l.b16 %v123
    %v637 = vunpack.c.h.b16 %v123
    %v638 = vunpack.c.l.b16 %v124
    %v639 = vunpack.c.h.b16 %v124
    %v640 = vunpack.c.l.b16 %v125
    %v641 = vunpack.c.h.b16 %v125
    %v642 = vunpack.c.l.b16 %v126
    %v643 = vunpack.c.h.b16 %v126
    %v644 = vunpack.c.l.b16 %v127
    %v645 = vunpack.c.h.b16 %v127
    %v646 = vunpack.c.l.b16 %v128
    %v647 = vunpack.c.h.b16 %v128
    %v648 = vunpack.c.l.b16 %v129
    %v649 = vunpack.c.h.b16 %v129
    %v650 = vunpack.c.l.b16 %v130
    %v651 = vunpack.c.h.b16 %v130
    %v652 = vunpack.c.l.b16 %v131
    %v653 = vunpack.c.h.b16 %v131
    %v654 = vunpack.c.l.b16 %v132
    %v655 = vunpack.c.h.b16 %v132
    %v656 = vunpack.c.l.b16 %v133
    %v657 = vunpack.c.h.b16 %v133
    %v658 = vunpack.c.l.b16 %v134
    %v659 = vunpack.c.h.b16 %v134
    %v660 = vunpack.c.l.b16 %v135
    %v661 = vunpack.c.h.b16 %v135
    %v662 = vunpack.c.l.b16 %v136
    %v663 = vunpack.c.h.b16 %v136
    %v664 = vunpack.c.l.b16 %v137
    %v665 = vunpack.c.h.b16 %v137
    %v666 = vunpack.c.l.b16 %v138
    %v667 = vunpack.c.h.b16 %v138
    %v668 = vunpack.c.l.b16 %v139
    %v669 = vunpack.c.h.b16 %v139
    %v670 = vunpack.c.l.b16 %v140
    %v671 = vunpack.c.h.b16 %v140
    %v672 = vunpack.c.l.b16 %v141
    %v673 = vunpack.c.h.b16 %v141
    %v674 = vunpack.c.l.b16 %v142
    %v675 = vunpack.c.h.b16 %v142
    %v676 = vunpack.c.l.b16 %v143
    %v677 = vunpack.c.h.b16 %v143
    %v678 = vunpack.c.l.b16 %v144
    %v679 = vunpack.c.h.b16 %v144
    %v680 = vunpack.c.l.b16 %v145
    %v681 = vunpack.c.h.b16 %v145
    %v682 = vunpack.c.l.b16 %v146
    %v683 = vunpack.c.h.b16 %v146
    %v684 = vunpack.c.l.b16 %v147
    %v685 = vunpack.c.h.b16 %v147
    %v686 = vunpack.c.l.b16 %v148
    %v687 = vunpack.c.h.b16 %v148
    %v688 = vunpack.c.l.b16 %v149
    %v689 = vunpack.c.h.b16 %v149
    %v690 = vunpack.c.l.b16 %v150
    %v691 = vunpack.c.h.b16 %v150
    %v692 = vunpack.c.l.b16 %v151
    %v693 = vunpack.c.h.b16 %v151
    %v694 = vunpack.c.l.b16 %v152
    %v695 = vunpack.c.h.b16 %v152
    %v696 = vunpack.c.l.b16 %v153
    %v697 = vunpack.c.h.b16 %v153
    %v698 = vunpack.c.l.b16 %v154
    %v699 = vunpack.c.h.b16 %v154
    %v700 = vunpack.c.l.b16 %v155
    %v701 = vunpack.c.h.b16 %v155
    %v702 = vunpack.c.l.b16 %v156
    %v703 = vunpack.c.h.b16 %v156
    %v704 = vunpack.c.l.b16 %v157
    %v705 = vunpack.c.h.b16 %v157
    %v706 = vunpack.c.l.b16 %v158
    %v707 = vunpack.c.h.b16 %v158
    %v708 = vunpack.c.l.b16 %v159
    %v709 = vunpack.c.h.b16 %v159
    %v710 = vunpack.c.l.b16 %v160
    %v711 = vunpack.c.h.b16 %v160
    %v712 = vunpack.c.l.b16 %v161
    %v713 = vunpack.c.h.b16 %v161
    %v714 = vunpack.c.l.b16 %v162
    %v715 = vunpack.c.h.b16 %v162
    %v716 = vunpack.c.l.b16 %v163
    %v717 = vunpack.c.h.b16 %v163
    %v718 = vunpack.c.l.b16 %v164
    %v719 = vunpack.c.h.b16 %v164
    %v720 = vunpack.c.l.b16 %v165
    %v721 = vunpack.c.h.b16 %v165
    %v722 = vunpack.c.l.b16 %v166
    %v723 = vunpack.c.h.b16 %v166
    %v724 = vunpack.c.l.b16 %v167
    %v725 = vunpack.c.h.b16 %v167
    %v726 = vunpack.c.l.b16 %v168
    %v727 = vunpack.c.h.b16 %v168
    %v728 = vunpack.c.l.b16 %v169
    %v729 = vunpack.c.h.b16 %v169
    %v730 = vunpack.c.l.b16 %v170
    %v731 = vunpack.c.h.b16 %v170
    %v732 = vunpack.c.l.b16 %v171
    %v733 = vunpack.c.h.b16 %v171
    %v734 = vunpack.c.l.b16 %v172
    %v735 = vunpack.c.h.b16 %v172
    %v736 = vunpack.c.l.b16 %v173
    %v737 = vunpack.c.h.b16 %v173
    %v738 = vunpack.c.l.b16 %v174
    %v739 = vunpack.c.h.b16 %v174
    %v740 = vunpack.c.l.b16 %v175
    %v741 = vunpack.c.h.b16 %v175
    %v742 = vunpack.c.l.b16 %v176
    %v743 = vunpack.c.h.b16 %v176
    %v744 = vunpack.c.l.b16 %v177
    %v745 = vunpack.c.h.b16 %v177
    %v746 = vunpack.c.l.b16 %v178
    %v747 = vunpack.c.h.b16 %v178
    %v748 = vunpack.c.l.b16 %v179
    %v749 = vunpack.c.h.b16 %v179
    %v750 = vunpack.c.l.b16 %v180
    %v751 = vunpack.c.h.b16 %v180
    %v752 = vunpack.c.l.b16 %v181
    %v753 = vunpack.c.h.b16 %v181
    %v754 = vunpack.c.l.b16 %v182
    %v755 = vunpack.c.h.b16 %v182
    %v756 = vunpack.c.l.b16 %v183
    %v757 = vunpack.c.h.b16 %v183
    %v758 = vunpack.c.l.b16 %v184
    %v759 = vunpack.c.h.b16 %v184
    %v760 = vunpack.c.l.b16 %v185
    %v761 = vunpack.c.h.b16 %v185
    %v762 = vunpack.c.l.b16 %v186
    %v763 = vunpack.c.h.b16 %v186
    %v764 = vunpack.c.l.b16 %v187
    %v765 = vunpack.c.h.b16 %v187
    %v766 = vunpack.c.l.b16 %v188
    %v767 = vunpack.c.h.b16 %v188
    %v768 = vunpack.c.l.b16 %v189
    %v769 = vunpack.c.h.b16 %v189
    %v770 = vunpack.c.l.b16 %v190
    %v771 = vunpack.c.h.b16 %v190
    %v772 = vunpack.c.l.b16 %v191
    %v773 = vunpack.c.h.b16 %v191
    %v774 = vunpack.c.l.b16 %v192
    %v775 = vunpack.c.h.b16 %v192
    %v776 = vunpack.c.l.b16 %v193
    %v777 = vunpack.c.h.b16 %v193
    %v778 = vunpack.c.l.b16 %v194
    %v779 = vunpack.c.h.b16 %v194
    %v780 = vunpack.c.l.b16 %v195
    %v781 = vunpack.c.h.b16 %v195
    %v782 = vunpack.c.l.b16 %v196
    %v783 = vunpack.c.h.b16 %v196
    %v784 = vunpack.c.l.b16 %v197
    %v785 = vunpack.c.h.b16 %v197
    %v786 = vunpack.c.l.b16 %v198
    %v787 = vunpack.c.h.b16 %v198
    %v788 = vunpack.c.l.b16 %v199
    %v789 = vunpack.c.h.b16 %v199
    %v790 = vunpack.c.l.b16 %v200
    %v791 = vunpack.c.h.b16 %v200
    %v792 = vunpack.c.l.b16 %v201
    %v793 = vunpack.c.h.b16 %v201
    %v794 = vunpack.c.l.b16 %v202
    %v795 = vunpack.c.h.b16 %v202
    %v796 = vunpack.c.l.b16 %v203
    %v797 = vunpack.c.h.b16 %v203
    %v798 = vunpack.c.l.b16 %v204
    %v799 = vunpack.c.h.b16 %v204
    %v800 = vunpack.c.l.b16 %v205
    %v801 = vunpack.c.h.b16 %v205
    %v802 = vunpack.c.l.b16 %v206
    %v803 = vunpack.c.h.b16 %v206
    %v804 = vunpack.c.l.b16 %v207
    %v805 = vunpack.c.h.b16 %v207
    %v806 = vunpack.c.l.b16 %v208
    %v807 = vunpack.c.h.b16 %v208
    %v808 = vunpack.c.l.b16 %v209
    %v809 = vunpack.c.h.b16 %v209
    %v810 = vunpack.c.l.b16 %v210
    %v811 = vunpack.c.h.b16 %v210
    %v812 = vunpack.c.l.b16 %v211
    %v813 = vunpack.c.h.b16 %v211
    %v814 = vunpack.c.l.b16 %v212
    %v815 = vunpack.c.h.b16 %v212
    %v816 = vunpack.c.l.b16 %v213
    %v817 = vunpack.c.h.b16 %v213
    %v818 = vunpack.c.l.b16 %v214
    %v819 = vunpack.c.h.b16 %v214
    %v820 = vunpack.c.l.b16 %v215
    %v821 = vunpack.c.h.b16 %v215
    %v822 = vunpack.c.l.b16 %v216
    %v823 = vunpack.c.h.b16 %v216
    %v824 = vunpack.c.l.b16 %v217
    %v825 = vunpack.c.h.b16 %v217
    %v826 = vunpack.c.l.b16 %v218
    %v827 = vunpack.c.h.b16 %v218
    %v828 = vunpack.c.l.b16 %v219
    %v829 = vunpack.c.h.b16 %v219
    %v830 = vunpack.c.l.b16 %v220
    %v831 = vunpack.c.h.b16 %v220
    %v832 = vunpack.c.l.b16 %v221
    %v833 = vunpack.c.h.b16 %v221
    %v834 = vunpack.c.l.b16 %v222
    %v835 = vunpack.c.h.b16 %v222
    %v836 = vunpack.c.l.b16 %v223
    %v837 = vunpack.c.h.b16 %v223
    %v838 = vunpack.c.l.b16 %v224
    %v839 = vunpack.c.h.b16 %v224
    %v840 = vunpack.c.l.b16 %v225
    %v841 = vunpack.c.h.b16 %v225
    %v842 = vunpack.c.l.b16 %v226
    %v843 = vunpack.c.h.b16 %v226
    %v844 = vunpack.c.l.b16 %v227
    %v845 = vunpack.c.h.b16 %v227
    %v846 = vunpack.c.l.b16 %v228
    %v847 = vunpack.c.h.b16 %v228
    %v848 = vunpack.c.l.b16 %v229
    %v849 = vunpack.c.h.b16 %v229
    %v850 = vunpack.c.l.b16 %v230
    %v851 = vunpack.c.h.b16 %v230
    %v852 = vunpack.c.l.b16 %v231
    %v853 = vunpack.c.h.b16 %v231
    %v854 = vunpack.c.l.b16 %v232
    %v855 = vunpack.c.h.b16 %v232
    %v856 = vunpack.c.l.b16 %v233
    %v857 = vunpack.c.h.b16 %v233
    %v858 = vunpack.c.l.b16 %v234
    %v859 = vunpack.c.h.b16 %v234
    %v860 = vunpack.c.l.b16 %v235
    %v861 = vunpack.c.h.b16 %v235
    %v862 = vunpack.c.l.b16 %v236
    %v863 = vunpack.c.h.b16 %v236
    %v864 = vunpack.c.l.b16 %v237
    %v865 = vunpack.c.h.b16 %v237
    %v866 = vunpack.c.l.b16 %v238
    %v867 = vunpack.c.h.b16 %v238
    %v868 = vunpack.c.l.b16 %v239
    %v869 = vunpack.c.h.b16 %v239
    %v870 = vunpack.c.l.b16 %v240
    %v871 = vunpack.c.h.b16 %v240
    %v872 = vunpack.c.l.b16 %v241
    %v873 = vunpack.c.h.b16 %v241
    %v874 = vunpack.c.l.b16 %v242
    %v875 = vunpack.c.h.b16 %v242
    %v876 = vunpack.c.l.b16 %v243
    %v877 = vunpack.c.h.b16 %v243
    %v878 = vunpack.c.l.b16 %v244
    %v879 = vunpack.c.h.b16 %v244
    %v880 = vunpack.c.l.b16 %v245
    %v881 = vunpack.c.h.b16 %v245
    %v882 = vunpack.c.l.b16 %v246
    %v883 = vunpack.c.h.b16 %v246
    %v884 = vunpack.c.l.b16 %v247
    %v885 = vunpack.c.h.b16 %v247
    %v886 = vunpack.c.l.b16 %v248
    %v887 = vunpack.c.h.b16 %v248
    %v888 = vunpack.c.l.b16 %v249
    %v889 = vunpack.c.h.b16 %v249
    %v890 = vunpack.c.l.b16 %v250
    %v891 = vunpack.c.h.b16 %v250
    %v892 = vunpack.c.l.b16 %v251
    %v893 = vunpack.c.h.b16 %v251
    %v894 = vunpack.c.l.b16 %v252
    %v895 = vunpack.c.h.b16 %v252
    %v896 = vunpack.c.l.b16 %v253
    %v897 = vunpack.c.h.b16 %v253
    %v898 = vunpack.c.l.b16 %v254
    %v899 = vunpack.c.h.b16 %v254
    %v900 = vunpack.c.l.b16 %v255
    %v901 = vunpack.c.h.b16 %v255
    %v902 = vunpack.c.l.b16 %v256
    %v903 = vunpack.c.h.b16 %v256
    %v904 = vunpack.c.l.b16 %v257
    %v905 = vunpack.c.h.b16 %v257
    %v906 = vunpack.c.l.b16 %v258
    %v907 = vunpack.c.h.b16 %v258
    %v908 = vunpack.c.l.b16 %v259
    %v909 = vunpack.c.h.b16 %v259
    %v910 = vunpack.c.l.b16 %v260
    %v911 = vunpack.c.h.b16 %v260
    %v912 = vunpack.c.l.b16 %v261
    %v913 = vunpack.c.h.b16 %v261
    %v914 = vunpack.c.l.b16 %v262
    %v915 = vunpack.c.h.b16 %v262
    %v916 = vunpack.c.l.b16 %v263
    %v917 = vunpack.c.h.b16 %v263
    %v918 = vunpack.c.l.b16 %v264
    %v919 = vunpack.c.h.b16 %v264
    %v920 = vunpack.c.l.b16 %v265
    %v921 = vunpack.c.h.b16 %v265
    %v922 = vunpack.c.l.b16 %v266
    %v923 = vunpack.c.h.b16 %v266
    %v924 = vunpack.c.l.b16 %v267
    %v925 = vunpack.c.h.b16 %v267
    %v926 = vunpack.c.l.b16 %v268
    %v927 = vunpack.c.h.b16 %v268
    %v928 = vunpack.c.l.b16 %v269
    %v929 = vunpack.c.h.b16 %v269
    %v930 = vunpack.c.l.b16 %v270
    %v931 = vunpack.c.h.b16 %v270
    %v932 = vunpack.c.l.b16 %v271
    %v933 = vunpack.c.h.b16 %v271
    %v934 = vunpack.c.l.b16 %v272
    %v935 = vunpack.c.h.b16 %v272
    %v936 = vunpack.c.l.b16 %v273
    %v937 = vunpack.c.h.b16 %v273
    %v938 = vunpack.c.l.b16 %v274
    %v939 = vunpack.c.h.b16 %v274
    %v940 = vunpack.c.l.b16 %v275
    %v941 = vunpack.c.h.b16 %v275
    %v942 = vunpack.c.l.b16 %v276
    %v943 = vunpack.c.h.b16 %v276
    %v944 = vunpack.c.l.b16 %v277
    %v945 = vunpack.c.h.b16 %v277
    %v946 = vunpack.c.l.b16 %v278
    %v947 = vunpack.c.h.b16 %v278
    %v948 = vunpack.c.l.b16 %v279
    %v949 = vunpack.c.h.b16 %v279
    %v950 = vunpack.c.l.b16 %v280
    %v951 = vunpack.c.h.b16 %v280
    %v952 = vunpack.c.l.b16 %v281
    %v953 = vunpack.c.h.b16 %v281
    %v954 = vunpack.c.l.b16 %v282
    %v955 = vunpack.c.h.b16 %v282
    %v956 = vunpack.c.l.b16 %v283
    %v957 = vunpack.c.h.b16 %v283
    %v958 = vunpack.c.l.b16 %v284
    %v959 = vunpack.c.h.b16 %v284
    %v960 = vunpack.c.l.b16 %v285
    %v961 = vunpack.c.h.b16 %v285
    %v962 = vunpack.c.l.b16 %v286
    %v963 = vunpack.c.h.b16 %v286
    %v964 = vunpack.c.l.b16 %v287
    %v965 = vunpack.c.h.b16 %v287
    %v966 = vunpack.c.l.b16 %v288
    %v967 = vunpack.c.h.b16 %v288
    %v968 = vunpack.c.l.b16 %v289
    %v969 = vunpack.c.h.b16 %v289
    %v970 = vunpack.c.l.b16 %v290
    %v971 = vunpack.c.h.b16 %v290
    %v972 = vunpack.c.l.b16 %v291
    %v973 = vunpack.c.h.b16 %v291
    %v974 = vunpack.c.l.b16 %v292
    %v975 = vunpack.c.h.b16 %v292
    %v976 = vunpack.c.l.b16 %v293
    %v977 = vunpack.c.h.b16 %v293
    %v978 = vpack.c.b16 %v600, %v594
    %v979 = vpack.c.b16 %v601, %v595
    %v980 = vpack.c.b16 %v602, %v596
    %v981 = vpack.c.b16 %v603, %v597
    %v982 = vpack.c.b16 %v604, %v598
    %v983 = vpack.c.b16 %v605, %v599
    %v984 = vpack.c.b16 %v612, %v606
    %v985 = vpack.c.b16 %v613, %v607
    %v986 = vpack.c.b16 %v614, %v608
    %v987 = vpack.c.b16 %v615, %v609
    %v988 = vpack.c.b16 %v616, %v610
    %v989 = vpack.c.b16 %v617, %v611
    %v990 = vpack.c.b16 %v624, %v618
    %v991 = vpack.c.b16 %v625, %v619
    %v992 = vpack.c.b16 %v626, %v620
    %v993 = vpack.c.b16 %v627, %v621
    %v994 = vpack.c.b16 %v628, %v622
    %v995 = vpack.c.b16 %v629, %v623
    %v996 = vpack.c.b16 %v636, %v630
    %v997 = vpack.c.b16 %v637, %v631
    %v998 = vpack.c.b16 %v638, %v632
    %v999 = vpack.c.b16 %v639, %v633
    %v1000 = vpack.c.b16 %v640, %v634
    %v1001 = vpack.c.b16 %v641, %v635
    %v1002 = vpack.c.b16 %v648, %v642
    %v1003 = vpack.c.b16 %v649, %v643
    %v1004 = vpack.c.b16 %v650, %v644
    %v1005 = vpack.c.b16 %v651, %v645
    %v1006 = vpack.c.b16 %v652, %v646
    %v1007 = vpack.c.b16 %v653, %v647
    %v1008 = vpack.c.b16 %v660, %v654
    %v1009 = vpack.c.b16 %v661, %v655
    %v1010 = vpack.c.b16 %v662, %v656
    %v1011 = vpack.c.b16 %v663, %v657
    %v1012 = vpack.c.b16 %v664, %v658
    %v1013 = vpack.c.b16 %v665, %v659
    %v1014 = vpack.c.b16 %v672, %v666
    %v1015 = vpack.c.b16 %v673, %v667
    %v1016 = vpack.c.b16 %v674, %v668
    %v1017 = vpack.c.b16 %v675, %v669
    %v1018 = vpack.c.b16 %v676, %v670
    %v1019 = vpack.c.b16 %v677, %v671
    %v1020 = vpack.c.b16 %v684, %v678
    %v1021 = vpack.c.b16 %v685, %v679
    %v1022 = vpack.c.b16 %v686, %v680
    %v1023 = vpack.c.b16 %v687, %v681
    %v1024 = vpack.c.b16 %v688, %v682
    %v1025 = vpack.c.b16 %v689, %v683
    %v1026 = vpack.c.b16 %v696, %v690
    %v1027 = vpack.c.b16 %v697, %v691
    %v1028 = vpack.c.b16 %v698, %v692
    %v1029 = vpack.c.b16 %v699, %v693
    %v1030 = vpack.c.b16 %v700, %v694
    %v1031 = vpack.c.b16 %v701, %v695
    %v1032 = vpack.c.b16 %v708, %v702
    %v1033 = vpack.c.b16 %v709, %v703
    %v1034 = vpack.c.b16 %v710, %v704
    %v1035 = vpack.c.b16 %v711, %v705
    %v1036 = vpack.c.b16 %v712, %v706
    %v1037 = vpack.c.b16 %v713, %v707
    %v1038 = vpack.c.b16 %v720, %v714
    %v1039 = vpack.c.b16 %v721, %v715
    %v1040 = vpack.c.b16 %v722, %v716
    %v1041 = vpack.c.b16 %v723, %v717
    %v1042 = vpack.c.b16 %v724, %v718
    %v1043 = vpack.c.b16 %v725, %v719
    %v1044 = vpack.c.b16 %v732, %v726
    %v1045 = vpack.c.b16 %v733, %v727
    %v1046 = vpack.c.b16 %v734, %v728
    %v1047 = vpack.c.b16 %v735, %v729
    %v1048 = vpack.c.b16 %v736, %v730
    %v1049 = vpack.c.b16 %v737, %v731
    %v1050 = vpack.c.b16 %v744, %v738
    %v1051 = vpack.c.b16 %v745, %v739
    %v1052 = vpack.c.b16 %v746, %v740
    %v1053 = vpack.c.b16 %v747, %v741
    %v1054 = vpack.c.b16 %v748, %v742
    %v1055 = vpack.c.b16 %v749, %v743
    %v1056 = vpack.c.b16 %v756, %v750
    %v1057 = vpack.c.b16 %v757, %v751
    %v1058 = vpack.c.b16 %v758, %v752
    %v1059 = vpack.c.b16 %v759, %v753
    %v1060 = vpack.c.b16 %v760, %v754
    %v1061 = vpack.c.b16 %v761, %v755
    %v1062 = vpack.c.b16 %v768, %v762
    %v1063 = vpack.c.b16 %v769, %v763
    %v1064 = vpack.c.b16 %v770, %v764
    %v1065 = vpack.c.b16 %v771, %v765
    %v1066 = vpack.c.b16 %v772, %v766
    %v1067 = vpack.c.b16 %v773, %v767
    %v1068 = vpack.c.b16 %v780, %v774
    %v1069 = vpack.c.b16 %v781, %v775
    %v1070 = vpack.c.b16 %v782, %v776
    %v1071 = vpack.c.b16 %v783, %v777
    %v1072 = vpack.c.b16 %v784, %v778
    %v1073 = vpack.c.b16 %v785, %v779
    %v1074 = vpack.c.b16 %v792, %v786
    %v1075 = vpack.c.b16 %v793, %v787
    %v1076 = vpack.c.b16 %v794, %v788
    %v1077 = vpack.c.b16 %v795, %v789
    %v1078 = vpack.c.b16 %v796, %v790
    %v1079 = vpack.c.b16 %v797, %v791
    %v1080 = vpack.c.b16 %v804, %v798
    %v1081 = vpack.c.b16 %v805, %v799
    %v1082 = vpack.c.b16 %v806, %v800
    %v1083 = vpack.c.b16 %v807, %v801
    %v1084 = vpack.c.b16 %v808, %v802
    %v1085 = vpack.c.b16 %v809, %v803
    %v1086 = vpack.c.b16 %v816, %v810
    %v1087 = vpack.c.b16 %v817, %v811
    %v1088 = vpack.c.b16 %v818, %v812
    %v1089 = vpack.c.b16 %v819, %v813
    %v1090 = vpack.c.b16 %v820, %v814
    %v1091 = vpack.c.b16 %v821, %v815
    %v1092 = vpack.c.b16 %v828, %v822
    %v1093 = vpack.c.b16 %v829, %v823
    %v1094 = vpack.c.b16 %v830, %v824
    %v1095 = vpack.c.b16 %v831, %v825
    %v1096 = vpack.c.b16 %v832, %v826
    %v1097 = vpack.c.b16 %v833, %v827
    %v1098 = vpack.c.b16 %v840, %v834
    %v1099 = vpack.c.b16 %v841, %v835
    %v1100 = vpack.c.b16 %v842, %v836
    %v1101 = vpack.c.b16 %v843, %v837
    %v1102 = vpack.c.b16 %v844, %v838
    %v1103 = vpack.c.b16 %v845, %v839
    %v1104 = vpack.c.b16 %v852, %v846
    %v1105 = vpack.c.b16 %v853, %v847
    %v1106 = vpack.c.b16 %v854, %v848
    %v1107 = vpack.c.b16 %v855, %v849
    %v1108 = vpack.c.b16 %v856, %v850
    %v1109 = vpack.c.b16 %v857, %v851
    %v1110 = vpack.c.b16 %v864, %v858
    %v1111 = vpack.c.b16 %v865, %v859
    %v1112 = vpack.c.b16 %v866, %v860
    %v1113 = vpack.c.b16 %v867, %v861
    %v1114 = vpack.c.b16 %v868, %v862
    %v1115 = vpack.c.b16 %v869, %v863
    %v1116 = vpack.c.b16 %v876, %v870
    %v1117 = vpack.c.b16 %v877, %v871
    %v1118 = vpack.c.b16 %v878, %v872
    %v1119 = vpack.c.b16 %v879, %v873
    %v1120 = vpack.c.b16 %v880, %v874
    %v1121 = vpack.c.b16 %v881, %v875
    %v1122 = vpack.c.b16 %v888, %v882
    %v1123 = vpack.c.b16 %v889, %v883
    %v1124 = vpack.c.b16 %v890, %v884
    %v1125 = vpack.c.b16 %v891, %v885
    %v1126 = vpack.c.b16 %v892, %v886
    %v1127 = vpack.c.b16 %v893, %v887
    %v1128 = vpack.c.b16 %v900, %v894
    %v1129 = vpack.c.b16 %v901, %v895
    %v1130 = vpack.c.b16 %v902, %v896
    %v1131 = vpack.c.b16 %v903, %v897
    %v1132 = vpack.c.b16 %v904, %v898
    %v1133 = vpack.c.b16 %v905, %v899
    %v1134 = vpack.c.b16 %v912, %v906
    %v1135 = vpack.c.b16 %v913, %v907
    %v1136 = vpack.c.b16 %v914, %v908
    %v1137 = vpack.c.b16 %v915, %v909
    %v1138 = vpack.c.b16 %v916, %v910
    %v1139 = vpack.c.b16 %v917, %v911
    %v1140 = vpack.c.b16 %v924, %v918
    %v1141 = vpack.c.b16 %v925, %v919
    %v1142 = vpack.c.b16 %v926, %v920
    %v1143 = vpack.c.b16 %v927, %v921
    %v1144 = vpack.c.b16 %v928, %v922
    %v1145 = vpack.c.b16 %v929, %v923
    %v1146 = vpack.c.b16 %v936, %v930
    %v1147 = vpack.c.b16 %v937, %v931
    %v1148 = vpack.c.b16 %v938, %v932
    %v1149 = vpack.c.b16 %v939, %v933
    %v1150 = vpack.c.b16 %v940, %v934
    %v1151 = vpack.c.b16 %v941, %v935
    %v1152 = vpack.c.b16 %v948, %v942
    %v1153 = vpack.c.b16 %v949, %v943
    %v1154 = vpack.c.b16 %v950, %v944
    %v1155 = vpack.c.b16 %v951, %v945
    %v1156 = vpack.c.b16 %v952, %v946
    %v1157 = vpack.c.b16 %v953, %v947
    %v1158 = vpack.c.b16 %v960, %v954
    %v1159 = vpack.c.b16 %v961, %v955
    %v1160 = vpack.c.b16 %v962, %v956
    %v1161 = vpack.c.b16 %v963, %v957
    %v1162 = vpack.c.b16 %v964, %v958
    %v1163 = vpack.c.b16 %v965, %v959
    %v1164 = vpack.c.b16 %v972, %v966
    %v1165 = vpack.c.b16 %v973, %v967
    %v1166 = vpack.c.b16 %v974, %v968
    %v1167 = vpack.c.b16 %v975, %v969
    %v1168 = vpack.c.b16 %v976, %v970
    %v1169 = vpack.c.b16 %v977, %v971
    %v1458 = vunpack.c.l.b16 %v294
    %v1459 = vunpack.c.h.b16 %v294
    %v1460 = vunpack.c.l.b16 %v295
    %v1461 = vunpack.c.h.b16 %v295
    %v1462 = vunpack.c.l.b16 %v296
    %v1463 = vunpack.c.h.b16 %v296
    %v1464 = vunpack.c.l.b16 %v297
    %v1465 = vunpack.c.h.b16 %v297
    %v1466 = vunpack.c.l.b16 %v298
    %v1467 = vunpack.c.h.b16 %v298
    %v1468 = vunpack.c.l.b16 %v299
    %v1469 = vunpack.c.h.b16 %v299
    %v1470 = vunpack.c.l.b16 %v300
    %v1471 = vunpack.c.h.b16 %v300
    %v1472 = vunpack.c.l.b16 %v301
    %v1473 = vunpack.c.h.b16 %v301
    %v1474 = vunpack.c.l.b16 %v302
    %v1475 = vunpack.c.h.b16 %v302
    %v1476 = vunpack.c.l.b16 %v303
    %v1477 = vunpack.c.h.b16 %v303
    %v1478 = vunpack.c.l.b16 %v304
    %v1479 = vunpack.c.h.b16 %v304
    %v1480 = vunpack.c.l.b16 %v305
    %v1481 = vunpack.c.h.b16 %v305
    %v1482 = vunpack.c.l.b16 %v306
    %v1483 = vunpack.c.h.b16 %v306
    %v1484 = vunpack.c.l.b16 %v307
    %v1485 = vunpack.c.h.b16 %v307
    %v1486 = vunpack.c.l.b16 %v308
    %v1487 = vunpack.c.h.b16 %v308
    %v1488 = vunpack.c.l.b16 %v309
    %v1489 = vunpack.c.h.b16 %v309
    %v1490 = vunpack.c.l.b16 %v310
    %v1491 = vunpack.c.h.b16 %v310
    %v1492 = vunpack.c.l.b16 %v311
    %v1493 = vunpack.c.h.b16 %v311
    %v1494 = vunpack.c.l.b16 %v312
    %v1495 = vunpack.c.h.b16 %v312
    %v1496 = vunpack.c.l.b16 %v313
    %v1497 = vunpack.c.h.b16 %v313
    %v1498 = vunpack.c.l.b16 %v314
    %v1499 = vunpack.c.h.b16 %v314
    %v1500 = vunpack.c.l.b16 %v315
    %v1501 = vunpack.c.h.b16 %v315
    %v1502 = vunpack.c.l.b16 %v316
    %v1503 = vunpack.c.h.b16 %v316
    %v1504 = vunpack.c.l.b16 %v317
    %v1505 = vunpack.c.h.b16 %v317
    %v1506 = vunpack.c.l.b16 %v318
    %v1507 = vunpack.c.h.b16 %v318
    %v1508 = vunpack.c.l.b16 %v319
    %v1509 = vunpack.c.h.b16 %v319
    %v1510 = vunpack.c.l.b16 %v320
    %v1511 = vunpack.c.h.b16 %v320
    %v1512 = vunpack.c.l.b16 %v321
    %v1513 = vunpack.c.h.b16 %v321
    %v1514 = vunpack.c.l.b16 %v322
    %v1515 = vunpack.c.h.b16 %v322
    %v1516 = vunpack.c.l.b16 %v323
    %v1517 = vunpack.c.h.b16 %v323
    %v1518 = vunpack.c.l.b16 %v324
    %v1519 = vunpack.c.h.b16 %v324
    %v1520 = vunpack.c.l.b16 %v325
    %v1521 = vunpack.c.h.b16 %v325
    %v1522 = vunpack.c.l.b16 %v326
    %v1523 = vunpack.c.h.b16 %v326
    %v1524 = vunpack.c.l.b16 %v327
    %v1525 = vunpack.c.h.b16 %v327
    %v1526 = vunpack.c.l.b16 %v328
    %v1527 = vunpack.c.h.b16 %v328
    %v1528 = vunpack.c.l.b16 %v329
    %v1529 = vunpack.c.h.b16 %v329
    %v1530 = vunpack.c.l.b16 %v330
    %v1531 = vunpack.c.h.b16 %v330
    %v1532 = vunpack.c.l.b16 %v331
    %v1533 = vunpack.c.h.b16 %v331
    %v1534 = vunpack.c.l.b16 %v332
    %v1535 = vunpack.c.h.b16 %v332
    %v1536 = vunpack.c.l.b16 %v333
    %v1537 = vunpack.c.h.b16 %v333
    %v1538 = vunpack.c.l.b16 %v334
    %v1539 = vunpack.c.h.b16 %v334
    %v1540 = vunpack.c.l.b16 %v335
    %v1541 = vunpack.c.h.b16 %v335
    %v1542 = vunpack.c.l.b16 %v336
    %v1543 = vunpack.c.h.b16 %v336
    %v1544 = vunpack.c.l.b16 %v337
    %v1545 = vunpack.c.h.b16 %v337
    %v1546 = vunpack.c.l.b16 %v338
    %v1547 = vunpack.c.h.b16 %v338
    %v1548 = vunpack.c.l.b16 %v339
    %v1549 = vunpack.c.h.b16 %v339
    %v1550 = vunpack.c.l.b16 %v340
    %v1551 = vunpack.c.h.b16 %v340
    %v1552 = vunpack.c.l.b16 %v341
    %v1553 = vunpack.c.h.b16 %v341
    %v1554 = vunpack.c.l.b16 %v342
    %v1555 = vunpack.c.h.b16 %v342
    %v1556 = vunpack.c.l.b16 %v343
    %v1557 = vunpack.c.h.b16 %v343
    %v1558 = vunpack.c.l.b16 %v344
    %v1559 = vunpack.c.h.b16 %v344
    %v1560 = vunpack.c.l.b16 %v345
    %v1561 = vunpack.c.h.b16 %v345
    %v1562 = vunpack.c.l.b16 %v346
    %v1563 = vunpack.c.h.b16 %v346
    %v1564 = vunpack.c.l.b16 %v347
    %v1565 = vunpack.c.h.b16 %v347
    %v1566 = vunpack.c.l.b16 %v348
    %v1567 = vunpack.c.h.b16 %v348
    %v1568 = vunpack.c.l.b16 %v349
    %v1569 = vunpack.c.h.b16 %v349
    %v1570 = vunpack.c.l.b16 %v350
    %v1571 = vunpack.c.h.b16 %v350
    %v1572 = vunpack.c.l.b16 %v351
    %v1573 = vunpack.c.h.b16 %v351
    %v1574 = vunpack.c.l.b16 %v352
    %v1575 = vunpack.c.h.b16 %v352
    %v1576 = vunpack.c.l.b16 %v353
    %v1577 = vunpack.c.h.b16 %v353
    %v1578 = vunpack.c.l.b16 %v354
    %v1579 = vunpack.c.h.b16 %v354
    %v1580 = vunpack.c.l.b16 %v355
    %v1581 = vunpack.c.h.b16 %v355
    %v1582 = vunpack.c.l.b16 %v356
    %v1583 = vunpack.c.h.b16 %v356
    %v1584 = vunpack.c.l.b16 %v357
    %v1585 = vunpack.c.h.b16 %v357
    %v1586 = vunpack.c.l.b16 %v358
    %v1587 = vunpack.c.h.b16 %v358
    %v1588 = vunpack.c.l.b16 %v359
    %v1589 = vunpack.c.h.b16 %v359
    %v1590 = vunpack.c.l.b16 %v360
    %v1591 = vunpack.c.h.b16 %v360
    %v1592 = vunpack.c.l.b16 %v361
    %v1593 = vunpack.c.h.b16 %v361
    %v1594 = vunpack.c.l.b16 %v362
    %v1595 = vunpack.c.h.b16 %v362
    %v1596 = vunpack.c.l.b16 %v363
    %v1597 = vunpack.c.h.b16 %v363
    %v1598 = vunpack.c.l.b16 %v364
    %v1599 = vunpack.c.h.b16 %v364
    %v1600 = vunpack.c.l.b16 %v365
    %v1601 = vunpack.c.h.b16 %v365
    %v1602 = vunpack.c.l.b16 %v366
    %v1603 = vunpack.c.h.b16 %v366
    %v1604 = vunpack.c.l.b16 %v367
    %v1605 = vunpack.c.h.b16 %v367
    %v1606 = vunpack.c.l.b16 %v368
    %v1607 = vunpack.c.h.b16 %v368
    %v1608 = vunpack.c.l.b16 %v369
    %v1609 = vunpack.c.h.b16 %v369
    %v1610 = vunpack.c.l.b16 %v370
    %v1611 = vunpack.c.h.b16 %v370
    %v1612 = vunpack.c.l.b16 %v371
    %v1613 = vunpack.c.h.b16 %v371
    %v1614 = vunpack.c.l.b16 %v372
    %v1615 = vunpack.c.h.b16 %v372
    %v1616 = vunpack.c.l.b16 %v373
    %v1617 = vunpack.c.h.b16 %v373
    %v1618 = vunpack.c.l.b16 %v374
    %v1619 = vunpack.c.h.b16 %v374
    %v1620 = vunpack.c.l.b16 %v375
    %v1621 = vunpack.c.h.b16 %v375
    %v1622 = vunpack.c.l.b16 %v376
    %v1623 = vunpack.c.h.b16 %v376
    %v1624 = vunpack.c.l.b16 %v377
    %v1625 = vunpack.c.h.b16 %v377
    %v1626 = vunpack.c.l.b16 %v378
    %v1627 = vunpack.c.h.b16 %v378
    %v1628 = vunpack.c.l.b16 %v379
    %v1629 = vunpack.c.h.b16 %v379
    %v1630 = vunpack.c.l.b16 %v380
    %v1631 = vunpack.c.h.b16 %v380
    %v1632 = vunpack.c.l.b16 %v381
    %v1633 = vunpack.c.h.b16 %v381
    %v1634 = vunpack.c.l.b16 %v382
    %v1635 = vunpack.c.h.b16 %v382
    %v1636 = vunpack.c.l.b16 %v383
    %v1637 = vunpack.c.h.b16 %v383
    %v1638 = vunpack.c.l.b16 %v384
    %v1639 = vunpack.c.h.b16 %v384
    %v1640 = vunpack.c.l.b16 %v385
    %v1641 = vunpack.c.h.b16 %v385
    %v1642 = vunpack.c.l.b16 %v386
    %v1643 = vunpack.c.h.b16 %v386
    %v1644 = vunpack.c.l.b16 %v387
    %v1645 = vunpack.c.h.b16 %v387
    %v1646 = vunpack.c.l.b16 %v388
    %v1647 = vunpack.c.h.b16 %v388
    %v1648 = vunpack.c.l.b16 %v389
    %v1649 = vunpack.c.h.b16 %v389
    %v1650 = vpack.c.b16 %v1460, %v1458
    %v1651 = vpack.c.b16 %v1461, %v1459
    %v1652 = vpack.c.b16 %v1464, %v1462
    %v1653 = vpack.c.b16 %v1465, %v1463
    %v1654 = vpack.c.b16 %v1468, %v1466
    %v1655 = vpack.c.b16 %v1469, %v1467
    %v1656 = vpack.c.b16 %v1472, %v1470
    %v1657 = vpack.c.b16 %v1473, %v1471
    %v1658 = vpack.c.b16 %v1476, %v1474
    %v1659 = vpack.c.b16 %v1477, %v1475
    %v1660 = vpack.c.b16 %v1480, %v1478
    %v1661 = vpack.c.b16 %v1481, %v1479
    %v1662 = vpack.c.b16 %v1484, %v1482
    %v1663 = vpack.c.b16 %v1485, %v1483
    %v1664 = vpack.c.b16 %v1488, %v1486
    %v1665 = vpack.c.b16 %v1489, %v1487
    %v1666 = vpack.c.b16 %v1492, %v1490
    %v1667 = vpack.c.b16 %v1493, %v1491
    %v1668 = vpack.c.b16 %v1496, %v1494
    %v1669 = vpack.c.b16 %v1497, %v1495
    %v1670 = vpack.c.b16 %v1500, %v1498
    %v1671 = vpack.c.b16 %v1501, %v1499
    %v1672 = vpack.c.b16 %v1504, %v1502
    %v1673 = vpack.c.b16 %v1505, %v1503
    %v1674 = vpack.c.b16 %v1508, %v1506
    %v1675 = vpack.c.b16 %v1509, %v1507
    %v1676 = vpack.c.b16 %v1512, %v1510
    %v1677 = vpack.c.b16 %v1513, %v1511
    %v1678 = vpack.c.b16 %v1516, %v1514
    %v1679 = vpack.c.b16 %v1517, %v1515
    %v1680 = vpack.c.b16 %v1520, %v1518
    %v1681 = vpack.c.b16 %v1521, %v1519
    %v1682 = vpack.c.b16 %v1524, %v1522
    %v1683 = vpack.c.b16 %v1525, %v1523
    %v1684 = vpack.c.b16 %v1528, %v1526
    %v1685 = vpack.c.b16 %v1529, %v1527
    %v1686 = vpack.c.b16 %v1532, %v1530
    %v1687 = vpack.c.b16 %v1533, %v1531
    %v1688 = vpack.c.b16 %v1536, %v1534
    %v1689 = vpack.c.b16 %v1537, %v1535
    %v1690 = vpack.c.b16 %v1540, %v1538
    %v1691 = vpack.c.b16 %v1541, %v1539
    %v1692 = vpack.c.b16 %v1544, %v1542
    %v1693 = vpack.c.b16 %v1545, %v1543
    %v1694 = vpack.c.b16 %v1548, %v1546
    %v1695 = vpack.c.b16 %v1549, %v1547
    %v1696 = vpack.c.b16 %v1552, %v1550
    %v1697 = vpack.c.b16 %v1553, %v1551
    %v1698 = vpack.c.b16 %v1556, %v1554
    %v1699 = vpack.c.b16 %v1557, %v1555
    %v1700 = vpack.c.b16 %v1560, %v1558
    %v1701 = vpack.c.b16 %v1561, %v1559
    %v1702 = vpack.c.b16 %v1564, %v1562
    %v1703 = vpack.c.b16 %v1565, %v1563
    %v1704 = vpack.c.b16 %v1568, %v1566
    %v1705 = vpack.c.b16 %v1569, %v1567
    %v1706 = vpack.c.b16 %v1572, %v1570
    %v1707 = vpack.c.b16 %v1573, %v1571
    %v1708 = vpack.c.b16 %v1576, %v1574
    %v1709 = vpack.c.b16 %v1577, %v1575
    %v1710 = vpack.c.b16 %v1580, %v1578
    %v1711 = vpack.c.b16 %v1581, %v1579
    %v1712 = vpack.c.b16 %v1584, %v1582
    %v1713 = vpack.c.b16 %v1585, %v1583
    %v1714 = vpack.c.b16 %v1588, %v1586
    %v1715 = vpack.c.b16 %v1589, %v1587
    %v1716 = vpack.c.b16 %v1592, %v1590
    %v1717 = vpack.c.b16 %v1593, %v1591
    %v1718 = vpack.c.b16 %v1596, %v1594
    %v1719 = vpack.c.b16 %v1597, %v1595
    %v1720 = vpack.c.b16 %v1600, %v1598
    %v1721 = vpack.c.b16 %v1601, %v1599
    %v1722 = vpack.c.b16 %v1604, %v1602
    %v1723 = vpack.c.b16 %v1605, %v1603
    %v1724 = vpack.c.b16 %v1608, %v1606
    %v1725 = vpack.c.b16 %v1609, %v1607
    %v1726 = vpack.c.b16 %v1612, %v1610
    %v1727 = vpack.c.b16 %v1613, %v1611
    %v1728 = vpack.c.b16 %v1616, %v1614
    %v1729 = vpack.c.b16 %v1617, %v1615
    %v1730 = vpack.c.b16 %v1620, %v1618
    %v1731 = vpack.c.b16 %v1621, %v1619
    %v1732 = vpack.c.b16 %v1624, %v1622
    %v1733 = vpack.c.b16 %v1625, %v1623
    %v1734 = vpack.c.b16 %v1628, %v1626
    %v1735 = vpack.c.b16 %v1629, %v1627
    %v1736 = vpack.c.b16 %v1632, %v1630
    %v1737 = vpack.c.b16 %v1633, %v1631
    %v1738 = vpack.c.b16 %v1636, %v1634
    %v1739 = vpack.c.b16 %v1637, %v1635
    %v1740 = vpack.c.b16 %v1640, %v1638
    %v1741 = vpack.c.b16 %v1641, %v1639
    %v1742 = vpack.c.b16 %v1644, %v1642
    %v1743 = vpack.c.b16 %v1645, %v1643
    %v1744 = vpack.c.b16 %v1648, %v1646
    %v1745 = vpack.c.b16 %v1649, %v1647
    %1842 = vmatprep.subr.bf16.mxu0 %v1651
    %1843 = vmatpush1.bf16.msra.mxu0 %v1650
    %1844 = vmatprep.subr.bf16.mxu0 %v1653
    %1845 = vmatpush1.bf16.msra.mxu0 %v1652
    %1846 = vmatprep.subr.bf16.mxu0 %v1655
    %1847 = vmatpush1.bf16.msra.mxu0 %v1654
    %1848 = vmatprep.subr.bf16.mxu0 %v1657
    %1849 = vmatpush1.bf16.msra.mxu0 %v1656
    %1850 = vmatprep.subr.bf16.mxu0 %v1659
    %1851 = vmatpush1.bf16.msra.mxu0 %v1658
    %1852 = vmatprep.subr.bf16.mxu0 %v1661
    %1853 = vmatpush1.bf16.msra.mxu0 %v1660
    %1854 = vmatprep.subr.bf16.mxu0 %v1663
    %1855 = vmatpush1.bf16.msra.mxu0 %v1662
    %1856 = vmatprep.subr.bf16.mxu0 %v1665
    %1857 = vmatpush1.bf16.msra.mxu0 %v1664
    %1858 = vmatprep.subr.bf16.mxu0 %v1667
    %1859 = vmatpush1.bf16.msra.mxu0 %v1666
    %1860 = vmatprep.subr.bf16.mxu0 %v1669
    %1861 = vmatpush1.bf16.msra.mxu0 %v1668
    %1862 = vmatprep.subr.bf16.mxu0 %v1671
    %1863 = vmatpush1.bf16.msra.mxu0 %v1670
    %1864 = vmatprep.subr.bf16.mxu0 %v1673
    %1865 = vmatpush1.bf16.msra.mxu0 %v1672
    %1866 = vmatprep.subr.bf16.mxu0 %v1675
    %1867 = vmatpush1.bf16.msra.mxu0 %v1674
    %1868 = vmatprep.subr.bf16.mxu0 %v1677
    %1869 = vmatpush1.bf16.msra.mxu0 %v1676
    %1870 = vmatprep.subr.bf16.mxu0 %v1679
    %1871 = vmatpush1.bf16.msra.mxu0 %v1678
    %1872 = vmatprep.subr.bf16.mxu0 %v1681
    %1873 = vmatpush1.bf16.msra.mxu0 %v1680
    %1874 = vmatprep.mubr.bf16.mxu0 %v979
    %1875 = vmatmul.mubr.bf16.gmra.mrb[0].mxu0 %v978
    %v1876 = vpop.f32.mrb[0].mxu0
    %v1877 = vadd.f32 %v395, %v1876
    %v1878 = vpop.f32.mrb[0].mxu0
    %v1879 = vadd.f32 %v399, %v1878
    %v1880 = vpop.f32.mrb[0].mxu0
    %v1881 = vadd.f32 %v395, %v1880
    %v1882 = vpop.f32.mrb[0].mxu0
    %v1883 = vadd.f32 %v399, %v1882
    %1884 = vmatprep.mubr.bf16.mxu0 %v985
    %1885 = vmatmul.mubr.bf16.gmra.mrb[0].mxu0 %v984
    %v1886 = vpop.f32.mrb[0].mxu0
    %v1887 = vadd.f32 %v395, %v1886
    %v1888 = vpop.f32.mrb[0].mxu0
    %v1889 = vadd.f32 %v399, %v1888
    %v1890 = vpop.f32.mrb[0].mxu0
    %v1891 = vadd.f32 %v395, %v1890
    %v1892 = vpop.f32.mrb[0].mxu0
    %v1893 = vadd.f32 %v399, %v1892
    %1894 = vmatprep.mubr.bf16.mxu0 %v991
    %1895 = vmatmul.mubr.bf16.gmra.mrb[0].mxu0 %v990
    %v1896 = vpop.f32.mrb[0].mxu0
    %v1897 = vadd.f32 %v395, %v1896
    %v1898 = vpop.f32.mrb[0].mxu0
    %v1899 = vadd.f32 %v399, %v1898
    %v1900 = vpop.f32.mrb[0].mxu0
    %v1901 = vadd.f32 %v395, %v1900
    %v1902 = vpop.f32.mrb[0].mxu0
    %v1903 = vadd.f32 %v399, %v1902
    %1904 = vmatprep.mubr.bf16.mxu0 %v997
    %1905 = vmatmul.mubr.bf16.gmra.mrb[0].mxu0 %v996
    %v1906 = vpop.f32.mrb[0].mxu0
    %v1907 = vadd.f32 %v395, %v1906
    %v1908 = vpop.f32.mrb[0].mxu0
    %v1909 = vadd.f32 %v399, %v1908
    %v1910 = vpop.f32.mrb[0].mxu0
    %v1911 = vadd.f32 %v395, %v1910
    %v1912 = vpop.f32.mrb[0].mxu0
    %v1913 = vadd.f32 %v399, %v1912
    %1914 = vmatprep.mubr.bf16.mxu0 %v1003
    %1915 = vmatmul.mubr.bf16.gmra.mrb[0].mxu0 %v1002
    %v1916 = vpop.f32.mrb[0].mxu0
    %v1917 = vadd.f32 %v395, %v1916
    %v1918 = vpop.f32.mrb[0].mxu0
    %v1919 = vadd.f32 %v399, %v1918
    %v1920 = vpop.f32.mrb[0].mxu0
    %v1921 = vadd.f32 %v395, %v1920
    %v1922 = vpop.f32.mrb[0].mxu0
    %v1923 = vadd.f32 %v399, %v1922
    %1924 = vmatprep.mubr.bf16.mxu0 %v1009
    %1925 = vmatmul.mubr.bf16.gmra.mrb[0].mxu0 %v1008
    %v1926 = vpop.f32.mrb[0].mxu0
    %v1927 = vadd.f32 %v395, %v1926
    %v1928 = vpop.f32.mrb[0].mxu0
    %v1929 = vadd.f32 %v399, %v1928
    %v1930 = vpop.f32.mrb[0].mxu0
    %v1931 = vadd.f32 %v395, %v1930
    %v1932 = vpop.f32.mrb[0].mxu0
    %v1933 = vadd.f32 %v399, %v1932
    %1934 = vmatprep.mubr.bf16.mxu0 %v1015
    %1935 = vmatmul.mubr.bf16.gmra.mrb[0].mxu0 %v1014
    %v1936 = vpop.f32.mrb[0].mxu0
    %v1937 = vadd.f32 %v395, %v1936
    %v1938 = vpop.f32.mrb[0].mxu0
    %v1939 = vadd.f32 %v399, %v1938
    %v1940 = vpop.f32.mrb[0].mxu0
    %v1941 = vadd.f32 %v395, %v1940
    %v1942 = vpop.f32.mrb[0].mxu0
    %v1943 = vadd.f32 %v399, %v1942
    %1944 = vmatprep.mubr.bf16.mxu0 %v1021
    %1945 = vmatmul.mubr.bf16.gmra.mrb[0].mxu0 %v1020
    %v1946 = vpop.f32.mrb[0].mxu0
    %v1947 = vadd.f32 %v395, %v1946
    %v1948 = vpop.f32.mrb[0].mxu0
    %v1949 = vadd.f32 %v399, %v1948
    %v1950 = vpop.f32.mrb[0].mxu0
    %v1951 = vadd.f32 %v395, %v1950
    %v1952 = vpop.f32.mrb[0].mxu0
    %v1953 = vadd.f32 %v399, %v1952
    %1954 = vmatprep.mubr.bf16.mxu0 %v1027
    %1955 = vmatmul.mubr.bf16.gmra.mrb[0].mxu0 %v1026
    %v1956 = vpop.f32.mrb[0].mxu0
    %v1957 = vadd.f32 %v395, %v1956
    %v1958 = vpop.f32.mrb[0].mxu0
    %v1959 = vadd.f32 %v399, %v1958
    %v1960 = vpop.f32.mrb[0].mxu0
    %v1961 = vadd.f32 %v395, %v1960
    %v1962 = vpop.f32.mrb[0].mxu0
    %v1963 = vadd.f32 %v399, %v1962
    %1964 = vmatprep.mubr.bf16.mxu0 %v1033
    %1965 = vmatmul.mubr.bf16.gmra.mrb[0].mxu0 %v1032
    %v1966 = vpop.f32.mrb[0].mxu0
    %v1967 = vadd.f32 %v395, %v1966
    %v1968 = vpop.f32.mrb[0].mxu0
    %v1969 = vadd.f32 %v399, %v1968
    %v1970 = vpop.f32.mrb[0].mxu0
    %v1971 = vadd.f32 %v395, %v1970
    %v1972 = vpop.f32.mrb[0].mxu0
    %v1973 = vadd.f32 %v399, %v1972
    %1974 = vmatprep.mubr.bf16.mxu0 %v1039
    %1975 = vmatmul.mubr.bf16.gmra.mrb[0].mxu0 %v1038
    %v1976 = vpop.f32.mrb[0].mxu0
    %v1977 = vadd.f32 %v395, %v1976
    %v1978 = vpop.f32.mrb[0].mxu0
    %v1979 = vadd.f32 %v399, %v1978
    %v1980 = vpop.f32.mrb[0].mxu0
    %v1981 = vadd.f32 %v395, %v1980
    %v1982 = vpop.f32.mrb[0].mxu0
    %v1983 = vadd.f32 %v399, %v1982
    %1984 = vmatprep.mubr.bf16.mxu0 %v1045
    %1985 = vmatmul.mubr.bf16.gmra.mrb[0].mxu0 %v1044
    %v1986 = vpop.f32.mrb[0].mxu0
    %v1987 = vadd.f32 %v395, %v1986
    %v1988 = vpop.f32.mrb[0].mxu0
    %v1989 = vadd.f32 %v399, %v1988
    %v1990 = vpop.f32.mrb[0].mxu0
    %v1991 = vadd.f32 %v395, %v1990
    %v1992 = vpop.f32.mrb[0].mxu0
    %v1993 = vadd.f32 %v399, %v1992
    %1994 = vmatprep.mubr.bf16.mxu0 %v1051
    %1995 = vmatmul.mubr.bf16.gmra.mrb[0].mxu0 %v1050
    %v1996 = vpop.f32.mrb[0].mxu0
    %v1997 = vadd.f32 %v395, %v1996
    %v1998 = vpop.f32.mrb[0].mxu0
    %v1999 = vadd.f32 %v399, %v1998
    %v2000 = vpop.f32.mrb[0].mxu0
    %v2001 = vadd.f32 %v395, %v2000
    %v2002 = vpop.f32.mrb[0].mxu0
    %v2003 = vadd.f32 %v399, %v2002
    %2004 = vmatprep.mubr.bf16.mxu0 %v1057
    %2005 = vmatmul.mubr.bf16.gmra.mrb[0].mxu0 %v1056
    %v2006 = vpop.f32.mrb[0].mxu0
    %v2007 = vadd.f32 %v395, %v2006
    %v2008 = vpop.f32.mrb[0].mxu0
    %v2009 = vadd.f32 %v399, %v2008
    %v2010 = vpop.f32.mrb[0].mxu0
    %v2011 = vadd.f32 %v395, %v2010
    %v2012 = vpop.f32.mrb[0].mxu0
    %v2013 = vadd.f32 %v399, %v2012
    %2014 = vmatprep.mubr.bf16.mxu0 %v1063
    %2015 = vmatmul.mubr.bf16.gmra.mrb[0].mxu0 %v1062
    %v2016 = vpop.f32.mrb[0].mxu0
    %v2017 = vadd.f32 %v395, %v2016
    %v2018 = vpop.f32.mrb[0].mxu0
    %v2019 = vadd.f32 %v399, %v2018
    %v2020 = vpop.f32.mrb[0].mxu0
    %v2021 = vadd.f32 %v395, %v2020
    %v2022 = vpop.f32.mrb[0].mxu0
    %v2023 = vadd.f32 %v399, %v2022
    %2024 = vmatprep.mubr.bf16.mxu0 %v1069
    %2025 = vmatmul.mubr.bf16.gmra.mrb[0].mxu0 %v1068
    %v2026 = vpop.f32.mrb[0].mxu0
    %v2027 = vadd.f32 %v395, %v2026
    %v2028 = vpop.f32.mrb[0].mxu0
    %v2029 = vadd.f32 %v399, %v2028
    %v2030 = vpop.f32.mrb[0].mxu0
    %v2031 = vadd.f32 %v395, %v2030
    %v2032 = vpop.f32.mrb[0].mxu0
    %v2033 = vadd.f32 %v399, %v2032
    %2034 = vmatprep.mubr.bf16.mxu0 %v1075
    %2035 = vmatmul.mubr.bf16.gmra.mrb[0].mxu0 %v1074
    %v2036 = vpop.f32.mrb[0].mxu0
    %v2037 = vadd.f32 %v395, %v2036
    %v2038 = vpop.f32.mrb[0].mxu0
    %v2039 = vadd.f32 %v399, %v2038
    %v2040 = vpop.f32.mrb[0].mxu0
    %v2041 = vadd.f32 %v395, %v2040
    %v2042 = vpop.f32.mrb[0].mxu0
    %v2043 = vadd.f32 %v399, %v2042
    %2044 = vmatprep.mubr.bf16.mxu0 %v1081
    %2045 = vmatmul.mubr.bf16.gmra.mrb[0].mxu0 %v1080
    %v2046 = vpop.f32.mrb[0].mxu0
    %v2047 = vadd.f32 %v395, %v2046
    %v2048 = vpop.f32.mrb[0].mxu0
    %v2049 = vadd.f32 %v399, %v2048
    %v2050 = vpop.f32.mrb[0].mxu0
    %v2051 = vadd.f32 %v395, %v2050
    %v2052 = vpop.f32.mrb[0].mxu0
    %v2053 = vadd.f32 %v399, %v2052
    %2054 = vmatprep.mubr.bf16.mxu0 %v1087
    %2055 = vmatmul.mubr.bf16.gmra.mrb[0].mxu0 %v1086
    %v2056 = vpop.f32.mrb[0].mxu0
    %v2057 = vadd.f32 %v395, %v2056
    %v2058 = vpop.f32.mrb[0].mxu0
    %v2059 = vadd.f32 %v399, %v2058
    %v2060 = vpop.f32.mrb[0].mxu0
    %v2061 = vadd.f32 %v395, %v2060
    %v2062 = vpop.f32.mrb[0].mxu0
    %v2063 = vadd.f32 %v399, %v2062
    %2064 = vmatprep.mubr.bf16.mxu0 %v1093
    %2065 = vmatmul.mubr.bf16.gmra.mrb[0].mxu0 %v1092
    %v2066 = vpop.f32.mrb[0].mxu0
    %v2067 = vadd.f32 %v395, %v2066
    %v2068 = vpop.f32.mrb[0].mxu0
    %v2069 = vadd.f32 %v399, %v2068
    %v2070 = vpop.f32.mrb[0].mxu0
    %v2071 = vadd.f32 %v395, %v2070
    %v2072 = vpop.f32.mrb[0].mxu0
    %v2073 = vadd.f32 %v399, %v2072
    %2074 = vmatprep.mubr.bf16.mxu0 %v1099
    %2075 = vmatmul.mubr.bf16.gmra.mrb[0].mxu0 %v1098
    %v2076 = vpop.f32.mrb[0].mxu0
    %v2077 = vadd.f32 %v395, %v2076
    %v2078 = vpop.f32.mrb[0].mxu0
    %v2079 = vadd.f32 %v399, %v2078
    %v2080 = vpop.f32.mrb[0].mxu0
    %v2081 = vadd.f32 %v395, %v2080
    %v2082 = vpop.f32.mrb[0].mxu0
    %v2083 = vadd.f32 %v399, %v2082
    %2084 = vmatprep.mubr.bf16.mxu0 %v1105
    %2085 = vmatmul.mubr.bf16.gmra.mrb[0].mxu0 %v1104
    %v2086 = vpop.f32.mrb[0].mxu0
    %v2087 = vadd.f32 %v395, %v2086
    %v2088 = vpop.f32.mrb[0].mxu0
    %v2089 = vadd.f32 %v399, %v2088
    %v2090 = vpop.f32.mrb[0].mxu0
    %v2091 = vadd.f32 %v395, %v2090
    %v2092 = vpop.f32.mrb[0].mxu0
    %v2093 = vadd.f32 %v399, %v2092
    %2094 = vmatprep.mubr.bf16.mxu0 %v1111
    %2095 = vmatmul.mubr.bf16.gmra.mrb[0].mxu0 %v1110
    %v2096 = vpop.f32.mrb[0].mxu0
    %v2097 = vadd.f32 %v395, %v2096
    %v2098 = vpop.f32.mrb[0].mxu0
    %v2099 = vadd.f32 %v399, %v2098
    %v2100 = vpop.f32.mrb[0].mxu0
    %v2101 = vadd.f32 %v395, %v2100
    %v2102 = vpop.f32.mrb[0].mxu0
    %v2103 = vadd.f32 %v399, %v2102
    %2104 = vmatprep.mubr.bf16.mxu0 %v1117
    %2105 = vmatmul.mubr.bf16.gmra.mrb[0].mxu0 %v1116
    %v2106 = vpop.f32.mrb[0].mxu0
    %v2107 = vadd.f32 %v395, %v2106
    %v2108 = vpop.f32.mrb[0].mxu0
    %v2109 = vadd.f32 %v399, %v2108
    %v2110 = vpop.f32.mrb[0].mxu0
    %v2111 = vadd.f32 %v395, %v2110
    %v2112 = vpop.f32.mrb[0].mxu0
    %v2113 = vadd.f32 %v399, %v2112
    %2114 = vmatprep.mubr.bf16.mxu0 %v1123
    %2115 = vmatmul.mubr.bf16.gmra.mrb[0].mxu0 %v1122
    %v2116 = vpop.f32.mrb[0].mxu0
    %v2117 = vadd.f32 %v395, %v2116
    %v2118 = vpop.f32.mrb[0].mxu0
    %v2119 = vadd.f32 %v399, %v2118
    %v2120 = vpop.f32.mrb[0].mxu0
    %v2121 = vadd.f32 %v395, %v2120
    %v2122 = vpop.f32.mrb[0].mxu0
    %v2123 = vadd.f32 %v399, %v2122
    %2124 = vmatprep.mubr.bf16.mxu0 %v1129
    %2125 = vmatmul.mubr.bf16.gmra.mrb[0].mxu0 %v1128
    %v2126 = vpop.f32.mrb[0].mxu0
    %v2127 = vadd.f32 %v395, %v2126
    %v2128 = vpop.f32.mrb[0].mxu0
    %v2129 = vadd.f32 %v399, %v2128
    %v2130 = vpop.f32.mrb[0].mxu0
    %v2131 = vadd.f32 %v395, %v2130
    %v2132 = vpop.f32.mrb[0].mxu0
    %v2133 = vadd.f32 %v399, %v2132
    %2134 = vmatprep.mubr.bf16.mxu0 %v1135
    %2135 = vmatmul.mubr.bf16.gmra.mrb[0].mxu0 %v1134
    %v2136 = vpop.f32.mrb[0].mxu0
    %v2137 = vadd.f32 %v395, %v2136
    %v2138 = vpop.f32.mrb[0].mxu0
    %v2139 = vadd.f32 %v399, %v2138
    %v2140 = vpop.f32.mrb[0].mxu0
    %v2141 = vadd.f32 %v395, %v2140
    %v2142 = vpop.f32.mrb[0].mxu0
    %v2143 = vadd.f32 %v399, %v2142
    %2144 = vmatprep.mubr.bf16.mxu0 %v1141
    %2145 = vmatmul.mubr.bf16.gmra.mrb[0].mxu0 %v1140
    %v2146 = vpop.f32.mrb[0].mxu0
    %v2147 = vadd.f32 %v395, %v2146
    %v2148 = vpop.f32.mrb[0].mxu0
    %v2149 = vadd.f32 %v399, %v2148
    %v2150 = vpop.f32.mrb[0].mxu0
    %v2151 = vadd.f32 %v395, %v2150
    %v2152 = vpop.f32.mrb[0].mxu0
    %v2153 = vadd.f32 %v399, %v2152
    %2154 = vmatprep.mubr.bf16.mxu0 %v1147
    %2155 = vmatmul.mubr.bf16.gmra.mrb[0].mxu0 %v1146
    %v2156 = vpop.f32.mrb[0].mxu0
    %v2157 = vadd.f32 %v395, %v2156
    %v2158 = vpop.f32.mrb[0].mxu0
    %v2159 = vadd.f32 %v399, %v2158
    %v2160 = vpop.f32.mrb[0].mxu0
    %v2161 = vadd.f32 %v395, %v2160
    %v2162 = vpop.f32.mrb[0].mxu0
    %v2163 = vadd.f32 %v399, %v2162
    %2164 = vmatprep.mubr.bf16.mxu0 %v1153
    %2165 = vmatmul.mubr.bf16.gmra.mrb[0].mxu0 %v1152
    %v2166 = vpop.f32.mrb[0].mxu0
    %v2167 = vadd.f32 %v395, %v2166
    %v2168 = vpop.f32.mrb[0].mxu0
    %v2169 = vadd.f32 %v399, %v2168
    %v2170 = vpop.f32.mrb[0].mxu0
    %v2171 = vadd.f32 %v395, %v2170
    %v2172 = vpop.f32.mrb[0].mxu0
    %v2173 = vadd.f32 %v399, %v2172
    %2174 = vmatprep.mubr.bf16.mxu0 %v1159
    %2175 = vmatmul.mubr.bf16.gmra.mrb[0].mxu0 %v1158
    %v2176 = vpop.f32.mrb[0].mxu0
    %v2177 = vadd.f32 %v395, %v2176
    %v2178 = vpop.f32.mrb[0].mxu0
    %v2179 = vadd.f32 %v399, %v2178
    %v2180 = vpop.f32.mrb[0].mxu0
    %v2181 = vadd.f32 %v395, %v2180
    %v2182 = vpop.f32.mrb[0].mxu0
    %v2183 = vadd.f32 %v399, %v2182
    %2184 = vmatprep.mubr.bf16.mxu0 %v1165
    %2185 = vmatmul.mubr.bf16.gmra.mrb[0].mxu0 %v1164
    %v2186 = vpop.f32.mrb[0].mxu0
    %v2187 = vadd.f32 %v395, %v2186
    %v2188 = vpop.f32.mrb[0].mxu0
    %v2189 = vadd.f32 %v399, %v2188
    %v2190 = vpop.f32.mrb[0].mxu0
    %v2191 = vadd.f32 %v395, %v2190
    %v2192 = vpop.f32.mrb[0].mxu0
    %v2193 = vadd.f32 %v399, %v2192
    %2194 = vdwg.mxu0
    %2195 = vmatprep.subr.bf16.mxu0 %v1683
    %2196 = vmatpush1.bf16.msra.mxu0 %v1682
    %2197 = vmatprep.subr.bf16.mxu0 %v1685
    %2198 = vmatpush1.bf16.msra.mxu0 %v1684
    %2199 = vmatprep.subr.bf16.mxu0 %v1687
    %2200 = vmatpush1.bf16.msra.mxu0 %v1686
    %2201 = vmatprep.subr.bf16.mxu0 %v1689
    %2202 = vmatpush1.bf16.msra.mxu0 %v1688
    %2203 = vmatprep.subr.bf16.mxu0 %v1691
    %2204 = vmatpush1.bf16.msra.mxu0 %v1690
    %2205 = vmatprep.subr.bf16.mxu0 %v1693
    %2206 = vmatpush1.bf16.msra.mxu0 %v1692
    %2207 = vmatprep.subr.bf16.mxu0 %v1695
    %2208 = vmatpush1.bf16.msra.mxu0 %v1694
    %2209 = vmatprep.subr.bf16.mxu0 %v1697
    %2210 = vmatpush1.bf16.msra.mxu0 %v1696
    %2211 = vmatprep.subr.bf16.mxu0 %v1699
    %2212 = vmatpush1.bf16.msra.mxu0 %v1698
    %2213 = vmatprep.subr.bf16.mxu0 %v1701
    %2214 = vmatpush1.bf16.msra.mxu0 %v1700
    %2215 = vmatprep.subr.bf16.mxu0 %v1703
    %2216 = vmatpush1.bf16.msra.mxu0 %v1702
    %2217 = vmatprep.subr.bf16.mxu0 %v1705
    %2218 = vmatpush1.bf16.msra.mxu0 %v1704
    %2219 = vmatprep.subr.bf16.mxu0 %v1707
    %2220 = vmatpush1.bf16.msra.mxu0 %v1706
    %2221 = vmatprep.subr.bf16.mxu0 %v1709
    %2222 = vmatpush1.bf16.msra.mxu0 %v1708
    %2223 = vmatprep.subr.bf16.mxu0 %v1711
    %2224 = vmatpush1.bf16.msra.mxu0 %v1710
    %2225 = vmatprep.subr.bf16.mxu0 %v1713
    %2226 = vmatpush1.bf16.msra.mxu0 %v1712
    %2227 = vmatprep.mubr.bf16.mxu0 %v981
    %2228 = vmatmul.mubr.bf16.gmra.mrb[0].mxu0 %v980
    %v2229 = vpop.f32.mrb[0].mxu0
    %v2230 = vadd.f32 %v1877, %v2229
    %v2231 = vpop.f32.mrb[0].mxu0
    %v2232 = vadd.f32 %v1879, %v2231
    %v2233 = vpop.f32.mrb[0].mxu0
    %v2234 = vadd.f32 %v1881, %v2233
    %v2235 = vpop.f32.mrb[0].mxu0
    %v2236 = vadd.f32 %v1883, %v2235
    %2237 = vmatprep.mubr.bf16.mxu0 %v987
    %2238 = vmatmul.mubr.bf16.gmra.mrb[0].mxu0 %v986
    %v2239 = vpop.f32.mrb[0].mxu0
    %v2240 = vadd.f32 %v1887, %v2239
    %v2241 = vpop.f32.mrb[0].mxu0
    %v2242 = vadd.f32 %v1889, %v2241
    %v2243 = vpop.f32.mrb[0].mxu0
    %v2244 = vadd.f32 %v1891, %v2243
    %v2245 = vpop.f32.mrb[0].mxu0
    %v2246 = vadd.f32 %v1893, %v2245
    %2247 = vmatprep.mubr.bf16.mxu0 %v993
    %2248 = vmatmul.mubr.bf16.gmra.mrb[0].mxu0 %v992
    %v2249 = vpop.f32.mrb[0].mxu0
    %v2250 = vadd.f32 %v1897, %v2249
    %v2251 = vpop.f32.mrb[0].mxu0
    %v2252 = vadd.f32 %v1899, %v2251
    %v2253 = vpop.f32.mrb[0].mxu0
    %v2254 = vadd.f32 %v1901, %v2253
    %v2255 = vpop.f32.mrb[0].mxu0
    %v2256 = vadd.f32 %v1903, %v2255
    %2257 = vmatprep.mubr.bf16.mxu0 %v999
    %2258 = vmatmul.mubr.bf16.gmra.mrb[0].mxu0 %v998
    %v2259 = vpop.f32.mrb[0].mxu0
    %v2260 = vadd.f32 %v1907, %v2259
    %v2261 = vpop.f32.mrb[0].mxu0
    %v2262 = vadd.f32 %v1909, %v2261
    %v2263 = vpop.f32.mrb[0].mxu0
    %v2264 = vadd.f32 %v1911, %v2263
    %v2265 = vpop.f32.mrb[0].mxu0
    %v2266 = vadd.f32 %v1913, %v2265
    %2267 = vmatprep.mubr.bf16.mxu0 %v1005
    %2268 = vmatmul.mubr.bf16.gmra.mrb[0].mxu0 %v1004
    %v2269 = vpop.f32.mrb[0].mxu0
    %v2270 = vadd.f32 %v1917, %v2269
    %v2271 = vpop.f32.mrb[0].mxu0
    %v2272 = vadd.f32 %v1919, %v2271
    %v2273 = vpop.f32.mrb[0].mxu0
    %v2274 = vadd.f32 %v1921, %v2273
    %v2275 = vpop.f32.mrb[0].mxu0
    %v2276 = vadd.f32 %v1923, %v2275
    %2277 = vmatprep.mubr.bf16.mxu0 %v1011
    %2278 = vmatmul.mubr.bf16.gmra.mrb[0].mxu0 %v1010
    %v2279 = vpop.f32.mrb[0].mxu0
    %v2280 = vadd.f32 %v1927, %v2279
    %v2281 = vpop.f32.mrb[0].mxu0
    %v2282 = vadd.f32 %v1929, %v2281
    %v2283 = vpop.f32.mrb[0].mxu0
    %v2284 = vadd.f32 %v1931, %v2283
    %v2285 = vpop.f32.mrb[0].mxu0
    %v2286 = vadd.f32 %v1933, %v2285
    %2287 = vmatprep.mubr.bf16.mxu0 %v1017
    %2288 = vmatmul.mubr.bf16.gmra.mrb[0].mxu0 %v1016
    %v2289 = vpop.f32.mrb[0].mxu0
    %v2290 = vadd.f32 %v1937, %v2289
    %v2291 = vpop.f32.mrb[0].mxu0
    %v2292 = vadd.f32 %v1939, %v2291
    %v2293 = vpop.f32.mrb[0].mxu0
    %v2294 = vadd.f32 %v1941, %v2293
    %v2295 = vpop.f32.mrb[0].mxu0
    %v2296 = vadd.f32 %v1943, %v2295
    %2297 = vmatprep.mubr.bf16.mxu0 %v1023
    %2298 = vmatmul.mubr.bf16.gmra.mrb[0].mxu0 %v1022
    %v2299 = vpop.f32.mrb[0].mxu0
    %v2300 = vadd.f32 %v1947, %v2299
    %v2301 = vpop.f32.mrb[0].mxu0
    %v2302 = vadd.f32 %v1949, %v2301
    %v2303 = vpop.f32.mrb[0].mxu0
    %v2304 = vadd.f32 %v1951, %v2303
    %v2305 = vpop.f32.mrb[0].mxu0
    %v2306 = vadd.f32 %v1953, %v2305
    %2307 = vmatprep.mubr.bf16.mxu0 %v1029
    %2308 = vmatmul.mubr.bf16.gmra.mrb[0].mxu0 %v1028
    %v2309 = vpop.f32.mrb[0].mxu0
    %v2310 = vadd.f32 %v1957, %v2309
    %v2311 = vpop.f32.mrb[0].mxu0
    %v2312 = vadd.f32 %v1959, %v2311
    %v2313 = vpop.f32.mrb[0].mxu0
    %v2314 = vadd.f32 %v1961, %v2313
    %v2315 = vpop.f32.mrb[0].mxu0
    %v2316 = vadd.f32 %v1963, %v2315
    %2317 = vmatprep.mubr.bf16.mxu0 %v1035
    %2318 = vmatmul.mubr.bf16.gmra.mrb[0].mxu0 %v1034
    %v2319 = vpop.f32.mrb[0].mxu0
    %v2320 = vadd.f32 %v1967, %v2319
    %v2321 = vpop.f32.mrb[0].mxu0
    %v2322 = vadd.f32 %v1969, %v2321
    %v2323 = vpop.f32.mrb[0].mxu0
    %v2324 = vadd.f32 %v1971, %v2323
    %v2325 = vpop.f32.mrb[0].mxu0
    %v2326 = vadd.f32 %v1973, %v2325
    %2327 = vmatprep.mubr.bf16.mxu0 %v1041
    %2328 = vmatmul.mubr.bf16.gmra.mrb[0].mxu0 %v1040
    %v2329 = vpop.f32.mrb[0].mxu0
    %v2330 = vadd.f32 %v1977, %v2329
    %v2331 = vpop.f32.mrb[0].mxu0
    %v2332 = vadd.f32 %v1979, %v2331
    %v2333 = vpop.f32.mrb[0].mxu0
    %v2334 = vadd.f32 %v1981, %v2333
    %v2335 = vpop.f32.mrb[0].mxu0
    %v2336 = vadd.f32 %v1983, %v2335
    %2337 = vmatprep.mubr.bf16.mxu0 %v1047
    %2338 = vmatmul.mubr.bf16.gmra.mrb[0].mxu0 %v1046
    %v2339 = vpop.f32.mrb[0].mxu0
    %v2340 = vadd.f32 %v1987, %v2339
    %v2341 = vpop.f32.mrb[0].mxu0
    %v2342 = vadd.f32 %v1989, %v2341
    %v2343 = vpop.f32.mrb[0].mxu0
    %v2344 = vadd.f32 %v1991, %v2343
    %v2345 = vpop.f32.mrb[0].mxu0
    %v2346 = vadd.f32 %v1993, %v2345
    %2347 = vmatprep.mubr.bf16.mxu0 %v1053
    %2348 = vmatmul.mubr.bf16.gmra.mrb[0].mxu0 %v1052
    %v2349 = vpop.f32.mrb[0].mxu0
    %v2350 = vadd.f32 %v1997, %v2349
    %v2351 = vpop.f32.mrb[0].mxu0
    %v2352 = vadd.f32 %v1999, %v2351
    %v2353 = vpop.f32.mrb[0].mxu0
    %v2354 = vadd.f32 %v2001, %v2353
    %v2355 = vpop.f32.mrb[0].mxu0
    %v2356 = vadd.f32 %v2003, %v2355
    %2357 = vmatprep.mubr.bf16.mxu0 %v1059
    %2358 = vmatmul.mubr.bf16.gmra.mrb[0].mxu0 %v1058
    %v2359 = vpop.f32.mrb[0].mxu0
    %v2360 = vadd.f32 %v2007, %v2359
    %v2361 = vpop.f32.mrb[0].mxu0
    %v2362 = vadd.f32 %v2009, %v2361
    %v2363 = vpop.f32.mrb[0].mxu0
    %v2364 = vadd.f32 %v2011, %v2363
    %v2365 = vpop.f32.mrb[0].mxu0
    %v2366 = vadd.f32 %v2013, %v2365
    %2367 = vmatprep.mubr.bf16.mxu0 %v1065
    %2368 = vmatmul.mubr.bf16.gmra.mrb[0].mxu0 %v1064
    %v2369 = vpop.f32.mrb[0].mxu0
    %v2370 = vadd.f32 %v2017, %v2369
    %v2371 = vpop.f32.mrb[0].mxu0
    %v2372 = vadd.f32 %v2019, %v2371
    %v2373 = vpop.f32.mrb[0].mxu0
    %v2374 = vadd.f32 %v2021, %v2373
    %v2375 = vpop.f32.mrb[0].mxu0
    %v2376 = vadd.f32 %v2023, %v2375
    %2377 = vmatprep.mubr.bf16.mxu0 %v1071
    %2378 = vmatmul.mubr.bf16.gmra.mrb[0].mxu0 %v1070
    %v2379 = vpop.f32.mrb[0].mxu0
    %v2380 = vadd.f32 %v2027, %v2379
    %v2381 = vpop.f32.mrb[0].mxu0
    %v2382 = vadd.f32 %v2029, %v2381
    %v2383 = vpop.f32.mrb[0].mxu0
    %v2384 = vadd.f32 %v2031, %v2383
    %v2385 = vpop.f32.mrb[0].mxu0
    %v2386 = vadd.f32 %v2033, %v2385
    %2387 = vmatprep.mubr.bf16.mxu0 %v1077
    %2388 = vmatmul.mubr.bf16.gmra.mrb[0].mxu0 %v1076
    %v2389 = vpop.f32.mrb[0].mxu0
    %v2390 = vadd.f32 %v2037, %v2389
    %v2391 = vpop.f32.mrb[0].mxu0
    %v2392 = vadd.f32 %v2039, %v2391
    %v2393 = vpop.f32.mrb[0].mxu0
    %v2394 = vadd.f32 %v2041, %v2393
    %v2395 = vpop.f32.mrb[0].mxu0
    %v2396 = vadd.f32 %v2043, %v2395
    %2397 = vmatprep.mubr.bf16.mxu0 %v1083
    %2398 = vmatmul.mubr.bf16.gmra.mrb[0].mxu0 %v1082
    %v2399 = vpop.f32.mrb[0].mxu0
    %v2400 = vadd.f32 %v2047, %v2399
    %v2401 = vpop.f32.mrb[0].mxu0
    %v2402 = vadd.f32 %v2049, %v2401
    %v2403 = vpop.f32.mrb[0].mxu0
    %v2404 = vadd.f32 %v2051, %v2403
    %v2405 = vpop.f32.mrb[0].mxu0
    %v2406 = vadd.f32 %v2053, %v2405
    %2407 = vmatprep.mubr.bf16.mxu0 %v1089
    %2408 = vmatmul.mubr.bf16.gmra.mrb[0].mxu0 %v1088
    %v2409 = vpop.f32.mrb[0].mxu0
    %v2410 = vadd.f32 %v2057, %v2409
    %v2411 = vpop.f32.mrb[0].mxu0
    %v2412 = vadd.f32 %v2059, %v2411
    %v2413 = vpop.f32.mrb[0].mxu0
    %v2414 = vadd.f32 %v2061, %v2413
    %v2415 = vpop.f32.mrb[0].mxu0
    %v2416 = vadd.f32 %v2063, %v2415
    %2417 = vmatprep.mubr.bf16.mxu0 %v1095
    %2418 = vmatmul.mubr.bf16.gmra.mrb[0].mxu0 %v1094
    %v2419 = vpop.f32.mrb[0].mxu0
    %v2420 = vadd.f32 %v2067, %v2419
    %v2421 = vpop.f32.mrb[0].mxu0
    %v2422 = vadd.f32 %v2069, %v2421
    %v2423 = vpop.f32.mrb[0].mxu0
    %v2424 = vadd.f32 %v2071, %v2423
    %v2425 = vpop.f32.mrb[0].mxu0
    %v2426 = vadd.f32 %v2073, %v2425
    %2427 = vmatprep.mubr.bf16.mxu0 %v1101
    %2428 = vmatmul.mubr.bf16.gmra.mrb[0].mxu0 %v1100
    %v2429 = vpop.f32.mrb[0].mxu0
    %v2430 = vadd.f32 %v2077, %v2429
    %v2431 = vpop.f32.mrb[0].mxu0
    %v2432 = vadd.f32 %v2079, %v2431
    %v2433 = vpop.f32.mrb[0].mxu0
    %v2434 = vadd.f32 %v2081, %v2433
    %v2435 = vpop.f32.mrb[0].mxu0
    %v2436 = vadd.f32 %v2083, %v2435
    %2437 = vmatprep.mubr.bf16.mxu0 %v1107
    %2438 = vmatmul.mubr.bf16.gmra.mrb[0].mxu0 %v1106
    %v2439 = vpop.f32.mrb[0].mxu0
    %v2440 = vadd.f32 %v2087, %v2439
    %v2441 = vpop.f32.mrb[0].mxu0
    %v2442 = vadd.f32 %v2089, %v2441
    %v2443 = vpop.f32.mrb[0].mxu0
    %v2444 = vadd.f32 %v2091, %v2443
    %v2445 = vpop.f32.mrb[0].mxu0
    %v2446 = vadd.f32 %v2093, %v2445
    %2447 = vmatprep.mubr.bf16.mxu0 %v1113
    %2448 = vmatmul.mubr.bf16.gmra.mrb[0].mxu0 %v1112
    %v2449 = vpop.f32.mrb[0].mxu0
    %v2450 = vadd.f32 %v2097, %v2449
    %v2451 = vpop.f32.mrb[0].mxu0
    %v2452 = vadd.f32 %v2099, %v2451
    %v2453 = vpop.f32.mrb[0].mxu0
    %v2454 = vadd.f32 %v2101, %v2453
    %v2455 = vpop.f32.mrb[0].mxu0
    %v2456 = vadd.f32 %v2103, %v2455
    %2457 = vmatprep.mubr.bf16.mxu0 %v1119
    %2458 = vmatmul.mubr.bf16.gmra.mrb[0].mxu0 %v1118
    %v2459 = vpop.f32.mrb[0].mxu0
    %v2460 = vadd.f32 %v2107, %v2459
    %v2461 = vpop.f32.mrb[0].mxu0
    %v2462 = vadd.f32 %v2109, %v2461
    %v2463 = vpop.f32.mrb[0].mxu0
    %v2464 = vadd.f32 %v2111, %v2463
    %v2465 = vpop.f32.mrb[0].mxu0
    %v2466 = vadd.f32 %v2113, %v2465
    %2467 = vmatprep.mubr.bf16.mxu0 %v1125
    %2468 = vmatmul.mubr.bf16.gmra.mrb[0].mxu0 %v1124
    %v2469 = vpop.f32.mrb[0].mxu0
    %v2470 = vadd.f32 %v2117, %v2469
    %v2471 = vpop.f32.mrb[0].mxu0
    %v2472 = vadd.f32 %v2119, %v2471
    %v2473 = vpop.f32.mrb[0].mxu0
    %v2474 = vadd.f32 %v2121, %v2473
    %v2475 = vpop.f32.mrb[0].mxu0
    %v2476 = vadd.f32 %v2123, %v2475
    %2477 = vmatprep.mubr.bf16.mxu0 %v1131
    %2478 = vmatmul.mubr.bf16.gmra.mrb[0].mxu0 %v1130
    %v2479 = vpop.f32.mrb[0].mxu0
    %v2480 = vadd.f32 %v2127, %v2479
    %v2481 = vpop.f32.mrb[0].mxu0
    %v2482 = vadd.f32 %v2129, %v2481
    %v2483 = vpop.f32.mrb[0].mxu0
    %v2484 = vadd.f32 %v2131, %v2483
    %v2485 = vpop.f32.mrb[0].mxu0
    %v2486 = vadd.f32 %v2133, %v2485
    %2487 = vmatprep.mubr.bf16.mxu0 %v1137
    %2488 = vmatmul.mubr.bf16.gmra.mrb[0].mxu0 %v1136
    %v2489 = vpop.f32.mrb[0].mxu0
    %v2490 = vadd.f32 %v2137, %v2489
    %v2491 = vpop.f32.mrb[0].mxu0
    %v2492 = vadd.f32 %v2139, %v2491
    %v2493 = vpop.f32.mrb[0].mxu0
    %v2494 = vadd.f32 %v2141, %v2493
    %v2495 = vpop.f32.mrb[0].mxu0
    %v2496 = vadd.f32 %v2143, %v2495
    %2497 = vmatprep.mubr.bf16.mxu0 %v1143
    %2498 = vmatmul.mubr.bf16.gmra.mrb[0].mxu0 %v1142
    %v2499 = vpop.f32.mrb[0].mxu0
    %v2500 = vadd.f32 %v2147, %v2499
    %v2501 = vpop.f32.mrb[0].mxu0
    %v2502 = vadd.f32 %v2149, %v2501
    %v2503 = vpop.f32.mrb[0].mxu0
    %v2504 = vadd.f32 %v2151, %v2503
    %v2505 = vpop.f32.mrb[0].mxu0
    %v2506 = vadd.f32 %v2153, %v2505
    %2507 = vmatprep.mubr.bf16.mxu0 %v1149
    %2508 = vmatmul.mubr.bf16.gmra.mrb[0].mxu0 %v1148
    %v2509 = vpop.f32.mrb[0].mxu0
    %v2510 = vadd.f32 %v2157, %v2509
    %v2511 = vpop.f32.mrb[0].mxu0
    %v2512 = vadd.f32 %v2159, %v2511
    %v2513 = vpop.f32.mrb[0].mxu0
    %v2514 = vadd.f32 %v2161, %v2513
    %v2515 = vpop.f32.mrb[0].mxu0
    %v2516 = vadd.f32 %v2163, %v2515
    %2517 = vmatprep.mubr.bf16.mxu0 %v1155
    %2518 = vmatmul.mubr.bf16.gmra.mrb[0].mxu0 %v1154
    %v2519 = vpop.f32.mrb[0].mxu0
    %v2520 = vadd.f32 %v2167, %v2519
    %v2521 = vpop.f32.mrb[0].mxu0
    %v2522 = vadd.f32 %v2169, %v2521
    %v2523 = vpop.f32.mrb[0].mxu0
    %v2524 = vadd.f32 %v2171, %v2523
    %v2525 = vpop.f32.mrb[0].mxu0
    %v2526 = vadd.f32 %v2173, %v2525
    %2527 = vmatprep.mubr.bf16.mxu0 %v1161
    %2528 = vmatmul.mubr.bf16.gmra.mrb[0].mxu0 %v1160
    %v2529 = vpop.f32.mrb[0].mxu0
    %v2530 = vadd.f32 %v2177, %v2529
    %v2531 = vpop.f32.mrb[0].mxu0
    %v2532 = vadd.f32 %v2179, %v2531
    %v2533 = vpop.f32.mrb[0].mxu0
    %v2534 = vadd.f32 %v2181, %v2533
    %v2535 = vpop.f32.mrb[0].mxu0
    %v2536 = vadd.f32 %v2183, %v2535
    %2537 = vmatprep.mubr.bf16.mxu0 %v1167
    %2538 = vmatmul.mubr.bf16.gmra.mrb[0].mxu0 %v1166
    %v2539 = vpop.f32.mrb[0].mxu0
    %v2540 = vadd.f32 %v2187, %v2539
    %v2541 = vpop.f32.mrb[0].mxu0
    %v2542 = vadd.f32 %v2189, %v2541
    %v2543 = vpop.f32.mrb[0].mxu0
    %v2544 = vadd.f32 %v2191, %v2543
    %v2545 = vpop.f32.mrb[0].mxu0
    %v2546 = vadd.f32 %v2193, %v2545
    %2547 = vdwg.mxu0
    %2548 = vmatprep.subr.bf16.mxu0 %v1715
    %2549 = vmatpush1.bf16.msra.mxu0 %v1714
    %2550 = vmatprep.subr.bf16.mxu0 %v1717
    %2551 = vmatpush1.bf16.msra.mxu0 %v1716
    %2552 = vmatprep.subr.bf16.mxu0 %v1719
    %2553 = vmatpush1.bf16.msra.mxu0 %v1718
    %2554 = vmatprep.subr.bf16.mxu0 %v1721
    %2555 = vmatpush1.bf16.msra.mxu0 %v1720
    %2556 = vmatprep.subr.bf16.mxu0 %v1723
    %2557 = vmatpush1.bf16.msra.mxu0 %v1722
    %2558 = vmatprep.subr.bf16.mxu0 %v1725
    %2559 = vmatpush1.bf16.msra.mxu0 %v1724
    %2560 = vmatprep.subr.bf16.mxu0 %v1727
    %2561 = vmatpush1.bf16.msra.mxu0 %v1726
    %2562 = vmatprep.subr.bf16.mxu0 %v1729
    %2563 = vmatpush1.bf16.msra.mxu0 %v1728
    %2564 = vmatprep.subr.bf16.mxu0 %v1731
    %2565 = vmatpush1.bf16.msra.mxu0 %v1730
    %2566 = vmatprep.subr.bf16.mxu0 %v1733
    %2567 = vmatpush1.bf16.msra.mxu0 %v1732
    %2568 = vmatprep.subr.bf16.mxu0 %v1735
    %2569 = vmatpush1.bf16.msra.mxu0 %v1734
    %2570 = vmatprep.subr.bf16.mxu0 %v1737
    %2571 = vmatpush1.bf16.msra.mxu0 %v1736
    %2572 = vmatprep.subr.bf16.mxu0 %v1739
    %2573 = vmatpush1.bf16.msra.mxu0 %v1738
    %2574 = vmatprep.subr.bf16.mxu0 %v1741
    %2575 = vmatpush1.bf16.msra.mxu0 %v1740
    %2576 = vmatprep.subr.bf16.mxu0 %v1743
    %2577 = vmatpush1.bf16.msra.mxu0 %v1742
    %2578 = vmatprep.subr.bf16.mxu0 %v1745
    %2579 = vmatpush1.bf16.msra.mxu0 %v1744
    %2580 = vmatprep.mubr.bf16.mxu0 %v983
    %2581 = vmatmul.mubr.bf16.gmra.mrb[0].mxu0 %v982
    %v2582 = vpop.f32.mrb[0].mxu0
    %v2583 = vadd.f32 %v2230, %v2582
    %v2584 = vpop.f32.mrb[0].mxu0
    %v2585 = vadd.f32 %v2232, %v2584
    %v2586 = vpop.f32.mrb[0].mxu0
    %v2587 = vadd.f32 %v2234, %v2586
    %v2588 = vpop.f32.mrb[0].mxu0
    %v2589 = vadd.f32 %v2236, %v2588
    %2590 = vmatprep.mubr.bf16.mxu0 %v989
    %2591 = vmatmul.mubr.bf16.gmra.mrb[0].mxu0 %v988
    %v2592 = vpop.f32.mrb[0].mxu0
    %v2593 = vadd.f32 %v2240, %v2592
    %v2594 = vpop.f32.mrb[0].mxu0
    %v2595 = vadd.f32 %v2242, %v2594
    %v2596 = vpop.f32.mrb[0].mxu0
    %v2597 = vadd.f32 %v2244, %v2596
    %v2598 = vpop.f32.mrb[0].mxu0
    %v2599 = vadd.f32 %v2246, %v2598
    %2600 = vmatprep.mubr.bf16.mxu0 %v995
    %2601 = vmatmul.mubr.bf16.gmra.mrb[0].mxu0 %v994
    %v2602 = vpop.f32.mrb[0].mxu0
    %v2603 = vadd.f32 %v2250, %v2602
    %v2604 = vpop.f32.mrb[0].mxu0
    %v2605 = vadd.f32 %v2252, %v2604
    %v2606 = vpop.f32.mrb[0].mxu0
    %v2607 = vadd.f32 %v2254, %v2606
    %v2608 = vpop.f32.mrb[0].mxu0
    %v2609 = vadd.f32 %v2256, %v2608
    %2610 = vmatprep.mubr.bf16.mxu0 %v1001
    %2611 = vmatmul.mubr.bf16.gmra.mrb[0].mxu0 %v1000
    %v2612 = vpop.f32.mrb[0].mxu0
    %v2613 = vadd.f32 %v2260, %v2612
    %v2614 = vpop.f32.mrb[0].mxu0
    %v2615 = vadd.f32 %v2262, %v2614
    %v2616 = vpop.f32.mrb[0].mxu0
    %v2617 = vadd.f32 %v2264, %v2616
    %v2618 = vpop.f32.mrb[0].mxu0
    %v2619 = vadd.f32 %v2266, %v2618
    %2620 = vmatprep.mubr.bf16.mxu0 %v1007
    %2621 = vmatmul.mubr.bf16.gmra.mrb[0].mxu0 %v1006
    %v2622 = vpop.f32.mrb[0].mxu0
    %v2623 = vadd.f32 %v2270, %v2622
    %v2624 = vpop.f32.mrb[0].mxu0
    %v2625 = vadd.f32 %v2272, %v2624
    %v2626 = vpop.f32.mrb[0].mxu0
    %v2627 = vadd.f32 %v2274, %v2626
    %v2628 = vpop.f32.mrb[0].mxu0
    %v2629 = vadd.f32 %v2276, %v2628
    %2630 = vmatprep.mubr.bf16.mxu0 %v1013
    %2631 = vmatmul.mubr.bf16.gmra.mrb[0].mxu0 %v1012
    %v2632 = vpop.f32.mrb[0].mxu0
    %v2633 = vadd.f32 %v2280, %v2632
    %v2634 = vpop.f32.mrb[0].mxu0
    %v2635 = vadd.f32 %v2282, %v2634
    %v2636 = vpop.f32.mrb[0].mxu0
    %v2637 = vadd.f32 %v2284, %v2636
    %v2638 = vpop.f32.mrb[0].mxu0
    %v2639 = vadd.f32 %v2286, %v2638
    %2640 = vmatprep.mubr.bf16.mxu0 %v1019
    %2641 = vmatmul.mubr.bf16.gmra.mrb[0].mxu0 %v1018
    %v2642 = vpop.f32.mrb[0].mxu0
    %v2643 = vadd.f32 %v2290, %v2642
    %v2644 = vpop.f32.mrb[0].mxu0
    %v2645 = vadd.f32 %v2292, %v2644
    %v2646 = vpop.f32.mrb[0].mxu0
    %v2647 = vadd.f32 %v2294, %v2646
    %v2648 = vpop.f32.mrb[0].mxu0
    %v2649 = vadd.f32 %v2296, %v2648
    %2650 = vmatprep.mubr.bf16.mxu0 %v1025
    %2651 = vmatmul.mubr.bf16.gmra.mrb[0].mxu0 %v1024
    %v2652 = vpop.f32.mrb[0].mxu0
    %v2653 = vadd.f32 %v2300, %v2652
    %v2654 = vpop.f32.mrb[0].mxu0
    %v2655 = vadd.f32 %v2302, %v2654
    %v2656 = vpop.f32.mrb[0].mxu0
    %v2657 = vadd.f32 %v2304, %v2656
    %v2658 = vpop.f32.mrb[0].mxu0
    %v2659 = vadd.f32 %v2306, %v2658
    %2660 = vmatprep.mubr.bf16.mxu0 %v1031
    %2661 = vmatmul.mubr.bf16.gmra.mrb[0].mxu0 %v1030
    %v2662 = vpop.f32.mrb[0].mxu0
    %v2663 = vadd.f32 %v2310, %v2662
    %v2664 = vpop.f32.mrb[0].mxu0
    %v2665 = vadd.f32 %v2312, %v2664
    %v2666 = vpop.f32.mrb[0].mxu0
    %v2667 = vadd.f32 %v2314, %v2666
    %v2668 = vpop.f32.mrb[0].mxu0
    %v2669 = vadd.f32 %v2316, %v2668
    %2670 = vmatprep.mubr.bf16.mxu0 %v1037
    %2671 = vmatmul.mubr.bf16.gmra.mrb[0].mxu0 %v1036
    %v2672 = vpop.f32.mrb[0].mxu0
    %v2673 = vadd.f32 %v2320, %v2672
    %v2674 = vpop.f32.mrb[0].mxu0
    %v2675 = vadd.f32 %v2322, %v2674
    %v2676 = vpop.f32.mrb[0].mxu0
    %v2677 = vadd.f32 %v2324, %v2676
    %v2678 = vpop.f32.mrb[0].mxu0
    %v2679 = vadd.f32 %v2326, %v2678
    %2680 = vmatprep.mubr.bf16.mxu0 %v1043
    %2681 = vmatmul.mubr.bf16.gmra.mrb[0].mxu0 %v1042
    %v2682 = vpop.f32.mrb[0].mxu0
    %v2683 = vadd.f32 %v2330, %v2682
    %v2684 = vpop.f32.mrb[0].mxu0
    %v2685 = vadd.f32 %v2332, %v2684
    %v2686 = vpop.f32.mrb[0].mxu0
    %v2687 = vadd.f32 %v2334, %v2686
    %v2688 = vpop.f32.mrb[0].mxu0
    %v2689 = vadd.f32 %v2336, %v2688
    %2690 = vmatprep.mubr.bf16.mxu0 %v1049
    %2691 = vmatmul.mubr.bf16.gmra.mrb[0].mxu0 %v1048
    %v2692 = vpop.f32.mrb[0].mxu0
    %v2693 = vadd.f32 %v2340, %v2692
    %v2694 = vpop.f32.mrb[0].mxu0
    %v2695 = vadd.f32 %v2342, %v2694
    %v2696 = vpop.f32.mrb[0].mxu0
    %v2697 = vadd.f32 %v2344, %v2696
    %v2698 = vpop.f32.mrb[0].mxu0
    %v2699 = vadd.f32 %v2346, %v2698
    %2700 = vmatprep.mubr.bf16.mxu0 %v1055
    %2701 = vmatmul.mubr.bf16.gmra.mrb[0].mxu0 %v1054
    %v2702 = vpop.f32.mrb[0].mxu0
    %v2703 = vadd.f32 %v2350, %v2702
    %v2704 = vpop.f32.mrb[0].mxu0
    %v2705 = vadd.f32 %v2352, %v2704
    %v2706 = vpop.f32.mrb[0].mxu0
    %v2707 = vadd.f32 %v2354, %v2706
    %v2708 = vpop.f32.mrb[0].mxu0
    %v2709 = vadd.f32 %v2356, %v2708
    %2710 = vmatprep.mubr.bf16.mxu0 %v1061
    %2711 = vmatmul.mubr.bf16.gmra.mrb[0].mxu0 %v1060
    %v2712 = vpop.f32.mrb[0].mxu0
    %v2713 = vadd.f32 %v2360, %v2712
    %v2714 = vpop.f32.mrb[0].mxu0
    %v2715 = vadd.f32 %v2362, %v2714
    %v2716 = vpop.f32.mrb[0].mxu0
    %v2717 = vadd.f32 %v2364, %v2716
    %v2718 = vpop.f32.mrb[0].mxu0
    %v2719 = vadd.f32 %v2366, %v2718
    %2720 = vmatprep.mubr.bf16.mxu0 %v1067
    %2721 = vmatmul.mubr.bf16.gmra.mrb[0].mxu0 %v1066
    %v2722 = vpop.f32.mrb[0].mxu0
    %v2723 = vadd.f32 %v2370, %v2722
    %v2724 = vpop.f32.mrb[0].mxu0
    %v2725 = vadd.f32 %v2372, %v2724
    %v2726 = vpop.f32.mrb[0].mxu0
    %v2727 = vadd.f32 %v2374, %v2726
    %v2728 = vpop.f32.mrb[0].mxu0
    %v2729 = vadd.f32 %v2376, %v2728
    %2730 = vmatprep.mubr.bf16.mxu0 %v1073
    %2731 = vmatmul.mubr.bf16.gmra.mrb[0].mxu0 %v1072
    %v2732 = vpop.f32.mrb[0].mxu0
    %v2733 = vadd.f32 %v2380, %v2732
    %v2734 = vpop.f32.mrb[0].mxu0
    %v2735 = vadd.f32 %v2382, %v2734
    %v2736 = vpop.f32.mrb[0].mxu0
    %v2737 = vadd.f32 %v2384, %v2736
    %v2738 = vpop.f32.mrb[0].mxu0
    %v2739 = vadd.f32 %v2386, %v2738
    %2740 = vmatprep.mubr.bf16.mxu0 %v1079
    %2741 = vmatmul.mubr.bf16.gmra.mrb[0].mxu0 %v1078
    %v2742 = vpop.f32.mrb[0].mxu0
    %v2743 = vadd.f32 %v2390, %v2742
    %v2744 = vpop.f32.mrb[0].mxu0
    %v2745 = vadd.f32 %v2392, %v2744
    %v2746 = vpop.f32.mrb[0].mxu0
    %v2747 = vadd.f32 %v2394, %v2746
    %v2748 = vpop.f32.mrb[0].mxu0
    %v2749 = vadd.f32 %v2396, %v2748
    %2750 = vmatprep.mubr.bf16.mxu0 %v1085
    %2751 = vmatmul.mubr.bf16.gmra.mrb[0].mxu0 %v1084
    %v2752 = vpop.f32.mrb[0].mxu0
    %v2753 = vadd.f32 %v2400, %v2752
    %v2754 = vpop.f32.mrb[0].mxu0
    %v2755 = vadd.f32 %v2402, %v2754
    %v2756 = vpop.f32.mrb[0].mxu0
    %v2757 = vadd.f32 %v2404, %v2756
    %v2758 = vpop.f32.mrb[0].mxu0
    %v2759 = vadd.f32 %v2406, %v2758
    %2760 = vmatprep.mubr.bf16.mxu0 %v1091
    %2761 = vmatmul.mubr.bf16.gmra.mrb[0].mxu0 %v1090
    %v2762 = vpop.f32.mrb[0].mxu0
    %v2763 = vadd.f32 %v2410, %v2762
    %v2764 = vpop.f32.mrb[0].mxu0
    %v2765 = vadd.f32 %v2412, %v2764
    %v2766 = vpop.f32.mrb[0].mxu0
    %v2767 = vadd.f32 %v2414, %v2766
    %v2768 = vpop.f32.mrb[0].mxu0
    %v2769 = vadd.f32 %v2416, %v2768
    %2770 = vmatprep.mubr.bf16.mxu0 %v1097
    %2771 = vmatmul.mubr.bf16.gmra.mrb[0].mxu0 %v1096
    %v2772 = vpop.f32.mrb[0].mxu0
    %v2773 = vadd.f32 %v2420, %v2772
    %v2774 = vpop.f32.mrb[0].mxu0
    %v2775 = vadd.f32 %v2422, %v2774
    %v2776 = vpop.f32.mrb[0].mxu0
    %v2777 = vadd.f32 %v2424, %v2776
    %v2778 = vpop.f32.mrb[0].mxu0
    %v2779 = vadd.f32 %v2426, %v2778
    %2780 = vmatprep.mubr.bf16.mxu0 %v1103
    %2781 = vmatmul.mubr.bf16.gmra.mrb[0].mxu0 %v1102
    %v2782 = vpop.f32.mrb[0].mxu0
    %v2783 = vadd.f32 %v2430, %v2782
    %v2784 = vpop.f32.mrb[0].mxu0
    %v2785 = vadd.f32 %v2432, %v2784
    %v2786 = vpop.f32.mrb[0].mxu0
    %v2787 = vadd.f32 %v2434, %v2786
    %v2788 = vpop.f32.mrb[0].mxu0
    %v2789 = vadd.f32 %v2436, %v2788
    %2790 = vmatprep.mubr.bf16.mxu0 %v1109
    %2791 = vmatmul.mubr.bf16.gmra.mrb[0].mxu0 %v1108
    %v2792 = vpop.f32.mrb[0].mxu0
    %v2793 = vadd.f32 %v2440, %v2792
    %v2794 = vpop.f32.mrb[0].mxu0
    %v2795 = vadd.f32 %v2442, %v2794
    %v2796 = vpop.f32.mrb[0].mxu0
    %v2797 = vadd.f32 %v2444, %v2796
    %v2798 = vpop.f32.mrb[0].mxu0
    %v2799 = vadd.f32 %v2446, %v2798
    %2800 = vmatprep.mubr.bf16.mxu0 %v1115
    %2801 = vmatmul.mubr.bf16.gmra.mrb[0].mxu0 %v1114
    %v2802 = vpop.f32.mrb[0].mxu0
    %v2803 = vadd.f32 %v2450, %v2802
    %v2804 = vpop.f32.mrb[0].mxu0
    %v2805 = vadd.f32 %v2452, %v2804
    %v2806 = vpop.f32.mrb[0].mxu0
    %v2807 = vadd.f32 %v2454, %v2806
    %v2808 = vpop.f32.mrb[0].mxu0
    %v2809 = vadd.f32 %v2456, %v2808
    %2810 = vmatprep.mubr.bf16.mxu0 %v1121
    %2811 = vmatmul.mubr.bf16.gmra.mrb[0].mxu0 %v1120
    %v2812 = vpop.f32.mrb[0].mxu0
    %v2813 = vadd.f32 %v2460, %v2812
    %v2814 = vpop.f32.mrb[0].mxu0
    %v2815 = vadd.f32 %v2462, %v2814
    %v2816 = vpop.f32.mrb[0].mxu0
    %v2817 = vadd.f32 %v2464, %v2816
    %v2818 = vpop.f32.mrb[0].mxu0
    %v2819 = vadd.f32 %v2466, %v2818
    %2820 = vmatprep.mubr.bf16.mxu0 %v1127
    %2821 = vmatmul.mubr.bf16.gmra.mrb[0].mxu0 %v1126
    %v2822 = vpop.f32.mrb[0].mxu0
    %v2823 = vadd.f32 %v2470, %v2822
    %v2824 = vpop.f32.mrb[0].mxu0
    %v2825 = vadd.f32 %v2472, %v2824
    %v2826 = vpop.f32.mrb[0].mxu0
    %v2827 = vadd.f32 %v2474, %v2826
    %v2828 = vpop.f32.mrb[0].mxu0
    %v2829 = vadd.f32 %v2476, %v2828
    %2830 = vmatprep.mubr.bf16.mxu0 %v1133
    %2831 = vmatmul.mubr.bf16.gmra.mrb[0].mxu0 %v1132
    %v2832 = vpop.f32.mrb[0].mxu0
    %v2833 = vadd.f32 %v2480, %v2832
    %v2834 = vpop.f32.mrb[0].mxu0
    %v2835 = vadd.f32 %v2482, %v2834
    %v2836 = vpop.f32.mrb[0].mxu0
    %v2837 = vadd.f32 %v2484, %v2836
    %v2838 = vpop.f32.mrb[0].mxu0
    %v2839 = vadd.f32 %v2486, %v2838
    %2840 = vmatprep.mubr.bf16.mxu0 %v1139
    %2841 = vmatmul.mubr.bf16.gmra.mrb[0].mxu0 %v1138
    %v2842 = vpop.f32.mrb[0].mxu0
    %v2843 = vadd.f32 %v2490, %v2842
    %v2844 = vpop.f32.mrb[0].mxu0
    %v2845 = vadd.f32 %v2492, %v2844
    %v2846 = vpop.f32.mrb[0].mxu0
    %v2847 = vadd.f32 %v2494, %v2846
    %v2848 = vpop.f32.mrb[0].mxu0
    %v2849 = vadd.f32 %v2496, %v2848
    %2850 = vmatprep.mubr.bf16.mxu0 %v1145
    %2851 = vmatmul.mubr.bf16.gmra.mrb[0].mxu0 %v1144
    %v2852 = vpop.f32.mrb[0].mxu0
    %v2853 = vadd.f32 %v2500, %v2852
    %v2854 = vpop.f32.mrb[0].mxu0
    %v2855 = vadd.f32 %v2502, %v2854
    %v2856 = vpop.f32.mrb[0].mxu0
    %v2857 = vadd.f32 %v2504, %v2856
    %v2858 = vpop.f32.mrb[0].mxu0
    %v2859 = vadd.f32 %v2506, %v2858
    %2860 = vmatprep.mubr.bf16.mxu0 %v1151
    %2861 = vmatmul.mubr.bf16.gmra.mrb[0].mxu0 %v1150
    %v2862 = vpop.f32.mrb[0].mxu0
    %v2863 = vadd.f32 %v2510, %v2862
    %v2864 = vpop.f32.mrb[0].mxu0
    %v2865 = vadd.f32 %v2512, %v2864
    %v2866 = vpop.f32.mrb[0].mxu0
    %v2867 = vadd.f32 %v2514, %v2866
    %v2868 = vpop.f32.mrb[0].mxu0
    %v2869 = vadd.f32 %v2516, %v2868
    %2870 = vmatprep.mubr.bf16.mxu0 %v1157
    %2871 = vmatmul.mubr.bf16.gmra.mrb[0].mxu0 %v1156
    %v2872 = vpop.f32.mrb[0].mxu0
    %v2873 = vadd.f32 %v2520, %v2872
    %v2874 = vpop.f32.mrb[0].mxu0
    %v2875 = vadd.f32 %v2522, %v2874
    %v2876 = vpop.f32.mrb[0].mxu0
    %v2877 = vadd.f32 %v2524, %v2876
    %v2878 = vpop.f32.mrb[0].mxu0
    %v2879 = vadd.f32 %v2526, %v2878
    %2880 = vmatprep.mubr.bf16.mxu0 %v1163
    %2881 = vmatmul.mubr.bf16.gmra.mrb[0].mxu0 %v1162
    %v2882 = vpop.f32.mrb[0].mxu0
    %v2883 = vadd.f32 %v2530, %v2882
    %v2884 = vpop.f32.mrb[0].mxu0
    %v2885 = vadd.f32 %v2532, %v2884
    %v2886 = vpop.f32.mrb[0].mxu0
    %v2887 = vadd.f32 %v2534, %v2886
    %v2888 = vpop.f32.mrb[0].mxu0
    %v2889 = vadd.f32 %v2536, %v2888
    %2890 = vmatprep.mubr.bf16.mxu0 %v1169
    %2891 = vmatmul.mubr.bf16.gmra.mrb[0].mxu0 %v1168
    %v2892 = vpop.f32.mrb[0].mxu0
    %v2893 = vadd.f32 %v2540, %v2892
    %v2894 = vpop.f32.mrb[0].mxu0
    %v2895 = vadd.f32 %v2542, %v2894
    %v2896 = vpop.f32.mrb[0].mxu0
    %v2897 = vadd.f32 %v2544, %v2896
    %v2898 = vpop.f32.mrb[0].mxu0
    %v2899 = vadd.f32 %v2546, %v2898
    %2900 = vdwg.mxu0
    %v2901 = vmul.f32 %v2583, 0.01
    %v2902 = vmul.f32 %v2585, 0.01
    %v2903 = vmul.f32 %v2587, 0.01
    %v2904 = vmul.f32 %v2589, 0.01
    %v2905 = vmul.f32 %v2593, 0.01
    %v2906 = vmul.f32 %v2595, 0.01
    %v2907 = vmul.f32 %v2597, 0.01
    %v2908 = vmul.f32 %v2599, 0.01
    %v2909 = vmul.f32 %v2603, 0.01
    %v2910 = vmul.f32 %v2605, 0.01
    %v2911 = vmul.f32 %v2607, 0.01
    %v2912 = vmul.f32 %v2609, 0.01
    %v2913 = vmul.f32 %v2613, 0.01
    %v2914 = vmul.f32 %v2615, 0.01
    %v2915 = vmul.f32 %v2617, 0.01
    %v2916 = vmul.f32 %v2619, 0.01
    %v2917 = vmul.f32 %v2623, 0.01
    %v2918 = vmul.f32 %v2625, 0.01
    %v2919 = vmul.f32 %v2627, 0.01
    %v2920 = vmul.f32 %v2629, 0.01
    %v2921 = vmul.f32 %v2633, 0.01
    %v2922 = vmul.f32 %v2635, 0.01
    %v2923 = vmul.f32 %v2637, 0.01
    %v2924 = vmul.f32 %v2639, 0.01
    %v2925 = vmul.f32 %v2643, 0.01
    %v2926 = vmul.f32 %v2645, 0.01
    %v2927 = vmul.f32 %v2647, 0.01
    %v2928 = vmul.f32 %v2649, 0.01
    %v2929 = vmul.f32 %v2653, 0.01
    %v2930 = vmul.f32 %v2655, 0.01
    %v2931 = vmul.f32 %v2657, 0.01
    %v2932 = vmul.f32 %v2659, 0.01
    %v2933 = vmul.f32 %v2663, 0.01
    %v2934 = vmul.f32 %v2665, 0.01
    %v2935 = vmul.f32 %v2667, 0.01
    %v2936 = vmul.f32 %v2669, 0.01
    %v2937 = vmul.f32 %v2673, 0.01
    %v2938 = vmul.f32 %v2675, 0.01
    %v2939 = vmul.f32 %v2677, 0.01
    %v2940 = vmul.f32 %v2679, 0.01
    %v2941 = vmul.f32 %v2683, 0.01
    %v2942 = vmul.f32 %v2685, 0.01
    %v2943 = vmul.f32 %v2687, 0.01
    %v2944 = vmul.f32 %v2689, 0.01
    %v2945 = vmul.f32 %v2693, 0.01
    %v2946 = vmul.f32 %v2695, 0.01
    %v2947 = vmul.f32 %v2697, 0.01
    %v2948 = vmul.f32 %v2699, 0.01
    %v2949 = vmul.f32 %v2703, 0.01
    %v2950 = vmul.f32 %v2705, 0.01
    %v2951 = vmul.f32 %v2707, 0.01
    %v2952 = vmul.f32 %v2709, 0.01
    %v2953 = vmul.f32 %v2713, 0.01
    %v2954 = vmul.f32 %v2715, 0.01
    %v2955 = vmul.f32 %v2717, 0.01
    %v2956 = vmul.f32 %v2719, 0.01
    %v2957 = vmul.f32 %v2723, 0.01
    %v2958 = vmul.f32 %v2725, 0.01
    %v2959 = vmul.f32 %v2727, 0.01
    %v2960 = vmul.f32 %v2729, 0.01
    %v2961 = vmul.f32 %v2733, 0.01
    %v2962 = vmul.f32 %v2735, 0.01
    %v2963 = vmul.f32 %v2737, 0.01
    %v2964 = vmul.f32 %v2739, 0.01
    %v2965 = vmul.f32 %v2743, 0.01
    %v2966 = vmul.f32 %v2745, 0.01
    %v2967 = vmul.f32 %v2747, 0.01
    %v2968 = vmul.f32 %v2749, 0.01
    %v2969 = vmul.f32 %v2753, 0.01
    %v2970 = vmul.f32 %v2755, 0.01
    %v2971 = vmul.f32 %v2757, 0.01
    %v2972 = vmul.f32 %v2759, 0.01
    %v2973 = vmul.f32 %v2763, 0.01
    %v2974 = vmul.f32 %v2765, 0.01
    %v2975 = vmul.f32 %v2767, 0.01
    %v2976 = vmul.f32 %v2769, 0.01
    %v2977 = vmul.f32 %v2773, 0.01
    %v2978 = vmul.f32 %v2775, 0.01
    %v2979 = vmul.f32 %v2777, 0.01
    %v2980 = vmul.f32 %v2779, 0.01
    %v2981 = vmul.f32 %v2783, 0.01
    %v2982 = vmul.f32 %v2785, 0.01
    %v2983 = vmul.f32 %v2787, 0.01
    %v2984 = vmul.f32 %v2789, 0.01
    %v2985 = vmul.f32 %v2793, 0.01
    %v2986 = vmul.f32 %v2795, 0.01
    %v2987 = vmul.f32 %v2797, 0.01
    %v2988 = vmul.f32 %v2799, 0.01
    %v2989 = vmul.f32 %v2803, 0.01
    %v2990 = vmul.f32 %v2805, 0.01
    %v2991 = vmul.f32 %v2807, 0.01
    %v2992 = vmul.f32 %v2809, 0.01
    %v2993 = vmul.f32 %v2813, 0.01
    %v2994 = vmul.f32 %v2815, 0.01
    %v2995 = vmul.f32 %v2817, 0.01
    %v2996 = vmul.f32 %v2819, 0.01
    %v2997 = vmul.f32 %v2823, 0.01
    %v2998 = vmul.f32 %v2825, 0.01
    %v2999 = vmul.f32 %v2827, 0.01
    %v3000 = vmul.f32 %v2829, 0.01
    %v3001 = vmul.f32 %v2833, 0.01
    %v3002 = vmul.f32 %v2835, 0.01
    %v3003 = vmul.f32 %v2837, 0.01
    %v3004 = vmul.f32 %v2839, 0.01
    %v3005 = vmul.f32 %v2843, 0.01
    %v3006 = vmul.f32 %v2845, 0.01
    %v3007 = vmul.f32 %v2847, 0.01
    %v3008 = vmul.f32 %v2849, 0.01
    %v3009 = vmul.f32 %v2853, 0.01
    %v3010 = vmul.f32 %v2855, 0.01
    %v3011 = vmul.f32 %v2857, 0.01
    %v3012 = vmul.f32 %v2859, 0.01
    %v3013 = vmul.f32 %v2863, 0.01
    %v3014 = vmul.f32 %v2865, 0.01
    %v3015 = vmul.f32 %v2867, 0.01
    %v3016 = vmul.f32 %v2869, 0.01
    %v3017 = vmul.f32 %v2873, 0.01
    %v3018 = vmul.f32 %v2875, 0.01
    %v3019 = vmul.f32 %v2877, 0.01
    %v3020 = vmul.f32 %v2879, 0.01
    %v3021 = vmul.f32 %v2883, 0.01
    %v3022 = vmul.f32 %v2885, 0.01
    %v3023 = vmul.f32 %v2887, 0.01
    %v3024 = vmul.f32 %v2889, 0.01
    %v3025 = vmul.f32 %v2893, 0.01
    %v3026 = vmul.f32 %v2895, 0.01
    %v3027 = vmul.f32 %v2897, 0.01
    %v3028 = vmul.f32 %v2899, 0.01
    %v3029 = vmax.f32 %v2583, %v2901
    %v3030 = vmax.f32 %v2585, %v2902
    %v3031 = vmax.f32 %v2587, %v2903
    %v3032 = vmax.f32 %v2589, %v2904
    %v3033 = vmax.f32 %v2593, %v2905
    %v3034 = vmax.f32 %v2595, %v2906
    %v3035 = vmax.f32 %v2597, %v2907
    %v3036 = vmax.f32 %v2599, %v2908
    %v3037 = vmax.f32 %v2603, %v2909
    %v3038 = vmax.f32 %v2605, %v2910
    %v3039 = vmax.f32 %v2607, %v2911
    %v3040 = vmax.f32 %v2609, %v2912
    %v3041 = vmax.f32 %v2613, %v2913
    %v3042 = vmax.f32 %v2615, %v2914
    %v3043 = vmax.f32 %v2617, %v2915
    %v3044 = vmax.f32 %v2619, %v2916
    %v3045 = vmax.f32 %v2623, %v2917
    %v3046 = vmax.f32 %v2625, %v2918
    %v3047 = vmax.f32 %v2627, %v2919
    %v3048 = vmax.f32 %v2629, %v2920
    %v3049 = vmax.f32 %v2633, %v2921
    %v3050 = vmax.f32 %v2635, %v2922
    %v3051 = vmax.f32 %v2637, %v2923
    %v3052 = vmax.f32 %v2639, %v2924
    %v3053 = vmax.f32 %v2643, %v2925
    %v3054 = vmax.f32 %v2645, %v2926
    %v3055 = vmax.f32 %v2647, %v2927
    %v3056 = vmax.f32 %v2649, %v2928
    %v3057 = vmax.f32 %v2653, %v2929
    %v3058 = vmax.f32 %v2655, %v2930
    %v3059 = vmax.f32 %v2657, %v2931
    %v3060 = vmax.f32 %v2659, %v2932
    %v3061 = vmax.f32 %v2663, %v2933
    %v3062 = vmax.f32 %v2665, %v2934
    %v3063 = vmax.f32 %v2667, %v2935
    %v3064 = vmax.f32 %v2669, %v2936
    %v3065 = vmax.f32 %v2673, %v2937
    %v3066 = vmax.f32 %v2675, %v2938
    %v3067 = vmax.f32 %v2677, %v2939
    %v3068 = vmax.f32 %v2679, %v2940
    %v3069 = vmax.f32 %v2683, %v2941
    %v3070 = vmax.f32 %v2685, %v2942
    %v3071 = vmax.f32 %v2687, %v2943
    %v3072 = vmax.f32 %v2689, %v2944
    %v3073 = vmax.f32 %v2693, %v2945
    %v3074 = vmax.f32 %v2695, %v2946
    %v3075 = vmax.f32 %v2697, %v2947
    %v3076 = vmax.f32 %v2699, %v2948
    %v3077 = vmax.f32 %v2703, %v2949
    %v3078 = vmax.f32 %v2705, %v2950
    %v3079 = vmax.f32 %v2707, %v2951
    %v3080 = vmax.f32 %v2709, %v2952
    %v3081 = vmax.f32 %v2713, %v2953
    %v3082 = vmax.f32 %v2715, %v2954
    %v3083 = vmax.f32 %v2717, %v2955
    %v3084 = vmax.f32 %v2719, %v2956
    %v3085 = vmax.f32 %v2723, %v2957
    %v3086 = vmax.f32 %v2725, %v2958
    %v3087 = vmax.f32 %v2727, %v2959
    %v3088 = vmax.f32 %v2729, %v2960
    %v3089 = vmax.f32 %v2733, %v2961
    %v3090 = vmax.f32 %v2735, %v2962
    %v3091 = vmax.f32 %v2737, %v2963
    %v3092 = vmax.f32 %v2739, %v2964
    %v3093 = vmax.f32 %v2743, %v2965
    %v3094 = vmax.f32 %v2745, %v2966
    %v3095 = vmax.f32 %v2747, %v2967
    %v3096 = vmax.f32 %v2749, %v2968
    %v3097 = vmax.f32 %v2753, %v2969
    %v3098 = vmax.f32 %v2755, %v2970
    %v3099 = vmax.f32 %v2757, %v2971
    %v3100 = vmax.f32 %v2759, %v2972
    %v3101 = vmax.f32 %v2763, %v2973
    %v3102 = vmax.f32 %v2765, %v2974
    %v3103 = vmax.f32 %v2767, %v2975
    %v3104 = vmax.f32 %v2769, %v2976
    %v3105 = vmax.f32 %v2773, %v2977
    %v3106 = vmax.f32 %v2775, %v2978
    %v3107 = vmax.f32 %v2777, %v2979
    %v3108 = vmax.f32 %v2779, %v2980
    %v3109 = vmax.f32 %v2783, %v2981
    %v3110 = vmax.f32 %v2785, %v2982
    %v3111 = vmax.f32 %v2787, %v2983
    %v3112 = vmax.f32 %v2789, %v2984
    %v3113 = vmax.f32 %v2793, %v2985
    %v3114 = vmax.f32 %v2795, %v2986
    %v3115 = vmax.f32 %v2797, %v2987
    %v3116 = vmax.f32 %v2799, %v2988
    %v3117 = vmax.f32 %v2803, %v2989
    %v3118 = vmax.f32 %v2805, %v2990
    %v3119 = vmax.f32 %v2807, %v2991
    %v3120 = vmax.f32 %v2809, %v2992
    %v3121 = vmax.f32 %v2813, %v2993
    %v3122 = vmax.f32 %v2815, %v2994
    %v3123 = vmax.f32 %v2817, %v2995
    %v3124 = vmax.f32 %v2819, %v2996
    %v3125 = vmax.f32 %v2823, %v2997
    %v3126 = vmax.f32 %v2825, %v2998
    %v3127 = vmax.f32 %v2827, %v2999
    %v3128 = vmax.f32 %v2829, %v3000
    %v3129 = vmax.f32 %v2833, %v3001
    %v3130 = vmax.f32 %v2835, %v3002
    %v3131 = vmax.f32 %v2837, %v3003
    %v3132 = vmax.f32 %v2839, %v3004
    %v3133 = vmax.f32 %v2843, %v3005
    %v3134 = vmax.f32 %v2845, %v3006
    %v3135 = vmax.f32 %v2847, %v3007
    %v3136 = vmax.f32 %v2849, %v3008
    %v3137 = vmax.f32 %v2853, %v3009
    %v3138 = vmax.f32 %v2855, %v3010
    %v3139 = vmax.f32 %v2857, %v3011
    %v3140 = vmax.f32 %v2859, %v3012
    %v3141 = vmax.f32 %v2863, %v3013
    %v3142 = vmax.f32 %v2865, %v3014
    %v3143 = vmax.f32 %v2867, %v3015
    %v3144 = vmax.f32 %v2869, %v3016
    %v3145 = vmax.f32 %v2873, %v3017
    %v3146 = vmax.f32 %v2875, %v3018
    %v3147 = vmax.f32 %v2877, %v3019
    %v3148 = vmax.f32 %v2879, %v3020
    %v3149 = vmax.f32 %v2883, %v3021
    %v3150 = vmax.f32 %v2885, %v3022
    %v3151 = vmax.f32 %v2887, %v3023
    %v3152 = vmax.f32 %v2889, %v3024
    %v3153 = vmax.f32 %v2893, %v3025
    %v3154 = vmax.f32 %v2895, %v3026
    %v3155 = vmax.f32 %v2897, %v3027
    %v3156 = vmax.f32 %v2899, %v3028
    %v3157 = vpack.c.bf16 %v3031, %v3029
    %v3158 = vpack.c.bf16 %v3032, %v3030
    %v3159 = vpack.c.bf16 %v3035, %v3033
    %v3160 = vpack.c.bf16 %v3036, %v3034
    %v3161 = vpack.c.bf16 %v3039, %v3037
    %v3162 = vpack.c.bf16 %v3040, %v3038
    %v3163 = vpack.c.bf16 %v3043, %v3041
    %v3164 = vpack.c.bf16 %v3044, %v3042
    %v3165 = vpack.c.bf16 %v3047, %v3045
    %v3166 = vpack.c.bf16 %v3048, %v3046
    %v3167 = vpack.c.bf16 %v3051, %v3049
    %v3168 = vpack.c.bf16 %v3052, %v3050
    %v3169 = vpack.c.bf16 %v3055, %v3053
    %v3170 = vpack.c.bf16 %v3056, %v3054
    %v3171 = vpack.c.bf16 %v3059, %v3057
    %v3172 = vpack.c.bf16 %v3060, %v3058
    %v3173 = vpack.c.bf16 %v3063, %v3061
    %v3174 = vpack.c.bf16 %v3064, %v3062
    %v3175 = vpack.c.bf16 %v3067, %v3065
    %v3176 = vpack.c.bf16 %v3068, %v3066
    %v3177 = vpack.c.bf16 %v3071, %v3069
    %v3178 = vpack.c.bf16 %v3072, %v3070
    %v3179 = vpack.c.bf16 %v3075, %v3073
    %v3180 = vpack.c.bf16 %v3076, %v3074
    %v3181 = vpack.c.bf16 %v3079, %v3077
    %v3182 = vpack.c.bf16 %v3080, %v3078
    %v3183 = vpack.c.bf16 %v3083, %v3081
    %v3184 = vpack.c.bf16 %v3084, %v3082
    %v3185 = vpack.c.bf16 %v3087, %v3085
    %v3186 = vpack.c.bf16 %v3088, %v3086
    %v3187 = vpack.c.bf16 %v3091, %v3089
    %v3188 = vpack.c.bf16 %v3092, %v3090
    %v3189 = vpack.c.bf16 %v3095, %v3093
    %v3190 = vpack.c.bf16 %v3096, %v3094
    %v3191 = vpack.c.bf16 %v3099, %v3097
    %v3192 = vpack.c.bf16 %v3100, %v3098
    %v3193 = vpack.c.bf16 %v3103, %v3101
    %v3194 = vpack.c.bf16 %v3104, %v3102
    %v3195 = vpack.c.bf16 %v3107, %v3105
    %v3196 = vpack.c.bf16 %v3108, %v3106
    %v3197 = vpack.c.bf16 %v3111, %v3109
    %v3198 = vpack.c.bf16 %v3112, %v3110
    %v3199 = vpack.c.bf16 %v3115, %v3113
    %v3200 = vpack.c.bf16 %v3116, %v3114
    %v3201 = vpack.c.bf16 %v3119, %v3117
    %v3202 = vpack.c.bf16 %v3120, %v3118
    %v3203 = vpack.c.bf16 %v3123, %v3121
    %v3204 = vpack.c.bf16 %v3124, %v3122
    %v3205 = vpack.c.bf16 %v3127, %v3125
    %v3206 = vpack.c.bf16 %v3128, %v3126
    %v3207 = vpack.c.bf16 %v3131, %v3129
    %v3208 = vpack.c.bf16 %v3132, %v3130
    %v3209 = vpack.c.bf16 %v3135, %v3133
    %v3210 = vpack.c.bf16 %v3136, %v3134
    %v3211 = vpack.c.bf16 %v3139, %v3137
    %v3212 = vpack.c.bf16 %v3140, %v3138
    %v3213 = vpack.c.bf16 %v3143, %v3141
    %v3214 = vpack.c.bf16 %v3144, %v3142
    %v3215 = vpack.c.bf16 %v3147, %v3145
    %v3216 = vpack.c.bf16 %v3148, %v3146
    %v3217 = vpack.c.bf16 %v3151, %v3149
    %v3218 = vpack.c.bf16 %v3152, %v3150
    %v3219 = vpack.c.bf16 %v3155, %v3153
    %v3220 = vpack.c.bf16 %v3156, %v3154
    %v3221 = vld [vmem:[#allocation7] sm:$0xff]
    %v3222 = vld [vmem:[#allocation7 + $0x8] sm:$0xff]
    %v3223 = vld [vmem:[#allocation7 + $0x10] sm:$0xff]
    %v3224 = vld [vmem:[#allocation7 + $0x18] sm:$0xff]
    %v3225 = vld [vmem:[#allocation7 + $0x20] sm:$0xff]
    %v3226 = vld [vmem:[#allocation7 + $0x28] sm:$0xff]
    %v3227 = vld [vmem:[#allocation7 + $0x30] sm:$0xff]
    %v3228 = vld [vmem:[#allocation7 + $0x38] sm:$0xff]
    %v3229 = vld [vmem:[#allocation7 + $0x40] sm:$0xff]
    %v3230 = vld [vmem:[#allocation7 + $0x48] sm:$0xff]
    %v3231 = vld [vmem:[#allocation7 + $0x50] sm:$0xff]
    %v3232 = vld [vmem:[#allocation7 + $0x58] sm:$0xff]
    %v3233 = vld [vmem:[#allocation7 + $0x60] sm:$0xff]
    %v3234 = vld [vmem:[#allocation7 + $0x68] sm:$0xff]
    %v3235 = vld [vmem:[#allocation7 + $0x70] sm:$0xff]
    %v3236 = vld [vmem:[#allocation7 + $0x78] sm:$0xff]
    %v3237 = vld [vmem:[#allocation7 + $0x80] sm:$0xff]
    %v3238 = vld [vmem:[#allocation7 + $0x88] sm:$0xff]
    %v3239 = vld [vmem:[#allocation7 + $0x90] sm:$0xff]
    %v3240 = vld [vmem:[#allocation7 + $0x98] sm:$0xff]
    %v3241 = vld [vmem:[#allocation7 + $0xa0] sm:$0xff]
    %v3242 = vld [vmem:[#allocation7 + $0xa8] sm:$0xff]
    %v3243 = vld [vmem:[#allocation7 + $0xb0] sm:$0xff]
    %v3244 = vld [vmem:[#allocation7 + $0xb8] sm:$0xff]
    %v3245 = vld [vmem:[#allocation7 + $0xc0] sm:$0xff]
    %v3246 = vld [vmem:[#allocation7 + $0xc8] sm:$0xff]
    %v3247 = vld [vmem:[#allocation7 + $0xd0] sm:$0xff]
    %v3248 = vld [vmem:[#allocation7 + $0xd8] sm:$0xff]
    %v3249 = vld [vmem:[#allocation7 + $0xe0] sm:$0xff]
    %v3250 = vld [vmem:[#allocation7 + $0xe8] sm:$0xff]
    %v3251 = vld [vmem:[#allocation7 + $0xf0] sm:$0xff]
    %v3252 = vld [vmem:[#allocation7 + $0xf8] sm:$0xff]
    %v3253 = vld [vmem:[#allocation7 + $0x100] sm:$0xff]
    %v3254 = vld [vmem:[#allocation7 + $0x108] sm:$0xff]
    %v3255 = vld [vmem:[#allocation7 + $0x110] sm:$0xff]
    %v3256 = vld [vmem:[#allocation7 + $0x118] sm:$0xff]
    %v3257 = vld [vmem:[#allocation7 + $0x120] sm:$0xff]
    %v3258 = vld [vmem:[#allocation7 + $0x128] sm:$0xff]
    %v3259 = vld [vmem:[#allocation7 + $0x130] sm:$0xff]
    %v3260 = vld [vmem:[#allocation7 + $0x138] sm:$0xff]
    %v3261 = vld [vmem:[#allocation7 + $0x140] sm:$0xff]
    %v3262 = vld [vmem:[#allocation7 + $0x148] sm:$0xff]
    %v3263 = vld [vmem:[#allocation7 + $0x150] sm:$0xff]
    %v3264 = vld [vmem:[#allocation7 + $0x158] sm:$0xff]
    %v3265 = vld [vmem:[#allocation7 + $0x160] sm:$0xff]
    %v3266 = vld [vmem:[#allocation7 + $0x168] sm:$0xff]
    %v3267 = vld [vmem:[#allocation7 + $0x170] sm:$0xff]
    %v3268 = vld [vmem:[#allocation7 + $0x178] sm:$0xff]
    %v3269 = vld [vmem:[#allocation7 + $0x180] sm:$0xff]
    %v3270 = vld [vmem:[#allocation7 + $0x188] sm:$0xff]
    %v3271 = vld [vmem:[#allocation7 + $0x190] sm:$0xff]
    %v3272 = vld [vmem:[#allocation7 + $0x198] sm:$0xff]
    %v3273 = vld [vmem:[#allocation7 + $0x1a0] sm:$0xff]
    %v3274 = vld [vmem:[#allocation7 + $0x1a8] sm:$0xff]
    %v3275 = vld [vmem:[#allocation7 + $0x1b0] sm:$0xff]
    %v3276 = vld [vmem:[#allocation7 + $0x1b8] sm:$0xff]
    %v3277 = vld [vmem:[#allocation7 + $0x1c0] sm:$0xff]
    %v3278 = vld [vmem:[#allocation7 + $0x1c8] sm:$0xff]
    %v3279 = vld [vmem:[#allocation7 + $0x1d0] sm:$0xff]
    %v3280 = vld [vmem:[#allocation7 + $0x1d8] sm:$0xff]
    %v3281 = vld [vmem:[#allocation7 + $0x1e0] sm:$0xff]
    %v3282 = vld [vmem:[#allocation7 + $0x1e8] sm:$0xff]
    %v3283 = vld [vmem:[#allocation7 + $0x1f0] sm:$0xff]
    %v3284 = vld [vmem:[#allocation7 + $0x1f8] sm:$0xff]
    %v3285 = vld [vmem:[%s4] sm:$0xf]
    %v3287 = vlaneseq
    %v3288 = vshrl.u32 %v3287, 7
    %v3289 = vsub.s32 0, %v3288
    %v3290 = vrot.slane %v3285, %v3289
    %v3291 = vlaneseq
    %v3292 = vshrl.u32 %v3291, 7
    %v3293 = vsub.s32 1, %v3292
    %v3294 = vrot.slane %v3285, %v3293
    %v3295 = vlaneseq
    %v3296 = vshrl.u32 %v3295, 7
    %v3297 = vsub.s32 2, %v3296
    %v3298 = vrot.slane %v3285, %v3297
    %v3299 = vlaneseq
    %v3300 = vshrl.u32 %v3299, 7
    %v3301 = vsub.s32 3, %v3300
    %v3302 = vrot.slane %v3285, %v3301
    %v3371 = vunpack.c.l.b16 %v3221
    %v3372 = vunpack.c.h.b16 %v3221
    %v3373 = vunpack.c.l.b16 %v3222
    %v3374 = vunpack.c.h.b16 %v3222
    %v3375 = vunpack.c.l.b16 %v3223
    %v3376 = vunpack.c.h.b16 %v3223
    %v3377 = vunpack.c.l.b16 %v3224
    %v3378 = vunpack.c.h.b16 %v3224
    %v3379 = vunpack.c.l.b16 %v3225
    %v3380 = vunpack.c.h.b16 %v3225
    %v3381 = vunpack.c.l.b16 %v3226
    %v3382 = vunpack.c.h.b16 %v3226
    %v3383 = vunpack.c.l.b16 %v3227
    %v3384 = vunpack.c.h.b16 %v3227
    %v3385 = vunpack.c.l.b16 %v3228
    %v3386 = vunpack.c.h.b16 %v3228
    %v3387 = vunpack.c.l.b16 %v3229
    %v3388 = vunpack.c.h.b16 %v3229
    %v3389 = vunpack.c.l.b16 %v3230
    %v3390 = vunpack.c.h.b16 %v3230
    %v3391 = vunpack.c.l.b16 %v3231
    %v3392 = vunpack.c.h.b16 %v3231
    %v3393 = vunpack.c.l.b16 %v3232
    %v3394 = vunpack.c.h.b16 %v3232
    %v3395 = vunpack.c.l.b16 %v3233
    %v3396 = vunpack.c.h.b16 %v3233
    %v3397 = vunpack.c.l.b16 %v3234
    %v3398 = vunpack.c.h.b16 %v3234
    %v3399 = vunpack.c.l.b16 %v3235
    %v3400 = vunpack.c.h.b16 %v3235
    %v3401 = vunpack.c.l.b16 %v3236
    %v3402 = vunpack.c.h.b16 %v3236
    %v3403 = vunpack.c.l.b16 %v3237
    %v3404 = vunpack.c.h.b16 %v3237
    %v3405 = vunpack.c.l.b16 %v3238
    %v3406 = vunpack.c.h.b16 %v3238
    %v3407 = vunpack.c.l.b16 %v3239
    %v3408 = vunpack.c.h.b16 %v3239
    %v3409 = vunpack.c.l.b16 %v3240
    %v3410 = vunpack.c.h.b16 %v3240
    %v3411 = vunpack.c.l.b16 %v3241
    %v3412 = vunpack.c.h.b16 %v3241
    %v3413 = vunpack.c.l.b16 %v3242
    %v3414 = vunpack.c.h.b16 %v3242
    %v3415 = vunpack.c.l.b16 %v3243
    %v3416 = vunpack.c.h.b16 %v3243
    %v3417 = vunpack.c.l.b16 %v3244
    %v3418 = vunpack.c.h.b16 %v3244
    %v3419 = vunpack.c.l.b16 %v3245
    %v3420 = vunpack.c.h.b16 %v3245
    %v3421 = vunpack.c.l.b16 %v3246
    %v3422 = vunpack.c.h.b16 %v3246
    %v3423 = vunpack.c.l.b16 %v3247
    %v3424 = vunpack.c.h.b16 %v3247
    %v3425 = vunpack.c.l.b16 %v3248
    %v3426 = vunpack.c.h.b16 %v3248
    %v3427 = vunpack.c.l.b16 %v3249
    %v3428 = vunpack.c.h.b16 %v3249
    %v3429 = vunpack.c.l.b16 %v3250
    %v3430 = vunpack.c.h.b16 %v3250
    %v3431 = vunpack.c.l.b16 %v3251
    %v3432 = vunpack.c.h.b16 %v3251
    %v3433 = vunpack.c.l.b16 %v3252
    %v3434 = vunpack.c.h.b16 %v3252
    %v3435 = vunpack.c.l.b16 %v3253
    %v3436 = vunpack.c.h.b16 %v3253
    %v3437 = vunpack.c.l.b16 %v3254
    %v3438 = vunpack.c.h.b16 %v3254
    %v3439 = vunpack.c.l.b16 %v3255
    %v3440 = vunpack.c.h.b16 %v3255
    %v3441 = vunpack.c.l.b16 %v3256
    %v3442 = vunpack.c.h.b16 %v3256
    %v3443 = vunpack.c.l.b16 %v3257
    %v3444 = vunpack.c.h.b16 %v3257
    %v3445 = vunpack.c.l.b16 %v3258
    %v3446 = vunpack.c.h.b16 %v3258
    %v3447 = vunpack.c.l.b16 %v3259
    %v3448 = vunpack.c.h.b16 %v3259
    %v3449 = vunpack.c.l.b16 %v3260
    %v3450 = vunpack.c.h.b16 %v3260
    %v3451 = vunpack.c.l.b16 %v3261
    %v3452 = vunpack.c.h.b16 %v3261
    %v3453 = vunpack.c.l.b16 %v3262
    %v3454 = vunpack.c.h.b16 %v3262
    %v3455 = vunpack.c.l.b16 %v3263
    %v3456 = vunpack.c.h.b16 %v3263
    %v3457 = vunpack.c.l.b16 %v3264
    %v3458 = vunpack.c.h.b16 %v3264
    %v3459 = vunpack.c.l.b16 %v3265
    %v3460 = vunpack.c.h.b16 %v3265
    %v3461 = vunpack.c.l.b16 %v3266
    %v3462 = vunpack.c.h.b16 %v3266
    %v3463 = vunpack.c.l.b16 %v3267
    %v3464 = vunpack.c.h.b16 %v3267
    %v3465 = vunpack.c.l.b16 %v3268
    %v3466 = vunpack.c.h.b16 %v3268
    %v3467 = vunpack.c.l.b16 %v3269
    %v3468 = vunpack.c.h.b16 %v3269
    %v3469 = vunpack.c.l.b16 %v3270
    %v3470 = vunpack.c.h.b16 %v3270
    %v3471 = vunpack.c.l.b16 %v3271
    %v3472 = vunpack.c.h.b16 %v3271
    %v3473 = vunpack.c.l.b16 %v3272
    %v3474 = vunpack.c.h.b16 %v3272
    %v3475 = vunpack.c.l.b16 %v3273
    %v3476 = vunpack.c.h.b16 %v3273
    %v3477 = vunpack.c.l.b16 %v3274
    %v3478 = vunpack.c.h.b16 %v3274
    %v3479 = vunpack.c.l.b16 %v3275
    %v3480 = vunpack.c.h.b16 %v3275
    %v3481 = vunpack.c.l.b16 %v3276
    %v3482 = vunpack.c.h.b16 %v3276
    %v3483 = vunpack.c.l.b16 %v3277
    %v3484 = vunpack.c.h.b16 %v3277
    %v3485 = vunpack.c.l.b16 %v3278
    %v3486 = vunpack.c.h.b16 %v3278
    %v3487 = vunpack.c.l.b16 %v3279
    %v3488 = vunpack.c.h.b16 %v3279
    %v3489 = vunpack.c.l.b16 %v3280
    %v3490 = vunpack.c.h.b16 %v3280
    %v3491 = vunpack.c.l.b16 %v3281
    %v3492 = vunpack.c.h.b16 %v3281
    %v3493 = vunpack.c.l.b16 %v3282
    %v3494 = vunpack.c.h.b16 %v3282
    %v3495 = vunpack.c.l.b16 %v3283
    %v3496 = vunpack.c.h.b16 %v3283
    %v3497 = vunpack.c.l.b16 %v3284
    %v3498 = vunpack.c.h.b16 %v3284
    %v3499 = vpack.c.b16 %v3375, %v3371
    %v3500 = vpack.c.b16 %v3376, %v3372
    %v3501 = vpack.c.b16 %v3377, %v3373
    %v3502 = vpack.c.b16 %v3378, %v3374
    %v3503 = vpack.c.b16 %v3383, %v3379
    %v3504 = vpack.c.b16 %v3384, %v3380
    %v3505 = vpack.c.b16 %v3385, %v3381
    %v3506 = vpack.c.b16 %v3386, %v3382
    %v3507 = vpack.c.b16 %v3391, %v3387
    %v3508 = vpack.c.b16 %v3392, %v3388
    %v3509 = vpack.c.b16 %v3393, %v3389
    %v3510 = vpack.c.b16 %v3394, %v3390
    %v3511 = vpack.c.b16 %v3399, %v3395
    %v3512 = vpack.c.b16 %v3400, %v3396
    %v3513 = vpack.c.b16 %v3401, %v3397
    %v3514 = vpack.c.b16 %v3402, %v3398
    %v3515 = vpack.c.b16 %v3407, %v3403
    %v3516 = vpack.c.b16 %v3408, %v3404
    %v3517 = vpack.c.b16 %v3409, %v3405
    %v3518 = vpack.c.b16 %v3410, %v3406
    %v3519 = vpack.c.b16 %v3415, %v3411
    %v3520 = vpack.c.b16 %v3416, %v3412
    %v3521 = vpack.c.b16 %v3417, %v3413
    %v3522 = vpack.c.b16 %v3418, %v3414
    %v3523 = vpack.c.b16 %v3423, %v3419
    %v3524 = vpack.c.b16 %v3424, %v3420
    %v3525 = vpack.c.b16 %v3425, %v3421
    %v3526 = vpack.c.b16 %v3426, %v3422
    %v3527 = vpack.c.b16 %v3431, %v3427
    %v3528 = vpack.c.b16 %v3432, %v3428
    %v3529 = vpack.c.b16 %v3433, %v3429
    %v3530 = vpack.c.b16 %v3434, %v3430
    %v3531 = vpack.c.b16 %v3439, %v3435
    %v3532 = vpack.c.b16 %v3440, %v3436
    %v3533 = vpack.c.b16 %v3441, %v3437
    %v3534 = vpack.c.b16 %v3442, %v3438
    %v3535 = vpack.c.b16 %v3447, %v3443
    %v3536 = vpack.c.b16 %v3448, %v3444
    %v3537 = vpack.c.b16 %v3449, %v3445
    %v3538 = vpack.c.b16 %v3450, %v3446
    %v3539 = vpack.c.b16 %v3455, %v3451
    %v3540 = vpack.c.b16 %v3456, %v3452
    %v3541 = vpack.c.b16 %v3457, %v3453
    %v3542 = vpack.c.b16 %v3458, %v3454
    %v3543 = vpack.c.b16 %v3463, %v3459
    %v3544 = vpack.c.b16 %v3464, %v3460
    %v3545 = vpack.c.b16 %v3465, %v3461
    %v3546 = vpack.c.b16 %v3466, %v3462
    %v3547 = vpack.c.b16 %v3471, %v3467
    %v3548 = vpack.c.b16 %v3472, %v3468
    %v3549 = vpack.c.b16 %v3473, %v3469
    %v3550 = vpack.c.b16 %v3474, %v3470
    %v3551 = vpack.c.b16 %v3479, %v3475
    %v3552 = vpack.c.b16 %v3480, %v3476
    %v3553 = vpack.c.b16 %v3481, %v3477
    %v3554 = vpack.c.b16 %v3482, %v3478
    %v3555 = vpack.c.b16 %v3487, %v3483
    %v3556 = vpack.c.b16 %v3488, %v3484
    %v3557 = vpack.c.b16 %v3489, %v3485
    %v3558 = vpack.c.b16 %v3490, %v3486
    %v3559 = vpack.c.b16 %v3495, %v3491
    %v3560 = vpack.c.b16 %v3496, %v3492
    %v3561 = vpack.c.b16 %v3497, %v3493
    %v3562 = vpack.c.b16 %v3498, %v3494
    %3627 = vmatprep.subr.bf16.mxu0 %v3500
    %3628 = vmatpush1.bf16.msra.mxu0 %v3499
    %3629 = vmatprep.subr.bf16.mxu0 %v3504
    %3630 = vmatpush1.bf16.msra.mxu0 %v3503
    %3631 = vmatprep.subr.bf16.mxu0 %v3508
    %3632 = vmatpush1.bf16.msra.mxu0 %v3507
    %3633 = vmatprep.subr.bf16.mxu0 %v3512
    %3634 = vmatpush1.bf16.msra.mxu0 %v3511
    %3635 = vmatprep.subr.bf16.mxu0 %v3516
    %3636 = vmatpush1.bf16.msra.mxu0 %v3515
    %3637 = vmatprep.subr.bf16.mxu0 %v3520
    %3638 = vmatpush1.bf16.msra.mxu0 %v3519
    %3639 = vmatprep.subr.bf16.mxu0 %v3524
    %3640 = vmatpush1.bf16.msra.mxu0 %v3523
    %3641 = vmatprep.subr.bf16.mxu0 %v3528
    %3642 = vmatpush1.bf16.msra.mxu0 %v3527
    %3643 = vmatprep.subr.bf16.mxu0 %v3532
    %3644 = vmatpush1.bf16.msra.mxu0 %v3531
    %3645 = vmatprep.subr.bf16.mxu0 %v3536
    %3646 = vmatpush1.bf16.msra.mxu0 %v3535
    %3647 = vmatprep.subr.bf16.mxu0 %v3540
    %3648 = vmatpush1.bf16.msra.mxu0 %v3539
    %3649 = vmatprep.subr.bf16.mxu0 %v3544
    %3650 = vmatpush1.bf16.msra.mxu0 %v3543
    %3651 = vmatprep.subr.bf16.mxu0 %v3548
    %3652 = vmatpush1.bf16.msra.mxu0 %v3547
    %3653 = vmatprep.subr.bf16.mxu0 %v3552
    %3654 = vmatpush1.bf16.msra.mxu0 %v3551
    %3655 = vmatprep.subr.bf16.mxu0 %v3556
    %3656 = vmatpush1.bf16.msra.mxu0 %v3555
    %3657 = vmatprep.subr.bf16.mxu0 %v3560
    %3658 = vmatpush1.bf16.msra.mxu0 %v3559
    %3659 = vmatprep.mubr.bf16.mxu0 %v3158
    %3660 = vmatmul.mubr.bf16.gmra.mrb[0].mxu0 %v3157
    %v3661 = vpop.f32.mrb[0].mxu0
    %v3662 = vadd.f32 %v3290, %v3661
    %v3663 = vpop.f32.mrb[0].mxu0
    %v3664 = vadd.f32 %v3294, %v3663
    %v3665 = vpop.f32.mrb[0].mxu0
    %v3666 = vadd.f32 %v3290, %v3665
    %v3667 = vpop.f32.mrb[0].mxu0
    %v3668 = vadd.f32 %v3294, %v3667
    %3669 = vmatprep.mubr.bf16.mxu0 %v3160
    %3670 = vmatmul.mubr.bf16.gmra.mrb[0].mxu0 %v3159
    %v3671 = vpop.f32.mrb[0].mxu0
    %v3672 = vadd.f32 %v3290, %v3671
    %v3673 = vpop.f32.mrb[0].mxu0
    %v3674 = vadd.f32 %v3294, %v3673
    %v3675 = vpop.f32.mrb[0].mxu0
    %v3676 = vadd.f32 %v3290, %v3675
    %v3677 = vpop.f32.mrb[0].mxu0
    %v3678 = vadd.f32 %v3294, %v3677
    %3679 = vmatprep.mubr.bf16.mxu0 %v3162
    %3680 = vmatmul.mubr.bf16.gmra.mrb[0].mxu0 %v3161
    %v3681 = vpop.f32.mrb[0].mxu0
    %v3682 = vadd.f32 %v3290, %v3681
    %v3683 = vpop.f32.mrb[0].mxu0
    %v3684 = vadd.f32 %v3294, %v3683
    %v3685 = vpop.f32.mrb[0].mxu0
    %v3686 = vadd.f32 %v3290, %v3685
    %v3687 = vpop.f32.mrb[0].mxu0
    %v3688 = vadd.f32 %v3294, %v3687
    %3689 = vmatprep.mubr.bf16.mxu0 %v3164
    %3690 = vmatmul.mubr.bf16.gmra.mrb[0].mxu0 %v3163
    %v3691 = vpop.f32.mrb[0].mxu0
    %v3692 = vadd.f32 %v3290, %v3691
    %v3693 = vpop.f32.mrb[0].mxu0
    %v3694 = vadd.f32 %v3294, %v3693
    %v3695 = vpop.f32.mrb[0].mxu0
    %v3696 = vadd.f32 %v3290, %v3695
    %v3697 = vpop.f32.mrb[0].mxu0
    %v3698 = vadd.f32 %v3294, %v3697
    %3699 = vmatprep.mubr.bf16.mxu0 %v3166
    %3700 = vmatmul.mubr.bf16.gmra.mrb[0].mxu0 %v3165
    %v3701 = vpop.f32.mrb[0].mxu0
    %v3702 = vadd.f32 %v3290, %v3701
    %v3703 = vpop.f32.mrb[0].mxu0
    %v3704 = vadd.f32 %v3294, %v3703
    %v3705 = vpop.f32.mrb[0].mxu0
    %v3706 = vadd.f32 %v3290, %v3705
    %v3707 = vpop.f32.mrb[0].mxu0
    %v3708 = vadd.f32 %v3294, %v3707
    %3709 = vmatprep.mubr.bf16.mxu0 %v3168
    %3710 = vmatmul.mubr.bf16.gmra.mrb[0].mxu0 %v3167
    %v3711 = vpop.f32.mrb[0].mxu0
    %v3712 = vadd.f32 %v3290, %v3711
    %v3713 = vpop.f32.mrb[0].mxu0
    %v3714 = vadd.f32 %v3294, %v3713
    %v3715 = vpop.f32.mrb[0].mxu0
    %v3716 = vadd.f32 %v3290, %v3715
    %v3717 = vpop.f32.mrb[0].mxu0
    %v3718 = vadd.f32 %v3294, %v3717
    %3719 = vmatprep.mubr.bf16.mxu0 %v3170
    %3720 = vmatmul.mubr.bf16.gmra.mrb[0].mxu0 %v3169
    %v3721 = vpop.f32.mrb[0].mxu0
    %v3722 = vadd.f32 %v3290, %v3721
    %v3723 = vpop.f32.mrb[0].mxu0
    %v3724 = vadd.f32 %v3294, %v3723
    %v3725 = vpop.f32.mrb[0].mxu0
    %v3726 = vadd.f32 %v3290, %v3725
    %v3727 = vpop.f32.mrb[0].mxu0
    %v3728 = vadd.f32 %v3294, %v3727
    %3729 = vmatprep.mubr.bf16.mxu0 %v3172
    %3730 = vmatmul.mubr.bf16.gmra.mrb[0].mxu0 %v3171
    %v3731 = vpop.f32.mrb[0].mxu0
    %v3732 = vadd.f32 %v3290, %v3731
    %v3733 = vpop.f32.mrb[0].mxu0
    %v3734 = vadd.f32 %v3294, %v3733
    %v3735 = vpop.f32.mrb[0].mxu0
    %v3736 = vadd.f32 %v3290, %v3735
    %v3737 = vpop.f32.mrb[0].mxu0
    %v3738 = vadd.f32 %v3294, %v3737
    %3739 = vmatprep.mubr.bf16.mxu0 %v3174
    %3740 = vmatmul.mubr.bf16.gmra.mrb[0].mxu0 %v3173
    %v3741 = vpop.f32.mrb[0].mxu0
    %v3742 = vadd.f32 %v3290, %v3741
    %v3743 = vpop.f32.mrb[0].mxu0
    %v3744 = vadd.f32 %v3294, %v3743
    %v3745 = vpop.f32.mrb[0].mxu0
    %v3746 = vadd.f32 %v3290, %v3745
    %v3747 = vpop.f32.mrb[0].mxu0
    %v3748 = vadd.f32 %v3294, %v3747
    %3749 = vmatprep.mubr.bf16.mxu0 %v3176
    %3750 = vmatmul.mubr.bf16.gmra.mrb[0].mxu0 %v3175
    %v3751 = vpop.f32.mrb[0].mxu0
    %v3752 = vadd.f32 %v3290, %v3751
    %v3753 = vpop.f32.mrb[0].mxu0
    %v3754 = vadd.f32 %v3294, %v3753
    %v3755 = vpop.f32.mrb[0].mxu0
    %v3756 = vadd.f32 %v3290, %v3755
    %v3757 = vpop.f32.mrb[0].mxu0
    %v3758 = vadd.f32 %v3294, %v3757
    %3759 = vmatprep.mubr.bf16.mxu0 %v3178
    %3760 = vmatmul.mubr.bf16.gmra.mrb[0].mxu0 %v3177
    %v3761 = vpop.f32.mrb[0].mxu0
    %v3762 = vadd.f32 %v3290, %v3761
    %v3763 = vpop.f32.mrb[0].mxu0
    %v3764 = vadd.f32 %v3294, %v3763
    %v3765 = vpop.f32.mrb[0].mxu0
    %v3766 = vadd.f32 %v3290, %v3765
    %v3767 = vpop.f32.mrb[0].mxu0
    %v3768 = vadd.f32 %v3294, %v3767
    %3769 = vmatprep.mubr.bf16.mxu0 %v3180
    %3770 = vmatmul.mubr.bf16.gmra.mrb[0].mxu0 %v3179
    %v3771 = vpop.f32.mrb[0].mxu0
    %v3772 = vadd.f32 %v3290, %v3771
    %v3773 = vpop.f32.mrb[0].mxu0
    %v3774 = vadd.f32 %v3294, %v3773
    %v3775 = vpop.f32.mrb[0].mxu0
    %v3776 = vadd.f32 %v3290, %v3775
    %v3777 = vpop.f32.mrb[0].mxu0
    %v3778 = vadd.f32 %v3294, %v3777
    %3779 = vmatprep.mubr.bf16.mxu0 %v3182
    %3780 = vmatmul.mubr.bf16.gmra.mrb[0].mxu0 %v3181
    %v3781 = vpop.f32.mrb[0].mxu0
    %v3782 = vadd.f32 %v3290, %v3781
    %v3783 = vpop.f32.mrb[0].mxu0
    %v3784 = vadd.f32 %v3294, %v3783
    %v3785 = vpop.f32.mrb[0].mxu0
    %v3786 = vadd.f32 %v3290, %v3785
    %v3787 = vpop.f32.mrb[0].mxu0
    %v3788 = vadd.f32 %v3294, %v3787
    %3789 = vmatprep.mubr.bf16.mxu0 %v3184
    %3790 = vmatmul.mubr.bf16.gmra.mrb[0].mxu0 %v3183
    %v3791 = vpop.f32.mrb[0].mxu0
    %v3792 = vadd.f32 %v3290, %v3791
    %v3793 = vpop.f32.mrb[0].mxu0
    %v3794 = vadd.f32 %v3294, %v3793
    %v3795 = vpop.f32.mrb[0].mxu0
    %v3796 = vadd.f32 %v3290, %v3795
    %v3797 = vpop.f32.mrb[0].mxu0
    %v3798 = vadd.f32 %v3294, %v3797
    %3799 = vmatprep.mubr.bf16.mxu0 %v3186
    %3800 = vmatmul.mubr.bf16.gmra.mrb[0].mxu0 %v3185
    %v3801 = vpop.f32.mrb[0].mxu0
    %v3802 = vadd.f32 %v3290, %v3801
    %v3803 = vpop.f32.mrb[0].mxu0
    %v3804 = vadd.f32 %v3294, %v3803
    %v3805 = vpop.f32.mrb[0].mxu0
    %v3806 = vadd.f32 %v3290, %v3805
    %v3807 = vpop.f32.mrb[0].mxu0
    %v3808 = vadd.f32 %v3294, %v3807
    %3809 = vmatprep.mubr.bf16.mxu0 %v3188
    %3810 = vmatmul.mubr.bf16.gmra.mrb[0].mxu0 %v3187
    %v3811 = vpop.f32.mrb[0].mxu0
    %v3812 = vadd.f32 %v3290, %v3811
    %v3813 = vpop.f32.mrb[0].mxu0
    %v3814 = vadd.f32 %v3294, %v3813
    %v3815 = vpop.f32.mrb[0].mxu0
    %v3816 = vadd.f32 %v3290, %v3815
    %v3817 = vpop.f32.mrb[0].mxu0
    %v3818 = vadd.f32 %v3294, %v3817
    %3819 = vmatprep.mubr.bf16.mxu0 %v3190
    %3820 = vmatmul.mubr.bf16.gmra.mrb[0].mxu0 %v3189
    %v3821 = vpop.f32.mrb[0].mxu0
    %v3822 = vadd.f32 %v3290, %v3821
    %v3823 = vpop.f32.mrb[0].mxu0
    %v3824 = vadd.f32 %v3294, %v3823
    %v3825 = vpop.f32.mrb[0].mxu0
    %v3826 = vadd.f32 %v3290, %v3825
    %v3827 = vpop.f32.mrb[0].mxu0
    %v3828 = vadd.f32 %v3294, %v3827
    %3829 = vmatprep.mubr.bf16.mxu0 %v3192
    %3830 = vmatmul.mubr.bf16.gmra.mrb[0].mxu0 %v3191
    %v3831 = vpop.f32.mrb[0].mxu0
    %v3832 = vadd.f32 %v3290, %v3831
    %v3833 = vpop.f32.mrb[0].mxu0
    %v3834 = vadd.f32 %v3294, %v3833
    %v3835 = vpop.f32.mrb[0].mxu0
    %v3836 = vadd.f32 %v3290, %v3835
    %v3837 = vpop.f32.mrb[0].mxu0
    %v3838 = vadd.f32 %v3294, %v3837
    %3839 = vmatprep.mubr.bf16.mxu0 %v3194
    %3840 = vmatmul.mubr.bf16.gmra.mrb[0].mxu0 %v3193
    %v3841 = vpop.f32.mrb[0].mxu0
    %v3842 = vadd.f32 %v3290, %v3841
    %v3843 = vpop.f32.mrb[0].mxu0
    %v3844 = vadd.f32 %v3294, %v3843
    %v3845 = vpop.f32.mrb[0].mxu0
    %v3846 = vadd.f32 %v3290, %v3845
    %v3847 = vpop.f32.mrb[0].mxu0
    %v3848 = vadd.f32 %v3294, %v3847
    %3849 = vmatprep.mubr.bf16.mxu0 %v3196
    %3850 = vmatmul.mubr.bf16.gmra.mrb[0].mxu0 %v3195
    %v3851 = vpop.f32.mrb[0].mxu0
    %v3852 = vadd.f32 %v3290, %v3851
    %v3853 = vpop.f32.mrb[0].mxu0
    %v3854 = vadd.f32 %v3294, %v3853
    %v3855 = vpop.f32.mrb[0].mxu0
    %v3856 = vadd.f32 %v3290, %v3855
    %v3857 = vpop.f32.mrb[0].mxu0
    %v3858 = vadd.f32 %v3294, %v3857
    %3859 = vmatprep.mubr.bf16.mxu0 %v3198
    %3860 = vmatmul.mubr.bf16.gmra.mrb[0].mxu0 %v3197
    %v3861 = vpop.f32.mrb[0].mxu0
    %v3862 = vadd.f32 %v3290, %v3861
    %v3863 = vpop.f32.mrb[0].mxu0
    %v3864 = vadd.f32 %v3294, %v3863
    %v3865 = vpop.f32.mrb[0].mxu0
    %v3866 = vadd.f32 %v3290, %v3865
    %v3867 = vpop.f32.mrb[0].mxu0
    %v3868 = vadd.f32 %v3294, %v3867
    %3869 = vmatprep.mubr.bf16.mxu0 %v3200
    %3870 = vmatmul.mubr.bf16.gmra.mrb[0].mxu0 %v3199
    %v3871 = vpop.f32.mrb[0].mxu0
    %v3872 = vadd.f32 %v3290, %v3871
    %v3873 = vpop.f32.mrb[0].mxu0
    %v3874 = vadd.f32 %v3294, %v3873
    %v3875 = vpop.f32.mrb[0].mxu0
    %v3876 = vadd.f32 %v3290, %v3875
    %v3877 = vpop.f32.mrb[0].mxu0
    %v3878 = vadd.f32 %v3294, %v3877
    %3879 = vmatprep.mubr.bf16.mxu0 %v3202
    %3880 = vmatmul.mubr.bf16.gmra.mrb[0].mxu0 %v3201
    %v3881 = vpop.f32.mrb[0].mxu0
    %v3882 = vadd.f32 %v3290, %v3881
    %v3883 = vpop.f32.mrb[0].mxu0
    %v3884 = vadd.f32 %v3294, %v3883
    %v3885 = vpop.f32.mrb[0].mxu0
    %v3886 = vadd.f32 %v3290, %v3885
    %v3887 = vpop.f32.mrb[0].mxu0
    %v3888 = vadd.f32 %v3294, %v3887
    %3889 = vmatprep.mubr.bf16.mxu0 %v3204
    %3890 = vmatmul.mubr.bf16.gmra.mrb[0].mxu0 %v3203
    %v3891 = vpop.f32.mrb[0].mxu0
    %v3892 = vadd.f32 %v3290, %v3891
    %v3893 = vpop.f32.mrb[0].mxu0
    %v3894 = vadd.f32 %v3294, %v3893
    %v3895 = vpop.f32.mrb[0].mxu0
    %v3896 = vadd.f32 %v3290, %v3895
    %v3897 = vpop.f32.mrb[0].mxu0
    %v3898 = vadd.f32 %v3294, %v3897
    %3899 = vmatprep.mubr.bf16.mxu0 %v3206
    %3900 = vmatmul.mubr.bf16.gmra.mrb[0].mxu0 %v3205
    %v3901 = vpop.f32.mrb[0].mxu0
    %v3902 = vadd.f32 %v3290, %v3901
    %v3903 = vpop.f32.mrb[0].mxu0
    %v3904 = vadd.f32 %v3294, %v3903
    %v3905 = vpop.f32.mrb[0].mxu0
    %v3906 = vadd.f32 %v3290, %v3905
    %v3907 = vpop.f32.mrb[0].mxu0
    %v3908 = vadd.f32 %v3294, %v3907
    %3909 = vmatprep.mubr.bf16.mxu0 %v3208
    %3910 = vmatmul.mubr.bf16.gmra.mrb[0].mxu0 %v3207
    %v3911 = vpop.f32.mrb[0].mxu0
    %v3912 = vadd.f32 %v3290, %v3911
    %v3913 = vpop.f32.mrb[0].mxu0
    %v3914 = vadd.f32 %v3294, %v3913
    %v3915 = vpop.f32.mrb[0].mxu0
    %v3916 = vadd.f32 %v3290, %v3915
    %v3917 = vpop.f32.mrb[0].mxu0
    %v3918 = vadd.f32 %v3294, %v3917
    %3919 = vmatprep.mubr.bf16.mxu0 %v3210
    %3920 = vmatmul.mubr.bf16.gmra.mrb[0].mxu0 %v3209
    %v3921 = vpop.f32.mrb[0].mxu0
    %v3922 = vadd.f32 %v3290, %v3921
    %v3923 = vpop.f32.mrb[0].mxu0
    %v3924 = vadd.f32 %v3294, %v3923
    %v3925 = vpop.f32.mrb[0].mxu0
    %v3926 = vadd.f32 %v3290, %v3925
    %v3927 = vpop.f32.mrb[0].mxu0
    %v3928 = vadd.f32 %v3294, %v3927
    %3929 = vmatprep.mubr.bf16.mxu0 %v3212
    %3930 = vmatmul.mubr.bf16.gmra.mrb[0].mxu0 %v3211
    %v3931 = vpop.f32.mrb[0].mxu0
    %v3932 = vadd.f32 %v3290, %v3931
    %v3933 = vpop.f32.mrb[0].mxu0
    %v3934 = vadd.f32 %v3294, %v3933
    %v3935 = vpop.f32.mrb[0].mxu0
    %v3936 = vadd.f32 %v3290, %v3935
    %v3937 = vpop.f32.mrb[0].mxu0
    %v3938 = vadd.f32 %v3294, %v3937
    %3939 = vmatprep.mubr.bf16.mxu0 %v3214
    %3940 = vmatmul.mubr.bf16.gmra.mrb[0].mxu0 %v3213
    %v3941 = vpop.f32.mrb[0].mxu0
    %v3942 = vadd.f32 %v3290, %v3941
    %v3943 = vpop.f32.mrb[0].mxu0
    %v3944 = vadd.f32 %v3294, %v3943
    %v3945 = vpop.f32.mrb[0].mxu0
    %v3946 = vadd.f32 %v3290, %v3945
    %v3947 = vpop.f32.mrb[0].mxu0
    %v3948 = vadd.f32 %v3294, %v3947
    %3949 = vmatprep.mubr.bf16.mxu0 %v3216
    %3950 = vmatmul.mubr.bf16.gmra.mrb[0].mxu0 %v3215
    %v3951 = vpop.f32.mrb[0].mxu0
    %v3952 = vadd.f32 %v3290, %v3951
    %v3953 = vpop.f32.mrb[0].mxu0
    %v3954 = vadd.f32 %v3294, %v3953
    %v3955 = vpop.f32.mrb[0].mxu0
    %v3956 = vadd.f32 %v3290, %v3955
    %v3957 = vpop.f32.mrb[0].mxu0
    %v3958 = vadd.f32 %v3294, %v3957
    %3959 = vmatprep.mubr.bf16.mxu0 %v3218
    %3960 = vmatmul.mubr.bf16.gmra.mrb[0].mxu0 %v3217
    %v3961 = vpop.f32.mrb[0].mxu0
    %v3962 = vadd.f32 %v3290, %v3961
    %v3963 = vpop.f32.mrb[0].mxu0
    %v3964 = vadd.f32 %v3294, %v3963
    %v3965 = vpop.f32.mrb[0].mxu0
    %v3966 = vadd.f32 %v3290, %v3965
    %v3967 = vpop.f32.mrb[0].mxu0
    %v3968 = vadd.f32 %v3294, %v3967
    %3969 = vmatprep.mubr.bf16.mxu0 %v3220
    %3970 = vmatmul.mubr.bf16.gmra.mrb[0].mxu0 %v3219
    %v3971 = vpop.f32.mrb[0].mxu0
    %v3972 = vadd.f32 %v3290, %v3971
    %v3973 = vpop.f32.mrb[0].mxu0
    %v3974 = vadd.f32 %v3294, %v3973
    %v3975 = vpop.f32.mrb[0].mxu0
    %v3976 = vadd.f32 %v3290, %v3975
    %v3977 = vpop.f32.mrb[0].mxu0
    %v3978 = vadd.f32 %v3294, %v3977
    %3979 = vdwg.mxu0
    %3980 = vmatprep.subr.bf16.mxu0 %v3502
    %3981 = vmatpush1.bf16.msra.mxu0 %v3501
    %3982 = vmatprep.subr.bf16.mxu0 %v3506
    %3983 = vmatpush1.bf16.msra.mxu0 %v3505
    %3984 = vmatprep.subr.bf16.mxu0 %v3510
    %3985 = vmatpush1.bf16.msra.mxu0 %v3509
    %3986 = vmatprep.subr.bf16.mxu0 %v3514
    %3987 = vmatpush1.bf16.msra.mxu0 %v3513
    %3988 = vmatprep.subr.bf16.mxu0 %v3518
    %3989 = vmatpush1.bf16.msra.mxu0 %v3517
    %3990 = vmatprep.subr.bf16.mxu0 %v3522
    %3991 = vmatpush1.bf16.msra.mxu0 %v3521
    %3992 = vmatprep.subr.bf16.mxu0 %v3526
    %3993 = vmatpush1.bf16.msra.mxu0 %v3525
    %3994 = vmatprep.subr.bf16.mxu0 %v3530
    %3995 = vmatpush1.bf16.msra.mxu0 %v3529
    %3996 = vmatprep.subr.bf16.mxu0 %v3534
    %3997 = vmatpush1.bf16.msra.mxu0 %v3533
    %3998 = vmatprep.subr.bf16.mxu0 %v3538
    %3999 = vmatpush1.bf16.msra.mxu0 %v3537
    %4000 = vmatprep.subr.bf16.mxu0 %v3542
    %4001 = vmatpush1.bf16.msra.mxu0 %v3541
    %4002 = vmatprep.subr.bf16.mxu0 %v3546
    %4003 = vmatpush1.bf16.msra.mxu0 %v3545
    %4004 = vmatprep.subr.bf16.mxu0 %v3550
    %4005 = vmatpush1.bf16.msra.mxu0 %v3549
    %4006 = vmatprep.subr.bf16.mxu0 %v3554
    %4007 = vmatpush1.bf16.msra.mxu0 %v3553
    %4008 = vmatprep.subr.bf16.mxu0 %v3558
    %4009 = vmatpush1.bf16.msra.mxu0 %v3557
    %4010 = vmatprep.subr.bf16.mxu0 %v3562
    %4011 = vmatpush1.bf16.msra.mxu0 %v3561
    %4012 = vmatprep.mubr.bf16.mxu0 %v3158
    %4013 = vmatmul.mubr.bf16.gmra.mrb[0].mxu0 %v3157
    %v4014 = vpop.f32.mrb[0].mxu0
    %v4015 = vadd.f32 %v3298, %v4014
    %v4016 = vpop.f32.mrb[0].mxu0
    %v4017 = vadd.f32 %v3302, %v4016
    %v4018 = vpop.f32.mrb[0].mxu0
    %v4019 = vadd.f32 %v3298, %v4018
    %v4020 = vpop.f32.mrb[0].mxu0
    %v4021 = vadd.f32 %v3302, %v4020
    %4022 = vmatprep.mubr.bf16.mxu0 %v3160
    %4023 = vmatmul.mubr.bf16.gmra.mrb[0].mxu0 %v3159
    %v4024 = vpop.f32.mrb[0].mxu0
    %v4025 = vadd.f32 %v3298, %v4024
    %v4026 = vpop.f32.mrb[0].mxu0
    %v4027 = vadd.f32 %v3302, %v4026
    %v4028 = vpop.f32.mrb[0].mxu0
    %v4029 = vadd.f32 %v3298, %v4028
    %v4030 = vpop.f32.mrb[0].mxu0
    %v4031 = vadd.f32 %v3302, %v4030
    %4032 = vmatprep.mubr.bf16.mxu0 %v3162
    %4033 = vmatmul.mubr.bf16.gmra.mrb[0].mxu0 %v3161
    %v4034 = vpop.f32.mrb[0].mxu0
    %v4035 = vadd.f32 %v3298, %v4034
    %v4036 = vpop.f32.mrb[0].mxu0
    %v4037 = vadd.f32 %v3302, %v4036
    %v4038 = vpop.f32.mrb[0].mxu0
    %v4039 = vadd.f32 %v3298, %v4038
    %v4040 = vpop.f32.mrb[0].mxu0
    %v4041 = vadd.f32 %v3302, %v4040
    %4042 = vmatprep.mubr.bf16.mxu0 %v3164
    %4043 = vmatmul.mubr.bf16.gmra.mrb[0].mxu0 %v3163
    %v4044 = vpop.f32.mrb[0].mxu0
    %v4045 = vadd.f32 %v3298, %v4044
    %v4046 = vpop.f32.mrb[0].mxu0
    %v4047 = vadd.f32 %v3302, %v4046
    %v4048 = vpop.f32.mrb[0].mxu0
    %v4049 = vadd.f32 %v3298, %v4048
    %v4050 = vpop.f32.mrb[0].mxu0
    %v4051 = vadd.f32 %v3302, %v4050
    %4052 = vmatprep.mubr.bf16.mxu0 %v3166
    %4053 = vmatmul.mubr.bf16.gmra.mrb[0].mxu0 %v3165
    %v4054 = vpop.f32.mrb[0].mxu0
    %v4055 = vadd.f32 %v3298, %v4054
    %v4056 = vpop.f32.mrb[0].mxu0
    %v4057 = vadd.f32 %v3302, %v4056
    %v4058 = vpop.f32.mrb[0].mxu0
    %v4059 = vadd.f32 %v3298, %v4058
    %v4060 = vpop.f32.mrb[0].mxu0
    %v4061 = vadd.f32 %v3302, %v4060
    %4062 = vmatprep.mubr.bf16.mxu0 %v3168
    %4063 = vmatmul.mubr.bf16.gmra.mrb[0].mxu0 %v3167
    %v4064 = vpop.f32.mrb[0].mxu0
    %v4065 = vadd.f32 %v3298, %v4064
    %v4066 = vpop.f32.mrb[0].mxu0
    %v4067 = vadd.f32 %v3302, %v4066
    %v4068 = vpop.f32.mrb[0].mxu0
    %v4069 = vadd.f32 %v3298, %v4068
    %v4070 = vpop.f32.mrb[0].mxu0
    %v4071 = vadd.f32 %v3302, %v4070
    %4072 = vmatprep.mubr.bf16.mxu0 %v3170
    %4073 = vmatmul.mubr.bf16.gmra.mrb[0].mxu0 %v3169
    %v4074 = vpop.f32.mrb[0].mxu0
    %v4075 = vadd.f32 %v3298, %v4074
    %v4076 = vpop.f32.mrb[0].mxu0
    %v4077 = vadd.f32 %v3302, %v4076
    %v4078 = vpop.f32.mrb[0].mxu0
    %v4079 = vadd.f32 %v3298, %v4078
    %v4080 = vpop.f32.mrb[0].mxu0
    %v4081 = vadd.f32 %v3302, %v4080
    %4082 = vmatprep.mubr.bf16.mxu0 %v3172
    %4083 = vmatmul.mubr.bf16.gmra.mrb[0].mxu0 %v3171
    %v4084 = vpop.f32.mrb[0].mxu0
    %v4085 = vadd.f32 %v3298, %v4084
    %v4086 = vpop.f32.mrb[0].mxu0
    %v4087 = vadd.f32 %v3302, %v4086
    %v4088 = vpop.f32.mrb[0].mxu0
    %v4089 = vadd.f32 %v3298, %v4088
    %v4090 = vpop.f32.mrb[0].mxu0
    %v4091 = vadd.f32 %v3302, %v4090
    %4092 = vmatprep.mubr.bf16.mxu0 %v3174
    %4093 = vmatmul.mubr.bf16.gmra.mrb[0].mxu0 %v3173
    %v4094 = vpop.f32.mrb[0].mxu0
    %v4095 = vadd.f32 %v3298, %v4094
    %v4096 = vpop.f32.mrb[0].mxu0
    %v4097 = vadd.f32 %v3302, %v4096
    %v4098 = vpop.f32.mrb[0].mxu0
    %v4099 = vadd.f32 %v3298, %v4098
    %v4100 = vpop.f32.mrb[0].mxu0
    %v4101 = vadd.f32 %v3302, %v4100
    %4102 = vmatprep.mubr.bf16.mxu0 %v3176
    %4103 = vmatmul.mubr.bf16.gmra.mrb[0].mxu0 %v3175
    %v4104 = vpop.f32.mrb[0].mxu0
    %v4105 = vadd.f32 %v3298, %v4104
    %v4106 = vpop.f32.mrb[0].mxu0
    %v4107 = vadd.f32 %v3302, %v4106
    %v4108 = vpop.f32.mrb[0].mxu0
    %v4109 = vadd.f32 %v3298, %v4108
    %v4110 = vpop.f32.mrb[0].mxu0
    %v4111 = vadd.f32 %v3302, %v4110
    %4112 = vmatprep.mubr.bf16.mxu0 %v3178
    %4113 = vmatmul.mubr.bf16.gmra.mrb[0].mxu0 %v3177
    %v4114 = vpop.f32.mrb[0].mxu0
    %v4115 = vadd.f32 %v3298, %v4114
    %v4116 = vpop.f32.mrb[0].mxu0
    %v4117 = vadd.f32 %v3302, %v4116
    %v4118 = vpop.f32.mrb[0].mxu0
    %v4119 = vadd.f32 %v3298, %v4118
    %v4120 = vpop.f32.mrb[0].mxu0
    %v4121 = vadd.f32 %v3302, %v4120
    %4122 = vmatprep.mubr.bf16.mxu0 %v3180
    %4123 = vmatmul.mubr.bf16.gmra.mrb[0].mxu0 %v3179
    %v4124 = vpop.f32.mrb[0].mxu0
    %v4125 = vadd.f32 %v3298, %v4124
    %v4126 = vpop.f32.mrb[0].mxu0
    %v4127 = vadd.f32 %v3302, %v4126
    %v4128 = vpop.f32.mrb[0].mxu0
    %v4129 = vadd.f32 %v3298, %v4128
    %v4130 = vpop.f32.mrb[0].mxu0
    %v4131 = vadd.f32 %v3302, %v4130
    %4132 = vmatprep.mubr.bf16.mxu0 %v3182
    %4133 = vmatmul.mubr.bf16.gmra.mrb[0].mxu0 %v3181
    %v4134 = vpop.f32.mrb[0].mxu0
    %v4135 = vadd.f32 %v3298, %v4134
    %v4136 = vpop.f32.mrb[0].mxu0
    %v4137 = vadd.f32 %v3302, %v4136
    %v4138 = vpop.f32.mrb[0].mxu0
    %v4139 = vadd.f32 %v3298, %v4138
    %v4140 = vpop.f32.mrb[0].mxu0
    %v4141 = vadd.f32 %v3302, %v4140
    %4142 = vmatprep.mubr.bf16.mxu0 %v3184
    %4143 = vmatmul.mubr.bf16.gmra.mrb[0].mxu0 %v3183
    %v4144 = vpop.f32.mrb[0].mxu0
    %v4145 = vadd.f32 %v3298, %v4144
    %v4146 = vpop.f32.mrb[0].mxu0
    %v4147 = vadd.f32 %v3302, %v4146
    %v4148 = vpop.f32.mrb[0].mxu0
    %v4149 = vadd.f32 %v3298, %v4148
    %v4150 = vpop.f32.mrb[0].mxu0
    %v4151 = vadd.f32 %v3302, %v4150
    %4152 = vmatprep.mubr.bf16.mxu0 %v3186
    %4153 = vmatmul.mubr.bf16.gmra.mrb[0].mxu0 %v3185
    %v4154 = vpop.f32.mrb[0].mxu0
    %v4155 = vadd.f32 %v3298, %v4154
    %v4156 = vpop.f32.mrb[0].mxu0
    %v4157 = vadd.f32 %v3302, %v4156
    %v4158 = vpop.f32.mrb[0].mxu0
    %v4159 = vadd.f32 %v3298, %v4158
    %v4160 = vpop.f32.mrb[0].mxu0
    %v4161 = vadd.f32 %v3302, %v4160
    %4162 = vmatprep.mubr.bf16.mxu0 %v3188
    %4163 = vmatmul.mubr.bf16.gmra.mrb[0].mxu0 %v3187
    %v4164 = vpop.f32.mrb[0].mxu0
    %v4165 = vadd.f32 %v3298, %v4164
    %v4166 = vpop.f32.mrb[0].mxu0
    %v4167 = vadd.f32 %v3302, %v4166
    %v4168 = vpop.f32.mrb[0].mxu0
    %v4169 = vadd.f32 %v3298, %v4168
    %v4170 = vpop.f32.mrb[0].mxu0
    %v4171 = vadd.f32 %v3302, %v4170
    %4172 = vmatprep.mubr.bf16.mxu0 %v3190
    %4173 = vmatmul.mubr.bf16.gmra.mrb[0].mxu0 %v3189
    %v4174 = vpop.f32.mrb[0].mxu0
    %v4175 = vadd.f32 %v3298, %v4174
    %v4176 = vpop.f32.mrb[0].mxu0
    %v4177 = vadd.f32 %v3302, %v4176
    %v4178 = vpop.f32.mrb[0].mxu0
    %v4179 = vadd.f32 %v3298, %v4178
    %v4180 = vpop.f32.mrb[0].mxu0
    %v4181 = vadd.f32 %v3302, %v4180
    %4182 = vmatprep.mubr.bf16.mxu0 %v3192
    %4183 = vmatmul.mubr.bf16.gmra.mrb[0].mxu0 %v3191
    %v4184 = vpop.f32.mrb[0].mxu0
    %v4185 = vadd.f32 %v3298, %v4184
    %v4186 = vpop.f32.mrb[0].mxu0
    %v4187 = vadd.f32 %v3302, %v4186
    %v4188 = vpop.f32.mrb[0].mxu0
    %v4189 = vadd.f32 %v3298, %v4188
    %v4190 = vpop.f32.mrb[0].mxu0
    %v4191 = vadd.f32 %v3302, %v4190
    %4192 = vmatprep.mubr.bf16.mxu0 %v3194
    %4193 = vmatmul.mubr.bf16.gmra.mrb[0].mxu0 %v3193
    %v4194 = vpop.f32.mrb[0].mxu0
    %v4195 = vadd.f32 %v3298, %v4194
    %v4196 = vpop.f32.mrb[0].mxu0
    %v4197 = vadd.f32 %v3302, %v4196
    %v4198 = vpop.f32.mrb[0].mxu0
    %v4199 = vadd.f32 %v3298, %v4198
    %v4200 = vpop.f32.mrb[0].mxu0
    %v4201 = vadd.f32 %v3302, %v4200
    %4202 = vmatprep.mubr.bf16.mxu0 %v3196
    %4203 = vmatmul.mubr.bf16.gmra.mrb[0].mxu0 %v3195
    %v4204 = vpop.f32.mrb[0].mxu0
    %v4205 = vadd.f32 %v3298, %v4204
    %v4206 = vpop.f32.mrb[0].mxu0
    %v4207 = vadd.f32 %v3302, %v4206
    %v4208 = vpop.f32.mrb[0].mxu0
    %v4209 = vadd.f32 %v3298, %v4208
    %v4210 = vpop.f32.mrb[0].mxu0
    %v4211 = vadd.f32 %v3302, %v4210
    %4212 = vmatprep.mubr.bf16.mxu0 %v3198
    %4213 = vmatmul.mubr.bf16.gmra.mrb[0].mxu0 %v3197
    %v4214 = vpop.f32.mrb[0].mxu0
    %v4215 = vadd.f32 %v3298, %v4214
    %v4216 = vpop.f32.mrb[0].mxu0
    %v4217 = vadd.f32 %v3302, %v4216
    %v4218 = vpop.f32.mrb[0].mxu0
    %v4219 = vadd.f32 %v3298, %v4218
    %v4220 = vpop.f32.mrb[0].mxu0
    %v4221 = vadd.f32 %v3302, %v4220
    %4222 = vmatprep.mubr.bf16.mxu0 %v3200
    %4223 = vmatmul.mubr.bf16.gmra.mrb[0].mxu0 %v3199
    %v4224 = vpop.f32.mrb[0].mxu0
    %v4225 = vadd.f32 %v3298, %v4224
    %v4226 = vpop.f32.mrb[0].mxu0
    %v4227 = vadd.f32 %v3302, %v4226
    %v4228 = vpop.f32.mrb[0].mxu0
    %v4229 = vadd.f32 %v3298, %v4228
    %v4230 = vpop.f32.mrb[0].mxu0
    %v4231 = vadd.f32 %v3302, %v4230
    %4232 = vmatprep.mubr.bf16.mxu0 %v3202
    %4233 = vmatmul.mubr.bf16.gmra.mrb[0].mxu0 %v3201
    %v4234 = vpop.f32.mrb[0].mxu0
    %v4235 = vadd.f32 %v3298, %v4234
    %v4236 = vpop.f32.mrb[0].mxu0
    %v4237 = vadd.f32 %v3302, %v4236
    %v4238 = vpop.f32.mrb[0].mxu0
    %v4239 = vadd.f32 %v3298, %v4238
    %v4240 = vpop.f32.mrb[0].mxu0
    %v4241 = vadd.f32 %v3302, %v4240
    %4242 = vmatprep.mubr.bf16.mxu0 %v3204
    %4243 = vmatmul.mubr.bf16.gmra.mrb[0].mxu0 %v3203
    %v4244 = vpop.f32.mrb[0].mxu0
    %v4245 = vadd.f32 %v3298, %v4244
    %v4246 = vpop.f32.mrb[0].mxu0
    %v4247 = vadd.f32 %v3302, %v4246
    %v4248 = vpop.f32.mrb[0].mxu0
    %v4249 = vadd.f32 %v3298, %v4248
    %v4250 = vpop.f32.mrb[0].mxu0
    %v4251 = vadd.f32 %v3302, %v4250
    %4252 = vmatprep.mubr.bf16.mxu0 %v3206
    %4253 = vmatmul.mubr.bf16.gmra.mrb[0].mxu0 %v3205
    %v4254 = vpop.f32.mrb[0].mxu0
    %v4255 = vadd.f32 %v3298, %v4254
    %v4256 = vpop.f32.mrb[0].mxu0
    %v4257 = vadd.f32 %v3302, %v4256
    %v4258 = vpop.f32.mrb[0].mxu0
    %v4259 = vadd.f32 %v3298, %v4258
    %v4260 = vpop.f32.mrb[0].mxu0
    %v4261 = vadd.f32 %v3302, %v4260
    %4262 = vmatprep.mubr.bf16.mxu0 %v3208
    %4263 = vmatmul.mubr.bf16.gmra.mrb[0].mxu0 %v3207
    %v4264 = vpop.f32.mrb[0].mxu0
    %v4265 = vadd.f32 %v3298, %v4264
    %v4266 = vpop.f32.mrb[0].mxu0
    %v4267 = vadd.f32 %v3302, %v4266
    %v4268 = vpop.f32.mrb[0].mxu0
    %v4269 = vadd.f32 %v3298, %v4268
    %v4270 = vpop.f32.mrb[0].mxu0
    %v4271 = vadd.f32 %v3302, %v4270
    %4272 = vmatprep.mubr.bf16.mxu0 %v3210
    %4273 = vmatmul.mubr.bf16.gmra.mrb[0].mxu0 %v3209
    %v4274 = vpop.f32.mrb[0].mxu0
    %v4275 = vadd.f32 %v3298, %v4274
    %v4276 = vpop.f32.mrb[0].mxu0
    %v4277 = vadd.f32 %v3302, %v4276
    %v4278 = vpop.f32.mrb[0].mxu0
    %v4279 = vadd.f32 %v3298, %v4278
    %v4280 = vpop.f32.mrb[0].mxu0
    %v4281 = vadd.f32 %v3302, %v4280
    %4282 = vmatprep.mubr.bf16.mxu0 %v3212
    %4283 = vmatmul.mubr.bf16.gmra.mrb[0].mxu0 %v3211
    %v4284 = vpop.f32.mrb[0].mxu0
    %v4285 = vadd.f32 %v3298, %v4284
    %v4286 = vpop.f32.mrb[0].mxu0
    %v4287 = vadd.f32 %v3302, %v4286
    %v4288 = vpop.f32.mrb[0].mxu0
    %v4289 = vadd.f32 %v3298, %v4288
    %v4290 = vpop.f32.mrb[0].mxu0
    %v4291 = vadd.f32 %v3302, %v4290
    %4292 = vmatprep.mubr.bf16.mxu0 %v3214
    %4293 = vmatmul.mubr.bf16.gmra.mrb[0].mxu0 %v3213
    %v4294 = vpop.f32.mrb[0].mxu0
    %v4295 = vadd.f32 %v3298, %v4294
    %v4296 = vpop.f32.mrb[0].mxu0
    %v4297 = vadd.f32 %v3302, %v4296
    %v4298 = vpop.f32.mrb[0].mxu0
    %v4299 = vadd.f32 %v3298, %v4298
    %v4300 = vpop.f32.mrb[0].mxu0
    %v4301 = vadd.f32 %v3302, %v4300
    %4302 = vmatprep.mubr.bf16.mxu0 %v3216
    %4303 = vmatmul.mubr.bf16.gmra.mrb[0].mxu0 %v3215
    %v4304 = vpop.f32.mrb[0].mxu0
    %v4305 = vadd.f32 %v3298, %v4304
    %v4306 = vpop.f32.mrb[0].mxu0
    %v4307 = vadd.f32 %v3302, %v4306
    %v4308 = vpop.f32.mrb[0].mxu0
    %v4309 = vadd.f32 %v3298, %v4308
    %v4310 = vpop.f32.mrb[0].mxu0
    %v4311 = vadd.f32 %v3302, %v4310
    %4312 = vmatprep.mubr.bf16.mxu0 %v3218
    %4313 = vmatmul.mubr.bf16.gmra.mrb[0].mxu0 %v3217
    %v4314 = vpop.f32.mrb[0].mxu0
    %v4315 = vadd.f32 %v3298, %v4314
    %v4316 = vpop.f32.mrb[0].mxu0
    %v4317 = vadd.f32 %v3302, %v4316
    %v4318 = vpop.f32.mrb[0].mxu0
    %v4319 = vadd.f32 %v3298, %v4318
    %v4320 = vpop.f32.mrb[0].mxu0
    %v4321 = vadd.f32 %v3302, %v4320
    %4322 = vmatprep.mubr.bf16.mxu0 %v3220
    %4323 = vmatmul.mubr.bf16.gmra.mrb[0].mxu0 %v3219
    %v4324 = vpop.f32.mrb[0].mxu0
    %v4325 = vadd.f32 %v3298, %v4324
    %v4326 = vpop.f32.mrb[0].mxu0
    %v4327 = vadd.f32 %v3302, %v4326
    %v4328 = vpop.f32.mrb[0].mxu0
    %v4329 = vadd.f32 %v3298, %v4328
    %v4330 = vpop.f32.mrb[0].mxu0
    %v4331 = vadd.f32 %v3302, %v4330
    %4332 = vdwg.mxu0
    %v4333 = vmul.f32 %v3662, 0.01
    %v4334 = vmul.f32 %v3664, 0.01
    %v4335 = vmul.f32 %v4015, 0.01
    %v4336 = vmul.f32 %v4017, 0.01
    %v4337 = vmul.f32 %v3666, 0.01
    %v4338 = vmul.f32 %v3668, 0.01
    %v4339 = vmul.f32 %v4019, 0.01
    %v4340 = vmul.f32 %v4021, 0.01
    %v4341 = vmul.f32 %v3672, 0.01
    %v4342 = vmul.f32 %v3674, 0.01
    %v4343 = vmul.f32 %v4025, 0.01
    %v4344 = vmul.f32 %v4027, 0.01
    %v4345 = vmul.f32 %v3676, 0.01
    %v4346 = vmul.f32 %v3678, 0.01
    %v4347 = vmul.f32 %v4029, 0.01
    %v4348 = vmul.f32 %v4031, 0.01
    %v4349 = vmul.f32 %v3682, 0.01
    %v4350 = vmul.f32 %v3684, 0.01
    %v4351 = vmul.f32 %v4035, 0.01
    %v4352 = vmul.f32 %v4037, 0.01
    %v4353 = vmul.f32 %v3686, 0.01
    %v4354 = vmul.f32 %v3688, 0.01
    %v4355 = vmul.f32 %v4039, 0.01
    %v4356 = vmul.f32 %v4041, 0.01
    %v4357 = vmul.f32 %v3692, 0.01
    %v4358 = vmul.f32 %v3694, 0.01
    %v4359 = vmul.f32 %v4045, 0.01
    %v4360 = vmul.f32 %v4047, 0.01
    %v4361 = vmul.f32 %v3696, 0.01
    %v4362 = vmul.f32 %v3698, 0.01
    %v4363 = vmul.f32 %v4049, 0.01
    %v4364 = vmul.f32 %v4051, 0.01
    %v4365 = vmul.f32 %v3702, 0.01
    %v4366 = vmul.f32 %v3704, 0.01
    %v4367 = vmul.f32 %v4055, 0.01
    %v4368 = vmul.f32 %v4057, 0.01
    %v4369 = vmul.f32 %v3706, 0.01
    %v4370 = vmul.f32 %v3708, 0.01
    %v4371 = vmul.f32 %v4059, 0.01
    %v4372 = vmul.f32 %v4061, 0.01
    %v4373 = vmul.f32 %v3712, 0.01
    %v4374 = vmul.f32 %v3714, 0.01
    %v4375 = vmul.f32 %v4065, 0.01
    %v4376 = vmul.f32 %v4067, 0.01
    %v4377 = vmul.f32 %v3716, 0.01
    %v4378 = vmul.f32 %v3718, 0.01
    %v4379 = vmul.f32 %v4069, 0.01
    %v4380 = vmul.f32 %v4071, 0.01
    %v4381 = vmul.f32 %v3722, 0.01
    %v4382 = vmul.f32 %v3724, 0.01
    %v4383 = vmul.f32 %v4075, 0.01
    %v4384 = vmul.f32 %v4077, 0.01
    %v4385 = vmul.f32 %v3726, 0.01
    %v4386 = vmul.f32 %v3728, 0.01
    %v4387 = vmul.f32 %v4079, 0.01
    %v4388 = vmul.f32 %v4081, 0.01
    %v4389 = vmul.f32 %v3732, 0.01
    %v4390 = vmul.f32 %v3734, 0.01
    %v4391 = vmul.f32 %v4085, 0.01
    %v4392 = vmul.f32 %v4087, 0.01
    %v4393 = vmul.f32 %v3736, 0.01
    %v4394 = vmul.f32 %v3738, 0.01
    %v4395 = vmul.f32 %v4089, 0.01
    %v4396 = vmul.f32 %v4091, 0.01
    %v4397 = vmul.f32 %v3742, 0.01
    %v4398 = vmul.f32 %v3744, 0.01
    %v4399 = vmul.f32 %v4095, 0.01
    %v4400 = vmul.f32 %v4097, 0.01
    %v4401 = vmul.f32 %v3746, 0.01
    %v4402 = vmul.f32 %v3748, 0.01
    %v4403 = vmul.f32 %v4099, 0.01
    %v4404 = vmul.f32 %v4101, 0.01
    %v4405 = vmul.f32 %v3752, 0.01
    %v4406 = vmul.f32 %v3754, 0.01
    %v4407 = vmul.f32 %v4105, 0.01
    %v4408 = vmul.f32 %v4107, 0.01
    %v4409 = vmul.f32 %v3756, 0.01
    %v4410 = vmul.f32 %v3758, 0.01
    %v4411 = vmul.f32 %v4109, 0.01
    %v4412 = vmul.f32 %v4111, 0.01
    %v4413 = vmul.f32 %v3762, 0.01
    %v4414 = vmul.f32 %v3764, 0.01
    %v4415 = vmul.f32 %v4115, 0.01
    %v4416 = vmul.f32 %v4117, 0.01
    %v4417 = vmul.f32 %v3766, 0.01
    %v4418 = vmul.f32 %v3768, 0.01
    %v4419 = vmul.f32 %v4119, 0.01
    %v4420 = vmul.f32 %v4121, 0.01
    %v4421 = vmul.f32 %v3772, 0.01
    %v4422 = vmul.f32 %v3774, 0.01
    %v4423 = vmul.f32 %v4125, 0.01
    %v4424 = vmul.f32 %v4127, 0.01
    %v4425 = vmul.f32 %v3776, 0.01
    %v4426 = vmul.f32 %v3778, 0.01
    %v4427 = vmul.f32 %v4129, 0.01
    %v4428 = vmul.f32 %v4131, 0.01
    %v4429 = vmul.f32 %v3782, 0.01
    %v4430 = vmul.f32 %v3784, 0.01
    %v4431 = vmul.f32 %v4135, 0.01
    %v4432 = vmul.f32 %v4137, 0.01
    %v4433 = vmul.f32 %v3786, 0.01
    %v4434 = vmul.f32 %v3788, 0.01
    %v4435 = vmul.f32 %v4139, 0.01
    %v4436 = vmul.f32 %v4141, 0.01
    %v4437 = vmul.f32 %v3792, 0.01
    %v4438 = vmul.f32 %v3794, 0.01
    %v4439 = vmul.f32 %v4145, 0.01
    %v4440 = vmul.f32 %v4147, 0.01
    %v4441 = vmul.f32 %v3796, 0.01
    %v4442 = vmul.f32 %v3798, 0.01
    %v4443 = vmul.f32 %v4149, 0.01
    %v4444 = vmul.f32 %v4151, 0.01
    %v4445 = vmul.f32 %v3802, 0.01
    %v4446 = vmul.f32 %v3804, 0.01
    %v4447 = vmul.f32 %v4155, 0.01
    %v4448 = vmul.f32 %v4157, 0.01
    %v4449 = vmul.f32 %v3806, 0.01
    %v4450 = vmul.f32 %v3808, 0.01
    %v4451 = vmul.f32 %v4159, 0.01
    %v4452 = vmul.f32 %v4161, 0.01
    %v4453 = vmul.f32 %v3812, 0.01
    %v4454 = vmul.f32 %v3814, 0.01
    %v4455 = vmul.f32 %v4165, 0.01
    %v4456 = vmul.f32 %v4167, 0.01
    %v4457 = vmul.f32 %v3816, 0.01
    %v4458 = vmul.f32 %v3818, 0.01
    %v4459 = vmul.f32 %v4169, 0.01
    %v4460 = vmul.f32 %v4171, 0.01
    %v4461 = vmul.f32 %v3822, 0.01
    %v4462 = vmul.f32 %v3824, 0.01
    %v4463 = vmul.f32 %v4175, 0.01
    %v4464 = vmul.f32 %v4177, 0.01
    %v4465 = vmul.f32 %v3826, 0.01
    %v4466 = vmul.f32 %v3828, 0.01
    %v4467 = vmul.f32 %v4179, 0.01
    %v4468 = vmul.f32 %v4181, 0.01
    %v4469 = vmul.f32 %v3832, 0.01
    %v4470 = vmul.f32 %v3834, 0.01
    %v4471 = vmul.f32 %v4185, 0.01
    %v4472 = vmul.f32 %v4187, 0.01
    %v4473 = vmul.f32 %v3836, 0.01
    %v4474 = vmul.f32 %v3838, 0.01
    %v4475 = vmul.f32 %v4189, 0.01
    %v4476 = vmul.f32 %v4191, 0.01
    %v4477 = vmul.f32 %v3842, 0.01
    %v4478 = vmul.f32 %v3844, 0.01
    %v4479 = vmul.f32 %v4195, 0.01
    %v4480 = vmul.f32 %v4197, 0.01
    %v4481 = vmul.f32 %v3846, 0.01
    %v4482 = vmul.f32 %v3848, 0.01
    %v4483 = vmul.f32 %v4199, 0.01
    %v4484 = vmul.f32 %v4201, 0.01
    %v4485 = vmul.f32 %v3852, 0.01
    %v4486 = vmul.f32 %v3854, 0.01
    %v4487 = vmul.f32 %v4205, 0.01
    %v4488 = vmul.f32 %v4207, 0.01
    %v4489 = vmul.f32 %v3856, 0.01
    %v4490 = vmul.f32 %v3858, 0.01
    %v4491 = vmul.f32 %v4209, 0.01
    %v4492 = vmul.f32 %v4211, 0.01
    %v4493 = vmul.f32 %v3862, 0.01
    %v4494 = vmul.f32 %v3864, 0.01
    %v4495 = vmul.f32 %v4215, 0.01
    %v4496 = vmul.f32 %v4217, 0.01
    %v4497 = vmul.f32 %v3866, 0.01
    %v4498 = vmul.f32 %v3868, 0.01
    %v4499 = vmul.f32 %v4219, 0.01
    %v4500 = vmul.f32 %v4221, 0.01
    %v4501 = vmul.f32 %v3872, 0.01
    %v4502 = vmul.f32 %v3874, 0.01
    %v4503 = vmul.f32 %v4225, 0.01
    %v4504 = vmul.f32 %v4227, 0.01
    %v4505 = vmul.f32 %v3876, 0.01
    %v4506 = vmul.f32 %v3878, 0.01
    %v4507 = vmul.f32 %v4229, 0.01
    %v4508 = vmul.f32 %v4231, 0.01
    %v4509 = vmul.f32 %v3882, 0.01
    %v4510 = vmul.f32 %v3884, 0.01
    %v4511 = vmul.f32 %v4235, 0.01
    %v4512 = vmul.f32 %v4237, 0.01
    %v4513 = vmul.f32 %v3886, 0.01
    %v4514 = vmul.f32 %v3888, 0.01
    %v4515 = vmul.f32 %v4239, 0.01
    %v4516 = vmul.f32 %v4241, 0.01
    %v4517 = vmul.f32 %v3892, 0.01
    %v4518 = vmul.f32 %v3894, 0.01
    %v4519 = vmul.f32 %v4245, 0.01
    %v4520 = vmul.f32 %v4247, 0.01
    %v4521 = vmul.f32 %v3896, 0.01
    %v4522 = vmul.f32 %v3898, 0.01
    %v4523 = vmul.f32 %v4249, 0.01
    %v4524 = vmul.f32 %v4251, 0.01
    %v4525 = vmul.f32 %v3902, 0.01
    %v4526 = vmul.f32 %v3904, 0.01
    %v4527 = vmul.f32 %v4255, 0.01
    %v4528 = vmul.f32 %v4257, 0.01
    %v4529 = vmul.f32 %v3906, 0.01
    %v4530 = vmul.f32 %v3908, 0.01
    %v4531 = vmul.f32 %v4259, 0.01
    %v4532 = vmul.f32 %v4261, 0.01
    %v4533 = vmul.f32 %v3912, 0.01
    %v4534 = vmul.f32 %v3914, 0.01
    %v4535 = vmul.f32 %v4265, 0.01
    %v4536 = vmul.f32 %v4267, 0.01
    %v4537 = vmul.f32 %v3916, 0.01
    %v4538 = vmul.f32 %v3918, 0.01
    %v4539 = vmul.f32 %v4269, 0.01
    %v4540 = vmul.f32 %v4271, 0.01
    %v4541 = vmul.f32 %v3922, 0.01
    %v4542 = vmul.f32 %v3924, 0.01
    %v4543 = vmul.f32 %v4275, 0.01
    %v4544 = vmul.f32 %v4277, 0.01
    %v4545 = vmul.f32 %v3926, 0.01
    %v4546 = vmul.f32 %v3928, 0.01
    %v4547 = vmul.f32 %v4279, 0.01
    %v4548 = vmul.f32 %v4281, 0.01
    %v4549 = vmul.f32 %v3932, 0.01
    %v4550 = vmul.f32 %v3934, 0.01
    %v4551 = vmul.f32 %v4285, 0.01
    %v4552 = vmul.f32 %v4287, 0.01
    %v4553 = vmul.f32 %v3936, 0.01
    %v4554 = vmul.f32 %v3938, 0.01
    %v4555 = vmul.f32 %v4289, 0.01
    %v4556 = vmul.f32 %v4291, 0.01
    %v4557 = vmul.f32 %v3942, 0.01
    %v4558 = vmul.f32 %v3944, 0.01
    %v4559 = vmul.f32 %v4295, 0.01
    %v4560 = vmul.f32 %v4297, 0.01
    %v4561 = vmul.f32 %v3946, 0.01
    %v4562 = vmul.f32 %v3948, 0.01
    %v4563 = vmul.f32 %v4299, 0.01
    %v4564 = vmul.f32 %v4301, 0.01
    %v4565 = vmul.f32 %v3952, 0.01
    %v4566 = vmul.f32 %v3954, 0.01
    %v4567 = vmul.f32 %v4305, 0.01
    %v4568 = vmul.f32 %v4307, 0.01
    %v4569 = vmul.f32 %v3956, 0.01
    %v4570 = vmul.f32 %v3958, 0.01
    %v4571 = vmul.f32 %v4309, 0.01
    %v4572 = vmul.f32 %v4311, 0.01
    %v4573 = vmul.f32 %v3962, 0.01
    %v4574 = vmul.f32 %v3964, 0.01
    %v4575 = vmul.f32 %v4315, 0.01
    %v4576 = vmul.f32 %v4317, 0.01
    %v4577 = vmul.f32 %v3966, 0.01
    %v4578 = vmul.f32 %v3968, 0.01
    %v4579 = vmul.f32 %v4319, 0.01
    %v4580 = vmul.f32 %v4321, 0.01
    %v4581 = vmul.f32 %v3972, 0.01
    %v4582 = vmul.f32 %v3974, 0.01
    %v4583 = vmul.f32 %v4325, 0.01
    %v4584 = vmul.f32 %v4327, 0.01
    %v4585 = vmul.f32 %v3976, 0.01
    %v4586 = vmul.f32 %v3978, 0.01
    %v4587 = vmul.f32 %v4329, 0.01
    %v4588 = vmul.f32 %v4331, 0.01
    %v4589 = vmax.f32 %v3662, %v4333
    %v4590 = vmax.f32 %v3664, %v4334
    %v4591 = vmax.f32 %v4015, %v4335
    %v4592 = vmax.f32 %v4017, %v4336
    %v4593 = vmax.f32 %v3666, %v4337
    %v4594 = vmax.f32 %v3668, %v4338
    %v4595 = vmax.f32 %v4019, %v4339
    %v4596 = vmax.f32 %v4021, %v4340
    %v4597 = vmax.f32 %v3672, %v4341
    %v4598 = vmax.f32 %v3674, %v4342
    %v4599 = vmax.f32 %v4025, %v4343
    %v4600 = vmax.f32 %v4027, %v4344
    %v4601 = vmax.f32 %v3676, %v4345
    %v4602 = vmax.f32 %v3678, %v4346
    %v4603 = vmax.f32 %v4029, %v4347
    %v4604 = vmax.f32 %v4031, %v4348
    %v4605 = vmax.f32 %v3682, %v4349
    %v4606 = vmax.f32 %v3684, %v4350
    %v4607 = vmax.f32 %v4035, %v4351
    %v4608 = vmax.f32 %v4037, %v4352
    %v4609 = vmax.f32 %v3686, %v4353
    %v4610 = vmax.f32 %v3688, %v4354
    %v4611 = vmax.f32 %v4039, %v4355
    %v4612 = vmax.f32 %v4041, %v4356
    %v4613 = vmax.f32 %v3692, %v4357
    %v4614 = vmax.f32 %v3694, %v4358
    %v4615 = vmax.f32 %v4045, %v4359
    %v4616 = vmax.f32 %v4047, %v4360
    %v4617 = vmax.f32 %v3696, %v4361
    %v4618 = vmax.f32 %v3698, %v4362
    %v4619 = vmax.f32 %v4049, %v4363
    %v4620 = vmax.f32 %v4051, %v4364
    %v4621 = vmax.f32 %v3702, %v4365
    %v4622 = vmax.f32 %v3704, %v4366
    %v4623 = vmax.f32 %v4055, %v4367
    %v4624 = vmax.f32 %v4057, %v4368
    %v4625 = vmax.f32 %v3706, %v4369
    %v4626 = vmax.f32 %v3708, %v4370
    %v4627 = vmax.f32 %v4059, %v4371
    %v4628 = vmax.f32 %v4061, %v4372
    %v4629 = vmax.f32 %v3712, %v4373
    %v4630 = vmax.f32 %v3714, %v4374
    %v4631 = vmax.f32 %v4065, %v4375
    %v4632 = vmax.f32 %v4067, %v4376
    %v4633 = vmax.f32 %v3716, %v4377
    %v4634 = vmax.f32 %v3718, %v4378
    %v4635 = vmax.f32 %v4069, %v4379
    %v4636 = vmax.f32 %v4071, %v4380
    %v4637 = vmax.f32 %v3722, %v4381
    %v4638 = vmax.f32 %v3724, %v4382
    %v4639 = vmax.f32 %v4075, %v4383
    %v4640 = vmax.f32 %v4077, %v4384
    %v4641 = vmax.f32 %v3726, %v4385
    %v4642 = vmax.f32 %v3728, %v4386
    %v4643 = vmax.f32 %v4079, %v4387
    %v4644 = vmax.f32 %v4081, %v4388
    %v4645 = vmax.f32 %v3732, %v4389
    %v4646 = vmax.f32 %v3734, %v4390
    %v4647 = vmax.f32 %v4085, %v4391
    %v4648 = vmax.f32 %v4087, %v4392
    %v4649 = vmax.f32 %v3736, %v4393
    %v4650 = vmax.f32 %v3738, %v4394
    %v4651 = vmax.f32 %v4089, %v4395
    %v4652 = vmax.f32 %v4091, %v4396
    %v4653 = vmax.f32 %v3742, %v4397
    %v4654 = vmax.f32 %v3744, %v4398
    %v4655 = vmax.f32 %v4095, %v4399
    %v4656 = vmax.f32 %v4097, %v4400
    %v4657 = vmax.f32 %v3746, %v4401
    %v4658 = vmax.f32 %v3748, %v4402
    %v4659 = vmax.f32 %v4099, %v4403
    %v4660 = vmax.f32 %v4101, %v4404
    %v4661 = vmax.f32 %v3752, %v4405
    %v4662 = vmax.f32 %v3754, %v4406
    %v4663 = vmax.f32 %v4105, %v4407
    %v4664 = vmax.f32 %v4107, %v4408
    %v4665 = vmax.f32 %v3756, %v4409
    %v4666 = vmax.f32 %v3758, %v4410
    %v4667 = vmax.f32 %v4109, %v4411
    %v4668 = vmax.f32 %v4111, %v4412
    %v4669 = vmax.f32 %v3762, %v4413
    %v4670 = vmax.f32 %v3764, %v4414
    %v4671 = vmax.f32 %v4115, %v4415
    %v4672 = vmax.f32 %v4117, %v4416
    %v4673 = vmax.f32 %v3766, %v4417
    %v4674 = vmax.f32 %v3768, %v4418
    %v4675 = vmax.f32 %v4119, %v4419
    %v4676 = vmax.f32 %v4121, %v4420
    %v4677 = vmax.f32 %v3772, %v4421
    %v4678 = vmax.f32 %v3774, %v4422
    %v4679 = vmax.f32 %v4125, %v4423
    %v4680 = vmax.f32 %v4127, %v4424
    %v4681 = vmax.f32 %v3776, %v4425
    %v4682 = vmax.f32 %v3778, %v4426
    %v4683 = vmax.f32 %v4129, %v4427
    %v4684 = vmax.f32 %v4131, %v4428
    %v4685 = vmax.f32 %v3782, %v4429
    %v4686 = vmax.f32 %v3784, %v4430
    %v4687 = vmax.f32 %v4135, %v4431
    %v4688 = vmax.f32 %v4137, %v4432
    %v4689 = vmax.f32 %v3786, %v4433
    %v4690 = vmax.f32 %v3788, %v4434
    %v4691 = vmax.f32 %v4139, %v4435
    %v4692 = vmax.f32 %v4141, %v4436
    %v4693 = vmax.f32 %v3792, %v4437
    %v4694 = vmax.f32 %v3794, %v4438
    %v4695 = vmax.f32 %v4145, %v4439
    %v4696 = vmax.f32 %v4147, %v4440
    %v4697 = vmax.f32 %v3796, %v4441
    %v4698 = vmax.f32 %v3798, %v4442
    %v4699 = vmax.f32 %v4149, %v4443
    %v4700 = vmax.f32 %v4151, %v4444
    %v4701 = vmax.f32 %v3802, %v4445
    %v4702 = vmax.f32 %v3804, %v4446
    %v4703 = vmax.f32 %v4155, %v4447
    %v4704 = vmax.f32 %v4157, %v4448
    %v4705 = vmax.f32 %v3806, %v4449
    %v4706 = vmax.f32 %v3808, %v4450
    %v4707 = vmax.f32 %v4159, %v4451
    %v4708 = vmax.f32 %v4161, %v4452
    %v4709 = vmax.f32 %v3812, %v4453
    %v4710 = vmax.f32 %v3814, %v4454
    %v4711 = vmax.f32 %v4165, %v4455
    %v4712 = vmax.f32 %v4167, %v4456
    %v4713 = vmax.f32 %v3816, %v4457
    %v4714 = vmax.f32 %v3818, %v4458
    %v4715 = vmax.f32 %v4169, %v4459
    %v4716 = vmax.f32 %v4171, %v4460
    %v4717 = vmax.f32 %v3822, %v4461
    %v4718 = vmax.f32 %v3824, %v4462
    %v4719 = vmax.f32 %v4175, %v4463
    %v4720 = vmax.f32 %v4177, %v4464
    %v4721 = vmax.f32 %v3826, %v4465
    %v4722 = vmax.f32 %v3828, %v4466
    %v4723 = vmax.f32 %v4179, %v4467
    %v4724 = vmax.f32 %v4181, %v4468
    %v4725 = vmax.f32 %v3832, %v4469
    %v4726 = vmax.f32 %v3834, %v4470
    %v4727 = vmax.f32 %v4185, %v4471
    %v4728 = vmax.f32 %v4187, %v4472
    %v4729 = vmax.f32 %v3836, %v4473
    %v4730 = vmax.f32 %v3838, %v4474
    %v4731 = vmax.f32 %v4189, %v4475
    %v4732 = vmax.f32 %v4191, %v4476
    %v4733 = vmax.f32 %v3842, %v4477
    %v4734 = vmax.f32 %v3844, %v4478
    %v4735 = vmax.f32 %v4195, %v4479
    %v4736 = vmax.f32 %v4197, %v4480
    %v4737 = vmax.f32 %v3846, %v4481
    %v4738 = vmax.f32 %v3848, %v4482
    %v4739 = vmax.f32 %v4199, %v4483
    %v4740 = vmax.f32 %v4201, %v4484
    %v4741 = vmax.f32 %v3852, %v4485
    %v4742 = vmax.f32 %v3854, %v4486
    %v4743 = vmax.f32 %v4205, %v4487
    %v4744 = vmax.f32 %v4207, %v4488
    %v4745 = vmax.f32 %v3856, %v4489
    %v4746 = vmax.f32 %v3858, %v4490
    %v4747 = vmax.f32 %v4209, %v4491
    %v4748 = vmax.f32 %v4211, %v4492
    %v4749 = vmax.f32 %v3862, %v4493
    %v4750 = vmax.f32 %v3864, %v4494
    %v4751 = vmax.f32 %v4215, %v4495
    %v4752 = vmax.f32 %v4217, %v4496
    %v4753 = vmax.f32 %v3866, %v4497
    %v4754 = vmax.f32 %v3868, %v4498
    %v4755 = vmax.f32 %v4219, %v4499
    %v4756 = vmax.f32 %v4221, %v4500
    %v4757 = vmax.f32 %v3872, %v4501
    %v4758 = vmax.f32 %v3874, %v4502
    %v4759 = vmax.f32 %v4225, %v4503
    %v4760 = vmax.f32 %v4227, %v4504
    %v4761 = vmax.f32 %v3876, %v4505
    %v4762 = vmax.f32 %v3878, %v4506
    %v4763 = vmax.f32 %v4229, %v4507
    %v4764 = vmax.f32 %v4231, %v4508
    %v4765 = vmax.f32 %v3882, %v4509
    %v4766 = vmax.f32 %v3884, %v4510
    %v4767 = vmax.f32 %v4235, %v4511
    %v4768 = vmax.f32 %v4237, %v4512
    %v4769 = vmax.f32 %v3886, %v4513
    %v4770 = vmax.f32 %v3888, %v4514
    %v4771 = vmax.f32 %v4239, %v4515
    %v4772 = vmax.f32 %v4241, %v4516
    %v4773 = vmax.f32 %v3892, %v4517
    %v4774 = vmax.f32 %v3894, %v4518
    %v4775 = vmax.f32 %v4245, %v4519
    %v4776 = vmax.f32 %v4247, %v4520
    %v4777 = vmax.f32 %v3896, %v4521
    %v4778 = vmax.f32 %v3898, %v4522
    %v4779 = vmax.f32 %v4249, %v4523
    %v4780 = vmax.f32 %v4251, %v4524
    %v4781 = vmax.f32 %v3902, %v4525
    %v4782 = vmax.f32 %v3904, %v4526
    %v4783 = vmax.f32 %v4255, %v4527
    %v4784 = vmax.f32 %v4257, %v4528
    %v4785 = vmax.f32 %v3906, %v4529
    %v4786 = vmax.f32 %v3908, %v4530
    %v4787 = vmax.f32 %v4259, %v4531
    %v4788 = vmax.f32 %v4261, %v4532
    %v4789 = vmax.f32 %v3912, %v4533
    %v4790 = vmax.f32 %v3914, %v4534
    %v4791 = vmax.f32 %v4265, %v4535
    %v4792 = vmax.f32 %v4267, %v4536
    %v4793 = vmax.f32 %v3916, %v4537
    %v4794 = vmax.f32 %v3918, %v4538
    %v4795 = vmax.f32 %v4269, %v4539
    %v4796 = vmax.f32 %v4271, %v4540
    %v4797 = vmax.f32 %v3922, %v4541
    %v4798 = vmax.f32 %v3924, %v4542
    %v4799 = vmax.f32 %v4275, %v4543
    %v4800 = vmax.f32 %v4277, %v4544
    %v4801 = vmax.f32 %v3926, %v4545
    %v4802 = vmax.f32 %v3928, %v4546
    %v4803 = vmax.f32 %v4279, %v4547
    %v4804 = vmax.f32 %v4281, %v4548
    %v4805 = vmax.f32 %v3932, %v4549
    %v4806 = vmax.f32 %v3934, %v4550
    %v4807 = vmax.f32 %v4285, %v4551
    %v4808 = vmax.f32 %v4287, %v4552
    %v4809 = vmax.f32 %v3936, %v4553
    %v4810 = vmax.f32 %v3938, %v4554
    %v4811 = vmax.f32 %v4289, %v4555
    %v4812 = vmax.f32 %v4291, %v4556
    %v4813 = vmax.f32 %v3942, %v4557
    %v4814 = vmax.f32 %v3944, %v4558
    %v4815 = vmax.f32 %v4295, %v4559
    %v4816 = vmax.f32 %v4297, %v4560
    %v4817 = vmax.f32 %v3946, %v4561
    %v4818 = vmax.f32 %v3948, %v4562
    %v4819 = vmax.f32 %v4299, %v4563
    %v4820 = vmax.f32 %v4301, %v4564
    %v4821 = vmax.f32 %v3952, %v4565
    %v4822 = vmax.f32 %v3954, %v4566
    %v4823 = vmax.f32 %v4305, %v4567
    %v4824 = vmax.f32 %v4307, %v4568
    %v4825 = vmax.f32 %v3956, %v4569
    %v4826 = vmax.f32 %v3958, %v4570
    %v4827 = vmax.f32 %v4309, %v4571
    %v4828 = vmax.f32 %v4311, %v4572
    %v4829 = vmax.f32 %v3962, %v4573
    %v4830 = vmax.f32 %v3964, %v4574
    %v4831 = vmax.f32 %v4315, %v4575
    %v4832 = vmax.f32 %v4317, %v4576
    %v4833 = vmax.f32 %v3966, %v4577
    %v4834 = vmax.f32 %v3968, %v4578
    %v4835 = vmax.f32 %v4319, %v4579
    %v4836 = vmax.f32 %v4321, %v4580
    %v4837 = vmax.f32 %v3972, %v4581
    %v4838 = vmax.f32 %v3974, %v4582
    %v4839 = vmax.f32 %v4325, %v4583
    %v4840 = vmax.f32 %v4327, %v4584
    %v4841 = vmax.f32 %v3976, %v4585
    %v4842 = vmax.f32 %v3978, %v4586
    %v4843 = vmax.f32 %v4329, %v4587
    %v4844 = vmax.f32 %v4331, %v4588
    %v4845 = vpack.c.bf16 %v4593, %v4589
    %v4846 = vpack.c.bf16 %v4594, %v4590
    %v4847 = vpack.c.bf16 %v4595, %v4591
    %v4848 = vpack.c.bf16 %v4596, %v4592
    %v4849 = vpack.c.bf16 %v4601, %v4597
    %v4850 = vpack.c.bf16 %v4602, %v4598
    %v4851 = vpack.c.bf16 %v4603, %v4599
    %v4852 = vpack.c.bf16 %v4604, %v4600
    %v4853 = vpack.c.bf16 %v4609, %v4605
    %v4854 = vpack.c.bf16 %v4610, %v4606
    %v4855 = vpack.c.bf16 %v4611, %v4607
    %v4856 = vpack.c.bf16 %v4612, %v4608
    %v4857 = vpack.c.bf16 %v4617, %v4613
    %v4858 = vpack.c.bf16 %v4618, %v4614
    %v4859 = vpack.c.bf16 %v4619, %v4615
    %v4860 = vpack.c.bf16 %v4620, %v4616
    %v4861 = vpack.c.bf16 %v4625, %v4621
    %v4862 = vpack.c.bf16 %v4626, %v4622
    %v4863 = vpack.c.bf16 %v4627, %v4623
    %v4864 = vpack.c.bf16 %v4628, %v4624
    %v4865 = vpack.c.bf16 %v4633, %v4629
    %v4866 = vpack.c.bf16 %v4634, %v4630
    %v4867 = vpack.c.bf16 %v4635, %v4631
    %v4868 = vpack.c.bf16 %v4636, %v4632
    %v4869 = vpack.c.bf16 %v4641, %v4637
    %v4870 = vpack.c.bf16 %v4642, %v4638
    %v4871 = vpack.c.bf16 %v4643, %v4639
    %v4872 = vpack.c.bf16 %v4644, %v4640
    %v4873 = vpack.c.bf16 %v4649, %v4645
    %v4874 = vpack.c.bf16 %v4650, %v4646
    %v4875 = vpack.c.bf16 %v4651, %v4647
    %v4876 = vpack.c.bf16 %v4652, %v4648
    %v4877 = vpack.c.bf16 %v4657, %v4653
    %v4878 = vpack.c.bf16 %v4658, %v4654
    %v4879 = vpack.c.bf16 %v4659, %v4655
    %v4880 = vpack.c.bf16 %v4660, %v4656
    %v4881 = vpack.c.bf16 %v4665, %v4661
    %v4882 = vpack.c.bf16 %v4666, %v4662
    %v4883 = vpack.c.bf16 %v4667, %v4663
    %v4884 = vpack.c.bf16 %v4668, %v4664
    %v4885 = vpack.c.bf16 %v4673, %v4669
    %v4886 = vpack.c.bf16 %v4674, %v4670
    %v4887 = vpack.c.bf16 %v4675, %v4671
    %v4888 = vpack.c.bf16 %v4676, %v4672
    %v4889 = vpack.c.bf16 %v4681, %v4677
    %v4890 = vpack.c.bf16 %v4682, %v4678
    %v4891 = vpack.c.bf16 %v4683, %v4679
    %v4892 = vpack.c.bf16 %v4684, %v4680
    %v4893 = vpack.c.bf16 %v4689, %v4685
    %v4894 = vpack.c.bf16 %v4690, %v4686
    %v4895 = vpack.c.bf16 %v4691, %v4687
    %v4896 = vpack.c.bf16 %v4692, %v4688
    %v4897 = vpack.c.bf16 %v4697, %v4693
    %v4898 = vpack.c.bf16 %v4698, %v4694
    %v4899 = vpack.c.bf16 %v4699, %v4695
    %v4900 = vpack.c.bf16 %v4700, %v4696
    %v4901 = vpack.c.bf16 %v4705, %v4701
    %v4902 = vpack.c.bf16 %v4706, %v4702
    %v4903 = vpack.c.bf16 %v4707, %v4703
    %v4904 = vpack.c.bf16 %v4708, %v4704
    %v4905 = vpack.c.bf16 %v4713, %v4709
    %v4906 = vpack.c.bf16 %v4714, %v4710
    %v4907 = vpack.c.bf16 %v4715, %v4711
    %v4908 = vpack.c.bf16 %v4716, %v4712
    %v4909 = vpack.c.bf16 %v4721, %v4717
    %v4910 = vpack.c.bf16 %v4722, %v4718
    %v4911 = vpack.c.bf16 %v4723, %v4719
    %v4912 = vpack.c.bf16 %v4724, %v4720
    %v4913 = vpack.c.bf16 %v4729, %v4725
    %v4914 = vpack.c.bf16 %v4730, %v4726
    %v4915 = vpack.c.bf16 %v4731, %v4727
    %v4916 = vpack.c.bf16 %v4732, %v4728
    %v4917 = vpack.c.bf16 %v4737, %v4733
    %v4918 = vpack.c.bf16 %v4738, %v4734
    %v4919 = vpack.c.bf16 %v4739, %v4735
    %v4920 = vpack.c.bf16 %v4740, %v4736
    %v4921 = vpack.c.bf16 %v4745, %v4741
    %v4922 = vpack.c.bf16 %v4746, %v4742
    %v4923 = vpack.c.bf16 %v4747, %v4743
    %v4924 = vpack.c.bf16 %v4748, %v4744
    %v4925 = vpack.c.bf16 %v4753, %v4749
    %v4926 = vpack.c.bf16 %v4754, %v4750
    %v4927 = vpack.c.bf16 %v4755, %v4751
    %v4928 = vpack.c.bf16 %v4756, %v4752
    %v4929 = vpack.c.bf16 %v4761, %v4757
    %v4930 = vpack.c.bf16 %v4762, %v4758
    %v4931 = vpack.c.bf16 %v4763, %v4759
    %v4932 = vpack.c.bf16 %v4764, %v4760
    %v4933 = vpack.c.bf16 %v4769, %v4765
    %v4934 = vpack.c.bf16 %v4770, %v4766
    %v4935 = vpack.c.bf16 %v4771, %v4767
    %v4936 = vpack.c.bf16 %v4772, %v4768
    %v4937 = vpack.c.bf16 %v4777, %v4773
    %v4938 = vpack.c.bf16 %v4778, %v4774
    %v4939 = vpack.c.bf16 %v4779, %v4775
    %v4940 = vpack.c.bf16 %v4780, %v4776
    %v4941 = vpack.c.bf16 %v4785, %v4781
    %v4942 = vpack.c.bf16 %v4786, %v4782
    %v4943 = vpack.c.bf16 %v4787, %v4783
    %v4944 = vpack.c.bf16 %v4788, %v4784
    %v4945 = vpack.c.bf16 %v4793, %v4789
    %v4946 = vpack.c.bf16 %v4794, %v4790
    %v4947 = vpack.c.bf16 %v4795, %v4791
    %v4948 = vpack.c.bf16 %v4796, %v4792
    %v4949 = vpack.c.bf16 %v4801, %v4797
    %v4950 = vpack.c.bf16 %v4802, %v4798
    %v4951 = vpack.c.bf16 %v4803, %v4799
    %v4952 = vpack.c.bf16 %v4804, %v4800
    %v4953 = vpack.c.bf16 %v4809, %v4805
    %v4954 = vpack.c.bf16 %v4810, %v4806
    %v4955 = vpack.c.bf16 %v4811, %v4807
    %v4956 = vpack.c.bf16 %v4812, %v4808
    %v4957 = vpack.c.bf16 %v4817, %v4813
    %v4958 = vpack.c.bf16 %v4818, %v4814
    %v4959 = vpack.c.bf16 %v4819, %v4815
    %v4960 = vpack.c.bf16 %v4820, %v4816
    %v4961 = vpack.c.bf16 %v4825, %v4821
    %v4962 = vpack.c.bf16 %v4826, %v4822
    %v4963 = vpack.c.bf16 %v4827, %v4823
    %v4964 = vpack.c.bf16 %v4828, %v4824
    %v4965 = vpack.c.bf16 %v4833, %v4829
    %v4966 = vpack.c.bf16 %v4834, %v4830
    %v4967 = vpack.c.bf16 %v4835, %v4831
    %v4968 = vpack.c.bf16 %v4836, %v4832
    %v4969 = vpack.c.bf16 %v4841, %v4837
    %v4970 = vpack.c.bf16 %v4842, %v4838
    %v4971 = vpack.c.bf16 %v4843, %v4839
    %v4972 = vpack.c.bf16 %v4844, %v4840
    %v4973 = vld [vmem:[#allocation8] sm:$0xff]
    %v4974 = vld [vmem:[#allocation8 + $0x8] sm:$0xff]
    %v4975 = vld [vmem:[#allocation8 + $0x10] sm:$0xff]
    %v4976 = vld [vmem:[#allocation8 + $0x18] sm:$0xff]
    %v4977 = vld [vmem:[#allocation8 + $0x20] sm:$0xff]
    %v4978 = vld [vmem:[#allocation8 + $0x28] sm:$0xff]
    %v4979 = vld [vmem:[#allocation8 + $0x30] sm:$0xff]
    %v4980 = vld [vmem:[#allocation8 + $0x38] sm:$0xff]
    %v4981 = vld [vmem:[#allocation8 + $0x40] sm:$0xff]
    %v4982 = vld [vmem:[#allocation8 + $0x48] sm:$0xff]
    %v4983 = vld [vmem:[#allocation8 + $0x50] sm:$0xff]
    %v4984 = vld [vmem:[#allocation8 + $0x58] sm:$0xff]
    %v4985 = vld [vmem:[#allocation8 + $0x60] sm:$0xff]
    %v4986 = vld [vmem:[#allocation8 + $0x68] sm:$0xff]
    %v4987 = vld [vmem:[#allocation8 + $0x70] sm:$0xff]
    %v4988 = vld [vmem:[#allocation8 + $0x78] sm:$0xff]
    %v4989 = vld [vmem:[#allocation8 + $0x80] sm:$0xff]
    %v4990 = vld [vmem:[#allocation8 + $0x88] sm:$0xff]
    %v4991 = vld [vmem:[#allocation8 + $0x90] sm:$0xff]
    %v4992 = vld [vmem:[#allocation8 + $0x98] sm:$0xff]
    %v4993 = vld [vmem:[#allocation8 + $0xa0] sm:$0xff]
    %v4994 = vld [vmem:[#allocation8 + $0xa8] sm:$0xff]
    %v4995 = vld [vmem:[#allocation8 + $0xb0] sm:$0xff]
    %v4996 = vld [vmem:[#allocation8 + $0xb8] sm:$0xff]
    %v4997 = vld [vmem:[#allocation8 + $0xc0] sm:$0xff]
    %v4998 = vld [vmem:[#allocation8 + $0xc8] sm:$0xff]
    %v4999 = vld [vmem:[#allocation8 + $0xd0] sm:$0xff]
    %v5000 = vld [vmem:[#allocation8 + $0xd8] sm:$0xff]
    %v5001 = vld [vmem:[#allocation8 + $0xe0] sm:$0xff]
    %v5002 = vld [vmem:[#allocation8 + $0xe8] sm:$0xff]
    %v5003 = vld [vmem:[#allocation8 + $0xf0] sm:$0xff]
    %v5004 = vld [vmem:[#allocation8 + $0xf8] sm:$0xff]
    %v5005 = vld [vmem:[#allocation8 + $0x100] sm:$0xff]
    %v5006 = vld [vmem:[#allocation8 + $0x108] sm:$0xff]
    %v5007 = vld [vmem:[#allocation8 + $0x110] sm:$0xff]
    %v5008 = vld [vmem:[#allocation8 + $0x118] sm:$0xff]
    %v5009 = vld [vmem:[#allocation8 + $0x120] sm:$0xff]
    %v5010 = vld [vmem:[#allocation8 + $0x128] sm:$0xff]
    %v5011 = vld [vmem:[#allocation8 + $0x130] sm:$0xff]
    %v5012 = vld [vmem:[#allocation8 + $0x138] sm:$0xff]
    %v5013 = vld [vmem:[#allocation8 + $0x140] sm:$0xff]
    %v5014 = vld [vmem:[#allocation8 + $0x148] sm:$0xff]
    %v5015 = vld [vmem:[#allocation8 + $0x150] sm:$0xff]
    %v5016 = vld [vmem:[#allocation8 + $0x158] sm:$0xff]
    %v5017 = vld [vmem:[#allocation8 + $0x160] sm:$0xff]
    %v5018 = vld [vmem:[#allocation8 + $0x168] sm:$0xff]
    %v5019 = vld [vmem:[#allocation8 + $0x170] sm:$0xff]
    %v5020 = vld [vmem:[#allocation8 + $0x178] sm:$0xff]
    %v5021 = vld [vmem:[#allocation8 + $0x180] sm:$0xff]
    %v5022 = vld [vmem:[#allocation8 + $0x188] sm:$0xff]
    %v5023 = vld [vmem:[#allocation8 + $0x190] sm:$0xff]
    %v5024 = vld [vmem:[#allocation8 + $0x198] sm:$0xff]
    %v5025 = vld [vmem:[#allocation8 + $0x1a0] sm:$0xff]
    %v5026 = vld [vmem:[#allocation8 + $0x1a8] sm:$0xff]
    %v5027 = vld [vmem:[#allocation8 + $0x1b0] sm:$0xff]
    %v5028 = vld [vmem:[#allocation8 + $0x1b8] sm:$0xff]
    %v5029 = vld [vmem:[#allocation8 + $0x1c0] sm:$0xff]
    %v5030 = vld [vmem:[#allocation8 + $0x1c8] sm:$0xff]
    %v5031 = vld [vmem:[#allocation8 + $0x1d0] sm:$0xff]
    %v5032 = vld [vmem:[#allocation8 + $0x1d8] sm:$0xff]
    %v5033 = vld [vmem:[#allocation8 + $0x1e0] sm:$0xff]
    %v5034 = vld [vmem:[#allocation8 + $0x1e8] sm:$0xff]
    %v5035 = vld [vmem:[#allocation8 + $0x1f0] sm:$0xff]
    %v5036 = vld [vmem:[#allocation8 + $0x1f8] sm:$0xff]
    %v5037 = vld [vmem:[#allocation8 + $0x200] sm:$0xff]
    %v5038 = vld [vmem:[#allocation8 + $0x208] sm:$0xff]
    %v5039 = vld [vmem:[#allocation8 + $0x210] sm:$0xff]
    %v5040 = vld [vmem:[#allocation8 + $0x218] sm:$0xff]
    %v5041 = vld [vmem:[#allocation8 + $0x220] sm:$0xff]
    %v5042 = vld [vmem:[#allocation8 + $0x228] sm:$0xff]
    %v5043 = vld [vmem:[#allocation8 + $0x230] sm:$0xff]
    %v5044 = vld [vmem:[#allocation8 + $0x238] sm:$0xff]
    %v5045 = vld [vmem:[#allocation8 + $0x240] sm:$0xff]
    %v5046 = vld [vmem:[#allocation8 + $0x248] sm:$0xff]
    %v5047 = vld [vmem:[#allocation8 + $0x250] sm:$0xff]
    %v5048 = vld [vmem:[#allocation8 + $0x258] sm:$0xff]
    %v5049 = vld [vmem:[#allocation8 + $0x260] sm:$0xff]
    %v5050 = vld [vmem:[#allocation8 + $0x268] sm:$0xff]
    %v5051 = vld [vmem:[#allocation8 + $0x270] sm:$0xff]
    %v5052 = vld [vmem:[#allocation8 + $0x278] sm:$0xff]
    %v5053 = vld [vmem:[#allocation8 + $0x280] sm:$0xff]
    %v5054 = vld [vmem:[#allocation8 + $0x288] sm:$0xff]
    %v5055 = vld [vmem:[#allocation8 + $0x290] sm:$0xff]
    %v5056 = vld [vmem:[#allocation8 + $0x298] sm:$0xff]
    %v5057 = vld [vmem:[#allocation8 + $0x2a0] sm:$0xff]
    %v5058 = vld [vmem:[#allocation8 + $0x2a8] sm:$0xff]
    %v5059 = vld [vmem:[#allocation8 + $0x2b0] sm:$0xff]
    %v5060 = vld [vmem:[#allocation8 + $0x2b8] sm:$0xff]
    %v5061 = vld [vmem:[#allocation8 + $0x2c0] sm:$0xff]
    %v5062 = vld [vmem:[#allocation8 + $0x2c8] sm:$0xff]
    %v5063 = vld [vmem:[#allocation8 + $0x2d0] sm:$0xff]
    %v5064 = vld [vmem:[#allocation8 + $0x2d8] sm:$0xff]
    %v5065 = vld [vmem:[#allocation8 + $0x2e0] sm:$0xff]
    %v5066 = vld [vmem:[#allocation8 + $0x2e8] sm:$0xff]
    %v5067 = vld [vmem:[#allocation8 + $0x2f0] sm:$0xff]
    %v5068 = vld [vmem:[#allocation8 + $0x2f8] sm:$0xff]
    %v5069 = vld [vmem:[#allocation8 + $0x300] sm:$0xff]
    %v5070 = vld [vmem:[#allocation8 + $0x308] sm:$0xff]
    %v5071 = vld [vmem:[#allocation8 + $0x310] sm:$0xff]
    %v5072 = vld [vmem:[#allocation8 + $0x318] sm:$0xff]
    %v5073 = vld [vmem:[#allocation8 + $0x320] sm:$0xff]
    %v5074 = vld [vmem:[#allocation8 + $0x328] sm:$0xff]
    %v5075 = vld [vmem:[#allocation8 + $0x330] sm:$0xff]
    %v5076 = vld [vmem:[#allocation8 + $0x338] sm:$0xff]
    %v5077 = vld [vmem:[#allocation8 + $0x340] sm:$0xff]
    %v5078 = vld [vmem:[#allocation8 + $0x348] sm:$0xff]
    %v5079 = vld [vmem:[#allocation8 + $0x350] sm:$0xff]
    %v5080 = vld [vmem:[#allocation8 + $0x358] sm:$0xff]
    %v5081 = vld [vmem:[#allocation8 + $0x360] sm:$0xff]
    %v5082 = vld [vmem:[#allocation8 + $0x368] sm:$0xff]
    %v5083 = vld [vmem:[#allocation8 + $0x370] sm:$0xff]
    %v5084 = vld [vmem:[#allocation8 + $0x378] sm:$0xff]
    %v5085 = vld [vmem:[#allocation8 + $0x380] sm:$0xff]
    %v5086 = vld [vmem:[#allocation8 + $0x388] sm:$0xff]
    %v5087 = vld [vmem:[#allocation8 + $0x390] sm:$0xff]
    %v5088 = vld [vmem:[#allocation8 + $0x398] sm:$0xff]
    %v5089 = vld [vmem:[#allocation8 + $0x3a0] sm:$0xff]
    %v5090 = vld [vmem:[#allocation8 + $0x3a8] sm:$0xff]
    %v5091 = vld [vmem:[#allocation8 + $0x3b0] sm:$0xff]
    %v5092 = vld [vmem:[#allocation8 + $0x3b8] sm:$0xff]
    %v5093 = vld [vmem:[#allocation8 + $0x3c0] sm:$0xff]
    %v5094 = vld [vmem:[#allocation8 + $0x3c8] sm:$0xff]
    %v5095 = vld [vmem:[#allocation8 + $0x3d0] sm:$0xff]
    %v5096 = vld [vmem:[#allocation8 + $0x3d8] sm:$0xff]
    %v5097 = vld [vmem:[#allocation8 + $0x3e0] sm:$0xff]
    %v5098 = vld [vmem:[#allocation8 + $0x3e8] sm:$0xff]
    %v5099 = vld [vmem:[#allocation8 + $0x3f0] sm:$0xff]
    %v5100 = vld [vmem:[#allocation8 + $0x3f8] sm:$0xff]
    %v5101 = vld [vmem:[#allocation8 + $0x400] sm:$0xff]
    %v5102 = vld [vmem:[#allocation8 + $0x408] sm:$0xff]
    %v5103 = vld [vmem:[#allocation8 + $0x410] sm:$0xff]
    %v5104 = vld [vmem:[#allocation8 + $0x418] sm:$0xff]
    %v5105 = vld [vmem:[#allocation8 + $0x420] sm:$0xff]
    %v5106 = vld [vmem:[#allocation8 + $0x428] sm:$0xff]
    %v5107 = vld [vmem:[#allocation8 + $0x430] sm:$0xff]
    %v5108 = vld [vmem:[#allocation8 + $0x438] sm:$0xff]
    %v5109 = vld [vmem:[#allocation8 + $0x440] sm:$0xff]
    %v5110 = vld [vmem:[#allocation8 + $0x448] sm:$0xff]
    %v5111 = vld [vmem:[#allocation8 + $0x450] sm:$0xff]
    %v5112 = vld [vmem:[#allocation8 + $0x458] sm:$0xff]
    %v5113 = vld [vmem:[#allocation8 + $0x460] sm:$0xff]
    %v5114 = vld [vmem:[#allocation8 + $0x468] sm:$0xff]
    %v5115 = vld [vmem:[#allocation8 + $0x470] sm:$0xff]
    %v5116 = vld [vmem:[#allocation8 + $0x478] sm:$0xff]
    %v5117 = vld [vmem:[#allocation8 + $0x480] sm:$0xff]
    %v5118 = vld [vmem:[#allocation8 + $0x488] sm:$0xff]
    %v5119 = vld [vmem:[#allocation8 + $0x490] sm:$0xff]
    %v5120 = vld [vmem:[#allocation8 + $0x498] sm:$0xff]
    %v5121 = vld [vmem:[#allocation8 + $0x4a0] sm:$0xff]
    %v5122 = vld [vmem:[#allocation8 + $0x4a8] sm:$0xff]
    %v5123 = vld [vmem:[#allocation8 + $0x4b0] sm:$0xff]
    %v5124 = vld [vmem:[#allocation8 + $0x4b8] sm:$0xff]
    %v5125 = vld [vmem:[#allocation8 + $0x4c0] sm:$0xff]
    %v5126 = vld [vmem:[#allocation8 + $0x4c8] sm:$0xff]
    %v5127 = vld [vmem:[#allocation8 + $0x4d0] sm:$0xff]
    %v5128 = vld [vmem:[#allocation8 + $0x4d8] sm:$0xff]
    %v5129 = vld [vmem:[#allocation8 + $0x4e0] sm:$0xff]
    %v5130 = vld [vmem:[#allocation8 + $0x4e8] sm:$0xff]
    %v5131 = vld [vmem:[#allocation8 + $0x4f0] sm:$0xff]
    %v5132 = vld [vmem:[#allocation8 + $0x4f8] sm:$0xff]
    %v5133 = vld [vmem:[#allocation8 + $0x500] sm:$0xff]
    %v5134 = vld [vmem:[#allocation8 + $0x508] sm:$0xff]
    %v5135 = vld [vmem:[#allocation8 + $0x510] sm:$0xff]
    %v5136 = vld [vmem:[#allocation8 + $0x518] sm:$0xff]
    %v5137 = vld [vmem:[#allocation8 + $0x520] sm:$0xff]
    %v5138 = vld [vmem:[#allocation8 + $0x528] sm:$0xff]
    %v5139 = vld [vmem:[#allocation8 + $0x530] sm:$0xff]
    %v5140 = vld [vmem:[#allocation8 + $0x538] sm:$0xff]
    %v5141 = vld [vmem:[#allocation8 + $0x540] sm:$0xff]
    %v5142 = vld [vmem:[#allocation8 + $0x548] sm:$0xff]
    %v5143 = vld [vmem:[#allocation8 + $0x550] sm:$0xff]
    %v5144 = vld [vmem:[#allocation8 + $0x558] sm:$0xff]
    %v5145 = vld [vmem:[#allocation8 + $0x560] sm:$0xff]
    %v5146 = vld [vmem:[#allocation8 + $0x568] sm:$0xff]
    %v5147 = vld [vmem:[#allocation8 + $0x570] sm:$0xff]
    %v5148 = vld [vmem:[#allocation8 + $0x578] sm:$0xff]
    %v5149 = vld [vmem:[#allocation8 + $0x580] sm:$0xff]
    %v5150 = vld [vmem:[#allocation8 + $0x588] sm:$0xff]
    %v5151 = vld [vmem:[#allocation8 + $0x590] sm:$0xff]
    %v5152 = vld [vmem:[#allocation8 + $0x598] sm:$0xff]
    %v5153 = vld [vmem:[#allocation8 + $0x5a0] sm:$0xff]
    %v5154 = vld [vmem:[#allocation8 + $0x5a8] sm:$0xff]
    %v5155 = vld [vmem:[#allocation8 + $0x5b0] sm:$0xff]
    %v5156 = vld [vmem:[#allocation8 + $0x5b8] sm:$0xff]
    %v5157 = vld [vmem:[#allocation8 + $0x5c0] sm:$0xff]
    %v5158 = vld [vmem:[#allocation8 + $0x5c8] sm:$0xff]
    %v5159 = vld [vmem:[#allocation8 + $0x5d0] sm:$0xff]
    %v5160 = vld [vmem:[#allocation8 + $0x5d8] sm:$0xff]
    %v5161 = vld [vmem:[#allocation8 + $0x5e0] sm:$0xff]
    %v5162 = vld [vmem:[#allocation8 + $0x5e8] sm:$0xff]
    %v5163 = vld [vmem:[#allocation8 + $0x5f0] sm:$0xff]
    %v5164 = vld [vmem:[#allocation8 + $0x5f8] sm:$0xff]
    %v5165 = vld [vmem:[#allocation8 + $0x600] sm:$0xff]
    %v5166 = vld [vmem:[#allocation8 + $0x608] sm:$0xff]
    %v5167 = vld [vmem:[#allocation8 + $0x610] sm:$0xff]
    %v5168 = vld [vmem:[#allocation8 + $0x618] sm:$0xff]
    %v5169 = vld [vmem:[#allocation8 + $0x620] sm:$0xff]
    %v5170 = vld [vmem:[#allocation8 + $0x628] sm:$0xff]
    %v5171 = vld [vmem:[#allocation8 + $0x630] sm:$0xff]
    %v5172 = vld [vmem:[#allocation8 + $0x638] sm:$0xff]
    %v5173 = vld [vmem:[#allocation8 + $0x640] sm:$0xff]
    %v5174 = vld [vmem:[#allocation8 + $0x648] sm:$0xff]
    %v5175 = vld [vmem:[#allocation8 + $0x650] sm:$0xff]
    %v5176 = vld [vmem:[#allocation8 + $0x658] sm:$0xff]
    %v5177 = vld [vmem:[#allocation8 + $0x660] sm:$0xff]
    %v5178 = vld [vmem:[#allocation8 + $0x668] sm:$0xff]
    %v5179 = vld [vmem:[#allocation8 + $0x670] sm:$0xff]
    %v5180 = vld [vmem:[#allocation8 + $0x678] sm:$0xff]
    %v5181 = vld [vmem:[#allocation8 + $0x680] sm:$0xff]
    %v5182 = vld [vmem:[#allocation8 + $0x688] sm:$0xff]
    %v5183 = vld [vmem:[#allocation8 + $0x690] sm:$0xff]
    %v5184 = vld [vmem:[#allocation8 + $0x698] sm:$0xff]
    %v5185 = vld [vmem:[#allocation8 + $0x6a0] sm:$0xff]
    %v5186 = vld [vmem:[#allocation8 + $0x6a8] sm:$0xff]
    %v5187 = vld [vmem:[#allocation8 + $0x6b0] sm:$0xff]
    %v5188 = vld [vmem:[#allocation8 + $0x6b8] sm:$0xff]
    %v5189 = vld [vmem:[#allocation8 + $0x6c0] sm:$0xff]
    %v5190 = vld [vmem:[#allocation8 + $0x6c8] sm:$0xff]
    %v5191 = vld [vmem:[#allocation8 + $0x6d0] sm:$0xff]
    %v5192 = vld [vmem:[#allocation8 + $0x6d8] sm:$0xff]
    %v5193 = vld [vmem:[#allocation8 + $0x6e0] sm:$0xff]
    %v5194 = vld [vmem:[#allocation8 + $0x6e8] sm:$0xff]
    %v5195 = vld [vmem:[#allocation8 + $0x6f0] sm:$0xff]
    %v5196 = vld [vmem:[#allocation8 + $0x6f8] sm:$0xff]
    %v5197 = vld [vmem:[#allocation8 + $0x700] sm:$0xff]
    %v5198 = vld [vmem:[#allocation8 + $0x708] sm:$0xff]
    %v5199 = vld [vmem:[#allocation8 + $0x710] sm:$0xff]
    %v5200 = vld [vmem:[#allocation8 + $0x718] sm:$0xff]
    %v5201 = vld [vmem:[#allocation8 + $0x720] sm:$0xff]
    %v5202 = vld [vmem:[#allocation8 + $0x728] sm:$0xff]
    %v5203 = vld [vmem:[#allocation8 + $0x730] sm:$0xff]
    %v5204 = vld [vmem:[#allocation8 + $0x738] sm:$0xff]
    %v5205 = vld [vmem:[#allocation8 + $0x740] sm:$0xff]
    %v5206 = vld [vmem:[#allocation8 + $0x748] sm:$0xff]
    %v5207 = vld [vmem:[#allocation8 + $0x750] sm:$0xff]
    %v5208 = vld [vmem:[#allocation8 + $0x758] sm:$0xff]
    %v5209 = vld [vmem:[#allocation8 + $0x760] sm:$0xff]
    %v5210 = vld [vmem:[#allocation8 + $0x768] sm:$0xff]
    %v5211 = vld [vmem:[#allocation8 + $0x770] sm:$0xff]
    %v5212 = vld [vmem:[#allocation8 + $0x778] sm:$0xff]
    %v5213 = vld [vmem:[#allocation8 + $0x780] sm:$0xff]
    %v5214 = vld [vmem:[#allocation8 + $0x788] sm:$0xff]
    %v5215 = vld [vmem:[#allocation8 + $0x790] sm:$0xff]
    %v5216 = vld [vmem:[#allocation8 + $0x798] sm:$0xff]
    %v5217 = vld [vmem:[#allocation8 + $0x7a0] sm:$0xff]
    %v5218 = vld [vmem:[#allocation8 + $0x7a8] sm:$0xff]
    %v5219 = vld [vmem:[#allocation8 + $0x7b0] sm:$0xff]
    %v5220 = vld [vmem:[#allocation8 + $0x7b8] sm:$0xff]
    %v5221 = vld [vmem:[#allocation8 + $0x7c0] sm:$0xff]
    %v5222 = vld [vmem:[#allocation8 + $0x7c8] sm:$0xff]
    %v5223 = vld [vmem:[#allocation8 + $0x7d0] sm:$0xff]
    %v5224 = vld [vmem:[#allocation8 + $0x7d8] sm:$0xff]
    %v5225 = vld [vmem:[#allocation8 + $0x7e0] sm:$0xff]
    %v5226 = vld [vmem:[#allocation8 + $0x7e8] sm:$0xff]
    %v5227 = vld [vmem:[#allocation8 + $0x7f0] sm:$0xff]
    %v5228 = vld [vmem:[#allocation8 + $0x7f8] sm:$0xff]
    %v5229 = vld [vmem:[%s6] sm:$0xff]
    %v5231 = vlaneseq
    %v5232 = vshrl.u32 %v5231, 7
    %v5233 = vsub.s32 0, %v5232
    %v5234 = vrot.slane %v5229, %v5233
    %v5235 = vlaneseq
    %v5236 = vshrl.u32 %v5235, 7
    %v5237 = vsub.s32 1, %v5236
    %v5238 = vrot.slane %v5229, %v5237
    %v5239 = vlaneseq
    %v5240 = vshrl.u32 %v5239, 7
    %v5241 = vsub.s32 2, %v5240
    %v5242 = vrot.slane %v5229, %v5241
    %v5243 = vlaneseq
    %v5244 = vshrl.u32 %v5243, 7
    %v5245 = vsub.s32 3, %v5244
    %v5246 = vrot.slane %v5229, %v5245
    %v5247 = vlaneseq
    %v5248 = vshrl.u32 %v5247, 7
    %v5249 = vsub.s32 4, %v5248
    %v5250 = vrot.slane %v5229, %v5249
    %v5251 = vlaneseq
    %v5252 = vshrl.u32 %v5251, 7
    %v5253 = vsub.s32 5, %v5252
    %v5254 = vrot.slane %v5229, %v5253
    %v5255 = vlaneseq
    %v5256 = vshrl.u32 %v5255, 7
    %v5257 = vsub.s32 6, %v5256
    %v5258 = vrot.slane %v5229, %v5257
    %v5259 = vlaneseq
    %v5260 = vshrl.u32 %v5259, 7
    %v5261 = vsub.s32 7, %v5260
    %v5262 = vrot.slane %v5229, %v5261
    %v5527 = vunpack.c.l.b16 %v4973
    %v5528 = vunpack.c.h.b16 %v4973
    %v5529 = vunpack.c.l.b16 %v4974
    %v5530 = vunpack.c.h.b16 %v4974
    %v5531 = vunpack.c.l.b16 %v4975
    %v5532 = vunpack.c.h.b16 %v4975
    %v5533 = vunpack.c.l.b16 %v4976
    %v5534 = vunpack.c.h.b16 %v4976
    %v5535 = vunpack.c.l.b16 %v4977
    %v5536 = vunpack.c.h.b16 %v4977
    %v5537 = vunpack.c.l.b16 %v4978
    %v5538 = vunpack.c.h.b16 %v4978
    %v5539 = vunpack.c.l.b16 %v4979
    %v5540 = vunpack.c.h.b16 %v4979
    %v5541 = vunpack.c.l.b16 %v4980
    %v5542 = vunpack.c.h.b16 %v4980
    %v5543 = vunpack.c.l.b16 %v4981
    %v5544 = vunpack.c.h.b16 %v4981
    %v5545 = vunpack.c.l.b16 %v4982
    %v5546 = vunpack.c.h.b16 %v4982
    %v5547 = vunpack.c.l.b16 %v4983
    %v5548 = vunpack.c.h.b16 %v4983
    %v5549 = vunpack.c.l.b16 %v4984
    %v5550 = vunpack.c.h.b16 %v4984
    %v5551 = vunpack.c.l.b16 %v4985
    %v5552 = vunpack.c.h.b16 %v4985
    %v5553 = vunpack.c.l.b16 %v4986
    %v5554 = vunpack.c.h.b16 %v4986
    %v5555 = vunpack.c.l.b16 %v4987
    %v5556 = vunpack.c.h.b16 %v4987
    %v5557 = vunpack.c.l.b16 %v4988
    %v5558 = vunpack.c.h.b16 %v4988
    %v5559 = vunpack.c.l.b16 %v4989
    %v5560 = vunpack.c.h.b16 %v4989
    %v5561 = vunpack.c.l.b16 %v4990
    %v5562 = vunpack.c.h.b16 %v4990
    %v5563 = vunpack.c.l.b16 %v4991
    %v5564 = vunpack.c.h.b16 %v4991
    %v5565 = vunpack.c.l.b16 %v4992
    %v5566 = vunpack.c.h.b16 %v4992
    %v5567 = vunpack.c.l.b16 %v4993
    %v5568 = vunpack.c.h.b16 %v4993
    %v5569 = vunpack.c.l.b16 %v4994
    %v5570 = vunpack.c.h.b16 %v4994
    %v5571 = vunpack.c.l.b16 %v4995
    %v5572 = vunpack.c.h.b16 %v4995
    %v5573 = vunpack.c.l.b16 %v4996
    %v5574 = vunpack.c.h.b16 %v4996
    %v5575 = vunpack.c.l.b16 %v4997
    %v5576 = vunpack.c.h.b16 %v4997
    %v5577 = vunpack.c.l.b16 %v4998
    %v5578 = vunpack.c.h.b16 %v4998
    %v5579 = vunpack.c.l.b16 %v4999
    %v5580 = vunpack.c.h.b16 %v4999
    %v5581 = vunpack.c.l.b16 %v5000
    %v5582 = vunpack.c.h.b16 %v5000
    %v5583 = vunpack.c.l.b16 %v5001
    %v5584 = vunpack.c.h.b16 %v5001
    %v5585 = vunpack.c.l.b16 %v5002
    %v5586 = vunpack.c.h.b16 %v5002
    %v5587 = vunpack.c.l.b16 %v5003
    %v5588 = vunpack.c.h.b16 %v5003
    %v5589 = vunpack.c.l.b16 %v5004
    %v5590 = vunpack.c.h.b16 %v5004
    %v5591 = vunpack.c.l.b16 %v5005
    %v5592 = vunpack.c.h.b16 %v5005
    %v5593 = vunpack.c.l.b16 %v5006
    %v5594 = vunpack.c.h.b16 %v5006
    %v5595 = vunpack.c.l.b16 %v5007
    %v5596 = vunpack.c.h.b16 %v5007
    %v5597 = vunpack.c.l.b16 %v5008
    %v5598 = vunpack.c.h.b16 %v5008
    %v5599 = vunpack.c.l.b16 %v5009
    %v5600 = vunpack.c.h.b16 %v5009
    %v5601 = vunpack.c.l.b16 %v5010
    %v5602 = vunpack.c.h.b16 %v5010
    %v5603 = vunpack.c.l.b16 %v5011
    %v5604 = vunpack.c.h.b16 %v5011
    %v5605 = vunpack.c.l.b16 %v5012
    %v5606 = vunpack.c.h.b16 %v5012
    %v5607 = vunpack.c.l.b16 %v5013
    %v5608 = vunpack.c.h.b16 %v5013
    %v5609 = vunpack.c.l.b16 %v5014
    %v5610 = vunpack.c.h.b16 %v5014
    %v5611 = vunpack.c.l.b16 %v5015
    %v5612 = vunpack.c.h.b16 %v5015
    %v5613 = vunpack.c.l.b16 %v5016
    %v5614 = vunpack.c.h.b16 %v5016
    %v5615 = vunpack.c.l.b16 %v5017
    %v5616 = vunpack.c.h.b16 %v5017
    %v5617 = vunpack.c.l.b16 %v5018
    %v5618 = vunpack.c.h.b16 %v5018
    %v5619 = vunpack.c.l.b16 %v5019
    %v5620 = vunpack.c.h.b16 %v5019
    %v5621 = vunpack.c.l.b16 %v5020
    %v5622 = vunpack.c.h.b16 %v5020
    %v5623 = vunpack.c.l.b16 %v5021
    %v5624 = vunpack.c.h.b16 %v5021
    %v5625 = vunpack.c.l.b16 %v5022
    %v5626 = vunpack.c.h.b16 %v5022
    %v5627 = vunpack.c.l.b16 %v5023
    %v5628 = vunpack.c.h.b16 %v5023
    %v5629 = vunpack.c.l.b16 %v5024
    %v5630 = vunpack.c.h.b16 %v5024
    %v5631 = vunpack.c.l.b16 %v5025
    %v5632 = vunpack.c.h.b16 %v5025
    %v5633 = vunpack.c.l.b16 %v5026
    %v5634 = vunpack.c.h.b16 %v5026
    %v5635 = vunpack.c.l.b16 %v5027
    %v5636 = vunpack.c.h.b16 %v5027
    %v5637 = vunpack.c.l.b16 %v5028
    %v5638 = vunpack.c.h.b16 %v5028
    %v5639 = vunpack.c.l.b16 %v5029
    %v5640 = vunpack.c.h.b16 %v5029
    %v5641 = vunpack.c.l.b16 %v5030
    %v5642 = vunpack.c.h.b16 %v5030
    %v5643 = vunpack.c.l.b16 %v5031
    %v5644 = vunpack.c.h.b16 %v5031
    %v5645 = vunpack.c.l.b16 %v5032
    %v5646 = vunpack.c.h.b16 %v5032
    %v5647 = vunpack.c.l.b16 %v5033
    %v5648 = vunpack.c.h.b16 %v5033
    %v5649 = vunpack.c.l.b16 %v5034
    %v5650 = vunpack.c.h.b16 %v5034
    %v5651 = vunpack.c.l.b16 %v5035
    %v5652 = vunpack.c.h.b16 %v5035
    %v5653 = vunpack.c.l.b16 %v5036
    %v5654 = vunpack.c.h.b16 %v5036
    %v5655 = vunpack.c.l.b16 %v5037
    %v5656 = vunpack.c.h.b16 %v5037
    %v5657 = vunpack.c.l.b16 %v5038
    %v5658 = vunpack.c.h.b16 %v5038
    %v5659 = vunpack.c.l.b16 %v5039
    %v5660 = vunpack.c.h.b16 %v5039
    %v5661 = vunpack.c.l.b16 %v5040
    %v5662 = vunpack.c.h.b16 %v5040
    %v5663 = vunpack.c.l.b16 %v5041
    %v5664 = vunpack.c.h.b16 %v5041
    %v5665 = vunpack.c.l.b16 %v5042
    %v5666 = vunpack.c.h.b16 %v5042
    %v5667 = vunpack.c.l.b16 %v5043
    %v5668 = vunpack.c.h.b16 %v5043
    %v5669 = vunpack.c.l.b16 %v5044
    %v5670 = vunpack.c.h.b16 %v5044
    %v5671 = vunpack.c.l.b16 %v5045
    %v5672 = vunpack.c.h.b16 %v5045
    %v5673 = vunpack.c.l.b16 %v5046
    %v5674 = vunpack.c.h.b16 %v5046
    %v5675 = vunpack.c.l.b16 %v5047
    %v5676 = vunpack.c.h.b16 %v5047
    %v5677 = vunpack.c.l.b16 %v5048
    %v5678 = vunpack.c.h.b16 %v5048
    %v5679 = vunpack.c.l.b16 %v5049
    %v5680 = vunpack.c.h.b16 %v5049
    %v5681 = vunpack.c.l.b16 %v5050
    %v5682 = vunpack.c.h.b16 %v5050
    %v5683 = vunpack.c.l.b16 %v5051
    %v5684 = vunpack.c.h.b16 %v5051
    %v5685 = vunpack.c.l.b16 %v5052
    %v5686 = vunpack.c.h.b16 %v5052
    %v5687 = vunpack.c.l.b16 %v5053
    %v5688 = vunpack.c.h.b16 %v5053
    %v5689 = vunpack.c.l.b16 %v5054
    %v5690 = vunpack.c.h.b16 %v5054
    %v5691 = vunpack.c.l.b16 %v5055
    %v5692 = vunpack.c.h.b16 %v5055
    %v5693 = vunpack.c.l.b16 %v5056
    %v5694 = vunpack.c.h.b16 %v5056
    %v5695 = vunpack.c.l.b16 %v5057
    %v5696 = vunpack.c.h.b16 %v5057
    %v5697 = vunpack.c.l.b16 %v5058
    %v5698 = vunpack.c.h.b16 %v5058
    %v5699 = vunpack.c.l.b16 %v5059
    %v5700 = vunpack.c.h.b16 %v5059
    %v5701 = vunpack.c.l.b16 %v5060
    %v5702 = vunpack.c.h.b16 %v5060
    %v5703 = vunpack.c.l.b16 %v5061
    %v5704 = vunpack.c.h.b16 %v5061
    %v5705 = vunpack.c.l.b16 %v5062
    %v5706 = vunpack.c.h.b16 %v5062
    %v5707 = vunpack.c.l.b16 %v5063
    %v5708 = vunpack.c.h.b16 %v5063
    %v5709 = vunpack.c.l.b16 %v5064
    %v5710 = vunpack.c.h.b16 %v5064
    %v5711 = vunpack.c.l.b16 %v5065
    %v5712 = vunpack.c.h.b16 %v5065
    %v5713 = vunpack.c.l.b16 %v5066
    %v5714 = vunpack.c.h.b16 %v5066
    %v5715 = vunpack.c.l.b16 %v5067
    %v5716 = vunpack.c.h.b16 %v5067
    %v5717 = vunpack.c.l.b16 %v5068
    %v5718 = vunpack.c.h.b16 %v5068
    %v5719 = vunpack.c.l.b16 %v5069
    %v5720 = vunpack.c.h.b16 %v5069
    %v5721 = vunpack.c.l.b16 %v5070
    %v5722 = vunpack.c.h.b16 %v5070
    %v5723 = vunpack.c.l.b16 %v5071
    %v5724 = vunpack.c.h.b16 %v5071
    %v5725 = vunpack.c.l.b16 %v5072
    %v5726 = vunpack.c.h.b16 %v5072
    %v5727 = vunpack.c.l.b16 %v5073
    %v5728 = vunpack.c.h.b16 %v5073
    %v5729 = vunpack.c.l.b16 %v5074
    %v5730 = vunpack.c.h.b16 %v5074
    %v5731 = vunpack.c.l.b16 %v5075
    %v5732 = vunpack.c.h.b16 %v5075
    %v5733 = vunpack.c.l.b16 %v5076
    %v5734 = vunpack.c.h.b16 %v5076
    %v5735 = vunpack.c.l.b16 %v5077
    %v5736 = vunpack.c.h.b16 %v5077
    %v5737 = vunpack.c.l.b16 %v5078
    %v5738 = vunpack.c.h.b16 %v5078
    %v5739 = vunpack.c.l.b16 %v5079
    %v5740 = vunpack.c.h.b16 %v5079
    %v5741 = vunpack.c.l.b16 %v5080
    %v5742 = vunpack.c.h.b16 %v5080
    %v5743 = vunpack.c.l.b16 %v5081
    %v5744 = vunpack.c.h.b16 %v5081
    %v5745 = vunpack.c.l.b16 %v5082
    %v5746 = vunpack.c.h.b16 %v5082
    %v5747 = vunpack.c.l.b16 %v5083
    %v5748 = vunpack.c.h.b16 %v5083
    %v5749 = vunpack.c.l.b16 %v5084
    %v5750 = vunpack.c.h.b16 %v5084
    %v5751 = vunpack.c.l.b16 %v5085
    %v5752 = vunpack.c.h.b16 %v5085
    %v5753 = vunpack.c.l.b16 %v5086
    %v5754 = vunpack.c.h.b16 %v5086
    %v5755 = vunpack.c.l.b16 %v5087
    %v5756 = vunpack.c.h.b16 %v5087
    %v5757 = vunpack.c.l.b16 %v5088
    %v5758 = vunpack.c.h.b16 %v5088
    %v5759 = vunpack.c.l.b16 %v5089
    %v5760 = vunpack.c.h.b16 %v5089
    %v5761 = vunpack.c.l.b16 %v5090
    %v5762 = vunpack.c.h.b16 %v5090
    %v5763 = vunpack.c.l.b16 %v5091
    %v5764 = vunpack.c.h.b16 %v5091
    %v5765 = vunpack.c.l.b16 %v5092
    %v5766 = vunpack.c.h.b16 %v5092
    %v5767 = vunpack.c.l.b16 %v5093
    %v5768 = vunpack.c.h.b16 %v5093
    %v5769 = vunpack.c.l.b16 %v5094
    %v5770 = vunpack.c.h.b16 %v5094
    %v5771 = vunpack.c.l.b16 %v5095
    %v5772 = vunpack.c.h.b16 %v5095
    %v5773 = vunpack.c.l.b16 %v5096
    %v5774 = vunpack.c.h.b16 %v5096
    %v5775 = vunpack.c.l.b16 %v5097
    %v5776 = vunpack.c.h.b16 %v5097
    %v5777 = vunpack.c.l.b16 %v5098
    %v5778 = vunpack.c.h.b16 %v5098
    %v5779 = vunpack.c.l.b16 %v5099
    %v5780 = vunpack.c.h.b16 %v5099
    %v5781 = vunpack.c.l.b16 %v5100
    %v5782 = vunpack.c.h.b16 %v5100
    %v5783 = vunpack.c.l.b16 %v5101
    %v5784 = vunpack.c.h.b16 %v5101
    %v5785 = vunpack.c.l.b16 %v5102
    %v5786 = vunpack.c.h.b16 %v5102
    %v5787 = vunpack.c.l.b16 %v5103
    %v5788 = vunpack.c.h.b16 %v5103
    %v5789 = vunpack.c.l.b16 %v5104
    %v5790 = vunpack.c.h.b16 %v5104
    %v5791 = vunpack.c.l.b16 %v5105
    %v5792 = vunpack.c.h.b16 %v5105
    %v5793 = vunpack.c.l.b16 %v5106
    %v5794 = vunpack.c.h.b16 %v5106
    %v5795 = vunpack.c.l.b16 %v5107
    %v5796 = vunpack.c.h.b16 %v5107
    %v5797 = vunpack.c.l.b16 %v5108
    %v5798 = vunpack.c.h.b16 %v5108
    %v5799 = vunpack.c.l.b16 %v5109
    %v5800 = vunpack.c.h.b16 %v5109
    %v5801 = vunpack.c.l.b16 %v5110
    %v5802 = vunpack.c.h.b16 %v5110
    %v5803 = vunpack.c.l.b16 %v5111
    %v5804 = vunpack.c.h.b16 %v5111
    %v5805 = vunpack.c.l.b16 %v5112
    %v5806 = vunpack.c.h.b16 %v5112
    %v5807 = vunpack.c.l.b16 %v5113
    %v5808 = vunpack.c.h.b16 %v5113
    %v5809 = vunpack.c.l.b16 %v5114
    %v5810 = vunpack.c.h.b16 %v5114
    %v5811 = vunpack.c.l.b16 %v5115
    %v5812 = vunpack.c.h.b16 %v5115
    %v5813 = vunpack.c.l.b16 %v5116
    %v5814 = vunpack.c.h.b16 %v5116
    %v5815 = vunpack.c.l.b16 %v5117
    %v5816 = vunpack.c.h.b16 %v5117
    %v5817 = vunpack.c.l.b16 %v5118
    %v5818 = vunpack.c.h.b16 %v5118
    %v5819 = vunpack.c.l.b16 %v5119
    %v5820 = vunpack.c.h.b16 %v5119
    %v5821 = vunpack.c.l.b16 %v5120
    %v5822 = vunpack.c.h.b16 %v5120
    %v5823 = vunpack.c.l.b16 %v5121
    %v5824 = vunpack.c.h.b16 %v5121
    %v5825 = vunpack.c.l.b16 %v5122
    %v5826 = vunpack.c.h.b16 %v5122
    %v5827 = vunpack.c.l.b16 %v5123
    %v5828 = vunpack.c.h.b16 %v5123
    %v5829 = vunpack.c.l.b16 %v5124
    %v5830 = vunpack.c.h.b16 %v5124
    %v5831 = vunpack.c.l.b16 %v5125
    %v5832 = vunpack.c.h.b16 %v5125
    %v5833 = vunpack.c.l.b16 %v5126
    %v5834 = vunpack.c.h.b16 %v5126
    %v5835 = vunpack.c.l.b16 %v5127
    %v5836 = vunpack.c.h.b16 %v5127
    %v5837 = vunpack.c.l.b16 %v5128
    %v5838 = vunpack.c.h.b16 %v5128
    %v5839 = vunpack.c.l.b16 %v5129
    %v5840 = vunpack.c.h.b16 %v5129
    %v5841 = vunpack.c.l.b16 %v5130
    %v5842 = vunpack.c.h.b16 %v5130
    %v5843 = vunpack.c.l.b16 %v5131
    %v5844 = vunpack.c.h.b16 %v5131
    %v5845 = vunpack.c.l.b16 %v5132
    %v5846 = vunpack.c.h.b16 %v5132
    %v5847 = vunpack.c.l.b16 %v5133
    %v5848 = vunpack.c.h.b16 %v5133
    %v5849 = vunpack.c.l.b16 %v5134
    %v5850 = vunpack.c.h.b16 %v5134
    %v5851 = vunpack.c.l.b16 %v5135
    %v5852 = vunpack.c.h.b16 %v5135
    %v5853 = vunpack.c.l.b16 %v5136
    %v5854 = vunpack.c.h.b16 %v5136
    %v5855 = vunpack.c.l.b16 %v5137
    %v5856 = vunpack.c.h.b16 %v5137
    %v5857 = vunpack.c.l.b16 %v5138
    %v5858 = vunpack.c.h.b16 %v5138
    %v5859 = vunpack.c.l.b16 %v5139
    %v5860 = vunpack.c.h.b16 %v5139
    %v5861 = vunpack.c.l.b16 %v5140
    %v5862 = vunpack.c.h.b16 %v5140
    %v5863 = vunpack.c.l.b16 %v5141
    %v5864 = vunpack.c.h.b16 %v5141
    %v5865 = vunpack.c.l.b16 %v5142
    %v5866 = vunpack.c.h.b16 %v5142
    %v5867 = vunpack.c.l.b16 %v5143
    %v5868 = vunpack.c.h.b16 %v5143
    %v5869 = vunpack.c.l.b16 %v5144
    %v5870 = vunpack.c.h.b16 %v5144
    %v5871 = vunpack.c.l.b16 %v5145
    %v5872 = vunpack.c.h.b16 %v5145
    %v5873 = vunpack.c.l.b16 %v5146
    %v5874 = vunpack.c.h.b16 %v5146
    %v5875 = vunpack.c.l.b16 %v5147
    %v5876 = vunpack.c.h.b16 %v5147
    %v5877 = vunpack.c.l.b16 %v5148
    %v5878 = vunpack.c.h.b16 %v5148
    %v5879 = vunpack.c.l.b16 %v5149
    %v5880 = vunpack.c.h.b16 %v5149
    %v5881 = vunpack.c.l.b16 %v5150
    %v5882 = vunpack.c.h.b16 %v5150
    %v5883 = vunpack.c.l.b16 %v5151
    %v5884 = vunpack.c.h.b16 %v5151
    %v5885 = vunpack.c.l.b16 %v5152
    %v5886 = vunpack.c.h.b16 %v5152
    %v5887 = vunpack.c.l.b16 %v5153
    %v5888 = vunpack.c.h.b16 %v5153
    %v5889 = vunpack.c.l.b16 %v5154
    %v5890 = vunpack.c.h.b16 %v5154
    %v5891 = vunpack.c.l.b16 %v5155
    %v5892 = vunpack.c.h.b16 %v5155
    %v5893 = vunpack.c.l.b16 %v5156
    %v5894 = vunpack.c.h.b16 %v5156
    %v5895 = vunpack.c.l.b16 %v5157
    %v5896 = vunpack.c.h.b16 %v5157
    %v5897 = vunpack.c.l.b16 %v5158
    %v5898 = vunpack.c.h.b16 %v5158
    %v5899 = vunpack.c.l.b16 %v5159
    %v5900 = vunpack.c.h.b16 %v5159
    %v5901 = vunpack.c.l.b16 %v5160
    %v5902 = vunpack.c.h.b16 %v5160
    %v5903 = vunpack.c.l.b16 %v5161
    %v5904 = vunpack.c.h.b16 %v5161
    %v5905 = vunpack.c.l.b16 %v5162
    %v5906 = vunpack.c.h.b16 %v5162
    %v5907 = vunpack.c.l.b16 %v5163
    %v5908 = vunpack.c.h.b16 %v5163
    %v5909 = vunpack.c.l.b16 %v5164
    %v5910 = vunpack.c.h.b16 %v5164
    %v5911 = vunpack.c.l.b16 %v5165
    %v5912 = vunpack.c.h.b16 %v5165
    %v5913 = vunpack.c.l.b16 %v5166
    %v5914 = vunpack.c.h.b16 %v5166
    %v5915 = vunpack.c.l.b16 %v5167
    %v5916 = vunpack.c.h.b16 %v5167
    %v5917 = vunpack.c.l.b16 %v5168
    %v5918 = vunpack.c.h.b16 %v5168
    %v5919 = vunpack.c.l.b16 %v5169
    %v5920 = vunpack.c.h.b16 %v5169
    %v5921 = vunpack.c.l.b16 %v5170
    %v5922 = vunpack.c.h.b16 %v5170
    %v5923 = vunpack.c.l.b16 %v5171
    %v5924 = vunpack.c.h.b16 %v5171
    %v5925 = vunpack.c.l.b16 %v5172
    %v5926 = vunpack.c.h.b16 %v5172
    %v5927 = vunpack.c.l.b16 %v5173
    %v5928 = vunpack.c.h.b16 %v5173
    %v5929 = vunpack.c.l.b16 %v5174
    %v5930 = vunpack.c.h.b16 %v5174
    %v5931 = vunpack.c.l.b16 %v5175
    %v5932 = vunpack.c.h.b16 %v5175
    %v5933 = vunpack.c.l.b16 %v5176
    %v5934 = vunpack.c.h.b16 %v5176
    %v5935 = vunpack.c.l.b16 %v5177
    %v5936 = vunpack.c.h.b16 %v5177
    %v5937 = vunpack.c.l.b16 %v5178
    %v5938 = vunpack.c.h.b16 %v5178
    %v5939 = vunpack.c.l.b16 %v5179
    %v5940 = vunpack.c.h.b16 %v5179
    %v5941 = vunpack.c.l.b16 %v5180
    %v5942 = vunpack.c.h.b16 %v5180
    %v5943 = vunpack.c.l.b16 %v5181
    %v5944 = vunpack.c.h.b16 %v5181
    %v5945 = vunpack.c.l.b16 %v5182
    %v5946 = vunpack.c.h.b16 %v5182
    %v5947 = vunpack.c.l.b16 %v5183
    %v5948 = vunpack.c.h.b16 %v5183
    %v5949 = vunpack.c.l.b16 %v5184
    %v5950 = vunpack.c.h.b16 %v5184
    %v5951 = vunpack.c.l.b16 %v5185
    %v5952 = vunpack.c.h.b16 %v5185
    %v5953 = vunpack.c.l.b16 %v5186
    %v5954 = vunpack.c.h.b16 %v5186
    %v5955 = vunpack.c.l.b16 %v5187
    %v5956 = vunpack.c.h.b16 %v5187
    %v5957 = vunpack.c.l.b16 %v5188
    %v5958 = vunpack.c.h.b16 %v5188
    %v5959 = vunpack.c.l.b16 %v5189
    %v5960 = vunpack.c.h.b16 %v5189
    %v5961 = vunpack.c.l.b16 %v5190
    %v5962 = vunpack.c.h.b16 %v5190
    %v5963 = vunpack.c.l.b16 %v5191
    %v5964 = vunpack.c.h.b16 %v5191
    %v5965 = vunpack.c.l.b16 %v5192
    %v5966 = vunpack.c.h.b16 %v5192
    %v5967 = vunpack.c.l.b16 %v5193
    %v5968 = vunpack.c.h.b16 %v5193
    %v5969 = vunpack.c.l.b16 %v5194
    %v5970 = vunpack.c.h.b16 %v5194
    %v5971 = vunpack.c.l.b16 %v5195
    %v5972 = vunpack.c.h.b16 %v5195
    %v5973 = vunpack.c.l.b16 %v5196
    %v5974 = vunpack.c.h.b16 %v5196
    %v5975 = vunpack.c.l.b16 %v5197
    %v5976 = vunpack.c.h.b16 %v5197
    %v5977 = vunpack.c.l.b16 %v5198
    %v5978 = vunpack.c.h.b16 %v5198
    %v5979 = vunpack.c.l.b16 %v5199
    %v5980 = vunpack.c.h.b16 %v5199
    %v5981 = vunpack.c.l.b16 %v5200
    %v5982 = vunpack.c.h.b16 %v5200
    %v5983 = vunpack.c.l.b16 %v5201
    %v5984 = vunpack.c.h.b16 %v5201
    %v5985 = vunpack.c.l.b16 %v5202
    %v5986 = vunpack.c.h.b16 %v5202
    %v5987 = vunpack.c.l.b16 %v5203
    %v5988 = vunpack.c.h.b16 %v5203
    %v5989 = vunpack.c.l.b16 %v5204
    %v5990 = vunpack.c.h.b16 %v5204
    %v5991 = vunpack.c.l.b16 %v5205
    %v5992 = vunpack.c.h.b16 %v5205
    %v5993 = vunpack.c.l.b16 %v5206
    %v5994 = vunpack.c.h.b16 %v5206
    %v5995 = vunpack.c.l.b16 %v5207
    %v5996 = vunpack.c.h.b16 %v5207
    %v5997 = vunpack.c.l.b16 %v5208
    %v5998 = vunpack.c.h.b16 %v5208
    %v5999 = vunpack.c.l.b16 %v5209
    %v6000 = vunpack.c.h.b16 %v5209
    %v6001 = vunpack.c.l.b16 %v5210
    %v6002 = vunpack.c.h.b16 %v5210
    %v6003 = vunpack.c.l.b16 %v5211
    %v6004 = vunpack.c.h.b16 %v5211
    %v6005 = vunpack.c.l.b16 %v5212
    %v6006 = vunpack.c.h.b16 %v5212
    %v6007 = vunpack.c.l.b16 %v5213
    %v6008 = vunpack.c.h.b16 %v5213
    %v6009 = vunpack.c.l.b16 %v5214
    %v6010 = vunpack.c.h.b16 %v5214
    %v6011 = vunpack.c.l.b16 %v5215
    %v6012 = vunpack.c.h.b16 %v5215
    %v6013 = vunpack.c.l.b16 %v5216
    %v6014 = vunpack.c.h.b16 %v5216
    %v6015 = vunpack.c.l.b16 %v5217
    %v6016 = vunpack.c.h.b16 %v5217
    %v6017 = vunpack.c.l.b16 %v5218
    %v6018 = vunpack.c.h.b16 %v5218
    %v6019 = vunpack.c.l.b16 %v5219
    %v6020 = vunpack.c.h.b16 %v5219
    %v6021 = vunpack.c.l.b16 %v5220
    %v6022 = vunpack.c.h.b16 %v5220
    %v6023 = vunpack.c.l.b16 %v5221
    %v6024 = vunpack.c.h.b16 %v5221
    %v6025 = vunpack.c.l.b16 %v5222
    %v6026 = vunpack.c.h.b16 %v5222
    %v6027 = vunpack.c.l.b16 %v5223
    %v6028 = vunpack.c.h.b16 %v5223
    %v6029 = vunpack.c.l.b16 %v5224
    %v6030 = vunpack.c.h.b16 %v5224
    %v6031 = vunpack.c.l.b16 %v5225
    %v6032 = vunpack.c.h.b16 %v5225
    %v6033 = vunpack.c.l.b16 %v5226
    %v6034 = vunpack.c.h.b16 %v5226
    %v6035 = vunpack.c.l.b16 %v5227
    %v6036 = vunpack.c.h.b16 %v5227
    %v6037 = vunpack.c.l.b16 %v5228
    %v6038 = vunpack.c.h.b16 %v5228
    %v6039 = vpack.c.b16 %v5535, %v5527
    %v6040 = vpack.c.b16 %v5536, %v5528
    %v6041 = vpack.c.b16 %v5537, %v5529
    %v6042 = vpack.c.b16 %v5538, %v5530
    %v6043 = vpack.c.b16 %v5539, %v5531
    %v6044 = vpack.c.b16 %v5540, %v5532
    %v6045 = vpack.c.b16 %v5541, %v5533
    %v6046 = vpack.c.b16 %v5542, %v5534
    %v6047 = vpack.c.b16 %v5551, %v5543
    %v6048 = vpack.c.b16 %v5552, %v5544
    %v6049 = vpack.c.b16 %v5553, %v5545
    %v6050 = vpack.c.b16 %v5554, %v5546
    %v6051 = vpack.c.b16 %v5555, %v5547
    %v6052 = vpack.c.b16 %v5556, %v5548
    %v6053 = vpack.c.b16 %v5557, %v5549
    %v6054 = vpack.c.b16 %v5558, %v5550
    %v6055 = vpack.c.b16 %v5567, %v5559
    %v6056 = vpack.c.b16 %v5568, %v5560
    %v6057 = vpack.c.b16 %v5569, %v5561
    %v6058 = vpack.c.b16 %v5570, %v5562
    %v6059 = vpack.c.b16 %v5571, %v5563
    %v6060 = vpack.c.b16 %v5572, %v5564
    %v6061 = vpack.c.b16 %v5573, %v5565
    %v6062 = vpack.c.b16 %v5574, %v5566
    %v6063 = vpack.c.b16 %v5583, %v5575
    %v6064 = vpack.c.b16 %v5584, %v5576
    %v6065 = vpack.c.b16 %v5585, %v5577
    %v6066 = vpack.c.b16 %v5586, %v5578
    %v6067 = vpack.c.b16 %v5587, %v5579
    %v6068 = vpack.c.b16 %v5588, %v5580
    %v6069 = vpack.c.b16 %v5589, %v5581
    %v6070 = vpack.c.b16 %v5590, %v5582
    %v6071 = vpack.c.b16 %v5599, %v5591
    %v6072 = vpack.c.b16 %v5600, %v5592
    %v6073 = vpack.c.b16 %v5601, %v5593
    %v6074 = vpack.c.b16 %v5602, %v5594
    %v6075 = vpack.c.b16 %v5603, %v5595
    %v6076 = vpack.c.b16 %v5604, %v5596
    %v6077 = vpack.c.b16 %v5605, %v5597
    %v6078 = vpack.c.b16 %v5606, %v5598
    %v6079 = vpack.c.b16 %v5615, %v5607
    %v6080 = vpack.c.b16 %v5616, %v5608
    %v6081 = vpack.c.b16 %v5617, %v5609
    %v6082 = vpack.c.b16 %v5618, %v5610
    %v6083 = vpack.c.b16 %v5619, %v5611
    %v6084 = vpack.c.b16 %v5620, %v5612
    %v6085 = vpack.c.b16 %v5621, %v5613
    %v6086 = vpack.c.b16 %v5622, %v5614
    %v6087 = vpack.c.b16 %v5631, %v5623
    %v6088 = vpack.c.b16 %v5632, %v5624
    %v6089 = vpack.c.b16 %v5633, %v5625
    %v6090 = vpack.c.b16 %v5634, %v5626
    %v6091 = vpack.c.b16 %v5635, %v5627
    %v6092 = vpack.c.b16 %v5636, %v5628
    %v6093 = vpack.c.b16 %v5637, %v5629
    %v6094 = vpack.c.b16 %v5638, %v5630
    %v6095 = vpack.c.b16 %v5647, %v5639
    %v6096 = vpack.c.b16 %v5648, %v5640
    %v6097 = vpack.c.b16 %v5649, %v5641
    %v6098 = vpack.c.b16 %v5650, %v5642
    %v6099 = vpack.c.b16 %v5651, %v5643
    %v6100 = vpack.c.b16 %v5652, %v5644
    %v6101 = vpack.c.b16 %v5653, %v5645
    %v6102 = vpack.c.b16 %v5654, %v5646
    %v6103 = vpack.c.b16 %v5663, %v5655
    %v6104 = vpack.c.b16 %v5664, %v5656
    %v6105 = vpack.c.b16 %v5665, %v5657
    %v6106 = vpack.c.b16 %v5666, %v5658
    %v6107 = vpack.c.b16 %v5667, %v5659
    %v6108 = vpack.c.b16 %v5668, %v5660
    %v6109 = vpack.c.b16 %v5669, %v5661
    %v6110 = vpack.c.b16 %v5670, %v5662
    %v6111 = vpack.c.b16 %v5679, %v5671
    %v6112 = vpack.c.b16 %v5680, %v5672
    %v6113 = vpack.c.b16 %v5681, %v5673
    %v6114 = vpack.c.b16 %v5682, %v5674
    %v6115 = vpack.c.b16 %v5683, %v5675
    %v6116 = vpack.c.b16 %v5684, %v5676
    %v6117 = vpack.c.b16 %v5685, %v5677
    %v6118 = vpack.c.b16 %v5686, %v5678
    %v6119 = vpack.c.b16 %v5695, %v5687
    %v6120 = vpack.c.b16 %v5696, %v5688
    %v6121 = vpack.c.b16 %v5697, %v5689
    %v6122 = vpack.c.b16 %v5698, %v5690
    %v6123 = vpack.c.b16 %v5699, %v5691
    %v6124 = vpack.c.b16 %v5700, %v5692
    %v6125 = vpack.c.b16 %v5701, %v5693
    %v6126 = vpack.c.b16 %v5702, %v5694
    %v6127 = vpack.c.b16 %v5711, %v5703
    %v6128 = vpack.c.b16 %v5712, %v5704
    %v6129 = vpack.c.b16 %v5713, %v5705
    %v6130 = vpack.c.b16 %v5714, %v5706
    %v6131 = vpack.c.b16 %v5715, %v5707
    %v6132 = vpack.c.b16 %v5716, %v5708
    %v6133 = vpack.c.b16 %v5717, %v5709
    %v6134 = vpack.c.b16 %v5718, %v5710
    %v6135 = vpack.c.b16 %v5727, %v5719
    %v6136 = vpack.c.b16 %v5728, %v5720
    %v6137 = vpack.c.b16 %v5729, %v5721
    %v6138 = vpack.c.b16 %v5730, %v5722
    %v6139 = vpack.c.b16 %v5731, %v5723
    %v6140 = vpack.c.b16 %v5732, %v5724
    %v6141 = vpack.c.b16 %v5733, %v5725
    %v6142 = vpack.c.b16 %v5734, %v5726
    %v6143 = vpack.c.b16 %v5743, %v5735
    %v6144 = vpack.c.b16 %v5744, %v5736
    %v6145 = vpack.c.b16 %v5745, %v5737
    %v6146 = vpack.c.b16 %v5746, %v5738
    %v6147 = vpack.c.b16 %v5747, %v5739
    %v6148 = vpack.c.b16 %v5748, %v5740
    %v6149 = vpack.c.b16 %v5749, %v5741
    %v6150 = vpack.c.b16 %v5750, %v5742
    %v6151 = vpack.c.b16 %v5759, %v5751
    %v6152 = vpack.c.b16 %v5760, %v5752
    %v6153 = vpack.c.b16 %v5761, %v5753
    %v6154 = vpack.c.b16 %v5762, %v5754
    %v6155 = vpack.c.b16 %v5763, %v5755
    %v6156 = vpack.c.b16 %v5764, %v5756
    %v6157 = vpack.c.b16 %v5765, %v5757
    %v6158 = vpack.c.b16 %v5766, %v5758
    %v6159 = vpack.c.b16 %v5775, %v5767
    %v6160 = vpack.c.b16 %v5776, %v5768
    %v6161 = vpack.c.b16 %v5777, %v5769
    %v6162 = vpack.c.b16 %v5778, %v5770
    %v6163 = vpack.c.b16 %v5779, %v5771
    %v6164 = vpack.c.b16 %v5780, %v5772
    %v6165 = vpack.c.b16 %v5781, %v5773
    %v6166 = vpack.c.b16 %v5782, %v5774
    %v6167 = vpack.c.b16 %v5791, %v5783
    %v6168 = vpack.c.b16 %v5792, %v5784
    %v6169 = vpack.c.b16 %v5793, %v5785
    %v6170 = vpack.c.b16 %v5794, %v5786
    %v6171 = vpack.c.b16 %v5795, %v5787
    %v6172 = vpack.c.b16 %v5796, %v5788
    %v6173 = vpack.c.b16 %v5797, %v5789
    %v6174 = vpack.c.b16 %v5798, %v5790
    %v6175 = vpack.c.b16 %v5807, %v5799
    %v6176 = vpack.c.b16 %v5808, %v5800
    %v6177 = vpack.c.b16 %v5809, %v5801
    %v6178 = vpack.c.b16 %v5810, %v5802
    %v6179 = vpack.c.b16 %v5811, %v5803
    %v6180 = vpack.c.b16 %v5812, %v5804
    %v6181 = vpack.c.b16 %v5813, %v5805
    %v6182 = vpack.c.b16 %v5814, %v5806
    %v6183 = vpack.c.b16 %v5823, %v5815
    %v6184 = vpack.c.b16 %v5824, %v5816
    %v6185 = vpack.c.b16 %v5825, %v5817
    %v6186 = vpack.c.b16 %v5826, %v5818
    %v6187 = vpack.c.b16 %v5827, %v5819
    %v6188 = vpack.c.b16 %v5828, %v5820
    %v6189 = vpack.c.b16 %v5829, %v5821
    %v6190 = vpack.c.b16 %v5830, %v5822
    %v6191 = vpack.c.b16 %v5839, %v5831
    %v6192 = vpack.c.b16 %v5840, %v5832
    %v6193 = vpack.c.b16 %v5841, %v5833
    %v6194 = vpack.c.b16 %v5842, %v5834
    %v6195 = vpack.c.b16 %v5843, %v5835
    %v6196 = vpack.c.b16 %v5844, %v5836
    %v6197 = vpack.c.b16 %v5845, %v5837
    %v6198 = vpack.c.b16 %v5846, %v5838
    %v6199 = vpack.c.b16 %v5855, %v5847
    %v6200 = vpack.c.b16 %v5856, %v5848
    %v6201 = vpack.c.b16 %v5857, %v5849
    %v6202 = vpack.c.b16 %v5858, %v5850
    %v6203 = vpack.c.b16 %v5859, %v5851
    %v6204 = vpack.c.b16 %v5860, %v5852
    %v6205 = vpack.c.b16 %v5861, %v5853
    %v6206 = vpack.c.b16 %v5862, %v5854
    %v6207 = vpack.c.b16 %v5871, %v5863
    %v6208 = vpack.c.b16 %v5872, %v5864
    %v6209 = vpack.c.b16 %v5873, %v5865
    %v6210 = vpack.c.b16 %v5874, %v5866
    %v6211 = vpack.c.b16 %v5875, %v5867
    %v6212 = vpack.c.b16 %v5876, %v5868
    %v6213 = vpack.c.b16 %v5877, %v5869
    %v6214 = vpack.c.b16 %v5878, %v5870
    %v6215 = vpack.c.b16 %v5887, %v5879
    %v6216 = vpack.c.b16 %v5888, %v5880
    %v6217 = vpack.c.b16 %v5889, %v5881
    %v6218 = vpack.c.b16 %v5890, %v5882
    %v6219 = vpack.c.b16 %v5891, %v5883
    %v6220 = vpack.c.b16 %v5892, %v5884
    %v6221 = vpack.c.b16 %v5893, %v5885
    %v6222 = vpack.c.b16 %v5894, %v5886
    %v6223 = vpack.c.b16 %v5903, %v5895
    %v6224 = vpack.c.b16 %v5904, %v5896
    %v6225 = vpack.c.b16 %v5905, %v5897
    %v6226 = vpack.c.b16 %v5906, %v5898
    %v6227 = vpack.c.b16 %v5907, %v5899
    %v6228 = vpack.c.b16 %v5908, %v5900
    %v6229 = vpack.c.b16 %v5909, %v5901
    %v6230 = vpack.c.b16 %v5910, %v5902
    %v6231 = vpack.c.b16 %v5919, %v5911
    %v6232 = vpack.c.b16 %v5920, %v5912
    %v6233 = vpack.c.b16 %v5921, %v5913
    %v6234 = vpack.c.b16 %v5922, %v5914
    %v6235 = vpack.c.b16 %v5923, %v5915
    %v6236 = vpack.c.b16 %v5924, %v5916
    %v6237 = vpack.c.b16 %v5925, %v5917
    %v6238 = vpack.c.b16 %v5926, %v5918
    %v6239 = vpack.c.b16 %v5935, %v5927
    %v6240 = vpack.c.b16 %v5936, %v5928
    %v6241 = vpack.c.b16 %v5937, %v5929
    %v6242 = vpack.c.b16 %v5938, %v5930
    %v6243 = vpack.c.b16 %v5939, %v5931
    %v6244 = vpack.c.b16 %v5940, %v5932
    %v6245 = vpack.c.b16 %v5941, %v5933
    %v6246 = vpack.c.b16 %v5942, %v5934
    %v6247 = vpack.c.b16 %v5951, %v5943
    %v6248 = vpack.c.b16 %v5952, %v5944
    %v6249 = vpack.c.b16 %v5953, %v5945
    %v6250 = vpack.c.b16 %v5954, %v5946
    %v6251 = vpack.c.b16 %v5955, %v5947
    %v6252 = vpack.c.b16 %v5956, %v5948
    %v6253 = vpack.c.b16 %v5957, %v5949
    %v6254 = vpack.c.b16 %v5958, %v5950
    %v6255 = vpack.c.b16 %v5967, %v5959
    %v6256 = vpack.c.b16 %v5968, %v5960
    %v6257 = vpack.c.b16 %v5969, %v5961
    %v6258 = vpack.c.b16 %v5970, %v5962
    %v6259 = vpack.c.b16 %v5971, %v5963
    %v6260 = vpack.c.b16 %v5972, %v5964
    %v6261 = vpack.c.b16 %v5973, %v5965
    %v6262 = vpack.c.b16 %v5974, %v5966
    %v6263 = vpack.c.b16 %v5983, %v5975
    %v6264 = vpack.c.b16 %v5984, %v5976
    %v6265 = vpack.c.b16 %v5985, %v5977
    %v6266 = vpack.c.b16 %v5986, %v5978
    %v6267 = vpack.c.b16 %v5987, %v5979
    %v6268 = vpack.c.b16 %v5988, %v5980
    %v6269 = vpack.c.b16 %v5989, %v5981
    %v6270 = vpack.c.b16 %v5990, %v5982
    %v6271 = vpack.c.b16 %v5999, %v5991
    %v6272 = vpack.c.b16 %v6000, %v5992
    %v6273 = vpack.c.b16 %v6001, %v5993
    %v6274 = vpack.c.b16 %v6002, %v5994
    %v6275 = vpack.c.b16 %v6003, %v5995
    %v6276 = vpack.c.b16 %v6004, %v5996
    %v6277 = vpack.c.b16 %v6005, %v5997
    %v6278 = vpack.c.b16 %v6006, %v5998
    %v6279 = vpack.c.b16 %v6015, %v6007
    %v6280 = vpack.c.b16 %v6016, %v6008
    %v6281 = vpack.c.b16 %v6017, %v6009
    %v6282 = vpack.c.b16 %v6018, %v6010
    %v6283 = vpack.c.b16 %v6019, %v6011
    %v6284 = vpack.c.b16 %v6020, %v6012
    %v6285 = vpack.c.b16 %v6021, %v6013
    %v6286 = vpack.c.b16 %v6022, %v6014
    %v6287 = vpack.c.b16 %v6031, %v6023
    %v6288 = vpack.c.b16 %v6032, %v6024
    %v6289 = vpack.c.b16 %v6033, %v6025
    %v6290 = vpack.c.b16 %v6034, %v6026
    %v6291 = vpack.c.b16 %v6035, %v6027
    %v6292 = vpack.c.b16 %v6036, %v6028
    %v6293 = vpack.c.b16 %v6037, %v6029
    %v6294 = vpack.c.b16 %v6038, %v6030
    %6551 = vmatprep.subr.bf16.mxu0 %v6040
    %6552 = vmatpush1.bf16.msra.mxu0 %v6039
    %6553 = vmatprep.subr.bf16.mxu0 %v6048
    %6554 = vmatpush1.bf16.msra.mxu0 %v6047
    %6555 = vmatprep.subr.bf16.mxu0 %v6056
    %6556 = vmatpush1.bf16.msra.mxu0 %v6055
    %6557 = vmatprep.subr.bf16.mxu0 %v6064
    %6558 = vmatpush1.bf16.msra.mxu0 %v6063
    %6559 = vmatprep.subr.bf16.mxu0 %v6072
    %6560 = vmatpush1.bf16.msra.mxu0 %v6071
    %6561 = vmatprep.subr.bf16.mxu0 %v6080
    %6562 = vmatpush1.bf16.msra.mxu0 %v6079
    %6563 = vmatprep.subr.bf16.mxu0 %v6088
    %6564 = vmatpush1.bf16.msra.mxu0 %v6087
    %6565 = vmatprep.subr.bf16.mxu0 %v6096
    %6566 = vmatpush1.bf16.msra.mxu0 %v6095
    %6567 = vmatprep.subr.bf16.mxu0 %v6104
    %6568 = vmatpush1.bf16.msra.mxu0 %v6103
    %6569 = vmatprep.subr.bf16.mxu0 %v6112
    %6570 = vmatpush1.bf16.msra.mxu0 %v6111
    %6571 = vmatprep.subr.bf16.mxu0 %v6120
    %6572 = vmatpush1.bf16.msra.mxu0 %v6119
    %6573 = vmatprep.subr.bf16.mxu0 %v6128
    %6574 = vmatpush1.bf16.msra.mxu0 %v6127
    %6575 = vmatprep.subr.bf16.mxu0 %v6136
    %6576 = vmatpush1.bf16.msra.mxu0 %v6135
    %6577 = vmatprep.subr.bf16.mxu0 %v6144
    %6578 = vmatpush1.bf16.msra.mxu0 %v6143
    %6579 = vmatprep.subr.bf16.mxu0 %v6152
    %6580 = vmatpush1.bf16.msra.mxu0 %v6151
    %6581 = vmatprep.subr.bf16.mxu0 %v6160
    %6582 = vmatpush1.bf16.msra.mxu0 %v6159
    %6583 = vmatprep.mubr.bf16.mxu0 %v4846
    %6584 = vmatmul.mubr.bf16.gmra.mrb[0].mxu0 %v4845
    %v6585 = vpop.f32.mrb[0].mxu0
    %v6586 = vadd.f32 %v5234, %v6585
    %v6587 = vpop.f32.mrb[0].mxu0
    %v6588 = vadd.f32 %v5238, %v6587
    %v6589 = vpop.f32.mrb[0].mxu0
    %v6590 = vadd.f32 %v5234, %v6589
    %v6591 = vpop.f32.mrb[0].mxu0
    %v6592 = vadd.f32 %v5238, %v6591
    %6593 = vmatprep.mubr.bf16.mxu0 %v4850
    %6594 = vmatmul.mubr.bf16.gmra.mrb[0].mxu0 %v4849
    %v6595 = vpop.f32.mrb[0].mxu0
    %v6596 = vadd.f32 %v5234, %v6595
    %v6597 = vpop.f32.mrb[0].mxu0
    %v6598 = vadd.f32 %v5238, %v6597
    %v6599 = vpop.f32.mrb[0].mxu0
    %v6600 = vadd.f32 %v5234, %v6599
    %v6601 = vpop.f32.mrb[0].mxu0
    %v6602 = vadd.f32 %v5238, %v6601
    %6603 = vmatprep.mubr.bf16.mxu0 %v4854
    %6604 = vmatmul.mubr.bf16.gmra.mrb[0].mxu0 %v4853
    %v6605 = vpop.f32.mrb[0].mxu0
    %v6606 = vadd.f32 %v5234, %v6605
    %v6607 = vpop.f32.mrb[0].mxu0
    %v6608 = vadd.f32 %v5238, %v6607
    %v6609 = vpop.f32.mrb[0].mxu0
    %v6610 = vadd.f32 %v5234, %v6609
    %v6611 = vpop.f32.mrb[0].mxu0
    %v6612 = vadd.f32 %v5238, %v6611
    %6613 = vmatprep.mubr.bf16.mxu0 %v4858
    %6614 = vmatmul.mubr.bf16.gmra.mrb[0].mxu0 %v4857
    %v6615 = vpop.f32.mrb[0].mxu0
    %v6616 = vadd.f32 %v5234, %v6615
    %v6617 = vpop.f32.mrb[0].mxu0
    %v6618 = vadd.f32 %v5238, %v6617
    %v6619 = vpop.f32.mrb[0].mxu0
    %v6620 = vadd.f32 %v5234, %v6619
    %v6621 = vpop.f32.mrb[0].mxu0
    %v6622 = vadd.f32 %v5238, %v6621
    %6623 = vmatprep.mubr.bf16.mxu0 %v4862
    %6624 = vmatmul.mubr.bf16.gmra.mrb[0].mxu0 %v4861
    %v6625 = vpop.f32.mrb[0].mxu0
    %v6626 = vadd.f32 %v5234, %v6625
    %v6627 = vpop.f32.mrb[0].mxu0
    %v6628 = vadd.f32 %v5238, %v6627
    %v6629 = vpop.f32.mrb[0].mxu0
    %v6630 = vadd.f32 %v5234, %v6629
    %v6631 = vpop.f32.mrb[0].mxu0
    %v6632 = vadd.f32 %v5238, %v6631
    %6633 = vmatprep.mubr.bf16.mxu0 %v4866
    %6634 = vmatmul.mubr.bf16.gmra.mrb[0].mxu0 %v4865
    %v6635 = vpop.f32.mrb[0].mxu0
    %v6636 = vadd.f32 %v5234, %v6635
    %v6637 = vpop.f32.mrb[0].mxu0
    %v6638 = vadd.f32 %v5238, %v6637
    %v6639 = vpop.f32.mrb[0].mxu0
    %v6640 = vadd.f32 %v5234, %v6639
    %v6641 = vpop.f32.mrb[0].mxu0
    %v6642 = vadd.f32 %v5238, %v6641
    %6643 = vmatprep.mubr.bf16.mxu0 %v4870
    %6644 = vmatmul.mubr.bf16.gmra.mrb[0].mxu0 %v4869
    %v6645 = vpop.f32.mrb[0].mxu0
    %v6646 = vadd.f32 %v5234, %v6645
    %v6647 = vpop.f32.mrb[0].mxu0
    %v6648 = vadd.f32 %v5238, %v6647
    %v6649 = vpop.f32.mrb[0].mxu0
    %v6650 = vadd.f32 %v5234, %v6649
    %v6651 = vpop.f32.mrb[0].mxu0
    %v6652 = vadd.f32 %v5238, %v6651
    %6653 = vmatprep.mubr.bf16.mxu0 %v4874
    %6654 = vmatmul.mubr.bf16.gmra.mrb[0].mxu0 %v4873
    %v6655 = vpop.f32.mrb[0].mxu0
    %v6656 = vadd.f32 %v5234, %v6655
    %v6657 = vpop.f32.mrb[0].mxu0
    %v6658 = vadd.f32 %v5238, %v6657
    %v6659 = vpop.f32.mrb[0].mxu0
    %v6660 = vadd.f32 %v5234, %v6659
    %v6661 = vpop.f32.mrb[0].mxu0
    %v6662 = vadd.f32 %v5238, %v6661
    %6663 = vmatprep.mubr.bf16.mxu0 %v4878
    %6664 = vmatmul.mubr.bf16.gmra.mrb[0].mxu0 %v4877
    %v6665 = vpop.f32.mrb[0].mxu0
    %v6666 = vadd.f32 %v5234, %v6665
    %v6667 = vpop.f32.mrb[0].mxu0
    %v6668 = vadd.f32 %v5238, %v6667
    %v6669 = vpop.f32.mrb[0].mxu0
    %v6670 = vadd.f32 %v5234, %v6669
    %v6671 = vpop.f32.mrb[0].mxu0
    %v6672 = vadd.f32 %v5238, %v6671
    %6673 = vmatprep.mubr.bf16.mxu0 %v4882
    %6674 = vmatmul.mubr.bf16.gmra.mrb[0].mxu0 %v4881
    %v6675 = vpop.f32.mrb[0].mxu0
    %v6676 = vadd.f32 %v5234, %v6675
    %v6677 = vpop.f32.mrb[0].mxu0
    %v6678 = vadd.f32 %v5238, %v6677
    %v6679 = vpop.f32.mrb[0].mxu0
    %v6680 = vadd.f32 %v5234, %v6679
    %v6681 = vpop.f32.mrb[0].mxu0
    %v6682 = vadd.f32 %v5238, %v6681
    %6683 = vmatprep.mubr.bf16.mxu0 %v4886
    %6684 = vmatmul.mubr.bf16.gmra.mrb[0].mxu0 %v4885
    %v6685 = vpop.f32.mrb[0].mxu0
    %v6686 = vadd.f32 %v5234, %v6685
    %v6687 = vpop.f32.mrb[0].mxu0
    %v6688 = vadd.f32 %v5238, %v6687
    %v6689 = vpop.f32.mrb[0].mxu0
    %v6690 = vadd.f32 %v5234, %v6689
    %v6691 = vpop.f32.mrb[0].mxu0
    %v6692 = vadd.f32 %v5238, %v6691
    %6693 = vmatprep.mubr.bf16.mxu0 %v4890
    %6694 = vmatmul.mubr.bf16.gmra.mrb[0].mxu0 %v4889
    %v6695 = vpop.f32.mrb[0].mxu0
    %v6696 = vadd.f32 %v5234, %v6695
    %v6697 = vpop.f32.mrb[0].mxu0
    %v6698 = vadd.f32 %v5238, %v6697
    %v6699 = vpop.f32.mrb[0].mxu0
    %v6700 = vadd.f32 %v5234, %v6699
    %v6701 = vpop.f32.mrb[0].mxu0
    %v6702 = vadd.f32 %v5238, %v6701
    %6703 = vmatprep.mubr.bf16.mxu0 %v4894
    %6704 = vmatmul.mubr.bf16.gmra.mrb[0].mxu0 %v4893
    %v6705 = vpop.f32.mrb[0].mxu0
    %v6706 = vadd.f32 %v5234, %v6705
    %v6707 = vpop.f32.mrb[0].mxu0
    %v6708 = vadd.f32 %v5238, %v6707
    %v6709 = vpop.f32.mrb[0].mxu0
    %v6710 = vadd.f32 %v5234, %v6709
    %v6711 = vpop.f32.mrb[0].mxu0
    %v6712 = vadd.f32 %v5238, %v6711
    %6713 = vmatprep.mubr.bf16.mxu0 %v4898
    %6714 = vmatmul.mubr.bf16.gmra.mrb[0].mxu0 %v4897
    %v6715 = vpop.f32.mrb[0].mxu0
    %v6716 = vadd.f32 %v5234, %v6715
    %v6717 = vpop.f32.mrb[0].mxu0
    %v6718 = vadd.f32 %v5238, %v6717
    %v6719 = vpop.f32.mrb[0].mxu0
    %v6720 = vadd.f32 %v5234, %v6719
    %v6721 = vpop.f32.mrb[0].mxu0
    %v6722 = vadd.f32 %v5238, %v6721
    %6723 = vmatprep.mubr.bf16.mxu0 %v4902
    %6724 = vmatmul.mubr.bf16.gmra.mrb[0].mxu0 %v4901
    %v6725 = vpop.f32.mrb[0].mxu0
    %v6726 = vadd.f32 %v5234, %v6725
    %v6727 = vpop.f32.mrb[0].mxu0
    %v6728 = vadd.f32 %v5238, %v6727
    %v6729 = vpop.f32.mrb[0].mxu0
    %v6730 = vadd.f32 %v5234, %v6729
    %v6731 = vpop.f32.mrb[0].mxu0
    %v6732 = vadd.f32 %v5238, %v6731
    %6733 = vmatprep.mubr.bf16.mxu0 %v4906
    %6734 = vmatmul.mubr.bf16.gmra.mrb[0].mxu0 %v4905
    %v6735 = vpop.f32.mrb[0].mxu0
    %v6736 = vadd.f32 %v5234, %v6735
    %v6737 = vpop.f32.mrb[0].mxu0
    %v6738 = vadd.f32 %v5238, %v6737
    %v6739 = vpop.f32.mrb[0].mxu0
    %v6740 = vadd.f32 %v5234, %v6739
    %v6741 = vpop.f32.mrb[0].mxu0
    %v6742 = vadd.f32 %v5238, %v6741
    %6743 = vmatprep.mubr.bf16.mxu0 %v4910
    %6744 = vmatmul.mubr.bf16.gmra.mrb[0].mxu0 %v4909
    %v6745 = vpop.f32.mrb[0].mxu0
    %v6746 = vadd.f32 %v5234, %v6745
    %v6747 = vpop.f32.mrb[0].mxu0
    %v6748 = vadd.f32 %v5238, %v6747
    %v6749 = vpop.f32.mrb[0].mxu0
    %v6750 = vadd.f32 %v5234, %v6749
    %v6751 = vpop.f32.mrb[0].mxu0
    %v6752 = vadd.f32 %v5238, %v6751
    %6753 = vmatprep.mubr.bf16.mxu0 %v4914
    %6754 = vmatmul.mubr.bf16.gmra.mrb[0].mxu0 %v4913
    %v6755 = vpop.f32.mrb[0].mxu0
    %v6756 = vadd.f32 %v5234, %v6755
    %v6757 = vpop.f32.mrb[0].mxu0
    %v6758 = vadd.f32 %v5238, %v6757
    %v6759 = vpop.f32.mrb[0].mxu0
    %v6760 = vadd.f32 %v5234, %v6759
    %v6761 = vpop.f32.mrb[0].mxu0
    %v6762 = vadd.f32 %v5238, %v6761
    %6763 = vmatprep.mubr.bf16.mxu0 %v4918
    %6764 = vmatmul.mubr.bf16.gmra.mrb[0].mxu0 %v4917
    %v6765 = vpop.f32.mrb[0].mxu0
    %v6766 = vadd.f32 %v5234, %v6765
    %v6767 = vpop.f32.mrb[0].mxu0
    %v6768 = vadd.f32 %v5238, %v6767
    %v6769 = vpop.f32.mrb[0].mxu0
    %v6770 = vadd.f32 %v5234, %v6769
    %v6771 = vpop.f32.mrb[0].mxu0
    %v6772 = vadd.f32 %v5238, %v6771
    %6773 = vmatprep.mubr.bf16.mxu0 %v4922
    %6774 = vmatmul.mubr.bf16.gmra.mrb[0].mxu0 %v4921
    %v6775 = vpop.f32.mrb[0].mxu0
    %v6776 = vadd.f32 %v5234, %v6775
    %v6777 = vpop.f32.mrb[0].mxu0
    %v6778 = vadd.f32 %v5238, %v6777
    %v6779 = vpop.f32.mrb[0].mxu0
    %v6780 = vadd.f32 %v5234, %v6779
    %v6781 = vpop.f32.mrb[0].mxu0
    %v6782 = vadd.f32 %v5238, %v6781
    %6783 = vmatprep.mubr.bf16.mxu0 %v4926
    %6784 = vmatmul.mubr.bf16.gmra.mrb[0].mxu0 %v4925
    %v6785 = vpop.f32.mrb[0].mxu0
    %v6786 = vadd.f32 %v5234, %v6785
    %v6787 = vpop.f32.mrb[0].mxu0
    %v6788 = vadd.f32 %v5238, %v6787
    %v6789 = vpop.f32.mrb[0].mxu0
    %v6790 = vadd.f32 %v5234, %v6789
    %v6791 = vpop.f32.mrb[0].mxu0
    %v6792 = vadd.f32 %v5238, %v6791
    %6793 = vmatprep.mubr.bf16.mxu0 %v4930
    %6794 = vmatmul.mubr.bf16.gmra.mrb[0].mxu0 %v4929
    %v6795 = vpop.f32.mrb[0].mxu0
    %v6796 = vadd.f32 %v5234, %v6795
    %v6797 = vpop.f32.mrb[0].mxu0
    %v6798 = vadd.f32 %v5238, %v6797
    %v6799 = vpop.f32.mrb[0].mxu0
    %v6800 = vadd.f32 %v5234, %v6799
    %v6801 = vpop.f32.mrb[0].mxu0
    %v6802 = vadd.f32 %v5238, %v6801
    %6803 = vmatprep.mubr.bf16.mxu0 %v4934
    %6804 = vmatmul.mubr.bf16.gmra.mrb[0].mxu0 %v4933
    %v6805 = vpop.f32.mrb[0].mxu0
    %v6806 = vadd.f32 %v5234, %v6805
    %v6807 = vpop.f32.mrb[0].mxu0
    %v6808 = vadd.f32 %v5238, %v6807
    %v6809 = vpop.f32.mrb[0].mxu0
    %v6810 = vadd.f32 %v5234, %v6809
    %v6811 = vpop.f32.mrb[0].mxu0
    %v6812 = vadd.f32 %v5238, %v6811
    %6813 = vmatprep.mubr.bf16.mxu0 %v4938
    %6814 = vmatmul.mubr.bf16.gmra.mrb[0].mxu0 %v4937
    %v6815 = vpop.f32.mrb[0].mxu0
    %v6816 = vadd.f32 %v5234, %v6815
    %v6817 = vpop.f32.mrb[0].mxu0
    %v6818 = vadd.f32 %v5238, %v6817
    %v6819 = vpop.f32.mrb[0].mxu0
    %v6820 = vadd.f32 %v5234, %v6819
    %v6821 = vpop.f32.mrb[0].mxu0
    %v6822 = vadd.f32 %v5238, %v6821
    %6823 = vmatprep.mubr.bf16.mxu0 %v4942
    %6824 = vmatmul.mubr.bf16.gmra.mrb[0].mxu0 %v4941
    %v6825 = vpop.f32.mrb[0].mxu0
    %v6826 = vadd.f32 %v5234, %v6825
    %v6827 = vpop.f32.mrb[0].mxu0
    %v6828 = vadd.f32 %v5238, %v6827
    %v6829 = vpop.f32.mrb[0].mxu0
    %v6830 = vadd.f32 %v5234, %v6829
    %v6831 = vpop.f32.mrb[0].mxu0
    %v6832 = vadd.f32 %v5238, %v6831
    %6833 = vmatprep.mubr.bf16.mxu0 %v4946
    %6834 = vmatmul.mubr.bf16.gmra.mrb[0].mxu0 %v4945
    %v6835 = vpop.f32.mrb[0].mxu0
    %v6836 = vadd.f32 %v5234, %v6835
    %v6837 = vpop.f32.mrb[0].mxu0
    %v6838 = vadd.f32 %v5238, %v6837
    %v6839 = vpop.f32.mrb[0].mxu0
    %v6840 = vadd.f32 %v5234, %v6839
    %v6841 = vpop.f32.mrb[0].mxu0
    %v6842 = vadd.f32 %v5238, %v6841
    %6843 = vmatprep.mubr.bf16.mxu0 %v4950
    %6844 = vmatmul.mubr.bf16.gmra.mrb[0].mxu0 %v4949
    %v6845 = vpop.f32.mrb[0].mxu0
    %v6846 = vadd.f32 %v5234, %v6845
    %v6847 = vpop.f32.mrb[0].mxu0
    %v6848 = vadd.f32 %v5238, %v6847
    %v6849 = vpop.f32.mrb[0].mxu0
    %v6850 = vadd.f32 %v5234, %v6849
    %v6851 = vpop.f32.mrb[0].mxu0
    %v6852 = vadd.f32 %v5238, %v6851
    %6853 = vmatprep.mubr.bf16.mxu0 %v4954
    %6854 = vmatmul.mubr.bf16.gmra.mrb[0].mxu0 %v4953
    %v6855 = vpop.f32.mrb[0].mxu0
    %v6856 = vadd.f32 %v5234, %v6855
    %v6857 = vpop.f32.mrb[0].mxu0
    %v6858 = vadd.f32 %v5238, %v6857
    %v6859 = vpop.f32.mrb[0].mxu0
    %v6860 = vadd.f32 %v5234, %v6859
    %v6861 = vpop.f32.mrb[0].mxu0
    %v6862 = vadd.f32 %v5238, %v6861
    %6863 = vmatprep.mubr.bf16.mxu0 %v4958
    %6864 = vmatmul.mubr.bf16.gmra.mrb[0].mxu0 %v4957
    %v6865 = vpop.f32.mrb[0].mxu0
    %v6866 = vadd.f32 %v5234, %v6865
    %v6867 = vpop.f32.mrb[0].mxu0
    %v6868 = vadd.f32 %v5238, %v6867
    %v6869 = vpop.f32.mrb[0].mxu0
    %v6870 = vadd.f32 %v5234, %v6869
    %v6871 = vpop.f32.mrb[0].mxu0
    %v6872 = vadd.f32 %v5238, %v6871
    %6873 = vmatprep.mubr.bf16.mxu0 %v4962
    %6874 = vmatmul.mubr.bf16.gmra.mrb[0].mxu0 %v4961
    %v6875 = vpop.f32.mrb[0].mxu0
    %v6876 = vadd.f32 %v5234, %v6875
    %v6877 = vpop.f32.mrb[0].mxu0
    %v6878 = vadd.f32 %v5238, %v6877
    %v6879 = vpop.f32.mrb[0].mxu0
    %v6880 = vadd.f32 %v5234, %v6879
    %v6881 = vpop.f32.mrb[0].mxu0
    %v6882 = vadd.f32 %v5238, %v6881
    %6883 = vmatprep.mubr.bf16.mxu0 %v4966
    %6884 = vmatmul.mubr.bf16.gmra.mrb[0].mxu0 %v4965
    %v6885 = vpop.f32.mrb[0].mxu0
    %v6886 = vadd.f32 %v5234, %v6885
    %v6887 = vpop.f32.mrb[0].mxu0
    %v6888 = vadd.f32 %v5238, %v6887
    %v6889 = vpop.f32.mrb[0].mxu0
    %v6890 = vadd.f32 %v5234, %v6889
    %v6891 = vpop.f32.mrb[0].mxu0
    %v6892 = vadd.f32 %v5238, %v6891
    %6893 = vmatprep.mubr.bf16.mxu0 %v4970
    %6894 = vmatmul.mubr.bf16.gmra.mrb[0].mxu0 %v4969
    %v6895 = vpop.f32.mrb[0].mxu0
    %v6896 = vadd.f32 %v5234, %v6895
    %v6897 = vpop.f32.mrb[0].mxu0
    %v6898 = vadd.f32 %v5238, %v6897
    %v6899 = vpop.f32.mrb[0].mxu0
    %v6900 = vadd.f32 %v5234, %v6899
    %v6901 = vpop.f32.mrb[0].mxu0
    %v6902 = vadd.f32 %v5238, %v6901
    %6903 = vdwg.mxu0
    %6904 = vmatprep.subr.bf16.mxu0 %v6168
    %6905 = vmatpush1.bf16.msra.mxu0 %v6167
    %6906 = vmatprep.subr.bf16.mxu0 %v6176
    %6907 = vmatpush1.bf16.msra.mxu0 %v6175
    %6908 = vmatprep.subr.bf16.mxu0 %v6184
    %6909 = vmatpush1.bf16.msra.mxu0 %v6183
    %6910 = vmatprep.subr.bf16.mxu0 %v6192
    %6911 = vmatpush1.bf16.msra.mxu0 %v6191
    %6912 = vmatprep.subr.bf16.mxu0 %v6200
    %6913 = vmatpush1.bf16.msra.mxu0 %v6199
    %6914 = vmatprep.subr.bf16.mxu0 %v6208
    %6915 = vmatpush1.bf16.msra.mxu0 %v6207
    %6916 = vmatprep.subr.bf16.mxu0 %v6216
    %6917 = vmatpush1.bf16.msra.mxu0 %v6215
    %6918 = vmatprep.subr.bf16.mxu0 %v6224
    %6919 = vmatpush1.bf16.msra.mxu0 %v6223
    %6920 = vmatprep.subr.bf16.mxu0 %v6232
    %6921 = vmatpush1.bf16.msra.mxu0 %v6231
    %6922 = vmatprep.subr.bf16.mxu0 %v6240
    %6923 = vmatpush1.bf16.msra.mxu0 %v6239
    %6924 = vmatprep.subr.bf16.mxu0 %v6248
    %6925 = vmatpush1.bf16.msra.mxu0 %v6247
    %6926 = vmatprep.subr.bf16.mxu0 %v6256
    %6927 = vmatpush1.bf16.msra.mxu0 %v6255
    %6928 = vmatprep.subr.bf16.mxu0 %v6264
    %6929 = vmatpush1.bf16.msra.mxu0 %v6263
    %6930 = vmatprep.subr.bf16.mxu0 %v6272
    %6931 = vmatpush1.bf16.msra.mxu0 %v6271
    %6932 = vmatprep.subr.bf16.mxu0 %v6280
    %6933 = vmatpush1.bf16.msra.mxu0 %v6279
    %6934 = vmatprep.subr.bf16.mxu0 %v6288
    %6935 = vmatpush1.bf16.msra.mxu0 %v6287
    %6936 = vmatprep.mubr.bf16.mxu0 %v4848
    %6937 = vmatmul.mubr.bf16.gmra.mrb[0].mxu0 %v4847
    %v6938 = vpop.f32.mrb[0].mxu0
    %v6939 = vadd.f32 %v6586, %v6938
    %v6940 = vpop.f32.mrb[0].mxu0
    %v6941 = vadd.f32 %v6588, %v6940
    %v6942 = vpop.f32.mrb[0].mxu0
    %v6943 = vadd.f32 %v6590, %v6942
    %v6944 = vpop.f32.mrb[0].mxu0
    %v6945 = vadd.f32 %v6592, %v6944
    %6946 = vmatprep.mubr.bf16.mxu0 %v4852
    %6947 = vmatmul.mubr.bf16.gmra.mrb[0].mxu0 %v4851
    %v6948 = vpop.f32.mrb[0].mxu0
    %v6949 = vadd.f32 %v6596, %v6948
    %v6950 = vpop.f32.mrb[0].mxu0
    %v6951 = vadd.f32 %v6598, %v6950
    %v6952 = vpop.f32.mrb[0].mxu0
    %v6953 = vadd.f32 %v6600, %v6952
    %v6954 = vpop.f32.mrb[0].mxu0
    %v6955 = vadd.f32 %v6602, %v6954
    %6956 = vmatprep.mubr.bf16.mxu0 %v4856
    %6957 = vmatmul.mubr.bf16.gmra.mrb[0].mxu0 %v4855
    %v6958 = vpop.f32.mrb[0].mxu0
    %v6959 = vadd.f32 %v6606, %v6958
    %v6960 = vpop.f32.mrb[0].mxu0
    %v6961 = vadd.f32 %v6608, %v6960
    %v6962 = vpop.f32.mrb[0].mxu0
    %v6963 = vadd.f32 %v6610, %v6962
    %v6964 = vpop.f32.mrb[0].mxu0
    %v6965 = vadd.f32 %v6612, %v6964
    %6966 = vmatprep.mubr.bf16.mxu0 %v4860
    %6967 = vmatmul.mubr.bf16.gmra.mrb[0].mxu0 %v4859
    %v6968 = vpop.f32.mrb[0].mxu0
    %v6969 = vadd.f32 %v6616, %v6968
    %v6970 = vpop.f32.mrb[0].mxu0
    %v6971 = vadd.f32 %v6618, %v6970
    %v6972 = vpop.f32.mrb[0].mxu0
    %v6973 = vadd.f32 %v6620, %v6972
    %v6974 = vpop.f32.mrb[0].mxu0
    %v6975 = vadd.f32 %v6622, %v6974
    %6976 = vmatprep.mubr.bf16.mxu0 %v4864
    %6977 = vmatmul.mubr.bf16.gmra.mrb[0].mxu0 %v4863
    %v6978 = vpop.f32.mrb[0].mxu0
    %v6979 = vadd.f32 %v6626, %v6978
    %v6980 = vpop.f32.mrb[0].mxu0
    %v6981 = vadd.f32 %v6628, %v6980
    %v6982 = vpop.f32.mrb[0].mxu0
    %v6983 = vadd.f32 %v6630, %v6982
    %v6984 = vpop.f32.mrb[0].mxu0
    %v6985 = vadd.f32 %v6632, %v6984
    %6986 = vmatprep.mubr.bf16.mxu0 %v4868
    %6987 = vmatmul.mubr.bf16.gmra.mrb[0].mxu0 %v4867
    %v6988 = vpop.f32.mrb[0].mxu0
    %v6989 = vadd.f32 %v6636, %v6988
    %v6990 = vpop.f32.mrb[0].mxu0
    %v6991 = vadd.f32 %v6638, %v6990
    %v6992 = vpop.f32.mrb[0].mxu0
    %v6993 = vadd.f32 %v6640, %v6992
    %v6994 = vpop.f32.mrb[0].mxu0
    %v6995 = vadd.f32 %v6642, %v6994
    %6996 = vmatprep.mubr.bf16.mxu0 %v4872
    %6997 = vmatmul.mubr.bf16.gmra.mrb[0].mxu0 %v4871
    %v6998 = vpop.f32.mrb[0].mxu0
    %v6999 = vadd.f32 %v6646, %v6998
    %v7000 = vpop.f32.mrb[0].mxu0
    %v7001 = vadd.f32 %v6648, %v7000
    %v7002 = vpop.f32.mrb[0].mxu0
    %v7003 = vadd.f32 %v6650, %v7002
    %v7004 = vpop.f32.mrb[0].mxu0
    %v7005 = vadd.f32 %v6652, %v7004
    %7006 = vmatprep.mubr.bf16.mxu0 %v4876
    %7007 = vmatmul.mubr.bf16.gmra.mrb[0].mxu0 %v4875
    %v7008 = vpop.f32.mrb[0].mxu0
    %v7009 = vadd.f32 %v6656, %v7008
    %v7010 = vpop.f32.mrb[0].mxu0
    %v7011 = vadd.f32 %v6658, %v7010
    %v7012 = vpop.f32.mrb[0].mxu0
    %v7013 = vadd.f32 %v6660, %v7012
    %v7014 = vpop.f32.mrb[0].mxu0
    %v7015 = vadd.f32 %v6662, %v7014
    %7016 = vmatprep.mubr.bf16.mxu0 %v4880
    %7017 = vmatmul.mubr.bf16.gmra.mrb[0].mxu0 %v4879
    %v7018 = vpop.f32.mrb[0].mxu0
    %v7019 = vadd.f32 %v6666, %v7018
    %v7020 = vpop.f32.mrb[0].mxu0
    %v7021 = vadd.f32 %v6668, %v7020
    %v7022 = vpop.f32.mrb[0].mxu0
    %v7023 = vadd.f32 %v6670, %v7022
    %v7024 = vpop.f32.mrb[0].mxu0
    %v7025 = vadd.f32 %v6672, %v7024
    %7026 = vmatprep.mubr.bf16.mxu0 %v4884
    %7027 = vmatmul.mubr.bf16.gmra.mrb[0].mxu0 %v4883
    %v7028 = vpop.f32.mrb[0].mxu0
    %v7029 = vadd.f32 %v6676, %v7028
    %v7030 = vpop.f32.mrb[0].mxu0
    %v7031 = vadd.f32 %v6678, %v7030
    %v7032 = vpop.f32.mrb[0].mxu0
    %v7033 = vadd.f32 %v6680, %v7032
    %v7034 = vpop.f32.mrb[0].mxu0
    %v7035 = vadd.f32 %v6682, %v7034
    %7036 = vmatprep.mubr.bf16.mxu0 %v4888
    %7037 = vmatmul.mubr.bf16.gmra.mrb[0].mxu0 %v4887
    %v7038 = vpop.f32.mrb[0].mxu0
    %v7039 = vadd.f32 %v6686, %v7038
    %v7040 = vpop.f32.mrb[0].mxu0
    %v7041 = vadd.f32 %v6688, %v7040
    %v7042 = vpop.f32.mrb[0].mxu0
    %v7043 = vadd.f32 %v6690, %v7042
    %v7044 = vpop.f32.mrb[0].mxu0
    %v7045 = vadd.f32 %v6692, %v7044
    %7046 = vmatprep.mubr.bf16.mxu0 %v4892
    %7047 = vmatmul.mubr.bf16.gmra.mrb[0].mxu0 %v4891
    %v7048 = vpop.f32.mrb[0].mxu0
    %v7049 = vadd.f32 %v6696, %v7048
    %v7050 = vpop.f32.mrb[0].mxu0
    %v7051 = vadd.f32 %v6698, %v7050
    %v7052 = vpop.f32.mrb[0].mxu0
    %v7053 = vadd.f32 %v6700, %v7052
    %v7054 = vpop.f32.mrb[0].mxu0
    %v7055 = vadd.f32 %v6702, %v7054
    %7056 = vmatprep.mubr.bf16.mxu0 %v4896
    %7057 = vmatmul.mubr.bf16.gmra.mrb[0].mxu0 %v4895
    %v7058 = vpop.f32.mrb[0].mxu0
    %v7059 = vadd.f32 %v6706, %v7058
    %v7060 = vpop.f32.mrb[0].mxu0
    %v7061 = vadd.f32 %v6708, %v7060
    %v7062 = vpop.f32.mrb[0].mxu0
    %v7063 = vadd.f32 %v6710, %v7062
    %v7064 = vpop.f32.mrb[0].mxu0
    %v7065 = vadd.f32 %v6712, %v7064
    %7066 = vmatprep.mubr.bf16.mxu0 %v4900
    %7067 = vmatmul.mubr.bf16.gmra.mrb[0].mxu0 %v4899
    %v7068 = vpop.f32.mrb[0].mxu0
    %v7069 = vadd.f32 %v6716, %v7068
    %v7070 = vpop.f32.mrb[0].mxu0
    %v7071 = vadd.f32 %v6718, %v7070
    %v7072 = vpop.f32.mrb[0].mxu0
    %v7073 = vadd.f32 %v6720, %v7072
    %v7074 = vpop.f32.mrb[0].mxu0
    %v7075 = vadd.f32 %v6722, %v7074
    %7076 = vmatprep.mubr.bf16.mxu0 %v4904
    %7077 = vmatmul.mubr.bf16.gmra.mrb[0].mxu0 %v4903
    %v7078 = vpop.f32.mrb[0].mxu0
    %v7079 = vadd.f32 %v6726, %v7078
    %v7080 = vpop.f32.mrb[0].mxu0
    %v7081 = vadd.f32 %v6728, %v7080
    %v7082 = vpop.f32.mrb[0].mxu0
    %v7083 = vadd.f32 %v6730, %v7082
    %v7084 = vpop.f32.mrb[0].mxu0
    %v7085 = vadd.f32 %v6732, %v7084
    %7086 = vmatprep.mubr.bf16.mxu0 %v4908
    %7087 = vmatmul.mubr.bf16.gmra.mrb[0].mxu0 %v4907
    %v7088 = vpop.f32.mrb[0].mxu0
    %v7089 = vadd.f32 %v6736, %v7088
    %v7090 = vpop.f32.mrb[0].mxu0
    %v7091 = vadd.f32 %v6738, %v7090
    %v7092 = vpop.f32.mrb[0].mxu0
    %v7093 = vadd.f32 %v6740, %v7092
    %v7094 = vpop.f32.mrb[0].mxu0
    %v7095 = vadd.f32 %v6742, %v7094
    %7096 = vmatprep.mubr.bf16.mxu0 %v4912
    %7097 = vmatmul.mubr.bf16.gmra.mrb[0].mxu0 %v4911
    %v7098 = vpop.f32.mrb[0].mxu0
    %v7099 = vadd.f32 %v6746, %v7098
    %v7100 = vpop.f32.mrb[0].mxu0
    %v7101 = vadd.f32 %v6748, %v7100
    %v7102 = vpop.f32.mrb[0].mxu0
    %v7103 = vadd.f32 %v6750, %v7102
    %v7104 = vpop.f32.mrb[0].mxu0
    %v7105 = vadd.f32 %v6752, %v7104
    %7106 = vmatprep.mubr.bf16.mxu0 %v4916
    %7107 = vmatmul.mubr.bf16.gmra.mrb[0].mxu0 %v4915
    %v7108 = vpop.f32.mrb[0].mxu0
    %v7109 = vadd.f32 %v6756, %v7108
    %v7110 = vpop.f32.mrb[0].mxu0
    %v7111 = vadd.f32 %v6758, %v7110
    %v7112 = vpop.f32.mrb[0].mxu0
    %v7113 = vadd.f32 %v6760, %v7112
    %v7114 = vpop.f32.mrb[0].mxu0
    %v7115 = vadd.f32 %v6762, %v7114
    %7116 = vmatprep.mubr.bf16.mxu0 %v4920
    %7117 = vmatmul.mubr.bf16.gmra.mrb[0].mxu0 %v4919
    %v7118 = vpop.f32.mrb[0].mxu0
    %v7119 = vadd.f32 %v6766, %v7118
    %v7120 = vpop.f32.mrb[0].mxu0
    %v7121 = vadd.f32 %v6768, %v7120
    %v7122 = vpop.f32.mrb[0].mxu0
    %v7123 = vadd.f32 %v6770, %v7122
    %v7124 = vpop.f32.mrb[0].mxu0
    %v7125 = vadd.f32 %v6772, %v7124
    %7126 = vmatprep.mubr.bf16.mxu0 %v4924
    %7127 = vmatmul.mubr.bf16.gmra.mrb[0].mxu0 %v4923
    %v7128 = vpop.f32.mrb[0].mxu0
    %v7129 = vadd.f32 %v6776, %v7128
    %v7130 = vpop.f32.mrb[0].mxu0
    %v7131 = vadd.f32 %v6778, %v7130
    %v7132 = vpop.f32.mrb[0].mxu0
    %v7133 = vadd.f32 %v6780, %v7132
    %v7134 = vpop.f32.mrb[0].mxu0
    %v7135 = vadd.f32 %v6782, %v7134
    %7136 = vmatprep.mubr.bf16.mxu0 %v4928
    %7137 = vmatmul.mubr.bf16.gmra.mrb[0].mxu0 %v4927
    %v7138 = vpop.f32.mrb[0].mxu0
    %v7139 = vadd.f32 %v6786, %v7138
    %v7140 = vpop.f32.mrb[0].mxu0
    %v7141 = vadd.f32 %v6788, %v7140
    %v7142 = vpop.f32.mrb[0].mxu0
    %v7143 = vadd.f32 %v6790, %v7142
    %v7144 = vpop.f32.mrb[0].mxu0
    %v7145 = vadd.f32 %v6792, %v7144
    %7146 = vmatprep.mubr.bf16.mxu0 %v4932
    %7147 = vmatmul.mubr.bf16.gmra.mrb[0].mxu0 %v4931
    %v7148 = vpop.f32.mrb[0].mxu0
    %v7149 = vadd.f32 %v6796, %v7148
    %v7150 = vpop.f32.mrb[0].mxu0
    %v7151 = vadd.f32 %v6798, %v7150
    %v7152 = vpop.f32.mrb[0].mxu0
    %v7153 = vadd.f32 %v6800, %v7152
    %v7154 = vpop.f32.mrb[0].mxu0
    %v7155 = vadd.f32 %v6802, %v7154
    %7156 = vmatprep.mubr.bf16.mxu0 %v4936
    %7157 = vmatmul.mubr.bf16.gmra.mrb[0].mxu0 %v4935
    %v7158 = vpop.f32.mrb[0].mxu0
    %v7159 = vadd.f32 %v6806, %v7158
    %v7160 = vpop.f32.mrb[0].mxu0
    %v7161 = vadd.f32 %v6808, %v7160
    %v7162 = vpop.f32.mrb[0].mxu0
    %v7163 = vadd.f32 %v6810, %v7162
    %v7164 = vpop.f32.mrb[0].mxu0
    %v7165 = vadd.f32 %v6812, %v7164
    %7166 = vmatprep.mubr.bf16.mxu0 %v4940
    %7167 = vmatmul.mubr.bf16.gmra.mrb[0].mxu0 %v4939
    %v7168 = vpop.f32.mrb[0].mxu0
    %v7169 = vadd.f32 %v6816, %v7168
    %v7170 = vpop.f32.mrb[0].mxu0
    %v7171 = vadd.f32 %v6818, %v7170
    %v7172 = vpop.f32.mrb[0].mxu0
    %v7173 = vadd.f32 %v6820, %v7172
    %v7174 = vpop.f32.mrb[0].mxu0
    %v7175 = vadd.f32 %v6822, %v7174
    %7176 = vmatprep.mubr.bf16.mxu0 %v4944
    %7177 = vmatmul.mubr.bf16.gmra.mrb[0].mxu0 %v4943
    %v7178 = vpop.f32.mrb[0].mxu0
    %v7179 = vadd.f32 %v6826, %v7178
    %v7180 = vpop.f32.mrb[0].mxu0
    %v7181 = vadd.f32 %v6828, %v7180
    %v7182 = vpop.f32.mrb[0].mxu0
    %v7183 = vadd.f32 %v6830, %v7182
    %v7184 = vpop.f32.mrb[0].mxu0
    %v7185 = vadd.f32 %v6832, %v7184
    %7186 = vmatprep.mubr.bf16.mxu0 %v4948
    %7187 = vmatmul.mubr.bf16.gmra.mrb[0].mxu0 %v4947
    %v7188 = vpop.f32.mrb[0].mxu0
    %v7189 = vadd.f32 %v6836, %v7188
    %v7190 = vpop.f32.mrb[0].mxu0
    %v7191 = vadd.f32 %v6838, %v7190
    %v7192 = vpop.f32.mrb[0].mxu0
    %v7193 = vadd.f32 %v6840, %v7192
    %v7194 = vpop.f32.mrb[0].mxu0
    %v7195 = vadd.f32 %v6842, %v7194
    %7196 = vmatprep.mubr.bf16.mxu0 %v4952
    %7197 = vmatmul.mubr.bf16.gmra.mrb[0].mxu0 %v4951
    %v7198 = vpop.f32.mrb[0].mxu0
    %v7199 = vadd.f32 %v6846, %v7198
    %v7200 = vpop.f32.mrb[0].mxu0
    %v7201 = vadd.f32 %v6848, %v7200
    %v7202 = vpop.f32.mrb[0].mxu0
    %v7203 = vadd.f32 %v6850, %v7202
    %v7204 = vpop.f32.mrb[0].mxu0
    %v7205 = vadd.f32 %v6852, %v7204
    %7206 = vmatprep.mubr.bf16.mxu0 %v4956
    %7207 = vmatmul.mubr.bf16.gmra.mrb[0].mxu0 %v4955
    %v7208 = vpop.f32.mrb[0].mxu0
    %v7209 = vadd.f32 %v6856, %v7208
    %v7210 = vpop.f32.mrb[0].mxu0
    %v7211 = vadd.f32 %v6858, %v7210
    %v7212 = vpop.f32.mrb[0].mxu0
    %v7213 = vadd.f32 %v6860, %v7212
    %v7214 = vpop.f32.mrb[0].mxu0
    %v7215 = vadd.f32 %v6862, %v7214
    %7216 = vmatprep.mubr.bf16.mxu0 %v4960
    %7217 = vmatmul.mubr.bf16.gmra.mrb[0].mxu0 %v4959
    %v7218 = vpop.f32.mrb[0].mxu0
    %v7219 = vadd.f32 %v6866, %v7218
    %v7220 = vpop.f32.mrb[0].mxu0
    %v7221 = vadd.f32 %v6868, %v7220
    %v7222 = vpop.f32.mrb[0].mxu0
    %v7223 = vadd.f32 %v6870, %v7222
    %v7224 = vpop.f32.mrb[0].mxu0
    %v7225 = vadd.f32 %v6872, %v7224
    %7226 = vmatprep.mubr.bf16.mxu0 %v4964
    %7227 = vmatmul.mubr.bf16.gmra.mrb[0].mxu0 %v4963
    %v7228 = vpop.f32.mrb[0].mxu0
    %v7229 = vadd.f32 %v6876, %v7228
    %v7230 = vpop.f32.mrb[0].mxu0
    %v7231 = vadd.f32 %v6878, %v7230
    %v7232 = vpop.f32.mrb[0].mxu0
    %v7233 = vadd.f32 %v6880, %v7232
    %v7234 = vpop.f32.mrb[0].mxu0
    %v7235 = vadd.f32 %v6882, %v7234
    %7236 = vmatprep.mubr.bf16.mxu0 %v4968
    %7237 = vmatmul.mubr.bf16.gmra.mrb[0].mxu0 %v4967
    %v7238 = vpop.f32.mrb[0].mxu0
    %v7239 = vadd.f32 %v6886, %v7238
    %v7240 = vpop.f32.mrb[0].mxu0
    %v7241 = vadd.f32 %v6888, %v7240
    %v7242 = vpop.f32.mrb[0].mxu0
    %v7243 = vadd.f32 %v6890, %v7242
    %v7244 = vpop.f32.mrb[0].mxu0
    %v7245 = vadd.f32 %v6892, %v7244
    %7246 = vmatprep.mubr.bf16.mxu0 %v4972
    %7247 = vmatmul.mubr.bf16.gmra.mrb[0].mxu0 %v4971
    %v7248 = vpop.f32.mrb[0].mxu0
    %v7249 = vadd.f32 %v6896, %v7248
    %v7250 = vpop.f32.mrb[0].mxu0
    %v7251 = vadd.f32 %v6898, %v7250
    %v7252 = vpop.f32.mrb[0].mxu0
    %v7253 = vadd.f32 %v6900, %v7252
    %v7254 = vpop.f32.mrb[0].mxu0
    %v7255 = vadd.f32 %v6902, %v7254
    %7256 = vdwg.mxu0
    %7257 = vmatprep.subr.bf16.mxu0 %v6042
    %7258 = vmatpush1.bf16.msra.mxu0 %v6041
    %7259 = vmatprep.subr.bf16.mxu0 %v6050
    %7260 = vmatpush1.bf16.msra.mxu0 %v6049
    %7261 = vmatprep.subr.bf16.mxu0 %v6058
    %7262 = vmatpush1.bf16.msra.mxu0 %v6057
    %7263 = vmatprep.subr.bf16.mxu0 %v6066
    %7264 = vmatpush1.bf16.msra.mxu0 %v6065
    %7265 = vmatprep.subr.bf16.mxu0 %v6074
    %7266 = vmatpush1.bf16.msra.mxu0 %v6073
    %7267 = vmatprep.subr.bf16.mxu0 %v6082
    %7268 = vmatpush1.bf16.msra.mxu0 %v6081
    %7269 = vmatprep.subr.bf16.mxu0 %v6090
    %7270 = vmatpush1.bf16.msra.mxu0 %v6089
    %7271 = vmatprep.subr.bf16.mxu0 %v6098
    %7272 = vmatpush1.bf16.msra.mxu0 %v6097
    %7273 = vmatprep.subr.bf16.mxu0 %v6106
    %7274 = vmatpush1.bf16.msra.mxu0 %v6105
    %7275 = vmatprep.subr.bf16.mxu0 %v6114
    %7276 = vmatpush1.bf16.msra.mxu0 %v6113
    %7277 = vmatprep.subr.bf16.mxu0 %v6122
    %7278 = vmatpush1.bf16.msra.mxu0 %v6121
    %7279 = vmatprep.subr.bf16.mxu0 %v6130
    %7280 = vmatpush1.bf16.msra.mxu0 %v6129
    %7281 = vmatprep.subr.bf16.mxu0 %v6138
    %7282 = vmatpush1.bf16.msra.mxu0 %v6137
    %7283 = vmatprep.subr.bf16.mxu0 %v6146
    %7284 = vmatpush1.bf16.msra.mxu0 %v6145
    %7285 = vmatprep.subr.bf16.mxu0 %v6154
    %7286 = vmatpush1.bf16.msra.mxu0 %v6153
    %7287 = vmatprep.subr.bf16.mxu0 %v6162
    %7288 = vmatpush1.bf16.msra.mxu0 %v6161
    %7289 = vmatprep.mubr.bf16.mxu0 %v4846
    %7290 = vmatmul.mubr.bf16.gmra.mrb[0].mxu0 %v4845
    %v7291 = vpop.f32.mrb[0].mxu0
    %v7292 = vadd.f32 %v5242, %v7291
    %v7293 = vpop.f32.mrb[0].mxu0
    %v7294 = vadd.f32 %v5246, %v7293
    %v7295 = vpop.f32.mrb[0].mxu0
    %v7296 = vadd.f32 %v5242, %v7295
    %v7297 = vpop.f32.mrb[0].mxu0
    %v7298 = vadd.f32 %v5246, %v7297
    %7299 = vmatprep.mubr.bf16.mxu0 %v4850
    %7300 = vmatmul.mubr.bf16.gmra.mrb[0].mxu0 %v4849
    %v7301 = vpop.f32.mrb[0].mxu0
    %v7302 = vadd.f32 %v5242, %v7301
    %v7303 = vpop.f32.mrb[0].mxu0
    %v7304 = vadd.f32 %v5246, %v7303
    %v7305 = vpop.f32.mrb[0].mxu0
    %v7306 = vadd.f32 %v5242, %v7305
    %v7307 = vpop.f32.mrb[0].mxu0
    %v7308 = vadd.f32 %v5246, %v7307
    %7309 = vmatprep.mubr.bf16.mxu0 %v4854
    %7310 = vmatmul.mubr.bf16.gmra.mrb[0].mxu0 %v4853
    %v7311 = vpop.f32.mrb[0].mxu0
    %v7312 = vadd.f32 %v5242, %v7311
    %v7313 = vpop.f32.mrb[0].mxu0
    %v7314 = vadd.f32 %v5246, %v7313
    %v7315 = vpop.f32.mrb[0].mxu0
    %v7316 = vadd.f32 %v5242, %v7315
    %v7317 = vpop.f32.mrb[0].mxu0
    %v7318 = vadd.f32 %v5246, %v7317
    %7319 = vmatprep.mubr.bf16.mxu0 %v4858
    %7320 = vmatmul.mubr.bf16.gmra.mrb[0].mxu0 %v4857
    %v7321 = vpop.f32.mrb[0].mxu0
    %v7322 = vadd.f32 %v5242, %v7321
    %v7323 = vpop.f32.mrb[0].mxu0
    %v7324 = vadd.f32 %v5246, %v7323
    %v7325 = vpop.f32.mrb[0].mxu0
    %v7326 = vadd.f32 %v5242, %v7325
    %v7327 = vpop.f32.mrb[0].mxu0
    %v7328 = vadd.f32 %v5246, %v7327
    %7329 = vmatprep.mubr.bf16.mxu0 %v4862
    %7330 = vmatmul.mubr.bf16.gmra.mrb[0].mxu0 %v4861
    %v7331 = vpop.f32.mrb[0].mxu0
    %v7332 = vadd.f32 %v5242, %v7331
    %v7333 = vpop.f32.mrb[0].mxu0
    %v7334 = vadd.f32 %v5246, %v7333
    %v7335 = vpop.f32.mrb[0].mxu0
    %v7336 = vadd.f32 %v5242, %v7335
    %v7337 = vpop.f32.mrb[0].mxu0
    %v7338 = vadd.f32 %v5246, %v7337
    %7339 = vmatprep.mubr.bf16.mxu0 %v4866
    %7340 = vmatmul.mubr.bf16.gmra.mrb[0].mxu0 %v4865
    %v7341 = vpop.f32.mrb[0].mxu0
    %v7342 = vadd.f32 %v5242, %v7341
    %v7343 = vpop.f32.mrb[0].mxu0
    %v7344 = vadd.f32 %v5246, %v7343
    %v7345 = vpop.f32.mrb[0].mxu0
    %v7346 = vadd.f32 %v5242, %v7345
    %v7347 = vpop.f32.mrb[0].mxu0
    %v7348 = vadd.f32 %v5246, %v7347
    %7349 = vmatprep.mubr.bf16.mxu0 %v4870
    %7350 = vmatmul.mubr.bf16.gmra.mrb[0].mxu0 %v4869
    %v7351 = vpop.f32.mrb[0].mxu0
    %v7352 = vadd.f32 %v5242, %v7351
    %v7353 = vpop.f32.mrb[0].mxu0
    %v7354 = vadd.f32 %v5246, %v7353
    %v7355 = vpop.f32.mrb[0].mxu0
    %v7356 = vadd.f32 %v5242, %v7355
    %v7357 = vpop.f32.mrb[0].mxu0
    %v7358 = vadd.f32 %v5246, %v7357
    %7359 = vmatprep.mubr.bf16.mxu0 %v4874
    %7360 = vmatmul.mubr.bf16.gmra.mrb[0].mxu0 %v4873
    %v7361 = vpop.f32.mrb[0].mxu0
    %v7362 = vadd.f32 %v5242, %v7361
    %v7363 = vpop.f32.mrb[0].mxu0
    %v7364 = vadd.f32 %v5246, %v7363
    %v7365 = vpop.f32.mrb[0].mxu0
    %v7366 = vadd.f32 %v5242, %v7365
    %v7367 = vpop.f32.mrb[0].mxu0
    %v7368 = vadd.f32 %v5246, %v7367
    %7369 = vmatprep.mubr.bf16.mxu0 %v4878
    %7370 = vmatmul.mubr.bf16.gmra.mrb[0].mxu0 %v4877
    %v7371 = vpop.f32.mrb[0].mxu0
    %v7372 = vadd.f32 %v5242, %v7371
    %v7373 = vpop.f32.mrb[0].mxu0
    %v7374 = vadd.f32 %v5246, %v7373
    %v7375 = vpop.f32.mrb[0].mxu0
    %v7376 = vadd.f32 %v5242, %v7375
    %v7377 = vpop.f32.mrb[0].mxu0
    %v7378 = vadd.f32 %v5246, %v7377
    %7379 = vmatprep.mubr.bf16.mxu0 %v4882
    %7380 = vmatmul.mubr.bf16.gmra.mrb[0].mxu0 %v4881
    %v7381 = vpop.f32.mrb[0].mxu0
    %v7382 = vadd.f32 %v5242, %v7381
    %v7383 = vpop.f32.mrb[0].mxu0
    %v7384 = vadd.f32 %v5246, %v7383
    %v7385 = vpop.f32.mrb[0].mxu0
    %v7386 = vadd.f32 %v5242, %v7385
    %v7387 = vpop.f32.mrb[0].mxu0
    %v7388 = vadd.f32 %v5246, %v7387
    %7389 = vmatprep.mubr.bf16.mxu0 %v4886
    %7390 = vmatmul.mubr.bf16.gmra.mrb[0].mxu0 %v4885
    %v7391 = vpop.f32.mrb[0].mxu0
    %v7392 = vadd.f32 %v5242, %v7391
    %v7393 = vpop.f32.mrb[0].mxu0
    %v7394 = vadd.f32 %v5246, %v7393
    %v7395 = vpop.f32.mrb[0].mxu0
    %v7396 = vadd.f32 %v5242, %v7395
    %v7397 = vpop.f32.mrb[0].mxu0
    %v7398 = vadd.f32 %v5246, %v7397
    %7399 = vmatprep.mubr.bf16.mxu0 %v4890
    %7400 = vmatmul.mubr.bf16.gmra.mrb[0].mxu0 %v4889
    %v7401 = vpop.f32.mrb[0].mxu0
    %v7402 = vadd.f32 %v5242, %v7401
    %v7403 = vpop.f32.mrb[0].mxu0
    %v7404 = vadd.f32 %v5246, %v7403
    %v7405 = vpop.f32.mrb[0].mxu0
    %v7406 = vadd.f32 %v5242, %v7405
    %v7407 = vpop.f32.mrb[0].mxu0
    %v7408 = vadd.f32 %v5246, %v7407
    %7409 = vmatprep.mubr.bf16.mxu0 %v4894
    %7410 = vmatmul.mubr.bf16.gmra.mrb[0].mxu0 %v4893
    %v7411 = vpop.f32.mrb[0].mxu0
    %v7412 = vadd.f32 %v5242, %v7411
    %v7413 = vpop.f32.mrb[0].mxu0
    %v7414 = vadd.f32 %v5246, %v7413
    %v7415 = vpop.f32.mrb[0].mxu0
    %v7416 = vadd.f32 %v5242, %v7415
    %v7417 = vpop.f32.mrb[0].mxu0
    %v7418 = vadd.f32 %v5246, %v7417
    %7419 = vmatprep.mubr.bf16.mxu0 %v4898
    %7420 = vmatmul.mubr.bf16.gmra.mrb[0].mxu0 %v4897
    %v7421 = vpop.f32.mrb[0].mxu0
    %v7422 = vadd.f32 %v5242, %v7421
    %v7423 = vpop.f32.mrb[0].mxu0
    %v7424 = vadd.f32 %v5246, %v7423
    %v7425 = vpop.f32.mrb[0].mxu0
    %v7426 = vadd.f32 %v5242, %v7425
    %v7427 = vpop.f32.mrb[0].mxu0
    %v7428 = vadd.f32 %v5246, %v7427
    %7429 = vmatprep.mubr.bf16.mxu0 %v4902
    %7430 = vmatmul.mubr.bf16.gmra.mrb[0].mxu0 %v4901
    %v7431 = vpop.f32.mrb[0].mxu0
    %v7432 = vadd.f32 %v5242, %v7431
    %v7433 = vpop.f32.mrb[0].mxu0
    %v7434 = vadd.f32 %v5246, %v7433
    %v7435 = vpop.f32.mrb[0].mxu0
    %v7436 = vadd.f32 %v5242, %v7435
    %v7437 = vpop.f32.mrb[0].mxu0
    %v7438 = vadd.f32 %v5246, %v7437
    %7439 = vmatprep.mubr.bf16.mxu0 %v4906
    %7440 = vmatmul.mubr.bf16.gmra.mrb[0].mxu0 %v4905
    %v7441 = vpop.f32.mrb[0].mxu0
    %v7442 = vadd.f32 %v5242, %v7441
    %v7443 = vpop.f32.mrb[0].mxu0
    %v7444 = vadd.f32 %v5246, %v7443
    %v7445 = vpop.f32.mrb[0].mxu0
    %v7446 = vadd.f32 %v5242, %v7445
    %v7447 = vpop.f32.mrb[0].mxu0
    %v7448 = vadd.f32 %v5246, %v7447
    %7449 = vmatprep.mubr.bf16.mxu0 %v4910
    %7450 = vmatmul.mubr.bf16.gmra.mrb[0].mxu0 %v4909
    %v7451 = vpop.f32.mrb[0].mxu0
    %v7452 = vadd.f32 %v5242, %v7451
    %v7453 = vpop.f32.mrb[0].mxu0
    %v7454 = vadd.f32 %v5246, %v7453
    %v7455 = vpop.f32.mrb[0].mxu0
    %v7456 = vadd.f32 %v5242, %v7455
    %v7457 = vpop.f32.mrb[0].mxu0
    %v7458 = vadd.f32 %v5246, %v7457
    %7459 = vmatprep.mubr.bf16.mxu0 %v4914
    %7460 = vmatmul.mubr.bf16.gmra.mrb[0].mxu0 %v4913
    %v7461 = vpop.f32.mrb[0].mxu0
    %v7462 = vadd.f32 %v5242, %v7461
    %v7463 = vpop.f32.mrb[0].mxu0
    %v7464 = vadd.f32 %v5246, %v7463
    %v7465 = vpop.f32.mrb[0].mxu0
    %v7466 = vadd.f32 %v5242, %v7465
    %v7467 = vpop.f32.mrb[0].mxu0
    %v7468 = vadd.f32 %v5246, %v7467
    %7469 = vmatprep.mubr.bf16.mxu0 %v4918
    %7470 = vmatmul.mubr.bf16.gmra.mrb[0].mxu0 %v4917
    %v7471 = vpop.f32.mrb[0].mxu0
    %v7472 = vadd.f32 %v5242, %v7471
    %v7473 = vpop.f32.mrb[0].mxu0
    %v7474 = vadd.f32 %v5246, %v7473
    %v7475 = vpop.f32.mrb[0].mxu0
    %v7476 = vadd.f32 %v5242, %v7475
    %v7477 = vpop.f32.mrb[0].mxu0
    %v7478 = vadd.f32 %v5246, %v7477
    %7479 = vmatprep.mubr.bf16.mxu0 %v4922
    %7480 = vmatmul.mubr.bf16.gmra.mrb[0].mxu0 %v4921
    %v7481 = vpop.f32.mrb[0].mxu0
    %v7482 = vadd.f32 %v5242, %v7481
    %v7483 = vpop.f32.mrb[0].mxu0
    %v7484 = vadd.f32 %v5246, %v7483
    %v7485 = vpop.f32.mrb[0].mxu0
    %v7486 = vadd.f32 %v5242, %v7485
    %v7487 = vpop.f32.mrb[0].mxu0
    %v7488 = vadd.f32 %v5246, %v7487
    %7489 = vmatprep.mubr.bf16.mxu0 %v4926
    %7490 = vmatmul.mubr.bf16.gmra.mrb[0].mxu0 %v4925
    %v7491 = vpop.f32.mrb[0].mxu0
    %v7492 = vadd.f32 %v5242, %v7491
    %v7493 = vpop.f32.mrb[0].mxu0
    %v7494 = vadd.f32 %v5246, %v7493
    %v7495 = vpop.f32.mrb[0].mxu0
    %v7496 = vadd.f32 %v5242, %v7495
    %v7497 = vpop.f32.mrb[0].mxu0
    %v7498 = vadd.f32 %v5246, %v7497
    %7499 = vmatprep.mubr.bf16.mxu0 %v4930
    %7500 = vmatmul.mubr.bf16.gmra.mrb[0].mxu0 %v4929
    %v7501 = vpop.f32.mrb[0].mxu0
    %v7502 = vadd.f32 %v5242, %v7501
    %v7503 = vpop.f32.mrb[0].mxu0
    %v7504 = vadd.f32 %v5246, %v7503
    %v7505 = vpop.f32.mrb[0].mxu0
    %v7506 = vadd.f32 %v5242, %v7505
    %v7507 = vpop.f32.mrb[0].mxu0
    %v7508 = vadd.f32 %v5246, %v7507
    %7509 = vmatprep.mubr.bf16.mxu0 %v4934
    %7510 = vmatmul.mubr.bf16.gmra.mrb[0].mxu0 %v4933
    %v7511 = vpop.f32.mrb[0].mxu0
    %v7512 = vadd.f32 %v5242, %v7511
    %v7513 = vpop.f32.mrb[0].mxu0
    %v7514 = vadd.f32 %v5246, %v7513
    %v7515 = vpop.f32.mrb[0].mxu0
    %v7516 = vadd.f32 %v5242, %v7515
    %v7517 = vpop.f32.mrb[0].mxu0
    %v7518 = vadd.f32 %v5246, %v7517
    %7519 = vmatprep.mubr.bf16.mxu0 %v4938
    %7520 = vmatmul.mubr.bf16.gmra.mrb[0].mxu0 %v4937
    %v7521 = vpop.f32.mrb[0].mxu0
    %v7522 = vadd.f32 %v5242, %v7521
    %v7523 = vpop.f32.mrb[0].mxu0
    %v7524 = vadd.f32 %v5246, %v7523
    %v7525 = vpop.f32.mrb[0].mxu0
    %v7526 = vadd.f32 %v5242, %v7525
    %v7527 = vpop.f32.mrb[0].mxu0
    %v7528 = vadd.f32 %v5246, %v7527
    %7529 = vmatprep.mubr.bf16.mxu0 %v4942
    %7530 = vmatmul.mubr.bf16.gmra.mrb[0].mxu0 %v4941
    %v7531 = vpop.f32.mrb[0].mxu0
    %v7532 = vadd.f32 %v5242, %v7531
    %v7533 = vpop.f32.mrb[0].mxu0
    %v7534 = vadd.f32 %v5246, %v7533
    %v7535 = vpop.f32.mrb[0].mxu0
    %v7536 = vadd.f32 %v5242, %v7535
    %v7537 = vpop.f32.mrb[0].mxu0
    %v7538 = vadd.f32 %v5246, %v7537
    %7539 = vmatprep.mubr.bf16.mxu0 %v4946
    %7540 = vmatmul.mubr.bf16.gmra.mrb[0].mxu0 %v4945
    %v7541 = vpop.f32.mrb[0].mxu0
    %v7542 = vadd.f32 %v5242, %v7541
    %v7543 = vpop.f32.mrb[0].mxu0
    %v7544 = vadd.f32 %v5246, %v7543
    %v7545 = vpop.f32.mrb[0].mxu0
    %v7546 = vadd.f32 %v5242, %v7545
    %v7547 = vpop.f32.mrb[0].mxu0
    %v7548 = vadd.f32 %v5246, %v7547
    %7549 = vmatprep.mubr.bf16.mxu0 %v4950
    %7550 = vmatmul.mubr.bf16.gmra.mrb[0].mxu0 %v4949
    %v7551 = vpop.f32.mrb[0].mxu0
    %v7552 = vadd.f32 %v5242, %v7551
    %v7553 = vpop.f32.mrb[0].mxu0
    %v7554 = vadd.f32 %v5246, %v7553
    %v7555 = vpop.f32.mrb[0].mxu0
    %v7556 = vadd.f32 %v5242, %v7555
    %v7557 = vpop.f32.mrb[0].mxu0
    %v7558 = vadd.f32 %v5246, %v7557
    %7559 = vmatprep.mubr.bf16.mxu0 %v4954
    %7560 = vmatmul.mubr.bf16.gmra.mrb[0].mxu0 %v4953
    %v7561 = vpop.f32.mrb[0].mxu0
    %v7562 = vadd.f32 %v5242, %v7561
    %v7563 = vpop.f32.mrb[0].mxu0
    %v7564 = vadd.f32 %v5246, %v7563
    %v7565 = vpop.f32.mrb[0].mxu0
    %v7566 = vadd.f32 %v5242, %v7565
    %v7567 = vpop.f32.mrb[0].mxu0
    %v7568 = vadd.f32 %v5246, %v7567
    %7569 = vmatprep.mubr.bf16.mxu0 %v4958
    %7570 = vmatmul.mubr.bf16.gmra.mrb[0].mxu0 %v4957
    %v7571 = vpop.f32.mrb[0].mxu0
    %v7572 = vadd.f32 %v5242, %v7571
    %v7573 = vpop.f32.mrb[0].mxu0
    %v7574 = vadd.f32 %v5246, %v7573
    %v7575 = vpop.f32.mrb[0].mxu0
    %v7576 = vadd.f32 %v5242, %v7575
    %v7577 = vpop.f32.mrb[0].mxu0
    %v7578 = vadd.f32 %v5246, %v7577
    %7579 = vmatprep.mubr.bf16.mxu0 %v4962
    %7580 = vmatmul.mubr.bf16.gmra.mrb[0].mxu0 %v4961
    %v7581 = vpop.f32.mrb[0].mxu0
    %v7582 = vadd.f32 %v5242, %v7581
    %v7583 = vpop.f32.mrb[0].mxu0
    %v7584 = vadd.f32 %v5246, %v7583
    %v7585 = vpop.f32.mrb[0].mxu0
    %v7586 = vadd.f32 %v5242, %v7585
    %v7587 = vpop.f32.mrb[0].mxu0
    %v7588 = vadd.f32 %v5246, %v7587
    %7589 = vmatprep.mubr.bf16.mxu0 %v4966
    %7590 = vmatmul.mubr.bf16.gmra.mrb[0].mxu0 %v4965
    %v7591 = vpop.f32.mrb[0].mxu0
    %v7592 = vadd.f32 %v5242, %v7591
    %v7593 = vpop.f32.mrb[0].mxu0
    %v7594 = vadd.f32 %v5246, %v7593
    %v7595 = vpop.f32.mrb[0].mxu0
    %v7596 = vadd.f32 %v5242, %v7595
    %v7597 = vpop.f32.mrb[0].mxu0
    %v7598 = vadd.f32 %v5246, %v7597
    %7599 = vmatprep.mubr.bf16.mxu0 %v4970
    %7600 = vmatmul.mubr.bf16.gmra.mrb[0].mxu0 %v4969
    %v7601 = vpop.f32.mrb[0].mxu0
    %v7602 = vadd.f32 %v5242, %v7601
    %v7603 = vpop.f32.mrb[0].mxu0
    %v7604 = vadd.f32 %v5246, %v7603
    %v7605 = vpop.f32.mrb[0].mxu0
    %v7606 = vadd.f32 %v5242, %v7605
    %v7607 = vpop.f32.mrb[0].mxu0
    %v7608 = vadd.f32 %v5246, %v7607
    %7609 = vdwg.mxu0
    %7610 = vmatprep.subr.bf16.mxu0 %v6170
    %7611 = vmatpush1.bf16.msra.mxu0 %v6169
    %7612 = vmatprep.subr.bf16.mxu0 %v6178
    %7613 = vmatpush1.bf16.msra.mxu0 %v6177
    %7614 = vmatprep.subr.bf16.mxu0 %v6186
    %7615 = vmatpush1.bf16.msra.mxu0 %v6185
    %7616 = vmatprep.subr.bf16.mxu0 %v6194
    %7617 = vmatpush1.bf16.msra.mxu0 %v6193
    %7618 = vmatprep.subr.bf16.mxu0 %v6202
    %7619 = vmatpush1.bf16.msra.mxu0 %v6201
    %7620 = vmatprep.subr.bf16.mxu0 %v6210
    %7621 = vmatpush1.bf16.msra.mxu0 %v6209
    %7622 = vmatprep.subr.bf16.mxu0 %v6218
    %7623 = vmatpush1.bf16.msra.mxu0 %v6217
    %7624 = vmatprep.subr.bf16.mxu0 %v6226
    %7625 = vmatpush1.bf16.msra.mxu0 %v6225
    %7626 = vmatprep.subr.bf16.mxu0 %v6234
    %7627 = vmatpush1.bf16.msra.mxu0 %v6233
    %7628 = vmatprep.subr.bf16.mxu0 %v6242
    %7629 = vmatpush1.bf16.msra.mxu0 %v6241
    %7630 = vmatprep.subr.bf16.mxu0 %v6250
    %7631 = vmatpush1.bf16.msra.mxu0 %v6249
    %7632 = vmatprep.subr.bf16.mxu0 %v6258
    %7633 = vmatpush1.bf16.msra.mxu0 %v6257
    %7634 = vmatprep.subr.bf16.mxu0 %v6266
    %7635 = vmatpush1.bf16.msra.mxu0 %v6265
    %7636 = vmatprep.subr.bf16.mxu0 %v6274
    %7637 = vmatpush1.bf16.msra.mxu0 %v6273
    %7638 = vmatprep.subr.bf16.mxu0 %v6282
    %7639 = vmatpush1.bf16.msra.mxu0 %v6281
    %7640 = vmatprep.subr.bf16.mxu0 %v6290
    %7641 = vmatpush1.bf16.msra.mxu0 %v6289
    %7642 = vmatprep.mubr.bf16.mxu0 %v4848
    %7643 = vmatmul.mubr.bf16.gmra.mrb[0].mxu0 %v4847
    %v7644 = vpop.f32.mrb[0].mxu0
    %v7645 = vadd.f32 %v7292, %v7644
    %v7646 = vpop.f32.mrb[0].mxu0
    %v7647 = vadd.f32 %v7294, %v7646
    %v7648 = vpop.f32.mrb[0].mxu0
    %v7649 = vadd.f32 %v7296, %v7648
    %v7650 = vpop.f32.mrb[0].mxu0
    %v7651 = vadd.f32 %v7298, %v7650
    %7652 = vmatprep.mubr.bf16.mxu0 %v4852
    %7653 = vmatmul.mubr.bf16.gmra.mrb[0].mxu0 %v4851
    %v7654 = vpop.f32.mrb[0].mxu0
    %v7655 = vadd.f32 %v7302, %v7654
    %v7656 = vpop.f32.mrb[0].mxu0
    %v7657 = vadd.f32 %v7304, %v7656
    %v7658 = vpop.f32.mrb[0].mxu0
    %v7659 = vadd.f32 %v7306, %v7658
    %v7660 = vpop.f32.mrb[0].mxu0
    %v7661 = vadd.f32 %v7308, %v7660
    %7662 = vmatprep.mubr.bf16.mxu0 %v4856
    %7663 = vmatmul.mubr.bf16.gmra.mrb[0].mxu0 %v4855
    %v7664 = vpop.f32.mrb[0].mxu0
    %v7665 = vadd.f32 %v7312, %v7664
    %v7666 = vpop.f32.mrb[0].mxu0
    %v7667 = vadd.f32 %v7314, %v7666
    %v7668 = vpop.f32.mrb[0].mxu0
    %v7669 = vadd.f32 %v7316, %v7668
    %v7670 = vpop.f32.mrb[0].mxu0
    %v7671 = vadd.f32 %v7318, %v7670
    %7672 = vmatprep.mubr.bf16.mxu0 %v4860
    %7673 = vmatmul.mubr.bf16.gmra.mrb[0].mxu0 %v4859
    %v7674 = vpop.f32.mrb[0].mxu0
    %v7675 = vadd.f32 %v7322, %v7674
    %v7676 = vpop.f32.mrb[0].mxu0
    %v7677 = vadd.f32 %v7324, %v7676
    %v7678 = vpop.f32.mrb[0].mxu0
    %v7679 = vadd.f32 %v7326, %v7678
    %v7680 = vpop.f32.mrb[0].mxu0
    %v7681 = vadd.f32 %v7328, %v7680
    %7682 = vmatprep.mubr.bf16.mxu0 %v4864
    %7683 = vmatmul.mubr.bf16.gmra.mrb[0].mxu0 %v4863
    %v7684 = vpop.f32.mrb[0].mxu0
    %v7685 = vadd.f32 %v7332, %v7684
    %v7686 = vpop.f32.mrb[0].mxu0
    %v7687 = vadd.f32 %v7334, %v7686
    %v7688 = vpop.f32.mrb[0].mxu0
    %v7689 = vadd.f32 %v7336, %v7688
    %v7690 = vpop.f32.mrb[0].mxu0
    %v7691 = vadd.f32 %v7338, %v7690
    %7692 = vmatprep.mubr.bf16.mxu0 %v4868
    %7693 = vmatmul.mubr.bf16.gmra.mrb[0].mxu0 %v4867
    %v7694 = vpop.f32.mrb[0].mxu0
    %v7695 = vadd.f32 %v7342, %v7694
    %v7696 = vpop.f32.mrb[0].mxu0
    %v7697 = vadd.f32 %v7344, %v7696
    %v7698 = vpop.f32.mrb[0].mxu0
    %v7699 = vadd.f32 %v7346, %v7698
    %v7700 = vpop.f32.mrb[0].mxu0
    %v7701 = vadd.f32 %v7348, %v7700
    %7702 = vmatprep.mubr.bf16.mxu0 %v4872
    %7703 = vmatmul.mubr.bf16.gmra.mrb[0].mxu0 %v4871
    %v7704 = vpop.f32.mrb[0].mxu0
    %v7705 = vadd.f32 %v7352, %v7704
    %v7706 = vpop.f32.mrb[0].mxu0
    %v7707 = vadd.f32 %v7354, %v7706
    %v7708 = vpop.f32.mrb[0].mxu0
    %v7709 = vadd.f32 %v7356, %v7708
    %v7710 = vpop.f32.mrb[0].mxu0
    %v7711 = vadd.f32 %v7358, %v7710
    %7712 = vmatprep.mubr.bf16.mxu0 %v4876
    %7713 = vmatmul.mubr.bf16.gmra.mrb[0].mxu0 %v4875
    %v7714 = vpop.f32.mrb[0].mxu0
    %v7715 = vadd.f32 %v7362, %v7714
    %v7716 = vpop.f32.mrb[0].mxu0
    %v7717 = vadd.f32 %v7364, %v7716
    %v7718 = vpop.f32.mrb[0].mxu0
    %v7719 = vadd.f32 %v7366, %v7718
    %v7720 = vpop.f32.mrb[0].mxu0
    %v7721 = vadd.f32 %v7368, %v7720
    %7722 = vmatprep.mubr.bf16.mxu0 %v4880
    %7723 = vmatmul.mubr.bf16.gmra.mrb[0].mxu0 %v4879
    %v7724 = vpop.f32.mrb[0].mxu0
    %v7725 = vadd.f32 %v7372, %v7724
    %v7726 = vpop.f32.mrb[0].mxu0
    %v7727 = vadd.f32 %v7374, %v7726
    %v7728 = vpop.f32.mrb[0].mxu0
    %v7729 = vadd.f32 %v7376, %v7728
    %v7730 = vpop.f32.mrb[0].mxu0
    %v7731 = vadd.f32 %v7378, %v7730
    %7732 = vmatprep.mubr.bf16.mxu0 %v4884
    %7733 = vmatmul.mubr.bf16.gmra.mrb[0].mxu0 %v4883
    %v7734 = vpop.f32.mrb[0].mxu0
    %v7735 = vadd.f32 %v7382, %v7734
    %v7736 = vpop.f32.mrb[0].mxu0
    %v7737 = vadd.f32 %v7384, %v7736
    %v7738 = vpop.f32.mrb[0].mxu0
    %v7739 = vadd.f32 %v7386, %v7738
    %v7740 = vpop.f32.mrb[0].mxu0
    %v7741 = vadd.f32 %v7388, %v7740
    %7742 = vmatprep.mubr.bf16.mxu0 %v4888
    %7743 = vmatmul.mubr.bf16.gmra.mrb[0].mxu0 %v4887
    %v7744 = vpop.f32.mrb[0].mxu0
    %v7745 = vadd.f32 %v7392, %v7744
    %v7746 = vpop.f32.mrb[0].mxu0
    %v7747 = vadd.f32 %v7394, %v7746
    %v7748 = vpop.f32.mrb[0].mxu0
    %v7749 = vadd.f32 %v7396, %v7748
    %v7750 = vpop.f32.mrb[0].mxu0
    %v7751 = vadd.f32 %v7398, %v7750
    %7752 = vmatprep.mubr.bf16.mxu0 %v4892
    %7753 = vmatmul.mubr.bf16.gmra.mrb[0].mxu0 %v4891
    %v7754 = vpop.f32.mrb[0].mxu0
    %v7755 = vadd.f32 %v7402, %v7754
    %v7756 = vpop.f32.mrb[0].mxu0
    %v7757 = vadd.f32 %v7404, %v7756
    %v7758 = vpop.f32.mrb[0].mxu0
    %v7759 = vadd.f32 %v7406, %v7758
    %v7760 = vpop.f32.mrb[0].mxu0
    %v7761 = vadd.f32 %v7408, %v7760
    %7762 = vmatprep.mubr.bf16.mxu0 %v4896
    %7763 = vmatmul.mubr.bf16.gmra.mrb[0].mxu0 %v4895
    %v7764 = vpop.f32.mrb[0].mxu0
    %v7765 = vadd.f32 %v7412, %v7764
    %v7766 = vpop.f32.mrb[0].mxu0
    %v7767 = vadd.f32 %v7414, %v7766
    %v7768 = vpop.f32.mrb[0].mxu0
    %v7769 = vadd.f32 %v7416, %v7768
    %v7770 = vpop.f32.mrb[0].mxu0
    %v7771 = vadd.f32 %v7418, %v7770
    %7772 = vmatprep.mubr.bf16.mxu0 %v4900
    %7773 = vmatmul.mubr.bf16.gmra.mrb[0].mxu0 %v4899
    %v7774 = vpop.f32.mrb[0].mxu0
    %v7775 = vadd.f32 %v7422, %v7774
    %v7776 = vpop.f32.mrb[0].mxu0
    %v7777 = vadd.f32 %v7424, %v7776
    %v7778 = vpop.f32.mrb[0].mxu0
    %v7779 = vadd.f32 %v7426, %v7778
    %v7780 = vpop.f32.mrb[0].mxu0
    %v7781 = vadd.f32 %v7428, %v7780
    %7782 = vmatprep.mubr.bf16.mxu0 %v4904
    %7783 = vmatmul.mubr.bf16.gmra.mrb[0].mxu0 %v4903
    %v7784 = vpop.f32.mrb[0].mxu0
    %v7785 = vadd.f32 %v7432, %v7784
    %v7786 = vpop.f32.mrb[0].mxu0
    %v7787 = vadd.f32 %v7434, %v7786
    %v7788 = vpop.f32.mrb[0].mxu0
    %v7789 = vadd.f32 %v7436, %v7788
    %v7790 = vpop.f32.mrb[0].mxu0
    %v7791 = vadd.f32 %v7438, %v7790
    %7792 = vmatprep.mubr.bf16.mxu0 %v4908
    %7793 = vmatmul.mubr.bf16.gmra.mrb[0].mxu0 %v4907
    %v7794 = vpop.f32.mrb[0].mxu0
    %v7795 = vadd.f32 %v7442, %v7794
    %v7796 = vpop.f32.mrb[0].mxu0
    %v7797 = vadd.f32 %v7444, %v7796
    %v7798 = vpop.f32.mrb[0].mxu0
    %v7799 = vadd.f32 %v7446, %v7798
    %v7800 = vpop.f32.mrb[0].mxu0
    %v7801 = vadd.f32 %v7448, %v7800
    %7802 = vmatprep.mubr.bf16.mxu0 %v4912
    %7803 = vmatmul.mubr.bf16.gmra.mrb[0].mxu0 %v4911
    %v7804 = vpop.f32.mrb[0].mxu0
    %v7805 = vadd.f32 %v7452, %v7804
    %v7806 = vpop.f32.mrb[0].mxu0
    %v7807 = vadd.f32 %v7454, %v7806
    %v7808 = vpop.f32.mrb[0].mxu0
    %v7809 = vadd.f32 %v7456, %v7808
    %v7810 = vpop.f32.mrb[0].mxu0
    %v7811 = vadd.f32 %v7458, %v7810
    %7812 = vmatprep.mubr.bf16.mxu0 %v4916
    %7813 = vmatmul.mubr.bf16.gmra.mrb[0].mxu0 %v4915
    %v7814 = vpop.f32.mrb[0].mxu0
    %v7815 = vadd.f32 %v7462, %v7814
    %v7816 = vpop.f32.mrb[0].mxu0
    %v7817 = vadd.f32 %v7464, %v7816
    %v7818 = vpop.f32.mrb[0].mxu0
    %v7819 = vadd.f32 %v7466, %v7818
    %v7820 = vpop.f32.mrb[0].mxu0
    %v7821 = vadd.f32 %v7468, %v7820
    %7822 = vmatprep.mubr.bf16.mxu0 %v4920
    %7823 = vmatmul.mubr.bf16.gmra.mrb[0].mxu0 %v4919
    %v7824 = vpop.f32.mrb[0].mxu0
    %v7825 = vadd.f32 %v7472, %v7824
    %v7826 = vpop.f32.mrb[0].mxu0
    %v7827 = vadd.f32 %v7474, %v7826
    %v7828 = vpop.f32.mrb[0].mxu0
    %v7829 = vadd.f32 %v7476, %v7828
    %v7830 = vpop.f32.mrb[0].mxu0
    %v7831 = vadd.f32 %v7478, %v7830
    %7832 = vmatprep.mubr.bf16.mxu0 %v4924
    %7833 = vmatmul.mubr.bf16.gmra.mrb[0].mxu0 %v4923
    %v7834 = vpop.f32.mrb[0].mxu0
    %v7835 = vadd.f32 %v7482, %v7834
    %v7836 = vpop.f32.mrb[0].mxu0
    %v7837 = vadd.f32 %v7484, %v7836
    %v7838 = vpop.f32.mrb[0].mxu0
    %v7839 = vadd.f32 %v7486, %v7838
    %v7840 = vpop.f32.mrb[0].mxu0
    %v7841 = vadd.f32 %v7488, %v7840
    %7842 = vmatprep.mubr.bf16.mxu0 %v4928
    %7843 = vmatmul.mubr.bf16.gmra.mrb[0].mxu0 %v4927
    %v7844 = vpop.f32.mrb[0].mxu0
    %v7845 = vadd.f32 %v7492, %v7844
    %v7846 = vpop.f32.mrb[0].mxu0
    %v7847 = vadd.f32 %v7494, %v7846
    %v7848 = vpop.f32.mrb[0].mxu0
    %v7849 = vadd.f32 %v7496, %v7848
    %v7850 = vpop.f32.mrb[0].mxu0
    %v7851 = vadd.f32 %v7498, %v7850
    %7852 = vmatprep.mubr.bf16.mxu0 %v4932
    %7853 = vmatmul.mubr.bf16.gmra.mrb[0].mxu0 %v4931
    %v7854 = vpop.f32.mrb[0].mxu0
    %v7855 = vadd.f32 %v7502, %v7854
    %v7856 = vpop.f32.mrb[0].mxu0
    %v7857 = vadd.f32 %v7504, %v7856
    %v7858 = vpop.f32.mrb[0].mxu0
    %v7859 = vadd.f32 %v7506, %v7858
    %v7860 = vpop.f32.mrb[0].mxu0
    %v7861 = vadd.f32 %v7508, %v7860
    %7862 = vmatprep.mubr.bf16.mxu0 %v4936
    %7863 = vmatmul.mubr.bf16.gmra.mrb[0].mxu0 %v4935
    %v7864 = vpop.f32.mrb[0].mxu0
    %v7865 = vadd.f32 %v7512, %v7864
    %v7866 = vpop.f32.mrb[0].mxu0
    %v7867 = vadd.f32 %v7514, %v7866
    %v7868 = vpop.f32.mrb[0].mxu0
    %v7869 = vadd.f32 %v7516, %v7868
    %v7870 = vpop.f32.mrb[0].mxu0
    %v7871 = vadd.f32 %v7518, %v7870
    %7872 = vmatprep.mubr.bf16.mxu0 %v4940
    %7873 = vmatmul.mubr.bf16.gmra.mrb[0].mxu0 %v4939
    %v7874 = vpop.f32.mrb[0].mxu0
    %v7875 = vadd.f32 %v7522, %v7874
    %v7876 = vpop.f32.mrb[0].mxu0
    %v7877 = vadd.f32 %v7524, %v7876
    %v7878 = vpop.f32.mrb[0].mxu0
    %v7879 = vadd.f32 %v7526, %v7878
    %v7880 = vpop.f32.mrb[0].mxu0
    %v7881 = vadd.f32 %v7528, %v7880
    %7882 = vmatprep.mubr.bf16.mxu0 %v4944
    %7883 = vmatmul.mubr.bf16.gmra.mrb[0].mxu0 %v4943
    %v7884 = vpop.f32.mrb[0].mxu0
    %v7885 = vadd.f32 %v7532, %v7884
    %v7886 = vpop.f32.mrb[0].mxu0
    %v7887 = vadd.f32 %v7534, %v7886
    %v7888 = vpop.f32.mrb[0].mxu0
    %v7889 = vadd.f32 %v7536, %v7888
    %v7890 = vpop.f32.mrb[0].mxu0
    %v7891 = vadd.f32 %v7538, %v7890
    %7892 = vmatprep.mubr.bf16.mxu0 %v4948
    %7893 = vmatmul.mubr.bf16.gmra.mrb[0].mxu0 %v4947
    %v7894 = vpop.f32.mrb[0].mxu0
    %v7895 = vadd.f32 %v7542, %v7894
    %v7896 = vpop.f32.mrb[0].mxu0
    %v7897 = vadd.f32 %v7544, %v7896
    %v7898 = vpop.f32.mrb[0].mxu0
    %v7899 = vadd.f32 %v7546, %v7898
    %v7900 = vpop.f32.mrb[0].mxu0
    %v7901 = vadd.f32 %v7548, %v7900
    %7902 = vmatprep.mubr.bf16.mxu0 %v4952
    %7903 = vmatmul.mubr.bf16.gmra.mrb[0].mxu0 %v4951
    %v7904 = vpop.f32.mrb[0].mxu0
    %v7905 = vadd.f32 %v7552, %v7904
    %v7906 = vpop.f32.mrb[0].mxu0
    %v7907 = vadd.f32 %v7554, %v7906
    %v7908 = vpop.f32.mrb[0].mxu0
    %v7909 = vadd.f32 %v7556, %v7908
    %v7910 = vpop.f32.mrb[0].mxu0
    %v7911 = vadd.f32 %v7558, %v7910
    %7912 = vmatprep.mubr.bf16.mxu0 %v4956
    %7913 = vmatmul.mubr.bf16.gmra.mrb[0].mxu0 %v4955
    %v7914 = vpop.f32.mrb[0].mxu0
    %v7915 = vadd.f32 %v7562, %v7914
    %v7916 = vpop.f32.mrb[0].mxu0
    %v7917 = vadd.f32 %v7564, %v7916
    %v7918 = vpop.f32.mrb[0].mxu0
    %v7919 = vadd.f32 %v7566, %v7918
    %v7920 = vpop.f32.mrb[0].mxu0
    %v7921 = vadd.f32 %v7568, %v7920
    %7922 = vmatprep.mubr.bf16.mxu0 %v4960
    %7923 = vmatmul.mubr.bf16.gmra.mrb[0].mxu0 %v4959
    %v7924 = vpop.f32.mrb[0].mxu0
    %v7925 = vadd.f32 %v7572, %v7924
    %v7926 = vpop.f32.mrb[0].mxu0
    %v7927 = vadd.f32 %v7574, %v7926
    %v7928 = vpop.f32.mrb[0].mxu0
    %v7929 = vadd.f32 %v7576, %v7928
    %v7930 = vpop.f32.mrb[0].mxu0
    %v7931 = vadd.f32 %v7578, %v7930
    %7932 = vmatprep.mubr.bf16.mxu0 %v4964
    %7933 = vmatmul.mubr.bf16.gmra.mrb[0].mxu0 %v4963
    %v7934 = vpop.f32.mrb[0].mxu0
    %v7935 = vadd.f32 %v7582, %v7934
    %v7936 = vpop.f32.mrb[0].mxu0
    %v7937 = vadd.f32 %v7584, %v7936
    %v7938 = vpop.f32.mrb[0].mxu0
    %v7939 = vadd.f32 %v7586, %v7938
    %v7940 = vpop.f32.mrb[0].mxu0
    %v7941 = vadd.f32 %v7588, %v7940
    %7942 = vmatprep.mubr.bf16.mxu0 %v4968
    %7943 = vmatmul.mubr.bf16.gmra.mrb[0].mxu0 %v4967
    %v7944 = vpop.f32.mrb[0].mxu0
    %v7945 = vadd.f32 %v7592, %v7944
    %v7946 = vpop.f32.mrb[0].mxu0
    %v7947 = vadd.f32 %v7594, %v7946
    %v7948 = vpop.f32.mrb[0].mxu0
    %v7949 = vadd.f32 %v7596, %v7948
    %v7950 = vpop.f32.mrb[0].mxu0
    %v7951 = vadd.f32 %v7598, %v7950
    %7952 = vmatprep.mubr.bf16.mxu0 %v4972
    %7953 = vmatmul.mubr.bf16.gmra.mrb[0].mxu0 %v4971
    %v7954 = vpop.f32.mrb[0].mxu0
    %v7955 = vadd.f32 %v7602, %v7954
    %v7956 = vpop.f32.mrb[0].mxu0
    %v7957 = vadd.f32 %v7604, %v7956
    %v7958 = vpop.f32.mrb[0].mxu0
    %v7959 = vadd.f32 %v7606, %v7958
    %v7960 = vpop.f32.mrb[0].mxu0
    %v7961 = vadd.f32 %v7608, %v7960
    %7962 = vdwg.mxu0
    %7963 = vmatprep.subr.bf16.mxu0 %v6044
    %7964 = vmatpush1.bf16.msra.mxu0 %v6043
    %7965 = vmatprep.subr.bf16.mxu0 %v6052
    %7966 = vmatpush1.bf16.msra.mxu0 %v6051
    %7967 = vmatprep.subr.bf16.mxu0 %v6060
    %7968 = vmatpush1.bf16.msra.mxu0 %v6059
    %7969 = vmatprep.subr.bf16.mxu0 %v6068
    %7970 = vmatpush1.bf16.msra.mxu0 %v6067
    %7971 = vmatprep.subr.bf16.mxu0 %v6076
    %7972 = vmatpush1.bf16.msra.mxu0 %v6075
    %7973 = vmatprep.subr.bf16.mxu0 %v6084
    %7974 = vmatpush1.bf16.msra.mxu0 %v6083
    %7975 = vmatprep.subr.bf16.mxu0 %v6092
    %7976 = vmatpush1.bf16.msra.mxu0 %v6091
    %7977 = vmatprep.subr.bf16.mxu0 %v6100
    %7978 = vmatpush1.bf16.msra.mxu0 %v6099
    %7979 = vmatprep.subr.bf16.mxu0 %v6108
    %7980 = vmatpush1.bf16.msra.mxu0 %v6107
    %7981 = vmatprep.subr.bf16.mxu0 %v6116
    %7982 = vmatpush1.bf16.msra.mxu0 %v6115
    %7983 = vmatprep.subr.bf16.mxu0 %v6124
    %7984 = vmatpush1.bf16.msra.mxu0 %v6123
    %7985 = vmatprep.subr.bf16.mxu0 %v6132
    %7986 = vmatpush1.bf16.msra.mxu0 %v6131
    %7987 = vmatprep.subr.bf16.mxu0 %v6140
    %7988 = vmatpush1.bf16.msra.mxu0 %v6139
    %7989 = vmatprep.subr.bf16.mxu0 %v6148
    %7990 = vmatpush1.bf16.msra.mxu0 %v6147
    %7991 = vmatprep.subr.bf16.mxu0 %v6156
    %7992 = vmatpush1.bf16.msra.mxu0 %v6155
    %7993 = vmatprep.subr.bf16.mxu0 %v6164
    %7994 = vmatpush1.bf16.msra.mxu0 %v6163
    %7995 = vmatprep.mubr.bf16.mxu0 %v4846
    %7996 = vmatmul.mubr.bf16.gmra.mrb[0].mxu0 %v4845
    %v7997 = vpop.f32.mrb[0].mxu0
    %v7998 = vadd.f32 %v5250, %v7997
    %v7999 = vpop.f32.mrb[0].mxu0
    %v8000 = vadd.f32 %v5254, %v7999
    %v8001 = vpop.f32.mrb[0].mxu0
    %v8002 = vadd.f32 %v5250, %v8001
    %v8003 = vpop.f32.mrb[0].mxu0
    %v8004 = vadd.f32 %v5254, %v8003
    %8005 = vmatprep.mubr.bf16.mxu0 %v4850
    %8006 = vmatmul.mubr.bf16.gmra.mrb[0].mxu0 %v4849
    %v8007 = vpop.f32.mrb[0].mxu0
    %v8008 = vadd.f32 %v5250, %v8007
    %v8009 = vpop.f32.mrb[0].mxu0
    %v8010 = vadd.f32 %v5254, %v8009
    %v8011 = vpop.f32.mrb[0].mxu0
    %v8012 = vadd.f32 %v5250, %v8011
    %v8013 = vpop.f32.mrb[0].mxu0
    %v8014 = vadd.f32 %v5254, %v8013
    %8015 = vmatprep.mubr.bf16.mxu0 %v4854
    %8016 = vmatmul.mubr.bf16.gmra.mrb[0].mxu0 %v4853
    %v8017 = vpop.f32.mrb[0].mxu0
    %v8018 = vadd.f32 %v5250, %v8017
    %v8019 = vpop.f32.mrb[0].mxu0
    %v8020 = vadd.f32 %v5254, %v8019
    %v8021 = vpop.f32.mrb[0].mxu0
    %v8022 = vadd.f32 %v5250, %v8021
    %v8023 = vpop.f32.mrb[0].mxu0
    %v8024 = vadd.f32 %v5254, %v8023
    %8025 = vmatprep.mubr.bf16.mxu0 %v4858
    %8026 = vmatmul.mubr.bf16.gmra.mrb[0].mxu0 %v4857
    %v8027 = vpop.f32.mrb[0].mxu0
    %v8028 = vadd.f32 %v5250, %v8027
    %v8029 = vpop.f32.mrb[0].mxu0
    %v8030 = vadd.f32 %v5254, %v8029
    %v8031 = vpop.f32.mrb[0].mxu0
    %v8032 = vadd.f32 %v5250, %v8031
    %v8033 = vpop.f32.mrb[0].mxu0
    %v8034 = vadd.f32 %v5254, %v8033
    %8035 = vmatprep.mubr.bf16.mxu0 %v4862
    %8036 = vmatmul.mubr.bf16.gmra.mrb[0].mxu0 %v4861
    %v8037 = vpop.f32.mrb[0].mxu0
    %v8038 = vadd.f32 %v5250, %v8037
    %v8039 = vpop.f32.mrb[0].mxu0
    %v8040 = vadd.f32 %v5254, %v8039
    %v8041 = vpop.f32.mrb[0].mxu0
    %v8042 = vadd.f32 %v5250, %v8041
    %v8043 = vpop.f32.mrb[0].mxu0
    %v8044 = vadd.f32 %v5254, %v8043
    %8045 = vmatprep.mubr.bf16.mxu0 %v4866
    %8046 = vmatmul.mubr.bf16.gmra.mrb[0].mxu0 %v4865
    %v8047 = vpop.f32.mrb[0].mxu0
    %v8048 = vadd.f32 %v5250, %v8047
    %v8049 = vpop.f32.mrb[0].mxu0
    %v8050 = vadd.f32 %v5254, %v8049
    %v8051 = vpop.f32.mrb[0].mxu0
    %v8052 = vadd.f32 %v5250, %v8051
    %v8053 = vpop.f32.mrb[0].mxu0
    %v8054 = vadd.f32 %v5254, %v8053
    %8055 = vmatprep.mubr.bf16.mxu0 %v4870
    %8056 = vmatmul.mubr.bf16.gmra.mrb[0].mxu0 %v4869
    %v8057 = vpop.f32.mrb[0].mxu0
    %v8058 = vadd.f32 %v5250, %v8057
    %v8059 = vpop.f32.mrb[0].mxu0
    %v8060 = vadd.f32 %v5254, %v8059
    %v8061 = vpop.f32.mrb[0].mxu0
    %v8062 = vadd.f32 %v5250, %v8061
    %v8063 = vpop.f32.mrb[0].mxu0
    %v8064 = vadd.f32 %v5254, %v8063
    %8065 = vmatprep.mubr.bf16.mxu0 %v4874
    %8066 = vmatmul.mubr.bf16.gmra.mrb[0].mxu0 %v4873
    %v8067 = vpop.f32.mrb[0].mxu0
    %v8068 = vadd.f32 %v5250, %v8067
    %v8069 = vpop.f32.mrb[0].mxu0
    %v8070 = vadd.f32 %v5254, %v8069
    %v8071 = vpop.f32.mrb[0].mxu0
    %v8072 = vadd.f32 %v5250, %v8071
    %v8073 = vpop.f32.mrb[0].mxu0
    %v8074 = vadd.f32 %v5254, %v8073
    %8075 = vmatprep.mubr.bf16.mxu0 %v4878
    %8076 = vmatmul.mubr.bf16.gmra.mrb[0].mxu0 %v4877
    %v8077 = vpop.f32.mrb[0].mxu0
    %v8078 = vadd.f32 %v5250, %v8077
    %v8079 = vpop.f32.mrb[0].mxu0
    %v8080 = vadd.f32 %v5254, %v8079
    %v8081 = vpop.f32.mrb[0].mxu0
    %v8082 = vadd.f32 %v5250, %v8081
    %v8083 = vpop.f32.mrb[0].mxu0
    %v8084 = vadd.f32 %v5254, %v8083
    %8085 = vmatprep.mubr.bf16.mxu0 %v4882
    %8086 = vmatmul.mubr.bf16.gmra.mrb[0].mxu0 %v4881
    %v8087 = vpop.f32.mrb[0].mxu0
    %v8088 = vadd.f32 %v5250, %v8087
    %v8089 = vpop.f32.mrb[0].mxu0
    %v8090 = vadd.f32 %v5254, %v8089
    %v8091 = vpop.f32.mrb[0].mxu0
    %v8092 = vadd.f32 %v5250, %v8091
    %v8093 = vpop.f32.mrb[0].mxu0
    %v8094 = vadd.f32 %v5254, %v8093
    %8095 = vmatprep.mubr.bf16.mxu0 %v4886
    %8096 = vmatmul.mubr.bf16.gmra.mrb[0].mxu0 %v4885
    %v8097 = vpop.f32.mrb[0].mxu0
    %v8098 = vadd.f32 %v5250, %v8097
    %v8099 = vpop.f32.mrb[0].mxu0
    %v8100 = vadd.f32 %v5254, %v8099
    %v8101 = vpop.f32.mrb[0].mxu0
    %v8102 = vadd.f32 %v5250, %v8101
    %v8103 = vpop.f32.mrb[0].mxu0
    %v8104 = vadd.f32 %v5254, %v8103
    %8105 = vmatprep.mubr.bf16.mxu0 %v4890
    %8106 = vmatmul.mubr.bf16.gmra.mrb[0].mxu0 %v4889
    %v8107 = vpop.f32.mrb[0].mxu0
    %v8108 = vadd.f32 %v5250, %v8107
    %v8109 = vpop.f32.mrb[0].mxu0
    %v8110 = vadd.f32 %v5254, %v8109
    %v8111 = vpop.f32.mrb[0].mxu0
    %v8112 = vadd.f32 %v5250, %v8111
    %v8113 = vpop.f32.mrb[0].mxu0
    %v8114 = vadd.f32 %v5254, %v8113
    %8115 = vmatprep.mubr.bf16.mxu0 %v4894
    %8116 = vmatmul.mubr.bf16.gmra.mrb[0].mxu0 %v4893
    %v8117 = vpop.f32.mrb[0].mxu0
    %v8118 = vadd.f32 %v5250, %v8117
    %v8119 = vpop.f32.mrb[0].mxu0
    %v8120 = vadd.f32 %v5254, %v8119
    %v8121 = vpop.f32.mrb[0].mxu0
    %v8122 = vadd.f32 %v5250, %v8121
    %v8123 = vpop.f32.mrb[0].mxu0
    %v8124 = vadd.f32 %v5254, %v8123
    %8125 = vmatprep.mubr.bf16.mxu0 %v4898
    %8126 = vmatmul.mubr.bf16.gmra.mrb[0].mxu0 %v4897
    %v8127 = vpop.f32.mrb[0].mxu0
    %v8128 = vadd.f32 %v5250, %v8127
    %v8129 = vpop.f32.mrb[0].mxu0
    %v8130 = vadd.f32 %v5254, %v8129
    %v8131 = vpop.f32.mrb[0].mxu0
    %v8132 = vadd.f32 %v5250, %v8131
    %v8133 = vpop.f32.mrb[0].mxu0
    %v8134 = vadd.f32 %v5254, %v8133
    %8135 = vmatprep.mubr.bf16.mxu0 %v4902
    %8136 = vmatmul.mubr.bf16.gmra.mrb[0].mxu0 %v4901
    %v8137 = vpop.f32.mrb[0].mxu0
    %v8138 = vadd.f32 %v5250, %v8137
    %v8139 = vpop.f32.mrb[0].mxu0
    %v8140 = vadd.f32 %v5254, %v8139
    %v8141 = vpop.f32.mrb[0].mxu0
    %v8142 = vadd.f32 %v5250, %v8141
    %v8143 = vpop.f32.mrb[0].mxu0
    %v8144 = vadd.f32 %v5254, %v8143
    %8145 = vmatprep.mubr.bf16.mxu0 %v4906
    %8146 = vmatmul.mubr.bf16.gmra.mrb[0].mxu0 %v4905
    %v8147 = vpop.f32.mrb[0].mxu0
    %v8148 = vadd.f32 %v5250, %v8147
    %v8149 = vpop.f32.mrb[0].mxu0
    %v8150 = vadd.f32 %v5254, %v8149
    %v8151 = vpop.f32.mrb[0].mxu0
    %v8152 = vadd.f32 %v5250, %v8151
    %v8153 = vpop.f32.mrb[0].mxu0
    %v8154 = vadd.f32 %v5254, %v8153
    %8155 = vmatprep.mubr.bf16.mxu0 %v4910
    %8156 = vmatmul.mubr.bf16.gmra.mrb[0].mxu0 %v4909
    %v8157 = vpop.f32.mrb[0].mxu0
    %v8158 = vadd.f32 %v5250, %v8157
    %v8159 = vpop.f32.mrb[0].mxu0
    %v8160 = vadd.f32 %v5254, %v8159
    %v8161 = vpop.f32.mrb[0].mxu0
    %v8162 = vadd.f32 %v5250, %v8161
    %v8163 = vpop.f32.mrb[0].mxu0
    %v8164 = vadd.f32 %v5254, %v8163
    %8165 = vmatprep.mubr.bf16.mxu0 %v4914
    %8166 = vmatmul.mubr.bf16.gmra.mrb[0].mxu0 %v4913
    %v8167 = vpop.f32.mrb[0].mxu0
    %v8168 = vadd.f32 %v5250, %v8167
    %v8169 = vpop.f32.mrb[0].mxu0
    %v8170 = vadd.f32 %v5254, %v8169
    %v8171 = vpop.f32.mrb[0].mxu0
    %v8172 = vadd.f32 %v5250, %v8171
    %v8173 = vpop.f32.mrb[0].mxu0
    %v8174 = vadd.f32 %v5254, %v8173
    %8175 = vmatprep.mubr.bf16.mxu0 %v4918
    %8176 = vmatmul.mubr.bf16.gmra.mrb[0].mxu0 %v4917
    %v8177 = vpop.f32.mrb[0].mxu0
    %v8178 = vadd.f32 %v5250, %v8177
    %v8179 = vpop.f32.mrb[0].mxu0
    %v8180 = vadd.f32 %v5254, %v8179
    %v8181 = vpop.f32.mrb[0].mxu0
    %v8182 = vadd.f32 %v5250, %v8181
    %v8183 = vpop.f32.mrb[0].mxu0
    %v8184 = vadd.f32 %v5254, %v8183
    %8185 = vmatprep.mubr.bf16.mxu0 %v4922
    %8186 = vmatmul.mubr.bf16.gmra.mrb[0].mxu0 %v4921
    %v8187 = vpop.f32.mrb[0].mxu0
    %v8188 = vadd.f32 %v5250, %v8187
    %v8189 = vpop.f32.mrb[0].mxu0
    %v8190 = vadd.f32 %v5254, %v8189
    %v8191 = vpop.f32.mrb[0].mxu0
    %v8192 = vadd.f32 %v5250, %v8191
    %v8193 = vpop.f32.mrb[0].mxu0
    %v8194 = vadd.f32 %v5254, %v8193
    %8195 = vmatprep.mubr.bf16.mxu0 %v4926
    %8196 = vmatmul.mubr.bf16.gmra.mrb[0].mxu0 %v4925
    %v8197 = vpop.f32.mrb[0].mxu0
    %v8198 = vadd.f32 %v5250, %v8197
    %v8199 = vpop.f32.mrb[0].mxu0
    %v8200 = vadd.f32 %v5254, %v8199
    %v8201 = vpop.f32.mrb[0].mxu0
    %v8202 = vadd.f32 %v5250, %v8201
    %v8203 = vpop.f32.mrb[0].mxu0
    %v8204 = vadd.f32 %v5254, %v8203
    %8205 = vmatprep.mubr.bf16.mxu0 %v4930
    %8206 = vmatmul.mubr.bf16.gmra.mrb[0].mxu0 %v4929
    %v8207 = vpop.f32.mrb[0].mxu0
    %v8208 = vadd.f32 %v5250, %v8207
    %v8209 = vpop.f32.mrb[0].mxu0
    %v8210 = vadd.f32 %v5254, %v8209
    %v8211 = vpop.f32.mrb[0].mxu0
    %v8212 = vadd.f32 %v5250, %v8211
    %v8213 = vpop.f32.mrb[0].mxu0
    %v8214 = vadd.f32 %v5254, %v8213
    %8215 = vmatprep.mubr.bf16.mxu0 %v4934
    %8216 = vmatmul.mubr.bf16.gmra.mrb[0].mxu0 %v4933
    %v8217 = vpop.f32.mrb[0].mxu0
    %v8218 = vadd.f32 %v5250, %v8217
    %v8219 = vpop.f32.mrb[0].mxu0
    %v8220 = vadd.f32 %v5254, %v8219
    %v8221 = vpop.f32.mrb[0].mxu0
    %v8222 = vadd.f32 %v5250, %v8221
    %v8223 = vpop.f32.mrb[0].mxu0
    %v8224 = vadd.f32 %v5254, %v8223
    %8225 = vmatprep.mubr.bf16.mxu0 %v4938
    %8226 = vmatmul.mubr.bf16.gmra.mrb[0].mxu0 %v4937
    %v8227 = vpop.f32.mrb[0].mxu0
    %v8228 = vadd.f32 %v5250, %v8227
    %v8229 = vpop.f32.mrb[0].mxu0
    %v8230 = vadd.f32 %v5254, %v8229
    %v8231 = vpop.f32.mrb[0].mxu0
    %v8232 = vadd.f32 %v5250, %v8231
    %v8233 = vpop.f32.mrb[0].mxu0
    %v8234 = vadd.f32 %v5254, %v8233
    %8235 = vmatprep.mubr.bf16.mxu0 %v4942
    %8236 = vmatmul.mubr.bf16.gmra.mrb[0].mxu0 %v4941
    %v8237 = vpop.f32.mrb[0].mxu0
    %v8238 = vadd.f32 %v5250, %v8237
    %v8239 = vpop.f32.mrb[0].mxu0
    %v8240 = vadd.f32 %v5254, %v8239
    %v8241 = vpop.f32.mrb[0].mxu0
    %v8242 = vadd.f32 %v5250, %v8241
    %v8243 = vpop.f32.mrb[0].mxu0
    %v8244 = vadd.f32 %v5254, %v8243
    %8245 = vmatprep.mubr.bf16.mxu0 %v4946
    %8246 = vmatmul.mubr.bf16.gmra.mrb[0].mxu0 %v4945
    %v8247 = vpop.f32.mrb[0].mxu0
    %v8248 = vadd.f32 %v5250, %v8247
    %v8249 = vpop.f32.mrb[0].mxu0
    %v8250 = vadd.f32 %v5254, %v8249
    %v8251 = vpop.f32.mrb[0].mxu0
    %v8252 = vadd.f32 %v5250, %v8251
    %v8253 = vpop.f32.mrb[0].mxu0
    %v8254 = vadd.f32 %v5254, %v8253
    %8255 = vmatprep.mubr.bf16.mxu0 %v4950
    %8256 = vmatmul.mubr.bf16.gmra.mrb[0].mxu0 %v4949
    %v8257 = vpop.f32.mrb[0].mxu0
    %v8258 = vadd.f32 %v5250, %v8257
    %v8259 = vpop.f32.mrb[0].mxu0
    %v8260 = vadd.f32 %v5254, %v8259
    %v8261 = vpop.f32.mrb[0].mxu0
    %v8262 = vadd.f32 %v5250, %v8261
    %v8263 = vpop.f32.mrb[0].mxu0
    %v8264 = vadd.f32 %v5254, %v8263
    %8265 = vmatprep.mubr.bf16.mxu0 %v4954
    %8266 = vmatmul.mubr.bf16.gmra.mrb[0].mxu0 %v4953
    %v8267 = vpop.f32.mrb[0].mxu0
    %v8268 = vadd.f32 %v5250, %v8267
    %v8269 = vpop.f32.mrb[0].mxu0
    %v8270 = vadd.f32 %v5254, %v8269
    %v8271 = vpop.f32.mrb[0].mxu0
    %v8272 = vadd.f32 %v5250, %v8271
    %v8273 = vpop.f32.mrb[0].mxu0
    %v8274 = vadd.f32 %v5254, %v8273
    %8275 = vmatprep.mubr.bf16.mxu0 %v4958
    %8276 = vmatmul.mubr.bf16.gmra.mrb[0].mxu0 %v4957
    %v8277 = vpop.f32.mrb[0].mxu0
    %v8278 = vadd.f32 %v5250, %v8277
    %v8279 = vpop.f32.mrb[0].mxu0
    %v8280 = vadd.f32 %v5254, %v8279
    %v8281 = vpop.f32.mrb[0].mxu0
    %v8282 = vadd.f32 %v5250, %v8281
    %v8283 = vpop.f32.mrb[0].mxu0
    %v8284 = vadd.f32 %v5254, %v8283
    %8285 = vmatprep.mubr.bf16.mxu0 %v4962
    %8286 = vmatmul.mubr.bf16.gmra.mrb[0].mxu0 %v4961
    %v8287 = vpop.f32.mrb[0].mxu0
    %v8288 = vadd.f32 %v5250, %v8287
    %v8289 = vpop.f32.mrb[0].mxu0
    %v8290 = vadd.f32 %v5254, %v8289
    %v8291 = vpop.f32.mrb[0].mxu0
    %v8292 = vadd.f32 %v5250, %v8291
    %v8293 = vpop.f32.mrb[0].mxu0
    %v8294 = vadd.f32 %v5254, %v8293
    %8295 = vmatprep.mubr.bf16.mxu0 %v4966
    %8296 = vmatmul.mubr.bf16.gmra.mrb[0].mxu0 %v4965
    %v8297 = vpop.f32.mrb[0].mxu0
    %v8298 = vadd.f32 %v5250, %v8297
    %v8299 = vpop.f32.mrb[0].mxu0
    %v8300 = vadd.f32 %v5254, %v8299
    %v8301 = vpop.f32.mrb[0].mxu0
    %v8302 = vadd.f32 %v5250, %v8301
    %v8303 = vpop.f32.mrb[0].mxu0
    %v8304 = vadd.f32 %v5254, %v8303
    %8305 = vmatprep.mubr.bf16.mxu0 %v4970
    %8306 = vmatmul.mubr.bf16.gmra.mrb[0].mxu0 %v4969
    %v8307 = vpop.f32.mrb[0].mxu0
    %v8308 = vadd.f32 %v5250, %v8307
    %v8309 = vpop.f32.mrb[0].mxu0
    %v8310 = vadd.f32 %v5254, %v8309
    %v8311 = vpop.f32.mrb[0].mxu0
    %v8312 = vadd.f32 %v5250, %v8311
    %v8313 = vpop.f32.mrb[0].mxu0
    %v8314 = vadd.f32 %v5254, %v8313
    %8315 = vdwg.mxu0
    %8316 = vmatprep.subr.bf16.mxu0 %v6172
    %8317 = vmatpush1.bf16.msra.mxu0 %v6171
    %8318 = vmatprep.subr.bf16.mxu0 %v6180
    %8319 = vmatpush1.bf16.msra.mxu0 %v6179
    %8320 = vmatprep.subr.bf16.mxu0 %v6188
    %8321 = vmatpush1.bf16.msra.mxu0 %v6187
    %8322 = vmatprep.subr.bf16.mxu0 %v6196
    %8323 = vmatpush1.bf16.msra.mxu0 %v6195
    %8324 = vmatprep.subr.bf16.mxu0 %v6204
    %8325 = vmatpush1.bf16.msra.mxu0 %v6203
    %8326 = vmatprep.subr.bf16.mxu0 %v6212
    %8327 = vmatpush1.bf16.msra.mxu0 %v6211
    %8328 = vmatprep.subr.bf16.mxu0 %v6220
    %8329 = vmatpush1.bf16.msra.mxu0 %v6219
    %8330 = vmatprep.subr.bf16.mxu0 %v6228
    %8331 = vmatpush1.bf16.msra.mxu0 %v6227
    %8332 = vmatprep.subr.bf16.mxu0 %v6236
    %8333 = vmatpush1.bf16.msra.mxu0 %v6235
    %8334 = vmatprep.subr.bf16.mxu0 %v6244
    %8335 = vmatpush1.bf16.msra.mxu0 %v6243
    %8336 = vmatprep.subr.bf16.mxu0 %v6252
    %8337 = vmatpush1.bf16.msra.mxu0 %v6251
    %8338 = vmatprep.subr.bf16.mxu0 %v6260
    %8339 = vmatpush1.bf16.msra.mxu0 %v6259
    %8340 = vmatprep.subr.bf16.mxu0 %v6268
    %8341 = vmatpush1.bf16.msra.mxu0 %v6267
    %8342 = vmatprep.subr.bf16.mxu0 %v6276
    %8343 = vmatpush1.bf16.msra.mxu0 %v6275
    %8344 = vmatprep.subr.bf16.mxu0 %v6284
    %8345 = vmatpush1.bf16.msra.mxu0 %v6283
    %8346 = vmatprep.subr.bf16.mxu0 %v6292
    %8347 = vmatpush1.bf16.msra.mxu0 %v6291
    %8348 = vmatprep.mubr.bf16.mxu0 %v4848
    %8349 = vmatmul.mubr.bf16.gmra.mrb[0].mxu0 %v4847
    %v8350 = vpop.f32.mrb[0].mxu0
    %v8351 = vadd.f32 %v7998, %v8350
    %v8352 = vpop.f32.mrb[0].mxu0
    %v8353 = vadd.f32 %v8000, %v8352
    %v8354 = vpop.f32.mrb[0].mxu0
    %v8355 = vadd.f32 %v8002, %v8354
    %v8356 = vpop.f32.mrb[0].mxu0
    %v8357 = vadd.f32 %v8004, %v8356
    %8358 = vmatprep.mubr.bf16.mxu0 %v4852
    %8359 = vmatmul.mubr.bf16.gmra.mrb[0].mxu0 %v4851
    %v8360 = vpop.f32.mrb[0].mxu0
    %v8361 = vadd.f32 %v8008, %v8360
    %v8362 = vpop.f32.mrb[0].mxu0
    %v8363 = vadd.f32 %v8010, %v8362
    %v8364 = vpop.f32.mrb[0].mxu0
    %v8365 = vadd.f32 %v8012, %v8364
    %v8366 = vpop.f32.mrb[0].mxu0
    %v8367 = vadd.f32 %v8014, %v8366
    %8368 = vmatprep.mubr.bf16.mxu0 %v4856
    %8369 = vmatmul.mubr.bf16.gmra.mrb[0].mxu0 %v4855
    %v8370 = vpop.f32.mrb[0].mxu0
    %v8371 = vadd.f32 %v8018, %v8370
    %v8372 = vpop.f32.mrb[0].mxu0
    %v8373 = vadd.f32 %v8020, %v8372
    %v8374 = vpop.f32.mrb[0].mxu0
    %v8375 = vadd.f32 %v8022, %v8374
    %v8376 = vpop.f32.mrb[0].mxu0
    %v8377 = vadd.f32 %v8024, %v8376
    %8378 = vmatprep.mubr.bf16.mxu0 %v4860
    %8379 = vmatmul.mubr.bf16.gmra.mrb[0].mxu0 %v4859
    %v8380 = vpop.f32.mrb[0].mxu0
    %v8381 = vadd.f32 %v8028, %v8380
    %v8382 = vpop.f32.mrb[0].mxu0
    %v8383 = vadd.f32 %v8030, %v8382
    %v8384 = vpop.f32.mrb[0].mxu0
    %v8385 = vadd.f32 %v8032, %v8384
    %v8386 = vpop.f32.mrb[0].mxu0
    %v8387 = vadd.f32 %v8034, %v8386
    %8388 = vmatprep.mubr.bf16.mxu0 %v4864
    %8389 = vmatmul.mubr.bf16.gmra.mrb[0].mxu0 %v4863
    %v8390 = vpop.f32.mrb[0].mxu0
    %v8391 = vadd.f32 %v8038, %v8390
    %v8392 = vpop.f32.mrb[0].mxu0
    %v8393 = vadd.f32 %v8040, %v8392
    %v8394 = vpop.f32.mrb[0].mxu0
    %v8395 = vadd.f32 %v8042, %v8394
    %v8396 = vpop.f32.mrb[0].mxu0
    %v8397 = vadd.f32 %v8044, %v8396
    %8398 = vmatprep.mubr.bf16.mxu0 %v4868
    %8399 = vmatmul.mubr.bf16.gmra.mrb[0].mxu0 %v4867
    %v8400 = vpop.f32.mrb[0].mxu0
    %v8401 = vadd.f32 %v8048, %v8400
    %v8402 = vpop.f32.mrb[0].mxu0
    %v8403 = vadd.f32 %v8050, %v8402
    %v8404 = vpop.f32.mrb[0].mxu0
    %v8405 = vadd.f32 %v8052, %v8404
    %v8406 = vpop.f32.mrb[0].mxu0
    %v8407 = vadd.f32 %v8054, %v8406
    %8408 = vmatprep.mubr.bf16.mxu0 %v4872
    %8409 = vmatmul.mubr.bf16.gmra.mrb[0].mxu0 %v4871
    %v8410 = vpop.f32.mrb[0].mxu0
    %v8411 = vadd.f32 %v8058, %v8410
    %v8412 = vpop.f32.mrb[0].mxu0
    %v8413 = vadd.f32 %v8060, %v8412
    %v8414 = vpop.f32.mrb[0].mxu0
    %v8415 = vadd.f32 %v8062, %v8414
    %v8416 = vpop.f32.mrb[0].mxu0
    %v8417 = vadd.f32 %v8064, %v8416
    %8418 = vmatprep.mubr.bf16.mxu0 %v4876
    %8419 = vmatmul.mubr.bf16.gmra.mrb[0].mxu0 %v4875
    %v8420 = vpop.f32.mrb[0].mxu0
    %v8421 = vadd.f32 %v8068, %v8420
    %v8422 = vpop.f32.mrb[0].mxu0
    %v8423 = vadd.f32 %v8070, %v8422
    %v8424 = vpop.f32.mrb[0].mxu0
    %v8425 = vadd.f32 %v8072, %v8424
    %v8426 = vpop.f32.mrb[0].mxu0
    %v8427 = vadd.f32 %v8074, %v8426
    %8428 = vmatprep.mubr.bf16.mxu0 %v4880
    %8429 = vmatmul.mubr.bf16.gmra.mrb[0].mxu0 %v4879
    %v8430 = vpop.f32.mrb[0].mxu0
    %v8431 = vadd.f32 %v8078, %v8430
    %v8432 = vpop.f32.mrb[0].mxu0
    %v8433 = vadd.f32 %v8080, %v8432
    %v8434 = vpop.f32.mrb[0].mxu0
    %v8435 = vadd.f32 %v8082, %v8434
    %v8436 = vpop.f32.mrb[0].mxu0
    %v8437 = vadd.f32 %v8084, %v8436
    %8438 = vmatprep.mubr.bf16.mxu0 %v4884
    %8439 = vmatmul.mubr.bf16.gmra.mrb[0].mxu0 %v4883
    %v8440 = vpop.f32.mrb[0].mxu0
    %v8441 = vadd.f32 %v8088, %v8440
    %v8442 = vpop.f32.mrb[0].mxu0
    %v8443 = vadd.f32 %v8090, %v8442
    %v8444 = vpop.f32.mrb[0].mxu0
    %v8445 = vadd.f32 %v8092, %v8444
    %v8446 = vpop.f32.mrb[0].mxu0
    %v8447 = vadd.f32 %v8094, %v8446
    %8448 = vmatprep.mubr.bf16.mxu0 %v4888
    %8449 = vmatmul.mubr.bf16.gmra.mrb[0].mxu0 %v4887
    %v8450 = vpop.f32.mrb[0].mxu0
    %v8451 = vadd.f32 %v8098, %v8450
    %v8452 = vpop.f32.mrb[0].mxu0
    %v8453 = vadd.f32 %v8100, %v8452
    %v8454 = vpop.f32.mrb[0].mxu0
    %v8455 = vadd.f32 %v8102, %v8454
    %v8456 = vpop.f32.mrb[0].mxu0
    %v8457 = vadd.f32 %v8104, %v8456
    %8458 = vmatprep.mubr.bf16.mxu0 %v4892
    %8459 = vmatmul.mubr.bf16.gmra.mrb[0].mxu0 %v4891
    %v8460 = vpop.f32.mrb[0].mxu0
    %v8461 = vadd.f32 %v8108, %v8460
    %v8462 = vpop.f32.mrb[0].mxu0
    %v8463 = vadd.f32 %v8110, %v8462
    %v8464 = vpop.f32.mrb[0].mxu0
    %v8465 = vadd.f32 %v8112, %v8464
    %v8466 = vpop.f32.mrb[0].mxu0
    %v8467 = vadd.f32 %v8114, %v8466
    %8468 = vmatprep.mubr.bf16.mxu0 %v4896
    %8469 = vmatmul.mubr.bf16.gmra.mrb[0].mxu0 %v4895
    %v8470 = vpop.f32.mrb[0].mxu0
    %v8471 = vadd.f32 %v8118, %v8470
    %v8472 = vpop.f32.mrb[0].mxu0
    %v8473 = vadd.f32 %v8120, %v8472
    %v8474 = vpop.f32.mrb[0].mxu0
    %v8475 = vadd.f32 %v8122, %v8474
    %v8476 = vpop.f32.mrb[0].mxu0
    %v8477 = vadd.f32 %v8124, %v8476
    %8478 = vmatprep.mubr.bf16.mxu0 %v4900
    %8479 = vmatmul.mubr.bf16.gmra.mrb[0].mxu0 %v4899
    %v8480 = vpop.f32.mrb[0].mxu0
    %v8481 = vadd.f32 %v8128, %v8480
    %v8482 = vpop.f32.mrb[0].mxu0
    %v8483 = vadd.f32 %v8130, %v8482
    %v8484 = vpop.f32.mrb[0].mxu0
    %v8485 = vadd.f32 %v8132, %v8484
    %v8486 = vpop.f32.mrb[0].mxu0
    %v8487 = vadd.f32 %v8134, %v8486
    %8488 = vmatprep.mubr.bf16.mxu0 %v4904
    %8489 = vmatmul.mubr.bf16.gmra.mrb[0].mxu0 %v4903
    %v8490 = vpop.f32.mrb[0].mxu0
    %v8491 = vadd.f32 %v8138, %v8490
    %v8492 = vpop.f32.mrb[0].mxu0
    %v8493 = vadd.f32 %v8140, %v8492
    %v8494 = vpop.f32.mrb[0].mxu0
    %v8495 = vadd.f32 %v8142, %v8494
    %v8496 = vpop.f32.mrb[0].mxu0
    %v8497 = vadd.f32 %v8144, %v8496
    %8498 = vmatprep.mubr.bf16.mxu0 %v4908
    %8499 = vmatmul.mubr.bf16.gmra.mrb[0].mxu0 %v4907
    %v8500 = vpop.f32.mrb[0].mxu0
    %v8501 = vadd.f32 %v8148, %v8500
    %v8502 = vpop.f32.mrb[0].mxu0
    %v8503 = vadd.f32 %v8150, %v8502
    %v8504 = vpop.f32.mrb[0].mxu0
    %v8505 = vadd.f32 %v8152, %v8504
    %v8506 = vpop.f32.mrb[0].mxu0
    %v8507 = vadd.f32 %v8154, %v8506
    %8508 = vmatprep.mubr.bf16.mxu0 %v4912
    %8509 = vmatmul.mubr.bf16.gmra.mrb[0].mxu0 %v4911
    %v8510 = vpop.f32.mrb[0].mxu0
    %v8511 = vadd.f32 %v8158, %v8510
    %v8512 = vpop.f32.mrb[0].mxu0
    %v8513 = vadd.f32 %v8160, %v8512
    %v8514 = vpop.f32.mrb[0].mxu0
    %v8515 = vadd.f32 %v8162, %v8514
    %v8516 = vpop.f32.mrb[0].mxu0
    %v8517 = vadd.f32 %v8164, %v8516
    %8518 = vmatprep.mubr.bf16.mxu0 %v4916
    %8519 = vmatmul.mubr.bf16.gmra.mrb[0].mxu0 %v4915
    %v8520 = vpop.f32.mrb[0].mxu0
    %v8521 = vadd.f32 %v8168, %v8520
    %v8522 = vpop.f32.mrb[0].mxu0
    %v8523 = vadd.f32 %v8170, %v8522
    %v8524 = vpop.f32.mrb[0].mxu0
    %v8525 = vadd.f32 %v8172, %v8524
    %v8526 = vpop.f32.mrb[0].mxu0
    %v8527 = vadd.f32 %v8174, %v8526
    %8528 = vmatprep.mubr.bf16.mxu0 %v4920
    %8529 = vmatmul.mubr.bf16.gmra.mrb[0].mxu0 %v4919
    %v8530 = vpop.f32.mrb[0].mxu0
    %v8531 = vadd.f32 %v8178, %v8530
    %v8532 = vpop.f32.mrb[0].mxu0
    %v8533 = vadd.f32 %v8180, %v8532
    %v8534 = vpop.f32.mrb[0].mxu0
    %v8535 = vadd.f32 %v8182, %v8534
    %v8536 = vpop.f32.mrb[0].mxu0
    %v8537 = vadd.f32 %v8184, %v8536
    %8538 = vmatprep.mubr.bf16.mxu0 %v4924
    %8539 = vmatmul.mubr.bf16.gmra.mrb[0].mxu0 %v4923
    %v8540 = vpop.f32.mrb[0].mxu0
    %v8541 = vadd.f32 %v8188, %v8540
    %v8542 = vpop.f32.mrb[0].mxu0
    %v8543 = vadd.f32 %v8190, %v8542
    %v8544 = vpop.f32.mrb[0].mxu0
    %v8545 = vadd.f32 %v8192, %v8544
    %v8546 = vpop.f32.mrb[0].mxu0
    %v8547 = vadd.f32 %v8194, %v8546
    %8548 = vmatprep.mubr.bf16.mxu0 %v4928
    %8549 = vmatmul.mubr.bf16.gmra.mrb[0].mxu0 %v4927
    %v8550 = vpop.f32.mrb[0].mxu0
    %v8551 = vadd.f32 %v8198, %v8550
    %v8552 = vpop.f32.mrb[0].mxu0
    %v8553 = vadd.f32 %v8200, %v8552
    %v8554 = vpop.f32.mrb[0].mxu0
    %v8555 = vadd.f32 %v8202, %v8554
    %v8556 = vpop.f32.mrb[0].mxu0
    %v8557 = vadd.f32 %v8204, %v8556
    %8558 = vmatprep.mubr.bf16.mxu0 %v4932
    %8559 = vmatmul.mubr.bf16.gmra.mrb[0].mxu0 %v4931
    %v8560 = vpop.f32.mrb[0].mxu0
    %v8561 = vadd.f32 %v8208, %v8560
    %v8562 = vpop.f32.mrb[0].mxu0
    %v8563 = vadd.f32 %v8210, %v8562
    %v8564 = vpop.f32.mrb[0].mxu0
    %v8565 = vadd.f32 %v8212, %v8564
    %v8566 = vpop.f32.mrb[0].mxu0
    %v8567 = vadd.f32 %v8214, %v8566
    %8568 = vmatprep.mubr.bf16.mxu0 %v4936
    %8569 = vmatmul.mubr.bf16.gmra.mrb[0].mxu0 %v4935
    %v8570 = vpop.f32.mrb[0].mxu0
    %v8571 = vadd.f32 %v8218, %v8570
    %v8572 = vpop.f32.mrb[0].mxu0
    %v8573 = vadd.f32 %v8220, %v8572
    %v8574 = vpop.f32.mrb[0].mxu0
    %v8575 = vadd.f32 %v8222, %v8574
    %v8576 = vpop.f32.mrb[0].mxu0
    %v8577 = vadd.f32 %v8224, %v8576
    %8578 = vmatprep.mubr.bf16.mxu0 %v4940
    %8579 = vmatmul.mubr.bf16.gmra.mrb[0].mxu0 %v4939
    %v8580 = vpop.f32.mrb[0].mxu0
    %v8581 = vadd.f32 %v8228, %v8580
    %v8582 = vpop.f32.mrb[0].mxu0
    %v8583 = vadd.f32 %v8230, %v8582
    %v8584 = vpop.f32.mrb[0].mxu0
    %v8585 = vadd.f32 %v8232, %v8584
    %v8586 = vpop.f32.mrb[0].mxu0
    %v8587 = vadd.f32 %v8234, %v8586
    %8588 = vmatprep.mubr.bf16.mxu0 %v4944
    %8589 = vmatmul.mubr.bf16.gmra.mrb[0].mxu0 %v4943
    %v8590 = vpop.f32.mrb[0].mxu0
    %v8591 = vadd.f32 %v8238, %v8590
    %v8592 = vpop.f32.mrb[0].mxu0
    %v8593 = vadd.f32 %v8240, %v8592
    %v8594 = vpop.f32.mrb[0].mxu0
    %v8595 = vadd.f32 %v8242, %v8594
    %v8596 = vpop.f32.mrb[0].mxu0
    %v8597 = vadd.f32 %v8244, %v8596
    %8598 = vmatprep.mubr.bf16.mxu0 %v4948
    %8599 = vmatmul.mubr.bf16.gmra.mrb[0].mxu0 %v4947
    %v8600 = vpop.f32.mrb[0].mxu0
    %v8601 = vadd.f32 %v8248, %v8600
    %v8602 = vpop.f32.mrb[0].mxu0
    %v8603 = vadd.f32 %v8250, %v8602
    %v8604 = vpop.f32.mrb[0].mxu0
    %v8605 = vadd.f32 %v8252, %v8604
    %v8606 = vpop.f32.mrb[0].mxu0
    %v8607 = vadd.f32 %v8254, %v8606
    %8608 = vmatprep.mubr.bf16.mxu0 %v4952
    %8609 = vmatmul.mubr.bf16.gmra.mrb[0].mxu0 %v4951
    %v8610 = vpop.f32.mrb[0].mxu0
    %v8611 = vadd.f32 %v8258, %v8610
    %v8612 = vpop.f32.mrb[0].mxu0
    %v8613 = vadd.f32 %v8260, %v8612
    %v8614 = vpop.f32.mrb[0].mxu0
    %v8615 = vadd.f32 %v8262, %v8614
    %v8616 = vpop.f32.mrb[0].mxu0
    %v8617 = vadd.f32 %v8264, %v8616
    %8618 = vmatprep.mubr.bf16.mxu0 %v4956
    %8619 = vmatmul.mubr.bf16.gmra.mrb[0].mxu0 %v4955
    %v8620 = vpop.f32.mrb[0].mxu0
    %v8621 = vadd.f32 %v8268, %v8620
    %v8622 = vpop.f32.mrb[0].mxu0
    %v8623 = vadd.f32 %v8270, %v8622
    %v8624 = vpop.f32.mrb[0].mxu0
    %v8625 = vadd.f32 %v8272, %v8624
    %v8626 = vpop.f32.mrb[0].mxu0
    %v8627 = vadd.f32 %v8274, %v8626
    %8628 = vmatprep.mubr.bf16.mxu0 %v4960
    %8629 = vmatmul.mubr.bf16.gmra.mrb[0].mxu0 %v4959
    %v8630 = vpop.f32.mrb[0].mxu0
    %v8631 = vadd.f32 %v8278, %v8630
    %v8632 = vpop.f32.mrb[0].mxu0
    %v8633 = vadd.f32 %v8280, %v8632
    %v8634 = vpop.f32.mrb[0].mxu0
    %v8635 = vadd.f32 %v8282, %v8634
    %v8636 = vpop.f32.mrb[0].mxu0
    %v8637 = vadd.f32 %v8284, %v8636
    %8638 = vmatprep.mubr.bf16.mxu0 %v4964
    %8639 = vmatmul.mubr.bf16.gmra.mrb[0].mxu0 %v4963
    %v8640 = vpop.f32.mrb[0].mxu0
    %v8641 = vadd.f32 %v8288, %v8640
    %v8642 = vpop.f32.mrb[0].mxu0
    %v8643 = vadd.f32 %v8290, %v8642
    %v8644 = vpop.f32.mrb[0].mxu0
    %v8645 = vadd.f32 %v8292, %v8644
    %v8646 = vpop.f32.mrb[0].mxu0
    %v8647 = vadd.f32 %v8294, %v8646
    %8648 = vmatprep.mubr.bf16.mxu0 %v4968
    %8649 = vmatmul.mubr.bf16.gmra.mrb[0].mxu0 %v4967
    %v8650 = vpop.f32.mrb[0].mxu0
    %v8651 = vadd.f32 %v8298, %v8650
    %v8652 = vpop.f32.mrb[0].mxu0
    %v8653 = vadd.f32 %v8300, %v8652
    %v8654 = vpop.f32.mrb[0].mxu0
    %v8655 = vadd.f32 %v8302, %v8654
    %v8656 = vpop.f32.mrb[0].mxu0
    %v8657 = vadd.f32 %v8304, %v8656
    %8658 = vmatprep.mubr.bf16.mxu0 %v4972
    %8659 = vmatmul.mubr.bf16.gmra.mrb[0].mxu0 %v4971
    %v8660 = vpop.f32.mrb[0].mxu0
    %v8661 = vadd.f32 %v8308, %v8660
    %v8662 = vpop.f32.mrb[0].mxu0
    %v8663 = vadd.f32 %v8310, %v8662
    %v8664 = vpop.f32.mrb[0].mxu0
    %v8665 = vadd.f32 %v8312, %v8664
    %v8666 = vpop.f32.mrb[0].mxu0
    %v8667 = vadd.f32 %v8314, %v8666
    %8668 = vdwg.mxu0
    %8669 = vmatprep.subr.bf16.mxu0 %v6046
    %8670 = vmatpush1.bf16.msra.mxu0 %v6045
    %8671 = vmatprep.subr.bf16.mxu0 %v6054
    %8672 = vmatpush1.bf16.msra.mxu0 %v6053
    %8673 = vmatprep.subr.bf16.mxu0 %v6062
    %8674 = vmatpush1.bf16.msra.mxu0 %v6061
    %8675 = vmatprep.subr.bf16.mxu0 %v6070
    %8676 = vmatpush1.bf16.msra.mxu0 %v6069
    %8677 = vmatprep.subr.bf16.mxu0 %v6078
    %8678 = vmatpush1.bf16.msra.mxu0 %v6077
    %8679 = vmatprep.subr.bf16.mxu0 %v6086
    %8680 = vmatpush1.bf16.msra.mxu0 %v6085
    %8681 = vmatprep.subr.bf16.mxu0 %v6094
    %8682 = vmatpush1.bf16.msra.mxu0 %v6093
    %8683 = vmatprep.subr.bf16.mxu0 %v6102
    %8684 = vmatpush1.bf16.msra.mxu0 %v6101
    %8685 = vmatprep.subr.bf16.mxu0 %v6110
    %8686 = vmatpush1.bf16.msra.mxu0 %v6109
    %8687 = vmatprep.subr.bf16.mxu0 %v6118
    %8688 = vmatpush1.bf16.msra.mxu0 %v6117
    %8689 = vmatprep.subr.bf16.mxu0 %v6126
    %8690 = vmatpush1.bf16.msra.mxu0 %v6125
    %8691 = vmatprep.subr.bf16.mxu0 %v6134
    %8692 = vmatpush1.bf16.msra.mxu0 %v6133
    %8693 = vmatprep.subr.bf16.mxu0 %v6142
    %8694 = vmatpush1.bf16.msra.mxu0 %v6141
    %8695 = vmatprep.subr.bf16.mxu0 %v6150
    %8696 = vmatpush1.bf16.msra.mxu0 %v6149
    %8697 = vmatprep.subr.bf16.mxu0 %v6158
    %8698 = vmatpush1.bf16.msra.mxu0 %v6157
    %8699 = vmatprep.subr.bf16.mxu0 %v6166
    %8700 = vmatpush1.bf16.msra.mxu0 %v6165
    %8701 = vmatprep.mubr.bf16.mxu0 %v4846
    %8702 = vmatmul.mubr.bf16.gmra.mrb[0].mxu0 %v4845
    %v8703 = vpop.f32.mrb[0].mxu0
    %v8704 = vadd.f32 %v5258, %v8703
    %v8705 = vpop.f32.mrb[0].mxu0
    %v8706 = vadd.f32 %v5262, %v8705
    %v8707 = vpop.f32.mrb[0].mxu0
    %v8708 = vadd.f32 %v5258, %v8707
    %v8709 = vpop.f32.mrb[0].mxu0
    %v8710 = vadd.f32 %v5262, %v8709
    %8711 = vmatprep.mubr.bf16.mxu0 %v4850
    %8712 = vmatmul.mubr.bf16.gmra.mrb[0].mxu0 %v4849
    %v8713 = vpop.f32.mrb[0].mxu0
    %v8714 = vadd.f32 %v5258, %v8713
    %v8715 = vpop.f32.mrb[0].mxu0
    %v8716 = vadd.f32 %v5262, %v8715
    %v8717 = vpop.f32.mrb[0].mxu0
    %v8718 = vadd.f32 %v5258, %v8717
    %v8719 = vpop.f32.mrb[0].mxu0
    %v8720 = vadd.f32 %v5262, %v8719
    %8721 = vmatprep.mubr.bf16.mxu0 %v4854
    %8722 = vmatmul.mubr.bf16.gmra.mrb[0].mxu0 %v4853
    %v8723 = vpop.f32.mrb[0].mxu0
    %v8724 = vadd.f32 %v5258, %v8723
    %v8725 = vpop.f32.mrb[0].mxu0
    %v8726 = vadd.f32 %v5262, %v8725
    %v8727 = vpop.f32.mrb[0].mxu0
    %v8728 = vadd.f32 %v5258, %v8727
    %v8729 = vpop.f32.mrb[0].mxu0
    %v8730 = vadd.f32 %v5262, %v8729
    %8731 = vmatprep.mubr.bf16.mxu0 %v4858
    %8732 = vmatmul.mubr.bf16.gmra.mrb[0].mxu0 %v4857
    %v8733 = vpop.f32.mrb[0].mxu0
    %v8734 = vadd.f32 %v5258, %v8733
    %v8735 = vpop.f32.mrb[0].mxu0
    %v8736 = vadd.f32 %v5262, %v8735
    %v8737 = vpop.f32.mrb[0].mxu0
    %v8738 = vadd.f32 %v5258, %v8737
    %v8739 = vpop.f32.mrb[0].mxu0
    %v8740 = vadd.f32 %v5262, %v8739
    %8741 = vmatprep.mubr.bf16.mxu0 %v4862
    %8742 = vmatmul.mubr.bf16.gmra.mrb[0].mxu0 %v4861
    %v8743 = vpop.f32.mrb[0].mxu0
    %v8744 = vadd.f32 %v5258, %v8743
    %v8745 = vpop.f32.mrb[0].mxu0
    %v8746 = vadd.f32 %v5262, %v8745
    %v8747 = vpop.f32.mrb[0].mxu0
    %v8748 = vadd.f32 %v5258, %v8747
    %v8749 = vpop.f32.mrb[0].mxu0
    %v8750 = vadd.f32 %v5262, %v8749
    %8751 = vmatprep.mubr.bf16.mxu0 %v4866
    %8752 = vmatmul.mubr.bf16.gmra.mrb[0].mxu0 %v4865
    %v8753 = vpop.f32.mrb[0].mxu0
    %v8754 = vadd.f32 %v5258, %v8753
    %v8755 = vpop.f32.mrb[0].mxu0
    %v8756 = vadd.f32 %v5262, %v8755
    %v8757 = vpop.f32.mrb[0].mxu0
    %v8758 = vadd.f32 %v5258, %v8757
    %v8759 = vpop.f32.mrb[0].mxu0
    %v8760 = vadd.f32 %v5262, %v8759
    %8761 = vmatprep.mubr.bf16.mxu0 %v4870
    %8762 = vmatmul.mubr.bf16.gmra.mrb[0].mxu0 %v4869
    %v8763 = vpop.f32.mrb[0].mxu0
    %v8764 = vadd.f32 %v5258, %v8763
    %v8765 = vpop.f32.mrb[0].mxu0
    %v8766 = vadd.f32 %v5262, %v8765
    %v8767 = vpop.f32.mrb[0].mxu0
    %v8768 = vadd.f32 %v5258, %v8767
    %v8769 = vpop.f32.mrb[0].mxu0
    %v8770 = vadd.f32 %v5262, %v8769
    %8771 = vmatprep.mubr.bf16.mxu0 %v4874
    %8772 = vmatmul.mubr.bf16.gmra.mrb[0].mxu0 %v4873
    %v8773 = vpop.f32.mrb[0].mxu0
    %v8774 = vadd.f32 %v5258, %v8773
    %v8775 = vpop.f32.mrb[0].mxu0
    %v8776 = vadd.f32 %v5262, %v8775
    %v8777 = vpop.f32.mrb[0].mxu0
    %v8778 = vadd.f32 %v5258, %v8777
    %v8779 = vpop.f32.mrb[0].mxu0
    %v8780 = vadd.f32 %v5262, %v8779
    %8781 = vmatprep.mubr.bf16.mxu0 %v4878
    %8782 = vmatmul.mubr.bf16.gmra.mrb[0].mxu0 %v4877
    %v8783 = vpop.f32.mrb[0].mxu0
    %v8784 = vadd.f32 %v5258, %v8783
    %v8785 = vpop.f32.mrb[0].mxu0
    %v8786 = vadd.f32 %v5262, %v8785
    %v8787 = vpop.f32.mrb[0].mxu0
    %v8788 = vadd.f32 %v5258, %v8787
    %v8789 = vpop.f32.mrb[0].mxu0
    %v8790 = vadd.f32 %v5262, %v8789
    %8791 = vmatprep.mubr.bf16.mxu0 %v4882
    %8792 = vmatmul.mubr.bf16.gmra.mrb[0].mxu0 %v4881
    %v8793 = vpop.f32.mrb[0].mxu0
    %v8794 = vadd.f32 %v5258, %v8793
    %v8795 = vpop.f32.mrb[0].mxu0
    %v8796 = vadd.f32 %v5262, %v8795
    %v8797 = vpop.f32.mrb[0].mxu0
    %v8798 = vadd.f32 %v5258, %v8797
    %v8799 = vpop.f32.mrb[0].mxu0
    %v8800 = vadd.f32 %v5262, %v8799
    %8801 = vmatprep.mubr.bf16.mxu0 %v4886
    %8802 = vmatmul.mubr.bf16.gmra.mrb[0].mxu0 %v4885
    %v8803 = vpop.f32.mrb[0].mxu0
    %v8804 = vadd.f32 %v5258, %v8803
    %v8805 = vpop.f32.mrb[0].mxu0
    %v8806 = vadd.f32 %v5262, %v8805
    %v8807 = vpop.f32.mrb[0].mxu0
    %v8808 = vadd.f32 %v5258, %v8807
    %v8809 = vpop.f32.mrb[0].mxu0
    %v8810 = vadd.f32 %v5262, %v8809
    %8811 = vmatprep.mubr.bf16.mxu0 %v4890
    %8812 = vmatmul.mubr.bf16.gmra.mrb[0].mxu0 %v4889
    %v8813 = vpop.f32.mrb[0].mxu0
    %v8814 = vadd.f32 %v5258, %v8813
    %v8815 = vpop.f32.mrb[0].mxu0
    %v8816 = vadd.f32 %v5262, %v8815
    %v8817 = vpop.f32.mrb[0].mxu0
    %v8818 = vadd.f32 %v5258, %v8817
    %v8819 = vpop.f32.mrb[0].mxu0
    %v8820 = vadd.f32 %v5262, %v8819
    %8821 = vmatprep.mubr.bf16.mxu0 %v4894
    %8822 = vmatmul.mubr.bf16.gmra.mrb[0].mxu0 %v4893
    %v8823 = vpop.f32.mrb[0].mxu0
    %v8824 = vadd.f32 %v5258, %v8823
    %v8825 = vpop.f32.mrb[0].mxu0
    %v8826 = vadd.f32 %v5262, %v8825
    %v8827 = vpop.f32.mrb[0].mxu0
    %v8828 = vadd.f32 %v5258, %v8827
    %v8829 = vpop.f32.mrb[0].mxu0
    %v8830 = vadd.f32 %v5262, %v8829
    %8831 = vmatprep.mubr.bf16.mxu0 %v4898
    %8832 = vmatmul.mubr.bf16.gmra.mrb[0].mxu0 %v4897
    %v8833 = vpop.f32.mrb[0].mxu0
    %v8834 = vadd.f32 %v5258, %v8833
    %v8835 = vpop.f32.mrb[0].mxu0
    %v8836 = vadd.f32 %v5262, %v8835
    %v8837 = vpop.f32.mrb[0].mxu0
    %v8838 = vadd.f32 %v5258, %v8837
    %v8839 = vpop.f32.mrb[0].mxu0
    %v8840 = vadd.f32 %v5262, %v8839
    %8841 = vmatprep.mubr.bf16.mxu0 %v4902
    %8842 = vmatmul.mubr.bf16.gmra.mrb[0].mxu0 %v4901
    %v8843 = vpop.f32.mrb[0].mxu0
    %v8844 = vadd.f32 %v5258, %v8843
    %v8845 = vpop.f32.mrb[0].mxu0
    %v8846 = vadd.f32 %v5262, %v8845
    %v8847 = vpop.f32.mrb[0].mxu0
    %v8848 = vadd.f32 %v5258, %v8847
    %v8849 = vpop.f32.mrb[0].mxu0
    %v8850 = vadd.f32 %v5262, %v8849
    %8851 = vmatprep.mubr.bf16.mxu0 %v4906
    %8852 = vmatmul.mubr.bf16.gmra.mrb[0].mxu0 %v4905
    %v8853 = vpop.f32.mrb[0].mxu0
    %v8854 = vadd.f32 %v5258, %v8853
    %v8855 = vpop.f32.mrb[0].mxu0
    %v8856 = vadd.f32 %v5262, %v8855
    %v8857 = vpop.f32.mrb[0].mxu0
    %v8858 = vadd.f32 %v5258, %v8857
    %v8859 = vpop.f32.mrb[0].mxu0
    %v8860 = vadd.f32 %v5262, %v8859
    %8861 = vmatprep.mubr.bf16.mxu0 %v4910
    %8862 = vmatmul.mubr.bf16.gmra.mrb[0].mxu0 %v4909
    %v8863 = vpop.f32.mrb[0].mxu0
    %v8864 = vadd.f32 %v5258, %v8863
    %v8865 = vpop.f32.mrb[0].mxu0
    %v8866 = vadd.f32 %v5262, %v8865
    %v8867 = vpop.f32.mrb[0].mxu0
    %v8868 = vadd.f32 %v5258, %v8867
    %v8869 = vpop.f32.mrb[0].mxu0
    %v8870 = vadd.f32 %v5262, %v8869
    %8871 = vmatprep.mubr.bf16.mxu0 %v4914
    %8872 = vmatmul.mubr.bf16.gmra.mrb[0].mxu0 %v4913
    %v8873 = vpop.f32.mrb[0].mxu0
    %v8874 = vadd.f32 %v5258, %v8873
    %v8875 = vpop.f32.mrb[0].mxu0
    %v8876 = vadd.f32 %v5262, %v8875
    %v8877 = vpop.f32.mrb[0].mxu0
    %v8878 = vadd.f32 %v5258, %v8877
    %v8879 = vpop.f32.mrb[0].mxu0
    %v8880 = vadd.f32 %v5262, %v8879
    %8881 = vmatprep.mubr.bf16.mxu0 %v4918
    %8882 = vmatmul.mubr.bf16.gmra.mrb[0].mxu0 %v4917
    %v8883 = vpop.f32.mrb[0].mxu0
    %v8884 = vadd.f32 %v5258, %v8883
    %v8885 = vpop.f32.mrb[0].mxu0
    %v8886 = vadd.f32 %v5262, %v8885
    %v8887 = vpop.f32.mrb[0].mxu0
    %v8888 = vadd.f32 %v5258, %v8887
    %v8889 = vpop.f32.mrb[0].mxu0
    %v8890 = vadd.f32 %v5262, %v8889
    %8891 = vmatprep.mubr.bf16.mxu0 %v4922
    %8892 = vmatmul.mubr.bf16.gmra.mrb[0].mxu0 %v4921
    %v8893 = vpop.f32.mrb[0].mxu0
    %v8894 = vadd.f32 %v5258, %v8893
    %v8895 = vpop.f32.mrb[0].mxu0
    %v8896 = vadd.f32 %v5262, %v8895
    %v8897 = vpop.f32.mrb[0].mxu0
    %v8898 = vadd.f32 %v5258, %v8897
    %v8899 = vpop.f32.mrb[0].mxu0
    %v8900 = vadd.f32 %v5262, %v8899
    %8901 = vmatprep.mubr.bf16.mxu0 %v4926
    %8902 = vmatmul.mubr.bf16.gmra.mrb[0].mxu0 %v4925
    %v8903 = vpop.f32.mrb[0].mxu0
    %v8904 = vadd.f32 %v5258, %v8903
    %v8905 = vpop.f32.mrb[0].mxu0
    %v8906 = vadd.f32 %v5262, %v8905
    %v8907 = vpop.f32.mrb[0].mxu0
    %v8908 = vadd.f32 %v5258, %v8907
    %v8909 = vpop.f32.mrb[0].mxu0
    %v8910 = vadd.f32 %v5262, %v8909
    %8911 = vmatprep.mubr.bf16.mxu0 %v4930
    %8912 = vmatmul.mubr.bf16.gmra.mrb[0].mxu0 %v4929
    %v8913 = vpop.f32.mrb[0].mxu0
    %v8914 = vadd.f32 %v5258, %v8913
    %v8915 = vpop.f32.mrb[0].mxu0
    %v8916 = vadd.f32 %v5262, %v8915
    %v8917 = vpop.f32.mrb[0].mxu0
    %v8918 = vadd.f32 %v5258, %v8917
    %v8919 = vpop.f32.mrb[0].mxu0
    %v8920 = vadd.f32 %v5262, %v8919
    %8921 = vmatprep.mubr.bf16.mxu0 %v4934
    %8922 = vmatmul.mubr.bf16.gmra.mrb[0].mxu0 %v4933
    %v8923 = vpop.f32.mrb[0].mxu0
    %v8924 = vadd.f32 %v5258, %v8923
    %v8925 = vpop.f32.mrb[0].mxu0
    %v8926 = vadd.f32 %v5262, %v8925
    %v8927 = vpop.f32.mrb[0].mxu0
    %v8928 = vadd.f32 %v5258, %v8927
    %v8929 = vpop.f32.mrb[0].mxu0
    %v8930 = vadd.f32 %v5262, %v8929
    %8931 = vmatprep.mubr.bf16.mxu0 %v4938
    %8932 = vmatmul.mubr.bf16.gmra.mrb[0].mxu0 %v4937
    %v8933 = vpop.f32.mrb[0].mxu0
    %v8934 = vadd.f32 %v5258, %v8933
    %v8935 = vpop.f32.mrb[0].mxu0
    %v8936 = vadd.f32 %v5262, %v8935
    %v8937 = vpop.f32.mrb[0].mxu0
    %v8938 = vadd.f32 %v5258, %v8937
    %v8939 = vpop.f32.mrb[0].mxu0
    %v8940 = vadd.f32 %v5262, %v8939
    %8941 = vmatprep.mubr.bf16.mxu0 %v4942
    %8942 = vmatmul.mubr.bf16.gmra.mrb[0].mxu0 %v4941
    %v8943 = vpop.f32.mrb[0].mxu0
    %v8944 = vadd.f32 %v5258, %v8943
    %v8945 = vpop.f32.mrb[0].mxu0
    %v8946 = vadd.f32 %v5262, %v8945
    %v8947 = vpop.f32.mrb[0].mxu0
    %v8948 = vadd.f32 %v5258, %v8947
    %v8949 = vpop.f32.mrb[0].mxu0
    %v8950 = vadd.f32 %v5262, %v8949
    %8951 = vmatprep.mubr.bf16.mxu0 %v4946
    %8952 = vmatmul.mubr.bf16.gmra.mrb[0].mxu0 %v4945
    %v8953 = vpop.f32.mrb[0].mxu0
    %v8954 = vadd.f32 %v5258, %v8953
    %v8955 = vpop.f32.mrb[0].mxu0
    %v8956 = vadd.f32 %v5262, %v8955
    %v8957 = vpop.f32.mrb[0].mxu0
    %v8958 = vadd.f32 %v5258, %v8957
    %v8959 = vpop.f32.mrb[0].mxu0
    %v8960 = vadd.f32 %v5262, %v8959
    %8961 = vmatprep.mubr.bf16.mxu0 %v4950
    %8962 = vmatmul.mubr.bf16.gmra.mrb[0].mxu0 %v4949
    %v8963 = vpop.f32.mrb[0].mxu0
    %v8964 = vadd.f32 %v5258, %v8963
    %v8965 = vpop.f32.mrb[0].mxu0
    %v8966 = vadd.f32 %v5262, %v8965
    %v8967 = vpop.f32.mrb[0].mxu0
    %v8968 = vadd.f32 %v5258, %v8967
    %v8969 = vpop.f32.mrb[0].mxu0
    %v8970 = vadd.f32 %v5262, %v8969
    %8971 = vmatprep.mubr.bf16.mxu0 %v4954
    %8972 = vmatmul.mubr.bf16.gmra.mrb[0].mxu0 %v4953
    %v8973 = vpop.f32.mrb[0].mxu0
    %v8974 = vadd.f32 %v5258, %v8973
    %v8975 = vpop.f32.mrb[0].mxu0
    %v8976 = vadd.f32 %v5262, %v8975
    %v8977 = vpop.f32.mrb[0].mxu0
    %v8978 = vadd.f32 %v5258, %v8977
    %v8979 = vpop.f32.mrb[0].mxu0
    %v8980 = vadd.f32 %v5262, %v8979
    %8981 = vmatprep.mubr.bf16.mxu0 %v4958
    %8982 = vmatmul.mubr.bf16.gmra.mrb[0].mxu0 %v4957
    %v8983 = vpop.f32.mrb[0].mxu0
    %v8984 = vadd.f32 %v5258, %v8983
    %v8985 = vpop.f32.mrb[0].mxu0
    %v8986 = vadd.f32 %v5262, %v8985
    %v8987 = vpop.f32.mrb[0].mxu0
    %v8988 = vadd.f32 %v5258, %v8987
    %v8989 = vpop.f32.mrb[0].mxu0
    %v8990 = vadd.f32 %v5262, %v8989
    %8991 = vmatprep.mubr.bf16.mxu0 %v4962
    %8992 = vmatmul.mubr.bf16.gmra.mrb[0].mxu0 %v4961
    %v8993 = vpop.f32.mrb[0].mxu0
    %v8994 = vadd.f32 %v5258, %v8993
    %v8995 = vpop.f32.mrb[0].mxu0
    %v8996 = vadd.f32 %v5262, %v8995
    %v8997 = vpop.f32.mrb[0].mxu0
    %v8998 = vadd.f32 %v5258, %v8997
    %v8999 = vpop.f32.mrb[0].mxu0
    %v9000 = vadd.f32 %v5262, %v8999
    %9001 = vmatprep.mubr.bf16.mxu0 %v4966
    %9002 = vmatmul.mubr.bf16.gmra.mrb[0].mxu0 %v4965
    %v9003 = vpop.f32.mrb[0].mxu0
    %v9004 = vadd.f32 %v5258, %v9003
    %v9005 = vpop.f32.mrb[0].mxu0
    %v9006 = vadd.f32 %v5262, %v9005
    %v9007 = vpop.f32.mrb[0].mxu0
    %v9008 = vadd.f32 %v5258, %v9007
    %v9009 = vpop.f32.mrb[0].mxu0
    %v9010 = vadd.f32 %v5262, %v9009
    %9011 = vmatprep.mubr.bf16.mxu0 %v4970
    %9012 = vmatmul.mubr.bf16.gmra.mrb[0].mxu0 %v4969
    %v9013 = vpop.f32.mrb[0].mxu0
    %v9014 = vadd.f32 %v5258, %v9013
    %v9015 = vpop.f32.mrb[0].mxu0
    %v9016 = vadd.f32 %v5262, %v9015
    %v9017 = vpop.f32.mrb[0].mxu0
    %v9018 = vadd.f32 %v5258, %v9017
    %v9019 = vpop.f32.mrb[0].mxu0
    %v9020 = vadd.f32 %v5262, %v9019
    %9021 = vdwg.mxu0
    %9022 = vmatprep.subr.bf16.mxu0 %v6174
    %9023 = vmatpush1.bf16.msra.mxu0 %v6173
    %9024 = vmatprep.subr.bf16.mxu0 %v6182
    %9025 = vmatpush1.bf16.msra.mxu0 %v6181
    %9026 = vmatprep.subr.bf16.mxu0 %v6190
    %9027 = vmatpush1.bf16.msra.mxu0 %v6189
    %9028 = vmatprep.subr.bf16.mxu0 %v6198
    %9029 = vmatpush1.bf16.msra.mxu0 %v6197
    %9030 = vmatprep.subr.bf16.mxu0 %v6206
    %9031 = vmatpush1.bf16.msra.mxu0 %v6205
    %9032 = vmatprep.subr.bf16.mxu0 %v6214
    %9033 = vmatpush1.bf16.msra.mxu0 %v6213
    %9034 = vmatprep.subr.bf16.mxu0 %v6222
    %9035 = vmatpush1.bf16.msra.mxu0 %v6221
    %9036 = vmatprep.subr.bf16.mxu0 %v6230
    %9037 = vmatpush1.bf16.msra.mxu0 %v6229
    %9038 = vmatprep.subr.bf16.mxu0 %v6238
    %9039 = vmatpush1.bf16.msra.mxu0 %v6237
    %9040 = vmatprep.subr.bf16.mxu0 %v6246
    %9041 = vmatpush1.bf16.msra.mxu0 %v6245
    %9042 = vmatprep.subr.bf16.mxu0 %v6254
    %9043 = vmatpush1.bf16.msra.mxu0 %v6253
    %9044 = vmatprep.subr.bf16.mxu0 %v6262
    %9045 = vmatpush1.bf16.msra.mxu0 %v6261
    %9046 = vmatprep.subr.bf16.mxu0 %v6270
    %9047 = vmatpush1.bf16.msra.mxu0 %v6269
    %9048 = vmatprep.subr.bf16.mxu0 %v6278
    %9049 = vmatpush1.bf16.msra.mxu0 %v6277
    %9050 = vmatprep.subr.bf16.mxu0 %v6286
    %9051 = vmatpush1.bf16.msra.mxu0 %v6285
    %9052 = vmatprep.subr.bf16.mxu0 %v6294
    %9053 = vmatpush1.bf16.msra.mxu0 %v6293
    %9054 = vmatprep.mubr.bf16.mxu0 %v4848
    %9055 = vmatmul.mubr.bf16.gmra.mrb[0].mxu0 %v4847
    %v9056 = vpop.f32.mrb[0].mxu0
    %v9057 = vadd.f32 %v8704, %v9056
    %v9058 = vpop.f32.mrb[0].mxu0
    %v9059 = vadd.f32 %v8706, %v9058
    %v9060 = vpop.f32.mrb[0].mxu0
    %v9061 = vadd.f32 %v8708, %v9060
    %v9062 = vpop.f32.mrb[0].mxu0
    %v9063 = vadd.f32 %v8710, %v9062
    %9064 = vmatprep.mubr.bf16.mxu0 %v4852
    %9065 = vmatmul.mubr.bf16.gmra.mrb[0].mxu0 %v4851
    %v9066 = vpop.f32.mrb[0].mxu0
    %v9067 = vadd.f32 %v8714, %v9066
    %v9068 = vpop.f32.mrb[0].mxu0
    %v9069 = vadd.f32 %v8716, %v9068
    %v9070 = vpop.f32.mrb[0].mxu0
    %v9071 = vadd.f32 %v8718, %v9070
    %v9072 = vpop.f32.mrb[0].mxu0
    %v9073 = vadd.f32 %v8720, %v9072
    %9074 = vmatprep.mubr.bf16.mxu0 %v4856
    %9075 = vmatmul.mubr.bf16.gmra.mrb[0].mxu0 %v4855
    %v9076 = vpop.f32.mrb[0].mxu0
    %v9077 = vadd.f32 %v8724, %v9076
    %v9078 = vpop.f32.mrb[0].mxu0
    %v9079 = vadd.f32 %v8726, %v9078
    %v9080 = vpop.f32.mrb[0].mxu0
    %v9081 = vadd.f32 %v8728, %v9080
    %v9082 = vpop.f32.mrb[0].mxu0
    %v9083 = vadd.f32 %v8730, %v9082
    %9084 = vmatprep.mubr.bf16.mxu0 %v4860
    %9085 = vmatmul.mubr.bf16.gmra.mrb[0].mxu0 %v4859
    %v9086 = vpop.f32.mrb[0].mxu0
    %v9087 = vadd.f32 %v8734, %v9086
    %v9088 = vpop.f32.mrb[0].mxu0
    %v9089 = vadd.f32 %v8736, %v9088
    %v9090 = vpop.f32.mrb[0].mxu0
    %v9091 = vadd.f32 %v8738, %v9090
    %v9092 = vpop.f32.mrb[0].mxu0
    %v9093 = vadd.f32 %v8740, %v9092
    %9094 = vmatprep.mubr.bf16.mxu0 %v4864
    %9095 = vmatmul.mubr.bf16.gmra.mrb[0].mxu0 %v4863
    %v9096 = vpop.f32.mrb[0].mxu0
    %v9097 = vadd.f32 %v8744, %v9096
    %v9098 = vpop.f32.mrb[0].mxu0
    %v9099 = vadd.f32 %v8746, %v9098
    %v9100 = vpop.f32.mrb[0].mxu0
    %v9101 = vadd.f32 %v8748, %v9100
    %v9102 = vpop.f32.mrb[0].mxu0
    %v9103 = vadd.f32 %v8750, %v9102
    %9104 = vmatprep.mubr.bf16.mxu0 %v4868
    %9105 = vmatmul.mubr.bf16.gmra.mrb[0].mxu0 %v4867
    %v9106 = vpop.f32.mrb[0].mxu0
    %v9107 = vadd.f32 %v8754, %v9106
    %v9108 = vpop.f32.mrb[0].mxu0
    %v9109 = vadd.f32 %v8756, %v9108
    %v9110 = vpop.f32.mrb[0].mxu0
    %v9111 = vadd.f32 %v8758, %v9110
    %v9112 = vpop.f32.mrb[0].mxu0
    %v9113 = vadd.f32 %v8760, %v9112
    %9114 = vmatprep.mubr.bf16.mxu0 %v4872
    %9115 = vmatmul.mubr.bf16.gmra.mrb[0].mxu0 %v4871
    %v9116 = vpop.f32.mrb[0].mxu0
    %v9117 = vadd.f32 %v8764, %v9116
    %v9118 = vpop.f32.mrb[0].mxu0
    %v9119 = vadd.f32 %v8766, %v9118
    %v9120 = vpop.f32.mrb[0].mxu0
    %v9121 = vadd.f32 %v8768, %v9120
    %v9122 = vpop.f32.mrb[0].mxu0
    %v9123 = vadd.f32 %v8770, %v9122
    %9124 = vmatprep.mubr.bf16.mxu0 %v4876
    %9125 = vmatmul.mubr.bf16.gmra.mrb[0].mxu0 %v4875
    %v9126 = vpop.f32.mrb[0].mxu0
    %v9127 = vadd.f32 %v8774, %v9126
    %v9128 = vpop.f32.mrb[0].mxu0
    %v9129 = vadd.f32 %v8776, %v9128
    %v9130 = vpop.f32.mrb[0].mxu0
    %v9131 = vadd.f32 %v8778, %v9130
    %v9132 = vpop.f32.mrb[0].mxu0
    %v9133 = vadd.f32 %v8780, %v9132
    %9134 = vmatprep.mubr.bf16.mxu0 %v4880
    %9135 = vmatmul.mubr.bf16.gmra.mrb[0].mxu0 %v4879
    %v9136 = vpop.f32.mrb[0].mxu0
    %v9137 = vadd.f32 %v8784, %v9136
    %v9138 = vpop.f32.mrb[0].mxu0
    %v9139 = vadd.f32 %v8786, %v9138
    %v9140 = vpop.f32.mrb[0].mxu0
    %v9141 = vadd.f32 %v8788, %v9140
    %v9142 = vpop.f32.mrb[0].mxu0
    %v9143 = vadd.f32 %v8790, %v9142
    %9144 = vmatprep.mubr.bf16.mxu0 %v4884
    %9145 = vmatmul.mubr.bf16.gmra.mrb[0].mxu0 %v4883
    %v9146 = vpop.f32.mrb[0].mxu0
    %v9147 = vadd.f32 %v8794, %v9146
    %v9148 = vpop.f32.mrb[0].mxu0
    %v9149 = vadd.f32 %v8796, %v9148
    %v9150 = vpop.f32.mrb[0].mxu0
    %v9151 = vadd.f32 %v8798, %v9150
    %v9152 = vpop.f32.mrb[0].mxu0
    %v9153 = vadd.f32 %v8800, %v9152
    %9154 = vmatprep.mubr.bf16.mxu0 %v4888
    %9155 = vmatmul.mubr.bf16.gmra.mrb[0].mxu0 %v4887
    %v9156 = vpop.f32.mrb[0].mxu0
    %v9157 = vadd.f32 %v8804, %v9156
    %v9158 = vpop.f32.mrb[0].mxu0
    %v9159 = vadd.f32 %v8806, %v9158
    %v9160 = vpop.f32.mrb[0].mxu0
    %v9161 = vadd.f32 %v8808, %v9160
    %v9162 = vpop.f32.mrb[0].mxu0
    %v9163 = vadd.f32 %v8810, %v9162
    %9164 = vmatprep.mubr.bf16.mxu0 %v4892
    %9165 = vmatmul.mubr.bf16.gmra.mrb[0].mxu0 %v4891
    %v9166 = vpop.f32.mrb[0].mxu0
    %v9167 = vadd.f32 %v8814, %v9166
    %v9168 = vpop.f32.mrb[0].mxu0
    %v9169 = vadd.f32 %v8816, %v9168
    %v9170 = vpop.f32.mrb[0].mxu0
    %v9171 = vadd.f32 %v8818, %v9170
    %v9172 = vpop.f32.mrb[0].mxu0
    %v9173 = vadd.f32 %v8820, %v9172
    %9174 = vmatprep.mubr.bf16.mxu0 %v4896
    %9175 = vmatmul.mubr.bf16.gmra.mrb[0].mxu0 %v4895
    %v9176 = vpop.f32.mrb[0].mxu0
    %v9177 = vadd.f32 %v8824, %v9176
    %v9178 = vpop.f32.mrb[0].mxu0
    %v9179 = vadd.f32 %v8826, %v9178
    %v9180 = vpop.f32.mrb[0].mxu0
    %v9181 = vadd.f32 %v8828, %v9180
    %v9182 = vpop.f32.mrb[0].mxu0
    %v9183 = vadd.f32 %v8830, %v9182
    %9184 = vmatprep.mubr.bf16.mxu0 %v4900
    %9185 = vmatmul.mubr.bf16.gmra.mrb[0].mxu0 %v4899
    %v9186 = vpop.f32.mrb[0].mxu0
    %v9187 = vadd.f32 %v8834, %v9186
    %v9188 = vpop.f32.mrb[0].mxu0
    %v9189 = vadd.f32 %v8836, %v9188
    %v9190 = vpop.f32.mrb[0].mxu0
    %v9191 = vadd.f32 %v8838, %v9190
    %v9192 = vpop.f32.mrb[0].mxu0
    %v9193 = vadd.f32 %v8840, %v9192
    %9194 = vmatprep.mubr.bf16.mxu0 %v4904
    %9195 = vmatmul.mubr.bf16.gmra.mrb[0].mxu0 %v4903
    %v9196 = vpop.f32.mrb[0].mxu0
    %v9197 = vadd.f32 %v8844, %v9196
    %v9198 = vpop.f32.mrb[0].mxu0
    %v9199 = vadd.f32 %v8846, %v9198
    %v9200 = vpop.f32.mrb[0].mxu0
    %v9201 = vadd.f32 %v8848, %v9200
    %v9202 = vpop.f32.mrb[0].mxu0
    %v9203 = vadd.f32 %v8850, %v9202
    %9204 = vmatprep.mubr.bf16.mxu0 %v4908
    %9205 = vmatmul.mubr.bf16.gmra.mrb[0].mxu0 %v4907
    %v9206 = vpop.f32.mrb[0].mxu0
    %v9207 = vadd.f32 %v8854, %v9206
    %v9208 = vpop.f32.mrb[0].mxu0
    %v9209 = vadd.f32 %v8856, %v9208
    %v9210 = vpop.f32.mrb[0].mxu0
    %v9211 = vadd.f32 %v8858, %v9210
    %v9212 = vpop.f32.mrb[0].mxu0
    %v9213 = vadd.f32 %v8860, %v9212
    %9214 = vmatprep.mubr.bf16.mxu0 %v4912
    %9215 = vmatmul.mubr.bf16.gmra.mrb[0].mxu0 %v4911
    %v9216 = vpop.f32.mrb[0].mxu0
    %v9217 = vadd.f32 %v8864, %v9216
    %v9218 = vpop.f32.mrb[0].mxu0
    %v9219 = vadd.f32 %v8866, %v9218
    %v9220 = vpop.f32.mrb[0].mxu0
    %v9221 = vadd.f32 %v8868, %v9220
    %v9222 = vpop.f32.mrb[0].mxu0
    %v9223 = vadd.f32 %v8870, %v9222
    %9224 = vmatprep.mubr.bf16.mxu0 %v4916
    %9225 = vmatmul.mubr.bf16.gmra.mrb[0].mxu0 %v4915
    %v9226 = vpop.f32.mrb[0].mxu0
    %v9227 = vadd.f32 %v8874, %v9226
    %v9228 = vpop.f32.mrb[0].mxu0
    %v9229 = vadd.f32 %v8876, %v9228
    %v9230 = vpop.f32.mrb[0].mxu0
    %v9231 = vadd.f32 %v8878, %v9230
    %v9232 = vpop.f32.mrb[0].mxu0
    %v9233 = vadd.f32 %v8880, %v9232
    %9234 = vmatprep.mubr.bf16.mxu0 %v4920
    %9235 = vmatmul.mubr.bf16.gmra.mrb[0].mxu0 %v4919
    %v9236 = vpop.f32.mrb[0].mxu0
    %v9237 = vadd.f32 %v8884, %v9236
    %v9238 = vpop.f32.mrb[0].mxu0
    %v9239 = vadd.f32 %v8886, %v9238
    %v9240 = vpop.f32.mrb[0].mxu0
    %v9241 = vadd.f32 %v8888, %v9240
    %v9242 = vpop.f32.mrb[0].mxu0
    %v9243 = vadd.f32 %v8890, %v9242
    %9244 = vmatprep.mubr.bf16.mxu0 %v4924
    %9245 = vmatmul.mubr.bf16.gmra.mrb[0].mxu0 %v4923
    %v9246 = vpop.f32.mrb[0].mxu0
    %v9247 = vadd.f32 %v8894, %v9246
    %v9248 = vpop.f32.mrb[0].mxu0
    %v9249 = vadd.f32 %v8896, %v9248
    %v9250 = vpop.f32.mrb[0].mxu0
    %v9251 = vadd.f32 %v8898, %v9250
    %v9252 = vpop.f32.mrb[0].mxu0
    %v9253 = vadd.f32 %v8900, %v9252
    %9254 = vmatprep.mubr.bf16.mxu0 %v4928
    %9255 = vmatmul.mubr.bf16.gmra.mrb[0].mxu0 %v4927
    %v9256 = vpop.f32.mrb[0].mxu0
    %v9257 = vadd.f32 %v8904, %v9256
    %v9258 = vpop.f32.mrb[0].mxu0
    %v9259 = vadd.f32 %v8906, %v9258
    %v9260 = vpop.f32.mrb[0].mxu0
    %v9261 = vadd.f32 %v8908, %v9260
    %v9262 = vpop.f32.mrb[0].mxu0
    %v9263 = vadd.f32 %v8910, %v9262
    %9264 = vmatprep.mubr.bf16.mxu0 %v4932
    %9265 = vmatmul.mubr.bf16.gmra.mrb[0].mxu0 %v4931
    %v9266 = vpop.f32.mrb[0].mxu0
    %v9267 = vadd.f32 %v8914, %v9266
    %v9268 = vpop.f32.mrb[0].mxu0
    %v9269 = vadd.f32 %v8916, %v9268
    %v9270 = vpop.f32.mrb[0].mxu0
    %v9271 = vadd.f32 %v8918, %v9270
    %v9272 = vpop.f32.mrb[0].mxu0
    %v9273 = vadd.f32 %v8920, %v9272
    %9274 = vmatprep.mubr.bf16.mxu0 %v4936
    %9275 = vmatmul.mubr.bf16.gmra.mrb[0].mxu0 %v4935
    %v9276 = vpop.f32.mrb[0].mxu0
    %v9277 = vadd.f32 %v8924, %v9276
    %v9278 = vpop.f32.mrb[0].mxu0
    %v9279 = vadd.f32 %v8926, %v9278
    %v9280 = vpop.f32.mrb[0].mxu0
    %v9281 = vadd.f32 %v8928, %v9280
    %v9282 = vpop.f32.mrb[0].mxu0
    %v9283 = vadd.f32 %v8930, %v9282
    %9284 = vmatprep.mubr.bf16.mxu0 %v4940
    %9285 = vmatmul.mubr.bf16.gmra.mrb[0].mxu0 %v4939
    %v9286 = vpop.f32.mrb[0].mxu0
    %v9287 = vadd.f32 %v8934, %v9286
    %v9288 = vpop.f32.mrb[0].mxu0
    %v9289 = vadd.f32 %v8936, %v9288
    %v9290 = vpop.f32.mrb[0].mxu0
    %v9291 = vadd.f32 %v8938, %v9290
    %v9292 = vpop.f32.mrb[0].mxu0
    %v9293 = vadd.f32 %v8940, %v9292
    %9294 = vmatprep.mubr.bf16.mxu0 %v4944
    %9295 = vmatmul.mubr.bf16.gmra.mrb[0].mxu0 %v4943
    %v9296 = vpop.f32.mrb[0].mxu0
    %v9297 = vadd.f32 %v8944, %v9296
    %v9298 = vpop.f32.mrb[0].mxu0
    %v9299 = vadd.f32 %v8946, %v9298
    %v9300 = vpop.f32.mrb[0].mxu0
    %v9301 = vadd.f32 %v8948, %v9300
    %v9302 = vpop.f32.mrb[0].mxu0
    %v9303 = vadd.f32 %v8950, %v9302
    %9304 = vmatprep.mubr.bf16.mxu0 %v4948
    %9305 = vmatmul.mubr.bf16.gmra.mrb[0].mxu0 %v4947
    %v9306 = vpop.f32.mrb[0].mxu0
    %v9307 = vadd.f32 %v8954, %v9306
    %v9308 = vpop.f32.mrb[0].mxu0
    %v9309 = vadd.f32 %v8956, %v9308
    %v9310 = vpop.f32.mrb[0].mxu0
    %v9311 = vadd.f32 %v8958, %v9310
    %v9312 = vpop.f32.mrb[0].mxu0
    %v9313 = vadd.f32 %v8960, %v9312
    %9314 = vmatprep.mubr.bf16.mxu0 %v4952
    %9315 = vmatmul.mubr.bf16.gmra.mrb[0].mxu0 %v4951
    %v9316 = vpop.f32.mrb[0].mxu0
    %v9317 = vadd.f32 %v8964, %v9316
    %v9318 = vpop.f32.mrb[0].mxu0
    %v9319 = vadd.f32 %v8966, %v9318
    %v9320 = vpop.f32.mrb[0].mxu0
    %v9321 = vadd.f32 %v8968, %v9320
    %v9322 = vpop.f32.mrb[0].mxu0
    %v9323 = vadd.f32 %v8970, %v9322
    %9324 = vmatprep.mubr.bf16.mxu0 %v4956
    %9325 = vmatmul.mubr.bf16.gmra.mrb[0].mxu0 %v4955
    %v9326 = vpop.f32.mrb[0].mxu0
    %v9327 = vadd.f32 %v8974, %v9326
    %v9328 = vpop.f32.mrb[0].mxu0
    %v9329 = vadd.f32 %v8976, %v9328
    %v9330 = vpop.f32.mrb[0].mxu0
    %v9331 = vadd.f32 %v8978, %v9330
    %v9332 = vpop.f32.mrb[0].mxu0
    %v9333 = vadd.f32 %v8980, %v9332
    %9334 = vmatprep.mubr.bf16.mxu0 %v4960
    %9335 = vmatmul.mubr.bf16.gmra.mrb[0].mxu0 %v4959
    %v9336 = vpop.f32.mrb[0].mxu0
    %v9337 = vadd.f32 %v8984, %v9336
    %v9338 = vpop.f32.mrb[0].mxu0
    %v9339 = vadd.f32 %v8986, %v9338
    %v9340 = vpop.f32.mrb[0].mxu0
    %v9341 = vadd.f32 %v8988, %v9340
    %v9342 = vpop.f32.mrb[0].mxu0
    %v9343 = vadd.f32 %v8990, %v9342
    %9344 = vmatprep.mubr.bf16.mxu0 %v4964
    %9345 = vmatmul.mubr.bf16.gmra.mrb[0].mxu0 %v4963
    %v9346 = vpop.f32.mrb[0].mxu0
    %v9347 = vadd.f32 %v8994, %v9346
    %v9348 = vpop.f32.mrb[0].mxu0
    %v9349 = vadd.f32 %v8996, %v9348
    %v9350 = vpop.f32.mrb[0].mxu0
    %v9351 = vadd.f32 %v8998, %v9350
    %v9352 = vpop.f32.mrb[0].mxu0
    %v9353 = vadd.f32 %v9000, %v9352
    %9354 = vmatprep.mubr.bf16.mxu0 %v4968
    %9355 = vmatmul.mubr.bf16.gmra.mrb[0].mxu0 %v4967
    %v9356 = vpop.f32.mrb[0].mxu0
    %v9357 = vadd.f32 %v9004, %v9356
    %v9358 = vpop.f32.mrb[0].mxu0
    %v9359 = vadd.f32 %v9006, %v9358
    %v9360 = vpop.f32.mrb[0].mxu0
    %v9361 = vadd.f32 %v9008, %v9360
    %v9362 = vpop.f32.mrb[0].mxu0
    %v9363 = vadd.f32 %v9010, %v9362
    %9364 = vmatprep.mubr.bf16.mxu0 %v4972
    %9365 = vmatmul.mubr.bf16.gmra.mrb[0].mxu0 %v4971
    %v9366 = vpop.f32.mrb[0].mxu0
    %v9367 = vadd.f32 %v9014, %v9366
    %v9368 = vpop.f32.mrb[0].mxu0
    %v9369 = vadd.f32 %v9016, %v9368
    %v9370 = vpop.f32.mrb[0].mxu0
    %v9371 = vadd.f32 %v9018, %v9370
    %v9372 = vpop.f32.mrb[0].mxu0
    %v9373 = vadd.f32 %v9020, %v9372
    %9374 = vdwg.mxu0
    %v9375 = vmul.f32 %v6939, 0.01
    %v9376 = vmul.f32 %v6941, 0.01
    %v9377 = vmul.f32 %v7645, 0.01
    %v9378 = vmul.f32 %v7647, 0.01
    %v9379 = vmul.f32 %v8351, 0.01
    %v9380 = vmul.f32 %v8353, 0.01
    %v9381 = vmul.f32 %v9057, 0.01
    %v9382 = vmul.f32 %v9059, 0.01
    %v9383 = vmul.f32 %v6943, 0.01
    %v9384 = vmul.f32 %v6945, 0.01
    %v9385 = vmul.f32 %v7649, 0.01
    %v9386 = vmul.f32 %v7651, 0.01
    %v9387 = vmul.f32 %v8355, 0.01
    %v9388 = vmul.f32 %v8357, 0.01
    %v9389 = vmul.f32 %v9061, 0.01
    %v9390 = vmul.f32 %v9063, 0.01
    %v9391 = vmul.f32 %v6949, 0.01
    %v9392 = vmul.f32 %v6951, 0.01
    %v9393 = vmul.f32 %v7655, 0.01
    %v9394 = vmul.f32 %v7657, 0.01
    %v9395 = vmul.f32 %v8361, 0.01
    %v9396 = vmul.f32 %v8363, 0.01
    %v9397 = vmul.f32 %v9067, 0.01
    %v9398 = vmul.f32 %v9069, 0.01
    %v9399 = vmul.f32 %v6953, 0.01
    %v9400 = vmul.f32 %v6955, 0.01
    %v9401 = vmul.f32 %v7659, 0.01
    %v9402 = vmul.f32 %v7661, 0.01
    %v9403 = vmul.f32 %v8365, 0.01
    %v9404 = vmul.f32 %v8367, 0.01
    %v9405 = vmul.f32 %v9071, 0.01
    %v9406 = vmul.f32 %v9073, 0.01
    %v9407 = vmul.f32 %v6959, 0.01
    %v9408 = vmul.f32 %v6961, 0.01
    %v9409 = vmul.f32 %v7665, 0.01
    %v9410 = vmul.f32 %v7667, 0.01
    %v9411 = vmul.f32 %v8371, 0.01
    %v9412 = vmul.f32 %v8373, 0.01
    %v9413 = vmul.f32 %v9077, 0.01
    %v9414 = vmul.f32 %v9079, 0.01
    %v9415 = vmul.f32 %v6963, 0.01
    %v9416 = vmul.f32 %v6965, 0.01
    %v9417 = vmul.f32 %v7669, 0.01
    %v9418 = vmul.f32 %v7671, 0.01
    %v9419 = vmul.f32 %v8375, 0.01
    %v9420 = vmul.f32 %v8377, 0.01
    %v9421 = vmul.f32 %v9081, 0.01
    %v9422 = vmul.f32 %v9083, 0.01
    %v9423 = vmul.f32 %v6969, 0.01
    %v9424 = vmul.f32 %v6971, 0.01
    %v9425 = vmul.f32 %v7675, 0.01
    %v9426 = vmul.f32 %v7677, 0.01
    %v9427 = vmul.f32 %v8381, 0.01
    %v9428 = vmul.f32 %v8383, 0.01
    %v9429 = vmul.f32 %v9087, 0.01
    %v9430 = vmul.f32 %v9089, 0.01
    %v9431 = vmul.f32 %v6973, 0.01
    %v9432 = vmul.f32 %v6975, 0.01
    %v9433 = vmul.f32 %v7679, 0.01
    %v9434 = vmul.f32 %v7681, 0.01
    %v9435 = vmul.f32 %v8385, 0.01
    %v9436 = vmul.f32 %v8387, 0.01
    %v9437 = vmul.f32 %v9091, 0.01
    %v9438 = vmul.f32 %v9093, 0.01
    %v9439 = vmul.f32 %v6979, 0.01
    %v9440 = vmul.f32 %v6981, 0.01
    %v9441 = vmul.f32 %v7685, 0.01
    %v9442 = vmul.f32 %v7687, 0.01
    %v9443 = vmul.f32 %v8391, 0.01
    %v9444 = vmul.f32 %v8393, 0.01
    %v9445 = vmul.f32 %v9097, 0.01
    %v9446 = vmul.f32 %v9099, 0.01
    %v9447 = vmul.f32 %v6983, 0.01
    %v9448 = vmul.f32 %v6985, 0.01
    %v9449 = vmul.f32 %v7689, 0.01
    %v9450 = vmul.f32 %v7691, 0.01
    %v9451 = vmul.f32 %v8395, 0.01
    %v9452 = vmul.f32 %v8397, 0.01
    %v9453 = vmul.f32 %v9101, 0.01
    %v9454 = vmul.f32 %v9103, 0.01
    %v9455 = vmul.f32 %v6989, 0.01
    %v9456 = vmul.f32 %v6991, 0.01
    %v9457 = vmul.f32 %v7695, 0.01
    %v9458 = vmul.f32 %v7697, 0.01
    %v9459 = vmul.f32 %v8401, 0.01
    %v9460 = vmul.f32 %v8403, 0.01
    %v9461 = vmul.f32 %v9107, 0.01
    %v9462 = vmul.f32 %v9109, 0.01
    %v9463 = vmul.f32 %v6993, 0.01
    %v9464 = vmul.f32 %v6995, 0.01
    %v9465 = vmul.f32 %v7699, 0.01
    %v9466 = vmul.f32 %v7701, 0.01
    %v9467 = vmul.f32 %v8405, 0.01
    %v9468 = vmul.f32 %v8407, 0.01
    %v9469 = vmul.f32 %v9111, 0.01
    %v9470 = vmul.f32 %v9113, 0.01
    %v9471 = vmul.f32 %v6999, 0.01
    %v9472 = vmul.f32 %v7001, 0.01
    %v9473 = vmul.f32 %v7705, 0.01
    %v9474 = vmul.f32 %v7707, 0.01
    %v9475 = vmul.f32 %v8411, 0.01
    %v9476 = vmul.f32 %v8413, 0.01
    %v9477 = vmul.f32 %v9117, 0.01
    %v9478 = vmul.f32 %v9119, 0.01
    %v9479 = vmul.f32 %v7003, 0.01
    %v9480 = vmul.f32 %v7005, 0.01
    %v9481 = vmul.f32 %v7709, 0.01
    %v9482 = vmul.f32 %v7711, 0.01
    %v9483 = vmul.f32 %v8415, 0.01
    %v9484 = vmul.f32 %v8417, 0.01
    %v9485 = vmul.f32 %v9121, 0.01
    %v9486 = vmul.f32 %v9123, 0.01
    %v9487 = vmul.f32 %v7009, 0.01
    %v9488 = vmul.f32 %v7011, 0.01
    %v9489 = vmul.f32 %v7715, 0.01
    %v9490 = vmul.f32 %v7717, 0.01
    %v9491 = vmul.f32 %v8421, 0.01
    %v9492 = vmul.f32 %v8423, 0.01
    %v9493 = vmul.f32 %v9127, 0.01
    %v9494 = vmul.f32 %v9129, 0.01
    %v9495 = vmul.f32 %v7013, 0.01
    %v9496 = vmul.f32 %v7015, 0.01
    %v9497 = vmul.f32 %v7719, 0.01
    %v9498 = vmul.f32 %v7721, 0.01
    %v9499 = vmul.f32 %v8425, 0.01
    %v9500 = vmul.f32 %v8427, 0.01
    %v9501 = vmul.f32 %v9131, 0.01
    %v9502 = vmul.f32 %v9133, 0.01
    %v9503 = vmul.f32 %v7019, 0.01
    %v9504 = vmul.f32 %v7021, 0.01
    %v9505 = vmul.f32 %v7725, 0.01
    %v9506 = vmul.f32 %v7727, 0.01
    %v9507 = vmul.f32 %v8431, 0.01
    %v9508 = vmul.f32 %v8433, 0.01
    %v9509 = vmul.f32 %v9137, 0.01
    %v9510 = vmul.f32 %v9139, 0.01
    %v9511 = vmul.f32 %v7023, 0.01
    %v9512 = vmul.f32 %v7025, 0.01
    %v9513 = vmul.f32 %v7729, 0.01
    %v9514 = vmul.f32 %v7731, 0.01
    %v9515 = vmul.f32 %v8435, 0.01
    %v9516 = vmul.f32 %v8437, 0.01
    %v9517 = vmul.f32 %v9141, 0.01
    %v9518 = vmul.f32 %v9143, 0.01
    %v9519 = vmul.f32 %v7029, 0.01
    %v9520 = vmul.f32 %v7031, 0.01
    %v9521 = vmul.f32 %v7735, 0.01
    %v9522 = vmul.f32 %v7737, 0.01
    %v9523 = vmul.f32 %v8441, 0.01
    %v9524 = vmul.f32 %v8443, 0.01
    %v9525 = vmul.f32 %v9147, 0.01
    %v9526 = vmul.f32 %v9149, 0.01
    %v9527 = vmul.f32 %v7033, 0.01
    %v9528 = vmul.f32 %v7035, 0.01
    %v9529 = vmul.f32 %v7739, 0.01
    %v9530 = vmul.f32 %v7741, 0.01
    %v9531 = vmul.f32 %v8445, 0.01
    %v9532 = vmul.f32 %v8447, 0.01
    %v9533 = vmul.f32 %v9151, 0.01
    %v9534 = vmul.f32 %v9153, 0.01
    %v9535 = vmul.f32 %v7039, 0.01
    %v9536 = vmul.f32 %v7041, 0.01
    %v9537 = vmul.f32 %v7745, 0.01
    %v9538 = vmul.f32 %v7747, 0.01
    %v9539 = vmul.f32 %v8451, 0.01
    %v9540 = vmul.f32 %v8453, 0.01
    %v9541 = vmul.f32 %v9157, 0.01
    %v9542 = vmul.f32 %v9159, 0.01
    %v9543 = vmul.f32 %v7043, 0.01
    %v9544 = vmul.f32 %v7045, 0.01
    %v9545 = vmul.f32 %v7749, 0.01
    %v9546 = vmul.f32 %v7751, 0.01
    %v9547 = vmul.f32 %v8455, 0.01
    %v9548 = vmul.f32 %v8457, 0.01
    %v9549 = vmul.f32 %v9161, 0.01
    %v9550 = vmul.f32 %v9163, 0.01
    %v9551 = vmul.f32 %v7049, 0.01
    %v9552 = vmul.f32 %v7051, 0.01
    %v9553 = vmul.f32 %v7755, 0.01
    %v9554 = vmul.f32 %v7757, 0.01
    %v9555 = vmul.f32 %v8461, 0.01
    %v9556 = vmul.f32 %v8463, 0.01
    %v9557 = vmul.f32 %v9167, 0.01
    %v9558 = vmul.f32 %v9169, 0.01
    %v9559 = vmul.f32 %v7053, 0.01
    %v9560 = vmul.f32 %v7055, 0.01
    %v9561 = vmul.f32 %v7759, 0.01
    %v9562 = vmul.f32 %v7761, 0.01
    %v9563 = vmul.f32 %v8465, 0.01
    %v9564 = vmul.f32 %v8467, 0.01
    %v9565 = vmul.f32 %v9171, 0.01
    %v9566 = vmul.f32 %v9173, 0.01
    %v9567 = vmul.f32 %v7059, 0.01
    %v9568 = vmul.f32 %v7061, 0.01
    %v9569 = vmul.f32 %v7765, 0.01
    %v9570 = vmul.f32 %v7767, 0.01
    %v9571 = vmul.f32 %v8471, 0.01
    %v9572 = vmul.f32 %v8473, 0.01
    %v9573 = vmul.f32 %v9177, 0.01
    %v9574 = vmul.f32 %v9179, 0.01
    %v9575 = vmul.f32 %v7063, 0.01
    %v9576 = vmul.f32 %v7065, 0.01
    %v9577 = vmul.f32 %v7769, 0.01
    %v9578 = vmul.f32 %v7771, 0.01
    %v9579 = vmul.f32 %v8475, 0.01
    %v9580 = vmul.f32 %v8477, 0.01
    %v9581 = vmul.f32 %v9181, 0.01
    %v9582 = vmul.f32 %v9183, 0.01
    %v9583 = vmul.f32 %v7069, 0.01
    %v9584 = vmul.f32 %v7071, 0.01
    %v9585 = vmul.f32 %v7775, 0.01
    %v9586 = vmul.f32 %v7777, 0.01
    %v9587 = vmul.f32 %v8481, 0.01
    %v9588 = vmul.f32 %v8483, 0.01
    %v9589 = vmul.f32 %v9187, 0.01
    %v9590 = vmul.f32 %v9189, 0.01
    %v9591 = vmul.f32 %v7073, 0.01
    %v9592 = vmul.f32 %v7075, 0.01
    %v9593 = vmul.f32 %v7779, 0.01
    %v9594 = vmul.f32 %v7781, 0.01
    %v9595 = vmul.f32 %v8485, 0.01
    %v9596 = vmul.f32 %v8487, 0.01
    %v9597 = vmul.f32 %v9191, 0.01
    %v9598 = vmul.f32 %v9193, 0.01
    %v9599 = vmul.f32 %v7079, 0.01
    %v9600 = vmul.f32 %v7081, 0.01
    %v9601 = vmul.f32 %v7785, 0.01
    %v9602 = vmul.f32 %v7787, 0.01
    %v9603 = vmul.f32 %v8491, 0.01
    %v9604 = vmul.f32 %v8493, 0.01
    %v9605 = vmul.f32 %v9197, 0.01
    %v9606 = vmul.f32 %v9199, 0.01
    %v9607 = vmul.f32 %v7083, 0.01
    %v9608 = vmul.f32 %v7085, 0.01
    %v9609 = vmul.f32 %v7789, 0.01
    %v9610 = vmul.f32 %v7791, 0.01
    %v9611 = vmul.f32 %v8495, 0.01
    %v9612 = vmul.f32 %v8497, 0.01
    %v9613 = vmul.f32 %v9201, 0.01
    %v9614 = vmul.f32 %v9203, 0.01
    %v9615 = vmul.f32 %v7089, 0.01
    %v9616 = vmul.f32 %v7091, 0.01
    %v9617 = vmul.f32 %v7795, 0.01
    %v9618 = vmul.f32 %v7797, 0.01
    %v9619 = vmul.f32 %v8501, 0.01
    %v9620 = vmul.f32 %v8503, 0.01
    %v9621 = vmul.f32 %v9207, 0.01
    %v9622 = vmul.f32 %v9209, 0.01
    %v9623 = vmul.f32 %v7093, 0.01
    %v9624 = vmul.f32 %v7095, 0.01
    %v9625 = vmul.f32 %v7799, 0.01
    %v9626 = vmul.f32 %v7801, 0.01
    %v9627 = vmul.f32 %v8505, 0.01
    %v9628 = vmul.f32 %v8507, 0.01
    %v9629 = vmul.f32 %v9211, 0.01
    %v9630 = vmul.f32 %v9213, 0.01
    %v9631 = vmul.f32 %v7099, 0.01
    %v9632 = vmul.f32 %v7101, 0.01
    %v9633 = vmul.f32 %v7805, 0.01
    %v9634 = vmul.f32 %v7807, 0.01
    %v9635 = vmul.f32 %v8511, 0.01
    %v9636 = vmul.f32 %v8513, 0.01
    %v9637 = vmul.f32 %v9217, 0.01
    %v9638 = vmul.f32 %v9219, 0.01
    %v9639 = vmul.f32 %v7103, 0.01
    %v9640 = vmul.f32 %v7105, 0.01
    %v9641 = vmul.f32 %v7809, 0.01
    %v9642 = vmul.f32 %v7811, 0.01
    %v9643 = vmul.f32 %v8515, 0.01
    %v9644 = vmul.f32 %v8517, 0.01
    %v9645 = vmul.f32 %v9221, 0.01
    %v9646 = vmul.f32 %v9223, 0.01
    %v9647 = vmul.f32 %v7109, 0.01
    %v9648 = vmul.f32 %v7111, 0.01
    %v9649 = vmul.f32 %v7815, 0.01
    %v9650 = vmul.f32 %v7817, 0.01
    %v9651 = vmul.f32 %v8521, 0.01
    %v9652 = vmul.f32 %v8523, 0.01
    %v9653 = vmul.f32 %v9227, 0.01
    %v9654 = vmul.f32 %v9229, 0.01
    %v9655 = vmul.f32 %v7113, 0.01
    %v9656 = vmul.f32 %v7115, 0.01
    %v9657 = vmul.f32 %v7819, 0.01
    %v9658 = vmul.f32 %v7821, 0.01
    %v9659 = vmul.f32 %v8525, 0.01
    %v9660 = vmul.f32 %v8527, 0.01
    %v9661 = vmul.f32 %v9231, 0.01
    %v9662 = vmul.f32 %v9233, 0.01
    %v9663 = vmul.f32 %v7119, 0.01
    %v9664 = vmul.f32 %v7121, 0.01
    %v9665 = vmul.f32 %v7825, 0.01
    %v9666 = vmul.f32 %v7827, 0.01
    %v9667 = vmul.f32 %v8531, 0.01
    %v9668 = vmul.f32 %v8533, 0.01
    %v9669 = vmul.f32 %v9237, 0.01
    %v9670 = vmul.f32 %v9239, 0.01
    %v9671 = vmul.f32 %v7123, 0.01
    %v9672 = vmul.f32 %v7125, 0.01
    %v9673 = vmul.f32 %v7829, 0.01
    %v9674 = vmul.f32 %v7831, 0.01
    %v9675 = vmul.f32 %v8535, 0.01
    %v9676 = vmul.f32 %v8537, 0.01
    %v9677 = vmul.f32 %v9241, 0.01
    %v9678 = vmul.f32 %v9243, 0.01
    %v9679 = vmul.f32 %v7129, 0.01
    %v9680 = vmul.f32 %v7131, 0.01
    %v9681 = vmul.f32 %v7835, 0.01
    %v9682 = vmul.f32 %v7837, 0.01
    %v9683 = vmul.f32 %v8541, 0.01
    %v9684 = vmul.f32 %v8543, 0.01
    %v9685 = vmul.f32 %v9247, 0.01
    %v9686 = vmul.f32 %v9249, 0.01
    %v9687 = vmul.f32 %v7133, 0.01
    %v9688 = vmul.f32 %v7135, 0.01
    %v9689 = vmul.f32 %v7839, 0.01
    %v9690 = vmul.f32 %v7841, 0.01
    %v9691 = vmul.f32 %v8545, 0.01
    %v9692 = vmul.f32 %v8547, 0.01
    %v9693 = vmul.f32 %v9251, 0.01
    %v9694 = vmul.f32 %v9253, 0.01
    %v9695 = vmul.f32 %v7139, 0.01
    %v9696 = vmul.f32 %v7141, 0.01
    %v9697 = vmul.f32 %v7845, 0.01
    %v9698 = vmul.f32 %v7847, 0.01
    %v9699 = vmul.f32 %v8551, 0.01
    %v9700 = vmul.f32 %v8553, 0.01
    %v9701 = vmul.f32 %v9257, 0.01
    %v9702 = vmul.f32 %v9259, 0.01
    %v9703 = vmul.f32 %v7143, 0.01
    %v9704 = vmul.f32 %v7145, 0.01
    %v9705 = vmul.f32 %v7849, 0.01
    %v9706 = vmul.f32 %v7851, 0.01
    %v9707 = vmul.f32 %v8555, 0.01
    %v9708 = vmul.f32 %v8557, 0.01
    %v9709 = vmul.f32 %v9261, 0.01
    %v9710 = vmul.f32 %v9263, 0.01
    %v9711 = vmul.f32 %v7149, 0.01
    %v9712 = vmul.f32 %v7151, 0.01
    %v9713 = vmul.f32 %v7855, 0.01
    %v9714 = vmul.f32 %v7857, 0.01
    %v9715 = vmul.f32 %v8561, 0.01
    %v9716 = vmul.f32 %v8563, 0.01
    %v9717 = vmul.f32 %v9267, 0.01
    %v9718 = vmul.f32 %v9269, 0.01
    %v9719 = vmul.f32 %v7153, 0.01
    %v9720 = vmul.f32 %v7155, 0.01
    %v9721 = vmul.f32 %v7859, 0.01
    %v9722 = vmul.f32 %v7861, 0.01
    %v9723 = vmul.f32 %v8565, 0.01
    %v9724 = vmul.f32 %v8567, 0.01
    %v9725 = vmul.f32 %v9271, 0.01
    %v9726 = vmul.f32 %v9273, 0.01
    %v9727 = vmul.f32 %v7159, 0.01
    %v9728 = vmul.f32 %v7161, 0.01
    %v9729 = vmul.f32 %v7865, 0.01
    %v9730 = vmul.f32 %v7867, 0.01
    %v9731 = vmul.f32 %v8571, 0.01
    %v9732 = vmul.f32 %v8573, 0.01
    %v9733 = vmul.f32 %v9277, 0.01
    %v9734 = vmul.f32 %v9279, 0.01
    %v9735 = vmul.f32 %v7163, 0.01
    %v9736 = vmul.f32 %v7165, 0.01
    %v9737 = vmul.f32 %v7869, 0.01
    %v9738 = vmul.f32 %v7871, 0.01
    %v9739 = vmul.f32 %v8575, 0.01
    %v9740 = vmul.f32 %v8577, 0.01
    %v9741 = vmul.f32 %v9281, 0.01
    %v9742 = vmul.f32 %v9283, 0.01
    %v9743 = vmul.f32 %v7169, 0.01
    %v9744 = vmul.f32 %v7171, 0.01
    %v9745 = vmul.f32 %v7875, 0.01
    %v9746 = vmul.f32 %v7877, 0.01
    %v9747 = vmul.f32 %v8581, 0.01
    %v9748 = vmul.f32 %v8583, 0.01
    %v9749 = vmul.f32 %v9287, 0.01
    %v9750 = vmul.f32 %v9289, 0.01
    %v9751 = vmul.f32 %v7173, 0.01
    %v9752 = vmul.f32 %v7175, 0.01
    %v9753 = vmul.f32 %v7879, 0.01
    %v9754 = vmul.f32 %v7881, 0.01
    %v9755 = vmul.f32 %v8585, 0.01
    %v9756 = vmul.f32 %v8587, 0.01
    %v9757 = vmul.f32 %v9291, 0.01
    %v9758 = vmul.f32 %v9293, 0.01
    %v9759 = vmul.f32 %v7179, 0.01
    %v9760 = vmul.f32 %v7181, 0.01
    %v9761 = vmul.f32 %v7885, 0.01
    %v9762 = vmul.f32 %v7887, 0.01
    %v9763 = vmul.f32 %v8591, 0.01
    %v9764 = vmul.f32 %v8593, 0.01
    %v9765 = vmul.f32 %v9297, 0.01
    %v9766 = vmul.f32 %v9299, 0.01
    %v9767 = vmul.f32 %v7183, 0.01
    %v9768 = vmul.f32 %v7185, 0.01
    %v9769 = vmul.f32 %v7889, 0.01
    %v9770 = vmul.f32 %v7891, 0.01
    %v9771 = vmul.f32 %v8595, 0.01
    %v9772 = vmul.f32 %v8597, 0.01
    %v9773 = vmul.f32 %v9301, 0.01
    %v9774 = vmul.f32 %v9303, 0.01
    %v9775 = vmul.f32 %v7189, 0.01
    %v9776 = vmul.f32 %v7191, 0.01
    %v9777 = vmul.f32 %v7895, 0.01
    %v9778 = vmul.f32 %v7897, 0.01
    %v9779 = vmul.f32 %v8601, 0.01
    %v9780 = vmul.f32 %v8603, 0.01
    %v9781 = vmul.f32 %v9307, 0.01
    %v9782 = vmul.f32 %v9309, 0.01
    %v9783 = vmul.f32 %v7193, 0.01
    %v9784 = vmul.f32 %v7195, 0.01
    %v9785 = vmul.f32 %v7899, 0.01
    %v9786 = vmul.f32 %v7901, 0.01
    %v9787 = vmul.f32 %v8605, 0.01
    %v9788 = vmul.f32 %v8607, 0.01
    %v9789 = vmul.f32 %v9311, 0.01
    %v9790 = vmul.f32 %v9313, 0.01
    %v9791 = vmul.f32 %v7199, 0.01
    %v9792 = vmul.f32 %v7201, 0.01
    %v9793 = vmul.f32 %v7905, 0.01
    %v9794 = vmul.f32 %v7907, 0.01
    %v9795 = vmul.f32 %v8611, 0.01
    %v9796 = vmul.f32 %v8613, 0.01
    %v9797 = vmul.f32 %v9317, 0.01
    %v9798 = vmul.f32 %v9319, 0.01
    %v9799 = vmul.f32 %v7203, 0.01
    %v9800 = vmul.f32 %v7205, 0.01
    %v9801 = vmul.f32 %v7909, 0.01
    %v9802 = vmul.f32 %v7911, 0.01
    %v9803 = vmul.f32 %v8615, 0.01
    %v9804 = vmul.f32 %v8617, 0.01
    %v9805 = vmul.f32 %v9321, 0.01
    %v9806 = vmul.f32 %v9323, 0.01
    %v9807 = vmul.f32 %v7209, 0.01
    %v9808 = vmul.f32 %v7211, 0.01
    %v9809 = vmul.f32 %v7915, 0.01
    %v9810 = vmul.f32 %v7917, 0.01
    %v9811 = vmul.f32 %v8621, 0.01
    %v9812 = vmul.f32 %v8623, 0.01
    %v9813 = vmul.f32 %v9327, 0.01
    %v9814 = vmul.f32 %v9329, 0.01
    %v9815 = vmul.f32 %v7213, 0.01
    %v9816 = vmul.f32 %v7215, 0.01
    %v9817 = vmul.f32 %v7919, 0.01
    %v9818 = vmul.f32 %v7921, 0.01
    %v9819 = vmul.f32 %v8625, 0.01
    %v9820 = vmul.f32 %v8627, 0.01
    %v9821 = vmul.f32 %v9331, 0.01
    %v9822 = vmul.f32 %v9333, 0.01
    %v9823 = vmul.f32 %v7219, 0.01
    %v9824 = vmul.f32 %v7221, 0.01
    %v9825 = vmul.f32 %v7925, 0.01
    %v9826 = vmul.f32 %v7927, 0.01
    %v9827 = vmul.f32 %v8631, 0.01
    %v9828 = vmul.f32 %v8633, 0.01
    %v9829 = vmul.f32 %v9337, 0.01
    %v9830 = vmul.f32 %v9339, 0.01
    %v9831 = vmul.f32 %v7223, 0.01
    %v9832 = vmul.f32 %v7225, 0.01
    %v9833 = vmul.f32 %v7929, 0.01
    %v9834 = vmul.f32 %v7931, 0.01
    %v9835 = vmul.f32 %v8635, 0.01
    %v9836 = vmul.f32 %v8637, 0.01
    %v9837 = vmul.f32 %v9341, 0.01
    %v9838 = vmul.f32 %v9343, 0.01
    %v9839 = vmul.f32 %v7229, 0.01
    %v9840 = vmul.f32 %v7231, 0.01
    %v9841 = vmul.f32 %v7935, 0.01
    %v9842 = vmul.f32 %v7937, 0.01
    %v9843 = vmul.f32 %v8641, 0.01
    %v9844 = vmul.f32 %v8643, 0.01
    %v9845 = vmul.f32 %v9347, 0.01
    %v9846 = vmul.f32 %v9349, 0.01
    %v9847 = vmul.f32 %v7233, 0.01
    %v9848 = vmul.f32 %v7235, 0.01
    %v9849 = vmul.f32 %v7939, 0.01
    %v9850 = vmul.f32 %v7941, 0.01
    %v9851 = vmul.f32 %v8645, 0.01
    %v9852 = vmul.f32 %v8647, 0.01
    %v9853 = vmul.f32 %v9351, 0.01
    %v9854 = vmul.f32 %v9353, 0.01
    %v9855 = vmul.f32 %v7239, 0.01
    %v9856 = vmul.f32 %v7241, 0.01
    %v9857 = vmul.f32 %v7945, 0.01
    %v9858 = vmul.f32 %v7947, 0.01
    %v9859 = vmul.f32 %v8651, 0.01
    %v9860 = vmul.f32 %v8653, 0.01
    %v9861 = vmul.f32 %v9357, 0.01
    %v9862 = vmul.f32 %v9359, 0.01
    %v9863 = vmul.f32 %v7243, 0.01
    %v9864 = vmul.f32 %v7245, 0.01
    %v9865 = vmul.f32 %v7949, 0.01
    %v9866 = vmul.f32 %v7951, 0.01
    %v9867 = vmul.f32 %v8655, 0.01
    %v9868 = vmul.f32 %v8657, 0.01
    %v9869 = vmul.f32 %v9361, 0.01
    %v9870 = vmul.f32 %v9363, 0.01
    %v9871 = vmul.f32 %v7249, 0.01
    %v9872 = vmul.f32 %v7251, 0.01
    %v9873 = vmul.f32 %v7955, 0.01
    %v9874 = vmul.f32 %v7957, 0.01
    %v9875 = vmul.f32 %v8661, 0.01
    %v9876 = vmul.f32 %v8663, 0.01
    %v9877 = vmul.f32 %v9367, 0.01
    %v9878 = vmul.f32 %v9369, 0.01
    %v9879 = vmul.f32 %v7253, 0.01
    %v9880 = vmul.f32 %v7255, 0.01
    %v9881 = vmul.f32 %v7959, 0.01
    %v9882 = vmul.f32 %v7961, 0.01
    %v9883 = vmul.f32 %v8665, 0.01
    %v9884 = vmul.f32 %v8667, 0.01
    %v9885 = vmul.f32 %v9371, 0.01
    %v9886 = vmul.f32 %v9373, 0.01
    %v9887 = vmax.f32 %v6939, %v9375
    %v9888 = vmax.f32 %v6941, %v9376
    %v9889 = vmax.f32 %v7645, %v9377
    %v9890 = vmax.f32 %v7647, %v9378
    %v9891 = vmax.f32 %v8351, %v9379
    %v9892 = vmax.f32 %v8353, %v9380
    %v9893 = vmax.f32 %v9057, %v9381
    %v9894 = vmax.f32 %v9059, %v9382
    %v9895 = vmax.f32 %v6943, %v9383
    %v9896 = vmax.f32 %v6945, %v9384
    %v9897 = vmax.f32 %v7649, %v9385
    %v9898 = vmax.f32 %v7651, %v9386
    %v9899 = vmax.f32 %v8355, %v9387
    %v9900 = vmax.f32 %v8357, %v9388
    %v9901 = vmax.f32 %v9061, %v9389
    %v9902 = vmax.f32 %v9063, %v9390
    %v9903 = vmax.f32 %v6949, %v9391
    %v9904 = vmax.f32 %v6951, %v9392
    %v9905 = vmax.f32 %v7655, %v9393
    %v9906 = vmax.f32 %v7657, %v9394
    %v9907 = vmax.f32 %v8361, %v9395
    %v9908 = vmax.f32 %v8363, %v9396
    %v9909 = vmax.f32 %v9067, %v9397
    %v9910 = vmax.f32 %v9069, %v9398
    %v9911 = vmax.f32 %v6953, %v9399
    %v9912 = vmax.f32 %v6955, %v9400
    %v9913 = vmax.f32 %v7659, %v9401
    %v9914 = vmax.f32 %v7661, %v9402
    %v9915 = vmax.f32 %v8365, %v9403
    %v9916 = vmax.f32 %v8367, %v9404
    %v9917 = vmax.f32 %v9071, %v9405
    %v9918 = vmax.f32 %v9073, %v9406
    %v9919 = vmax.f32 %v6959, %v9407
    %v9920 = vmax.f32 %v6961, %v9408
    %v9921 = vmax.f32 %v7665, %v9409
    %v9922 = vmax.f32 %v7667, %v9410
    %v9923 = vmax.f32 %v8371, %v9411
    %v9924 = vmax.f32 %v8373, %v9412
    %v9925 = vmax.f32 %v9077, %v9413
    %v9926 = vmax.f32 %v9079, %v9414
    %v9927 = vmax.f32 %v6963, %v9415
    %v9928 = vmax.f32 %v6965, %v9416
    %v9929 = vmax.f32 %v7669, %v9417
    %v9930 = vmax.f32 %v7671, %v9418
    %v9931 = vmax.f32 %v8375, %v9419
    %v9932 = vmax.f32 %v8377, %v9420
    %v9933 = vmax.f32 %v9081, %v9421
    %v9934 = vmax.f32 %v9083, %v9422
    %v9935 = vmax.f32 %v6969, %v9423
    %v9936 = vmax.f32 %v6971, %v9424
    %v9937 = vmax.f32 %v7675, %v9425
    %v9938 = vmax.f32 %v7677, %v9426
    %v9939 = vmax.f32 %v8381, %v9427
    %v9940 = vmax.f32 %v8383, %v9428
    %v9941 = vmax.f32 %v9087, %v9429
    %v9942 = vmax.f32 %v9089, %v9430
    %v9943 = vmax.f32 %v6973, %v9431
    %v9944 = vmax.f32 %v6975, %v9432
    %v9945 = vmax.f32 %v7679, %v9433
    %v9946 = vmax.f32 %v7681, %v9434
    %v9947 = vmax.f32 %v8385, %v9435
    %v9948 = vmax.f32 %v8387, %v9436
    %v9949 = vmax.f32 %v9091, %v9437
    %v9950 = vmax.f32 %v9093, %v9438
    %v9951 = vmax.f32 %v6979, %v9439
    %v9952 = vmax.f32 %v6981, %v9440
    %v9953 = vmax.f32 %v7685, %v9441
    %v9954 = vmax.f32 %v7687, %v9442
    %v9955 = vmax.f32 %v8391, %v9443
    %v9956 = vmax.f32 %v8393, %v9444
    %v9957 = vmax.f32 %v9097, %v9445
    %v9958 = vmax.f32 %v9099, %v9446
    %v9959 = vmax.f32 %v6983, %v9447
    %v9960 = vmax.f32 %v6985, %v9448
    %v9961 = vmax.f32 %v7689, %v9449
    %v9962 = vmax.f32 %v7691, %v9450
    %v9963 = vmax.f32 %v8395, %v9451
    %v9964 = vmax.f32 %v8397, %v9452
    %v9965 = vmax.f32 %v9101, %v9453
    %v9966 = vmax.f32 %v9103, %v9454
    %v9967 = vmax.f32 %v6989, %v9455
    %v9968 = vmax.f32 %v6991, %v9456
    %v9969 = vmax.f32 %v7695, %v9457
    %v9970 = vmax.f32 %v7697, %v9458
    %v9971 = vmax.f32 %v8401, %v9459
    %v9972 = vmax.f32 %v8403, %v9460
    %v9973 = vmax.f32 %v9107, %v9461
    %v9974 = vmax.f32 %v9109, %v9462
    %v9975 = vmax.f32 %v6993, %v9463
    %v9976 = vmax.f32 %v6995, %v9464
    %v9977 = vmax.f32 %v7699, %v9465
    %v9978 = vmax.f32 %v7701, %v9466
    %v9979 = vmax.f32 %v8405, %v9467
    %v9980 = vmax.f32 %v8407, %v9468
    %v9981 = vmax.f32 %v9111, %v9469
    %v9982 = vmax.f32 %v9113, %v9470
    %v9983 = vmax.f32 %v6999, %v9471
    %v9984 = vmax.f32 %v7001, %v9472
    %v9985 = vmax.f32 %v7705, %v9473
    %v9986 = vmax.f32 %v7707, %v9474
    %v9987 = vmax.f32 %v8411, %v9475
    %v9988 = vmax.f32 %v8413, %v9476
    %v9989 = vmax.f32 %v9117, %v9477
    %v9990 = vmax.f32 %v9119, %v9478
    %v9991 = vmax.f32 %v7003, %v9479
    %v9992 = vmax.f32 %v7005, %v9480
    %v9993 = vmax.f32 %v7709, %v9481
    %v9994 = vmax.f32 %v7711, %v9482
    %v9995 = vmax.f32 %v8415, %v9483
    %v9996 = vmax.f32 %v8417, %v9484
    %v9997 = vmax.f32 %v9121, %v9485
    %v9998 = vmax.f32 %v9123, %v9486
    %v9999 = vmax.f32 %v7009, %v9487
    %v10000 = vmax.f32 %v7011, %v9488
    %v10001 = vmax.f32 %v7715, %v9489
    %v10002 = vmax.f32 %v7717, %v9490
    %v10003 = vmax.f32 %v8421, %v9491
    %v10004 = vmax.f32 %v8423, %v9492
    %v10005 = vmax.f32 %v9127, %v9493
    %v10006 = vmax.f32 %v9129, %v9494
    %v10007 = vmax.f32 %v7013, %v9495
    %v10008 = vmax.f32 %v7015, %v9496
    %v10009 = vmax.f32 %v7719, %v9497
    %v10010 = vmax.f32 %v7721, %v9498
    %v10011 = vmax.f32 %v8425, %v9499
    %v10012 = vmax.f32 %v8427, %v9500
    %v10013 = vmax.f32 %v9131, %v9501
    %v10014 = vmax.f32 %v9133, %v9502
    %v10015 = vmax.f32 %v7019, %v9503
    %v10016 = vmax.f32 %v7021, %v9504
    %v10017 = vmax.f32 %v7725, %v9505
    %v10018 = vmax.f32 %v7727, %v9506
    %v10019 = vmax.f32 %v8431, %v9507
    %v10020 = vmax.f32 %v8433, %v9508
    %v10021 = vmax.f32 %v9137, %v9509
    %v10022 = vmax.f32 %v9139, %v9510
    %v10023 = vmax.f32 %v7023, %v9511
    %v10024 = vmax.f32 %v7025, %v9512
    %v10025 = vmax.f32 %v7729, %v9513
    %v10026 = vmax.f32 %v7731, %v9514
    %v10027 = vmax.f32 %v8435, %v9515
    %v10028 = vmax.f32 %v8437, %v9516
    %v10029 = vmax.f32 %v9141, %v9517
    %v10030 = vmax.f32 %v9143, %v9518
    %v10031 = vmax.f32 %v7029, %v9519
    %v10032 = vmax.f32 %v7031, %v9520
    %v10033 = vmax.f32 %v7735, %v9521
    %v10034 = vmax.f32 %v7737, %v9522
    %v10035 = vmax.f32 %v8441, %v9523
    %v10036 = vmax.f32 %v8443, %v9524
    %v10037 = vmax.f32 %v9147, %v9525
    %v10038 = vmax.f32 %v9149, %v9526
    %v10039 = vmax.f32 %v7033, %v9527
    %v10040 = vmax.f32 %v7035, %v9528
    %v10041 = vmax.f32 %v7739, %v9529
    %v10042 = vmax.f32 %v7741, %v9530
    %v10043 = vmax.f32 %v8445, %v9531
    %v10044 = vmax.f32 %v8447, %v9532
    %v10045 = vmax.f32 %v9151, %v9533
    %v10046 = vmax.f32 %v9153, %v9534
    %v10047 = vmax.f32 %v7039, %v9535
    %v10048 = vmax.f32 %v7041, %v9536
    %v10049 = vmax.f32 %v7745, %v9537
    %v10050 = vmax.f32 %v7747, %v9538
    %v10051 = vmax.f32 %v8451, %v9539
    %v10052 = vmax.f32 %v8453, %v9540
    %v10053 = vmax.f32 %v9157, %v9541
    %v10054 = vmax.f32 %v9159, %v9542
    %v10055 = vmax.f32 %v7043, %v9543
    %v10056 = vmax.f32 %v7045, %v9544
    %v10057 = vmax.f32 %v7749, %v9545
    %v10058 = vmax.f32 %v7751, %v9546
    %v10059 = vmax.f32 %v8455, %v9547
    %v10060 = vmax.f32 %v8457, %v9548
    %v10061 = vmax.f32 %v9161, %v9549
    %v10062 = vmax.f32 %v9163, %v9550
    %v10063 = vmax.f32 %v7049, %v9551
    %v10064 = vmax.f32 %v7051, %v9552
    %v10065 = vmax.f32 %v7755, %v9553
    %v10066 = vmax.f32 %v7757, %v9554
    %v10067 = vmax.f32 %v8461, %v9555
    %v10068 = vmax.f32 %v8463, %v9556
    %v10069 = vmax.f32 %v9167, %v9557
    %v10070 = vmax.f32 %v9169, %v9558
    %v10071 = vmax.f32 %v7053, %v9559
    %v10072 = vmax.f32 %v7055, %v9560
    %v10073 = vmax.f32 %v7759, %v9561
    %v10074 = vmax.f32 %v7761, %v9562
    %v10075 = vmax.f32 %v8465, %v9563
    %v10076 = vmax.f32 %v8467, %v9564
    %v10077 = vmax.f32 %v9171, %v9565
    %v10078 = vmax.f32 %v9173, %v9566
    %v10079 = vmax.f32 %v7059, %v9567
    %v10080 = vmax.f32 %v7061, %v9568
    %v10081 = vmax.f32 %v7765, %v9569
    %v10082 = vmax.f32 %v7767, %v9570
    %v10083 = vmax.f32 %v8471, %v9571
    %v10084 = vmax.f32 %v8473, %v9572
    %v10085 = vmax.f32 %v9177, %v9573
    %v10086 = vmax.f32 %v9179, %v9574
    %v10087 = vmax.f32 %v7063, %v9575
    %v10088 = vmax.f32 %v7065, %v9576
    %v10089 = vmax.f32 %v7769, %v9577
    %v10090 = vmax.f32 %v7771, %v9578
    %v10091 = vmax.f32 %v8475, %v9579
    %v10092 = vmax.f32 %v8477, %v9580
    %v10093 = vmax.f32 %v9181, %v9581
    %v10094 = vmax.f32 %v9183, %v9582
    %v10095 = vmax.f32 %v7069, %v9583
    %v10096 = vmax.f32 %v7071, %v9584
    %v10097 = vmax.f32 %v7775, %v9585
    %v10098 = vmax.f32 %v7777, %v9586
    %v10099 = vmax.f32 %v8481, %v9587
    %v10100 = vmax.f32 %v8483, %v9588
    %v10101 = vmax.f32 %v9187, %v9589
    %v10102 = vmax.f32 %v9189, %v9590
    %v10103 = vmax.f32 %v7073, %v9591
    %v10104 = vmax.f32 %v7075, %v9592
    %v10105 = vmax.f32 %v7779, %v9593
    %v10106 = vmax.f32 %v7781, %v9594
    %v10107 = vmax.f32 %v8485, %v9595
    %v10108 = vmax.f32 %v8487, %v9596
    %v10109 = vmax.f32 %v9191, %v9597
    %v10110 = vmax.f32 %v9193, %v9598
    %v10111 = vmax.f32 %v7079, %v9599
    %v10112 = vmax.f32 %v7081, %v9600
    %v10113 = vmax.f32 %v7785, %v9601
    %v10114 = vmax.f32 %v7787, %v9602
    %v10115 = vmax.f32 %v8491, %v9603
    %v10116 = vmax.f32 %v8493, %v9604
    %v10117 = vmax.f32 %v9197, %v9605
    %v10118 = vmax.f32 %v9199, %v9606
    %v10119 = vmax.f32 %v7083, %v9607
    %v10120 = vmax.f32 %v7085, %v9608
    %v10121 = vmax.f32 %v7789, %v9609
    %v10122 = vmax.f32 %v7791, %v9610
    %v10123 = vmax.f32 %v8495, %v9611
    %v10124 = vmax.f32 %v8497, %v9612
    %v10125 = vmax.f32 %v9201, %v9613
    %v10126 = vmax.f32 %v9203, %v9614
    %v10127 = vmax.f32 %v7089, %v9615
    %v10128 = vmax.f32 %v7091, %v9616
    %v10129 = vmax.f32 %v7795, %v9617
    %v10130 = vmax.f32 %v7797, %v9618
    %v10131 = vmax.f32 %v8501, %v9619
    %v10132 = vmax.f32 %v8503, %v9620
    %v10133 = vmax.f32 %v9207, %v9621
    %v10134 = vmax.f32 %v9209, %v9622
    %v10135 = vmax.f32 %v7093, %v9623
    %v10136 = vmax.f32 %v7095, %v9624
    %v10137 = vmax.f32 %v7799, %v9625
    %v10138 = vmax.f32 %v7801, %v9626
    %v10139 = vmax.f32 %v8505, %v9627
    %v10140 = vmax.f32 %v8507, %v9628
    %v10141 = vmax.f32 %v9211, %v9629
    %v10142 = vmax.f32 %v9213, %v9630
    %v10143 = vmax.f32 %v7099, %v9631
    %v10144 = vmax.f32 %v7101, %v9632
    %v10145 = vmax.f32 %v7805, %v9633
    %v10146 = vmax.f32 %v7807, %v9634
    %v10147 = vmax.f32 %v8511, %v9635
    %v10148 = vmax.f32 %v8513, %v9636
    %v10149 = vmax.f32 %v9217, %v9637
    %v10150 = vmax.f32 %v9219, %v9638
    %v10151 = vmax.f32 %v7103, %v9639
    %v10152 = vmax.f32 %v7105, %v9640
    %v10153 = vmax.f32 %v7809, %v9641
    %v10154 = vmax.f32 %v7811, %v9642
    %v10155 = vmax.f32 %v8515, %v9643
    %v10156 = vmax.f32 %v8517, %v9644
    %v10157 = vmax.f32 %v9221, %v9645
    %v10158 = vmax.f32 %v9223, %v9646
    %v10159 = vmax.f32 %v7109, %v9647
    %v10160 = vmax.f32 %v7111, %v9648
    %v10161 = vmax.f32 %v7815, %v9649
    %v10162 = vmax.f32 %v7817, %v9650
    %v10163 = vmax.f32 %v8521, %v9651
    %v10164 = vmax.f32 %v8523, %v9652
    %v10165 = vmax.f32 %v9227, %v9653
    %v10166 = vmax.f32 %v9229, %v9654
    %v10167 = vmax.f32 %v7113, %v9655
    %v10168 = vmax.f32 %v7115, %v9656
    %v10169 = vmax.f32 %v7819, %v9657
    %v10170 = vmax.f32 %v7821, %v9658
    %v10171 = vmax.f32 %v8525, %v9659
    %v10172 = vmax.f32 %v8527, %v9660
    %v10173 = vmax.f32 %v9231, %v9661
    %v10174 = vmax.f32 %v9233, %v9662
    %v10175 = vmax.f32 %v7119, %v9663
    %v10176 = vmax.f32 %v7121, %v9664
    %v10177 = vmax.f32 %v7825, %v9665
    %v10178 = vmax.f32 %v7827, %v9666
    %v10179 = vmax.f32 %v8531, %v9667
    %v10180 = vmax.f32 %v8533, %v9668
    %v10181 = vmax.f32 %v9237, %v9669
    %v10182 = vmax.f32 %v9239, %v9670
    %v10183 = vmax.f32 %v7123, %v9671
    %v10184 = vmax.f32 %v7125, %v9672
    %v10185 = vmax.f32 %v7829, %v9673
    %v10186 = vmax.f32 %v7831, %v9674
    %v10187 = vmax.f32 %v8535, %v9675
    %v10188 = vmax.f32 %v8537, %v9676
    %v10189 = vmax.f32 %v9241, %v9677
    %v10190 = vmax.f32 %v9243, %v9678
    %v10191 = vmax.f32 %v7129, %v9679
    %v10192 = vmax.f32 %v7131, %v9680
    %v10193 = vmax.f32 %v7835, %v9681
    %v10194 = vmax.f32 %v7837, %v9682
    %v10195 = vmax.f32 %v8541, %v9683
    %v10196 = vmax.f32 %v8543, %v9684
    %v10197 = vmax.f32 %v9247, %v9685
    %v10198 = vmax.f32 %v9249, %v9686
    %v10199 = vmax.f32 %v7133, %v9687
    %v10200 = vmax.f32 %v7135, %v9688
    %v10201 = vmax.f32 %v7839, %v9689
    %v10202 = vmax.f32 %v7841, %v9690
    %v10203 = vmax.f32 %v8545, %v9691
    %v10204 = vmax.f32 %v8547, %v9692
    %v10205 = vmax.f32 %v9251, %v9693
    %v10206 = vmax.f32 %v9253, %v9694
    %v10207 = vmax.f32 %v7139, %v9695
    %v10208 = vmax.f32 %v7141, %v9696
    %v10209 = vmax.f32 %v7845, %v9697
    %v10210 = vmax.f32 %v7847, %v9698
    %v10211 = vmax.f32 %v8551, %v9699
    %v10212 = vmax.f32 %v8553, %v9700
    %v10213 = vmax.f32 %v9257, %v9701
    %v10214 = vmax.f32 %v9259, %v9702
    %v10215 = vmax.f32 %v7143, %v9703
    %v10216 = vmax.f32 %v7145, %v9704
    %v10217 = vmax.f32 %v7849, %v9705
    %v10218 = vmax.f32 %v7851, %v9706
    %v10219 = vmax.f32 %v8555, %v9707
    %v10220 = vmax.f32 %v8557, %v9708
    %v10221 = vmax.f32 %v9261, %v9709
    %v10222 = vmax.f32 %v9263, %v9710
    %v10223 = vmax.f32 %v7149, %v9711
    %v10224 = vmax.f32 %v7151, %v9712
    %v10225 = vmax.f32 %v7855, %v9713
    %v10226 = vmax.f32 %v7857, %v9714
    %v10227 = vmax.f32 %v8561, %v9715
    %v10228 = vmax.f32 %v8563, %v9716
    %v10229 = vmax.f32 %v9267, %v9717
    %v10230 = vmax.f32 %v9269, %v9718
    %v10231 = vmax.f32 %v7153, %v9719
    %v10232 = vmax.f32 %v7155, %v9720
    %v10233 = vmax.f32 %v7859, %v9721
    %v10234 = vmax.f32 %v7861, %v9722
    %v10235 = vmax.f32 %v8565, %v9723
    %v10236 = vmax.f32 %v8567, %v9724
    %v10237 = vmax.f32 %v9271, %v9725
    %v10238 = vmax.f32 %v9273, %v9726
    %v10239 = vmax.f32 %v7159, %v9727
    %v10240 = vmax.f32 %v7161, %v9728
    %v10241 = vmax.f32 %v7865, %v9729
    %v10242 = vmax.f32 %v7867, %v9730
    %v10243 = vmax.f32 %v8571, %v9731
    %v10244 = vmax.f32 %v8573, %v9732
    %v10245 = vmax.f32 %v9277, %v9733
    %v10246 = vmax.f32 %v9279, %v9734
    %v10247 = vmax.f32 %v7163, %v9735
    %v10248 = vmax.f32 %v7165, %v9736
    %v10249 = vmax.f32 %v7869, %v9737
    %v10250 = vmax.f32 %v7871, %v9738
    %v10251 = vmax.f32 %v8575, %v9739
    %v10252 = vmax.f32 %v8577, %v9740
    %v10253 = vmax.f32 %v9281, %v9741
    %v10254 = vmax.f32 %v9283, %v9742
    %v10255 = vmax.f32 %v7169, %v9743
    %v10256 = vmax.f32 %v7171, %v9744
    %v10257 = vmax.f32 %v7875, %v9745
    %v10258 = vmax.f32 %v7877, %v9746
    %v10259 = vmax.f32 %v8581, %v9747
    %v10260 = vmax.f32 %v8583, %v9748
    %v10261 = vmax.f32 %v9287, %v9749
    %v10262 = vmax.f32 %v9289, %v9750
    %v10263 = vmax.f32 %v7173, %v9751
    %v10264 = vmax.f32 %v7175, %v9752
    %v10265 = vmax.f32 %v7879, %v9753
    %v10266 = vmax.f32 %v7881, %v9754
    %v10267 = vmax.f32 %v8585, %v9755
    %v10268 = vmax.f32 %v8587, %v9756
    %v10269 = vmax.f32 %v9291, %v9757
    %v10270 = vmax.f32 %v9293, %v9758
    %v10271 = vmax.f32 %v7179, %v9759
    %v10272 = vmax.f32 %v7181, %v9760
    %v10273 = vmax.f32 %v7885, %v9761
    %v10274 = vmax.f32 %v7887, %v9762
    %v10275 = vmax.f32 %v8591, %v9763
    %v10276 = vmax.f32 %v8593, %v9764
    %v10277 = vmax.f32 %v9297, %v9765
    %v10278 = vmax.f32 %v9299, %v9766
    %v10279 = vmax.f32 %v7183, %v9767
    %v10280 = vmax.f32 %v7185, %v9768
    %v10281 = vmax.f32 %v7889, %v9769
    %v10282 = vmax.f32 %v7891, %v9770
    %v10283 = vmax.f32 %v8595, %v9771
    %v10284 = vmax.f32 %v8597, %v9772
    %v10285 = vmax.f32 %v9301, %v9773
    %v10286 = vmax.f32 %v9303, %v9774
    %v10287 = vmax.f32 %v7189, %v9775
    %v10288 = vmax.f32 %v7191, %v9776
    %v10289 = vmax.f32 %v7895, %v9777
    %v10290 = vmax.f32 %v7897, %v9778
    %v10291 = vmax.f32 %v8601, %v9779
    %v10292 = vmax.f32 %v8603, %v9780
    %v10293 = vmax.f32 %v9307, %v9781
    %v10294 = vmax.f32 %v9309, %v9782
    %v10295 = vmax.f32 %v7193, %v9783
    %v10296 = vmax.f32 %v7195, %v9784
    %v10297 = vmax.f32 %v7899, %v9785
    %v10298 = vmax.f32 %v7901, %v9786
    %v10299 = vmax.f32 %v8605, %v9787
    %v10300 = vmax.f32 %v8607, %v9788
    %v10301 = vmax.f32 %v9311, %v9789
    %v10302 = vmax.f32 %v9313, %v9790
    %v10303 = vmax.f32 %v7199, %v9791
    %v10304 = vmax.f32 %v7201, %v9792
    %v10305 = vmax.f32 %v7905, %v9793
    %v10306 = vmax.f32 %v7907, %v9794
    %v10307 = vmax.f32 %v8611, %v9795
    %v10308 = vmax.f32 %v8613, %v9796
    %v10309 = vmax.f32 %v9317, %v9797
    %v10310 = vmax.f32 %v9319, %v9798
    %v10311 = vmax.f32 %v7203, %v9799
    %v10312 = vmax.f32 %v7205, %v9800
    %v10313 = vmax.f32 %v7909, %v9801
    %v10314 = vmax.f32 %v7911, %v9802
    %v10315 = vmax.f32 %v8615, %v9803
    %v10316 = vmax.f32 %v8617, %v9804
    %v10317 = vmax.f32 %v9321, %v9805
    %v10318 = vmax.f32 %v9323, %v9806
    %v10319 = vmax.f32 %v7209, %v9807
    %v10320 = vmax.f32 %v7211, %v9808
    %v10321 = vmax.f32 %v7915, %v9809
    %v10322 = vmax.f32 %v7917, %v9810
    %v10323 = vmax.f32 %v8621, %v9811
    %v10324 = vmax.f32 %v8623, %v9812
    %v10325 = vmax.f32 %v9327, %v9813
    %v10326 = vmax.f32 %v9329, %v9814
    %v10327 = vmax.f32 %v7213, %v9815
    %v10328 = vmax.f32 %v7215, %v9816
    %v10329 = vmax.f32 %v7919, %v9817
    %v10330 = vmax.f32 %v7921, %v9818
    %v10331 = vmax.f32 %v8625, %v9819
    %v10332 = vmax.f32 %v8627, %v9820
    %v10333 = vmax.f32 %v9331, %v9821
    %v10334 = vmax.f32 %v9333, %v9822
    %v10335 = vmax.f32 %v7219, %v9823
    %v10336 = vmax.f32 %v7221, %v9824
    %v10337 = vmax.f32 %v7925, %v9825
    %v10338 = vmax.f32 %v7927, %v9826
    %v10339 = vmax.f32 %v8631, %v9827
    %v10340 = vmax.f32 %v8633, %v9828
    %v10341 = vmax.f32 %v9337, %v9829
    %v10342 = vmax.f32 %v9339, %v9830
    %v10343 = vmax.f32 %v7223, %v9831
    %v10344 = vmax.f32 %v7225, %v9832
    %v10345 = vmax.f32 %v7929, %v9833
    %v10346 = vmax.f32 %v7931, %v9834
    %v10347 = vmax.f32 %v8635, %v9835
    %v10348 = vmax.f32 %v8637, %v9836
    %v10349 = vmax.f32 %v9341, %v9837
    %v10350 = vmax.f32 %v9343, %v9838
    %v10351 = vmax.f32 %v7229, %v9839
    %v10352 = vmax.f32 %v7231, %v9840
    %v10353 = vmax.f32 %v7935, %v9841
    %v10354 = vmax.f32 %v7937, %v9842
    %v10355 = vmax.f32 %v8641, %v9843
    %v10356 = vmax.f32 %v8643, %v9844
    %v10357 = vmax.f32 %v9347, %v9845
    %v10358 = vmax.f32 %v9349, %v9846
    %v10359 = vmax.f32 %v7233, %v9847
    %v10360 = vmax.f32 %v7235, %v9848
    %v10361 = vmax.f32 %v7939, %v9849
    %v10362 = vmax.f32 %v7941, %v9850
    %v10363 = vmax.f32 %v8645, %v9851
    %v10364 = vmax.f32 %v8647, %v9852
    %v10365 = vmax.f32 %v9351, %v9853
    %v10366 = vmax.f32 %v9353, %v9854
    %v10367 = vmax.f32 %v7239, %v9855
    %v10368 = vmax.f32 %v7241, %v9856
    %v10369 = vmax.f32 %v7945, %v9857
    %v10370 = vmax.f32 %v7947, %v9858
    %v10371 = vmax.f32 %v8651, %v9859
    %v10372 = vmax.f32 %v8653, %v9860
    %v10373 = vmax.f32 %v9357, %v9861
    %v10374 = vmax.f32 %v9359, %v9862
    %v10375 = vmax.f32 %v7243, %v9863
    %v10376 = vmax.f32 %v7245, %v9864
    %v10377 = vmax.f32 %v7949, %v9865
    %v10378 = vmax.f32 %v7951, %v9866
    %v10379 = vmax.f32 %v8655, %v9867
    %v10380 = vmax.f32 %v8657, %v9868
    %v10381 = vmax.f32 %v9361, %v9869
    %v10382 = vmax.f32 %v9363, %v9870
    %v10383 = vmax.f32 %v7249, %v9871
    %v10384 = vmax.f32 %v7251, %v9872
    %v10385 = vmax.f32 %v7955, %v9873
    %v10386 = vmax.f32 %v7957, %v9874
    %v10387 = vmax.f32 %v8661, %v9875
    %v10388 = vmax.f32 %v8663, %v9876
    %v10389 = vmax.f32 %v9367, %v9877
    %v10390 = vmax.f32 %v9369, %v9878
    %v10391 = vmax.f32 %v7253, %v9879
    %v10392 = vmax.f32 %v7255, %v9880
    %v10393 = vmax.f32 %v7959, %v9881
    %v10394 = vmax.f32 %v7961, %v9882
    %v10395 = vmax.f32 %v8665, %v9883
    %v10396 = vmax.f32 %v8667, %v9884
    %v10397 = vmax.f32 %v9371, %v9885
    %v10398 = vmax.f32 %v9373, %v9886
    %v10399 = vpack.c.bf16 %v9895, %v9887
    %v10400 = vpack.c.bf16 %v9896, %v9888
    %v10401 = vpack.c.bf16 %v9897, %v9889
    %v10402 = vpack.c.bf16 %v9898, %v9890
    %v10403 = vpack.c.bf16 %v9899, %v9891
    %v10404 = vpack.c.bf16 %v9900, %v9892
    %v10405 = vpack.c.bf16 %v9901, %v9893
    %v10406 = vpack.c.bf16 %v9902, %v9894
    %v10407 = vpack.c.bf16 %v9911, %v9903
    %v10408 = vpack.c.bf16 %v9912, %v9904
    %v10409 = vpack.c.bf16 %v9913, %v9905
    %v10410 = vpack.c.bf16 %v9914, %v9906
    %v10411 = vpack.c.bf16 %v9915, %v9907
    %v10412 = vpack.c.bf16 %v9916, %v9908
    %v10413 = vpack.c.bf16 %v9917, %v9909
    %v10414 = vpack.c.bf16 %v9918, %v9910
    %v10415 = vpack.c.bf16 %v9927, %v9919
    %v10416 = vpack.c.bf16 %v9928, %v9920
    %v10417 = vpack.c.bf16 %v9929, %v9921
    %v10418 = vpack.c.bf16 %v9930, %v9922
    %v10419 = vpack.c.bf16 %v9931, %v9923
    %v10420 = vpack.c.bf16 %v9932, %v9924
    %v10421 = vpack.c.bf16 %v9933, %v9925
    %v10422 = vpack.c.bf16 %v9934, %v9926
    %v10423 = vpack.c.bf16 %v9943, %v9935
    %v10424 = vpack.c.bf16 %v9944, %v9936
    %v10425 = vpack.c.bf16 %v9945, %v9937
    %v10426 = vpack.c.bf16 %v9946, %v9938
    %v10427 = vpack.c.bf16 %v9947, %v9939
    %v10428 = vpack.c.bf16 %v9948, %v9940
    %v10429 = vpack.c.bf16 %v9949, %v9941
    %v10430 = vpack.c.bf16 %v9950, %v9942
    %v10431 = vpack.c.bf16 %v9959, %v9951
    %v10432 = vpack.c.bf16 %v9960, %v9952
    %v10433 = vpack.c.bf16 %v9961, %v9953
    %v10434 = vpack.c.bf16 %v9962, %v9954
    %v10435 = vpack.c.bf16 %v9963, %v9955
    %v10436 = vpack.c.bf16 %v9964, %v9956
    %v10437 = vpack.c.bf16 %v9965, %v9957
    %v10438 = vpack.c.bf16 %v9966, %v9958
    %v10439 = vpack.c.bf16 %v9975, %v9967
    %v10440 = vpack.c.bf16 %v9976, %v9968
    %v10441 = vpack.c.bf16 %v9977, %v9969
    %v10442 = vpack.c.bf16 %v9978, %v9970
    %v10443 = vpack.c.bf16 %v9979, %v9971
    %v10444 = vpack.c.bf16 %v9980, %v9972
    %v10445 = vpack.c.bf16 %v9981, %v9973
    %v10446 = vpack.c.bf16 %v9982, %v9974
    %v10447 = vpack.c.bf16 %v9991, %v9983
    %v10448 = vpack.c.bf16 %v9992, %v9984
    %v10449 = vpack.c.bf16 %v9993, %v9985
    %v10450 = vpack.c.bf16 %v9994, %v9986
    %v10451 = vpack.c.bf16 %v9995, %v9987
    %v10452 = vpack.c.bf16 %v9996, %v9988
    %v10453 = vpack.c.bf16 %v9997, %v9989
    %v10454 = vpack.c.bf16 %v9998, %v9990
    %v10455 = vpack.c.bf16 %v10007, %v9999
    %v10456 = vpack.c.bf16 %v10008, %v10000
    %v10457 = vpack.c.bf16 %v10009, %v10001
    %v10458 = vpack.c.bf16 %v10010, %v10002
    %v10459 = vpack.c.bf16 %v10011, %v10003
    %v10460 = vpack.c.bf16 %v10012, %v10004
    %v10461 = vpack.c.bf16 %v10013, %v10005
    %v10462 = vpack.c.bf16 %v10014, %v10006
    %v10463 = vpack.c.bf16 %v10023, %v10015
    %v10464 = vpack.c.bf16 %v10024, %v10016
    %v10465 = vpack.c.bf16 %v10025, %v10017
    %v10466 = vpack.c.bf16 %v10026, %v10018
    %v10467 = vpack.c.bf16 %v10027, %v10019
    %v10468 = vpack.c.bf16 %v10028, %v10020
    %v10469 = vpack.c.bf16 %v10029, %v10021
    %v10470 = vpack.c.bf16 %v10030, %v10022
    %v10471 = vpack.c.bf16 %v10039, %v10031
    %v10472 = vpack.c.bf16 %v10040, %v10032
    %v10473 = vpack.c.bf16 %v10041, %v10033
    %v10474 = vpack.c.bf16 %v10042, %v10034
    %v10475 = vpack.c.bf16 %v10043, %v10035
    %v10476 = vpack.c.bf16 %v10044, %v10036
    %v10477 = vpack.c.bf16 %v10045, %v10037
    %v10478 = vpack.c.bf16 %v10046, %v10038
    %v10479 = vpack.c.bf16 %v10055, %v10047
    %v10480 = vpack.c.bf16 %v10056, %v10048
    %v10481 = vpack.c.bf16 %v10057, %v10049
    %v10482 = vpack.c.bf16 %v10058, %v10050
    %v10483 = vpack.c.bf16 %v10059, %v10051
    %v10484 = vpack.c.bf16 %v10060, %v10052
    %v10485 = vpack.c.bf16 %v10061, %v10053
    %v10486 = vpack.c.bf16 %v10062, %v10054
    %v10487 = vpack.c.bf16 %v10071, %v10063
    %v10488 = vpack.c.bf16 %v10072, %v10064
    %v10489 = vpack.c.bf16 %v10073, %v10065
    %v10490 = vpack.c.bf16 %v10074, %v10066
    %v10491 = vpack.c.bf16 %v10075, %v10067
    %v10492 = vpack.c.bf16 %v10076, %v10068
    %v10493 = vpack.c.bf16 %v10077, %v10069
    %v10494 = vpack.c.bf16 %v10078, %v10070
    %v10495 = vpack.c.bf16 %v10087, %v10079
    %v10496 = vpack.c.bf16 %v10088, %v10080
    %v10497 = vpack.c.bf16 %v10089, %v10081
    %v10498 = vpack.c.bf16 %v10090, %v10082
    %v10499 = vpack.c.bf16 %v10091, %v10083
    %v10500 = vpack.c.bf16 %v10092, %v10084
    %v10501 = vpack.c.bf16 %v10093, %v10085
    %v10502 = vpack.c.bf16 %v10094, %v10086
    %v10503 = vpack.c.bf16 %v10103, %v10095
    %v10504 = vpack.c.bf16 %v10104, %v10096
    %v10505 = vpack.c.bf16 %v10105, %v10097
    %v10506 = vpack.c.bf16 %v10106, %v10098
    %v10507 = vpack.c.bf16 %v10107, %v10099
    %v10508 = vpack.c.bf16 %v10108, %v10100
    %v10509 = vpack.c.bf16 %v10109, %v10101
    %v10510 = vpack.c.bf16 %v10110, %v10102
    %v10511 = vpack.c.bf16 %v10119, %v10111
    %v10512 = vpack.c.bf16 %v10120, %v10112
    %v10513 = vpack.c.bf16 %v10121, %v10113
    %v10514 = vpack.c.bf16 %v10122, %v10114
    %v10515 = vpack.c.bf16 %v10123, %v10115
    %v10516 = vpack.c.bf16 %v10124, %v10116
    %v10517 = vpack.c.bf16 %v10125, %v10117
    %v10518 = vpack.c.bf16 %v10126, %v10118
    %v10519 = vpack.c.bf16 %v10135, %v10127
    %v10520 = vpack.c.bf16 %v10136, %v10128
    %v10521 = vpack.c.bf16 %v10137, %v10129
    %v10522 = vpack.c.bf16 %v10138, %v10130
    %v10523 = vpack.c.bf16 %v10139, %v10131
    %v10524 = vpack.c.bf16 %v10140, %v10132
    %v10525 = vpack.c.bf16 %v10141, %v10133
    %v10526 = vpack.c.bf16 %v10142, %v10134
    %v10527 = vpack.c.bf16 %v10151, %v10143
    %v10528 = vpack.c.bf16 %v10152, %v10144
    %v10529 = vpack.c.bf16 %v10153, %v10145
    %v10530 = vpack.c.bf16 %v10154, %v10146
    %v10531 = vpack.c.bf16 %v10155, %v10147
    %v10532 = vpack.c.bf16 %v10156, %v10148
    %v10533 = vpack.c.bf16 %v10157, %v10149
    %v10534 = vpack.c.bf16 %v10158, %v10150
    %v10535 = vpack.c.bf16 %v10167, %v10159
    %v10536 = vpack.c.bf16 %v10168, %v10160
    %v10537 = vpack.c.bf16 %v10169, %v10161
    %v10538 = vpack.c.bf16 %v10170, %v10162
    %v10539 = vpack.c.bf16 %v10171, %v10163
    %v10540 = vpack.c.bf16 %v10172, %v10164
    %v10541 = vpack.c.bf16 %v10173, %v10165
    %v10542 = vpack.c.bf16 %v10174, %v10166
    %v10543 = vpack.c.bf16 %v10183, %v10175
    %v10544 = vpack.c.bf16 %v10184, %v10176
    %v10545 = vpack.c.bf16 %v10185, %v10177
    %v10546 = vpack.c.bf16 %v10186, %v10178
    %v10547 = vpack.c.bf16 %v10187, %v10179
    %v10548 = vpack.c.bf16 %v10188, %v10180
    %v10549 = vpack.c.bf16 %v10189, %v10181
    %v10550 = vpack.c.bf16 %v10190, %v10182
    %v10551 = vpack.c.bf16 %v10199, %v10191
    %v10552 = vpack.c.bf16 %v10200, %v10192
    %v10553 = vpack.c.bf16 %v10201, %v10193
    %v10554 = vpack.c.bf16 %v10202, %v10194
    %v10555 = vpack.c.bf16 %v10203, %v10195
    %v10556 = vpack.c.bf16 %v10204, %v10196
    %v10557 = vpack.c.bf16 %v10205, %v10197
    %v10558 = vpack.c.bf16 %v10206, %v10198
    %v10559 = vpack.c.bf16 %v10215, %v10207
    %v10560 = vpack.c.bf16 %v10216, %v10208
    %v10561 = vpack.c.bf16 %v10217, %v10209
    %v10562 = vpack.c.bf16 %v10218, %v10210
    %v10563 = vpack.c.bf16 %v10219, %v10211
    %v10564 = vpack.c.bf16 %v10220, %v10212
    %v10565 = vpack.c.bf16 %v10221, %v10213
    %v10566 = vpack.c.bf16 %v10222, %v10214
    %v10567 = vpack.c.bf16 %v10231, %v10223
    %v10568 = vpack.c.bf16 %v10232, %v10224
    %v10569 = vpack.c.bf16 %v10233, %v10225
    %v10570 = vpack.c.bf16 %v10234, %v10226
    %v10571 = vpack.c.bf16 %v10235, %v10227
    %v10572 = vpack.c.bf16 %v10236, %v10228
    %v10573 = vpack.c.bf16 %v10237, %v10229
    %v10574 = vpack.c.bf16 %v10238, %v10230
    %v10575 = vpack.c.bf16 %v10247, %v10239
    %v10576 = vpack.c.bf16 %v10248, %v10240
    %v10577 = vpack.c.bf16 %v10249, %v10241
    %v10578 = vpack.c.bf16 %v10250, %v10242
    %v10579 = vpack.c.bf16 %v10251, %v10243
    %v10580 = vpack.c.bf16 %v10252, %v10244
    %v10581 = vpack.c.bf16 %v10253, %v10245
    %v10582 = vpack.c.bf16 %v10254, %v10246
    %v10583 = vpack.c.bf16 %v10263, %v10255
    %v10584 = vpack.c.bf16 %v10264, %v10256
    %v10585 = vpack.c.bf16 %v10265, %v10257
    %v10586 = vpack.c.bf16 %v10266, %v10258
    %v10587 = vpack.c.bf16 %v10267, %v10259
    %v10588 = vpack.c.bf16 %v10268, %v10260
    %v10589 = vpack.c.bf16 %v10269, %v10261
    %v10590 = vpack.c.bf16 %v10270, %v10262
    %v10591 = vpack.c.bf16 %v10279, %v10271
    %v10592 = vpack.c.bf16 %v10280, %v10272
    %v10593 = vpack.c.bf16 %v10281, %v10273
    %v10594 = vpack.c.bf16 %v10282, %v10274
    %v10595 = vpack.c.bf16 %v10283, %v10275
    %v10596 = vpack.c.bf16 %v10284, %v10276
    %v10597 = vpack.c.bf16 %v10285, %v10277
    %v10598 = vpack.c.bf16 %v10286, %v10278
    %v10599 = vpack.c.bf16 %v10295, %v10287
    %v10600 = vpack.c.bf16 %v10296, %v10288
    %v10601 = vpack.c.bf16 %v10297, %v10289
    %v10602 = vpack.c.bf16 %v10298, %v10290
    %v10603 = vpack.c.bf16 %v10299, %v10291
    %v10604 = vpack.c.bf16 %v10300, %v10292
    %v10605 = vpack.c.bf16 %v10301, %v10293
    %v10606 = vpack.c.bf16 %v10302, %v10294
    %v10607 = vpack.c.bf16 %v10311, %v10303
    %v10608 = vpack.c.bf16 %v10312, %v10304
    %v10609 = vpack.c.bf16 %v10313, %v10305
    %v10610 = vpack.c.bf16 %v10314, %v10306
    %v10611 = vpack.c.bf16 %v10315, %v10307
    %v10612 = vpack.c.bf16 %v10316, %v10308
    %v10613 = vpack.c.bf16 %v10317, %v10309
    %v10614 = vpack.c.bf16 %v10318, %v10310
    %v10615 = vpack.c.bf16 %v10327, %v10319
    %v10616 = vpack.c.bf16 %v10328, %v10320
    %v10617 = vpack.c.bf16 %v10329, %v10321
    %v10618 = vpack.c.bf16 %v10330, %v10322
    %v10619 = vpack.c.bf16 %v10331, %v10323
    %v10620 = vpack.c.bf16 %v10332, %v10324
    %v10621 = vpack.c.bf16 %v10333, %v10325
    %v10622 = vpack.c.bf16 %v10334, %v10326
    %v10623 = vpack.c.bf16 %v10343, %v10335
    %v10624 = vpack.c.bf16 %v10344, %v10336
    %v10625 = vpack.c.bf16 %v10345, %v10337
    %v10626 = vpack.c.bf16 %v10346, %v10338
    %v10627 = vpack.c.bf16 %v10347, %v10339
    %v10628 = vpack.c.bf16 %v10348, %v10340
    %v10629 = vpack.c.bf16 %v10349, %v10341
    %v10630 = vpack.c.bf16 %v10350, %v10342
    %v10631 = vpack.c.bf16 %v10359, %v10351
    %v10632 = vpack.c.bf16 %v10360, %v10352
    %v10633 = vpack.c.bf16 %v10361, %v10353
    %v10634 = vpack.c.bf16 %v10362, %v10354
    %v10635 = vpack.c.bf16 %v10363, %v10355
    %v10636 = vpack.c.bf16 %v10364, %v10356
    %v10637 = vpack.c.bf16 %v10365, %v10357
    %v10638 = vpack.c.bf16 %v10366, %v10358
    %v10639 = vpack.c.bf16 %v10375, %v10367
    %v10640 = vpack.c.bf16 %v10376, %v10368
    %v10641 = vpack.c.bf16 %v10377, %v10369
    %v10642 = vpack.c.bf16 %v10378, %v10370
    %v10643 = vpack.c.bf16 %v10379, %v10371
    %v10644 = vpack.c.bf16 %v10380, %v10372
    %v10645 = vpack.c.bf16 %v10381, %v10373
    %v10646 = vpack.c.bf16 %v10382, %v10374
    %v10647 = vpack.c.bf16 %v10391, %v10383
    %v10648 = vpack.c.bf16 %v10392, %v10384
    %v10649 = vpack.c.bf16 %v10393, %v10385
    %v10650 = vpack.c.bf16 %v10394, %v10386
    %v10651 = vpack.c.bf16 %v10395, %v10387
    %v10652 = vpack.c.bf16 %v10396, %v10388
    %v10653 = vpack.c.bf16 %v10397, %v10389
    %v10654 = vpack.c.bf16 %v10398, %v10390
    %v10655 = vld [vmem:[#allocation10] sm:$0xf]
    %v10656 = vld [vmem:[#allocation10 + $0x4] sm:$0xf]
    %v10657 = vld [vmem:[#allocation10 + $0x8] sm:$0xf]
    %v10658 = vld [vmem:[#allocation10 + $0xc] sm:$0xf]
    %v10659 = vld [vmem:[#allocation10 + $0x10] sm:$0xf]
    %v10660 = vld [vmem:[#allocation10 + $0x14] sm:$0xf]
    %v10661 = vld [vmem:[#allocation10 + $0x18] sm:$0xf]
    %v10662 = vld [vmem:[#allocation10 + $0x1c] sm:$0xf]
    %v10663 = vld [vmem:[#allocation10 + $0x20] sm:$0xf]
    %v10664 = vld [vmem:[#allocation10 + $0x24] sm:$0xf]
    %v10665 = vld [vmem:[#allocation10 + $0x28] sm:$0xf]
    %v10666 = vld [vmem:[#allocation10 + $0x2c] sm:$0xf]
    %v10667 = vld [vmem:[#allocation10 + $0x30] sm:$0xf]
    %v10668 = vld [vmem:[#allocation10 + $0x34] sm:$0xf]
    %v10669 = vld [vmem:[#allocation10 + $0x38] sm:$0xf]
    %v10670 = vld [vmem:[#allocation10 + $0x3c] sm:$0xf]
    %v10671 = vld [vmem:[#allocation10 + $0x40] sm:$0xf]
    %v10672 = vld [vmem:[#allocation10 + $0x44] sm:$0xf]
    %v10673 = vld [vmem:[#allocation10 + $0x48] sm:$0xf]
    %v10674 = vld [vmem:[#allocation10 + $0x4c] sm:$0xf]
    %v10675 = vld [vmem:[#allocation10 + $0x50] sm:$0xf]
    %v10676 = vld [vmem:[#allocation10 + $0x54] sm:$0xf]
    %v10677 = vld [vmem:[#allocation10 + $0x58] sm:$0xf]
    %v10678 = vld [vmem:[#allocation10 + $0x5c] sm:$0xf]
    %v10679 = vld [vmem:[#allocation10 + $0x60] sm:$0xf]
    %v10680 = vld [vmem:[#allocation10 + $0x64] sm:$0xf]
    %v10681 = vld [vmem:[#allocation10 + $0x68] sm:$0xf]
    %v10682 = vld [vmem:[#allocation10 + $0x6c] sm:$0xf]
    %v10683 = vld [vmem:[#allocation10 + $0x70] sm:$0xf]
    %v10684 = vld [vmem:[#allocation10 + $0x74] sm:$0xf]
    %v10685 = vld [vmem:[#allocation10 + $0x78] sm:$0xf]
    %v10686 = vld [vmem:[#allocation10 + $0x7c] sm:$0xf]
    %v10687 = vld [vmem:[#allocation10 + $0x80] sm:$0xf]
    %v10688 = vld [vmem:[#allocation10 + $0x84] sm:$0xf]
    %v10689 = vld [vmem:[#allocation10 + $0x88] sm:$0xf]
    %v10690 = vld [vmem:[#allocation10 + $0x8c] sm:$0xf]
    %v10691 = vld [vmem:[#allocation10 + $0x90] sm:$0xf]
    %v10692 = vld [vmem:[#allocation10 + $0x94] sm:$0xf]
    %v10693 = vld [vmem:[#allocation10 + $0x98] sm:$0xf]
    %v10694 = vld [vmem:[#allocation10 + $0x9c] sm:$0xf]
    %v10695 = vld [vmem:[#allocation10 + $0xa0] sm:$0xf]
    %v10696 = vld [vmem:[#allocation10 + $0xa4] sm:$0xf]
    %v10697 = vld [vmem:[#allocation10 + $0xa8] sm:$0xf]
    %v10698 = vld [vmem:[#allocation10 + $0xac] sm:$0xf]
    %v10699 = vld [vmem:[#allocation10 + $0xb0] sm:$0xf]
    %v10700 = vld [vmem:[#allocation10 + $0xb4] sm:$0xf]
    %v10701 = vld [vmem:[#allocation10 + $0xb8] sm:$0xf]
    %v10702 = vld [vmem:[#allocation10 + $0xbc] sm:$0xf]
    %v10703 = vld [vmem:[#allocation10 + $0xc0] sm:$0xf]
    %v10704 = vld [vmem:[#allocation10 + $0xc4] sm:$0xf]
    %v10705 = vld [vmem:[#allocation10 + $0xc8] sm:$0xf]
    %v10706 = vld [vmem:[#allocation10 + $0xcc] sm:$0xf]
    %v10707 = vld [vmem:[#allocation10 + $0xd0] sm:$0xf]
    %v10708 = vld [vmem:[#allocation10 + $0xd4] sm:$0xf]
    %v10709 = vld [vmem:[#allocation10 + $0xd8] sm:$0xf]
    %v10710 = vld [vmem:[#allocation10 + $0xdc] sm:$0xf]
    %v10711 = vld [vmem:[#allocation10 + $0xe0] sm:$0xf]
    %v10712 = vld [vmem:[#allocation10 + $0xe4] sm:$0xf]
    %v10713 = vld [vmem:[#allocation10 + $0xe8] sm:$0xf]
    %v10714 = vld [vmem:[#allocation10 + $0xec] sm:$0xf]
    %v10715 = vld [vmem:[#allocation10 + $0xf0] sm:$0xf]
    %v10716 = vld [vmem:[#allocation10 + $0xf4] sm:$0xf]
    %v10717 = vld [vmem:[#allocation10 + $0xf8] sm:$0xf]
    %v10718 = vld [vmem:[#allocation10 + $0xfc] sm:$0xf]
    %v10719 = vld [vmem:[#allocation10 + $0x100] sm:$0xf]
    %v10720 = vld [vmem:[#allocation10 + $0x104] sm:$0xf]
    %v10721 = vld [vmem:[#allocation10 + $0x108] sm:$0xf]
    %v10722 = vld [vmem:[#allocation10 + $0x10c] sm:$0xf]
    %v10723 = vld [vmem:[#allocation10 + $0x110] sm:$0xf]
    %v10724 = vld [vmem:[#allocation10 + $0x114] sm:$0xf]
    %v10725 = vld [vmem:[#allocation10 + $0x118] sm:$0xf]
    %v10726 = vld [vmem:[#allocation10 + $0x11c] sm:$0xf]
    %v10727 = vld [vmem:[#allocation10 + $0x120] sm:$0xf]
    %v10728 = vld [vmem:[#allocation10 + $0x124] sm:$0xf]
    %v10729 = vld [vmem:[#allocation10 + $0x128] sm:$0xf]
    %v10730 = vld [vmem:[#allocation10 + $0x12c] sm:$0xf]
    %v10731 = vld [vmem:[#allocation10 + $0x130] sm:$0xf]
    %v10732 = vld [vmem:[#allocation10 + $0x134] sm:$0xf]
    %v10733 = vld [vmem:[#allocation10 + $0x138] sm:$0xf]
    %v10734 = vld [vmem:[#allocation10 + $0x13c] sm:$0xf]
    %v10735 = vld [vmem:[#allocation10 + $0x140] sm:$0xf]
    %v10736 = vld [vmem:[#allocation10 + $0x144] sm:$0xf]
    %v10737 = vld [vmem:[#allocation10 + $0x148] sm:$0xf]
    %v10738 = vld [vmem:[#allocation10 + $0x14c] sm:$0xf]
    %v10739 = vld [vmem:[#allocation10 + $0x150] sm:$0xf]
    %v10740 = vld [vmem:[#allocation10 + $0x154] sm:$0xf]
    %v10741 = vld [vmem:[#allocation10 + $0x158] sm:$0xf]
    %v10742 = vld [vmem:[#allocation10 + $0x15c] sm:$0xf]
    %v10743 = vld [vmem:[#allocation10 + $0x160] sm:$0xf]
    %v10744 = vld [vmem:[#allocation10 + $0x164] sm:$0xf]
    %v10745 = vld [vmem:[#allocation10 + $0x168] sm:$0xf]
    %v10746 = vld [vmem:[#allocation10 + $0x16c] sm:$0xf]
    %v10747 = vld [vmem:[#allocation10 + $0x170] sm:$0xf]
    %v10748 = vld [vmem:[#allocation10 + $0x174] sm:$0xf]
    %v10749 = vld [vmem:[#allocation10 + $0x178] sm:$0xf]
    %v10750 = vld [vmem:[#allocation10 + $0x17c] sm:$0xf]
    %v10751 = vld [vmem:[#allocation10 + $0x180] sm:$0xf]
    %v10752 = vld [vmem:[#allocation10 + $0x184] sm:$0xf]
    %v10753 = vld [vmem:[#allocation10 + $0x188] sm:$0xf]
    %v10754 = vld [vmem:[#allocation10 + $0x18c] sm:$0xf]
    %v10755 = vld [vmem:[#allocation10 + $0x190] sm:$0xf]
    %v10756 = vld [vmem:[#allocation10 + $0x194] sm:$0xf]
    %v10757 = vld [vmem:[#allocation10 + $0x198] sm:$0xf]
    %v10758 = vld [vmem:[#allocation10 + $0x19c] sm:$0xf]
    %v10759 = vld [vmem:[#allocation10 + $0x1a0] sm:$0xf]
    %v10760 = vld [vmem:[#allocation10 + $0x1a4] sm:$0xf]
    %v10761 = vld [vmem:[#allocation10 + $0x1a8] sm:$0xf]
    %v10762 = vld [vmem:[#allocation10 + $0x1ac] sm:$0xf]
    %v10763 = vld [vmem:[#allocation10 + $0x1b0] sm:$0xf]
    %v10764 = vld [vmem:[#allocation10 + $0x1b4] sm:$0xf]
    %v10765 = vld [vmem:[#allocation10 + $0x1b8] sm:$0xf]
    %v10766 = vld [vmem:[#allocation10 + $0x1bc] sm:$0xf]
    %v10767 = vld [vmem:[#allocation10 + $0x1c0] sm:$0xf]
    %v10768 = vld [vmem:[#allocation10 + $0x1c4] sm:$0xf]
    %v10769 = vld [vmem:[#allocation10 + $0x1c8] sm:$0xf]
    %v10770 = vld [vmem:[#allocation10 + $0x1cc] sm:$0xf]
    %v10771 = vld [vmem:[#allocation10 + $0x1d0] sm:$0xf]
    %v10772 = vld [vmem:[#allocation10 + $0x1d4] sm:$0xf]
    %v10773 = vld [vmem:[#allocation10 + $0x1d8] sm:$0xf]
    %v10774 = vld [vmem:[#allocation10 + $0x1dc] sm:$0xf]
    %v10775 = vld [vmem:[#allocation10 + $0x1e0] sm:$0xf]
    %v10776 = vld [vmem:[#allocation10 + $0x1e4] sm:$0xf]
    %v10777 = vld [vmem:[#allocation10 + $0x1e8] sm:$0xf]
    %v10778 = vld [vmem:[#allocation10 + $0x1ec] sm:$0xf]
    %v10779 = vld [vmem:[#allocation10 + $0x1f0] sm:$0xf]
    %v10780 = vld [vmem:[#allocation10 + $0x1f4] sm:$0xf]
    %v10781 = vld [vmem:[#allocation10 + $0x1f8] sm:$0xf]
    %v10782 = vld [vmem:[#allocation10 + $0x1fc] sm:$0xf]
    %v10783 = vld [vmem:[%s8] sm:$0x1]
    %v10785 = vlaneseq
    %v10786 = vshrl.u32 %v10785, 7
    %v10787 = vsub.s32 0, %v10786
    %v10788 = vrot.slane %v10783, %v10787
    %v10918 = vunpack.c.l.b16 %v10655
    %v10919 = vunpack.c.l.b16 %v10656
    %v10920 = vunpack.c.l.b16 %v10657
    %v10921 = vunpack.c.l.b16 %v10658
    %v10922 = vunpack.c.l.b16 %v10659
    %v10923 = vunpack.c.l.b16 %v10660
    %v10924 = vunpack.c.l.b16 %v10661
    %v10925 = vunpack.c.l.b16 %v10662
    %v10926 = vunpack.c.l.b16 %v10663
    %v10927 = vunpack.c.l.b16 %v10664
    %v10928 = vunpack.c.l.b16 %v10665
    %v10929 = vunpack.c.l.b16 %v10666
    %v10930 = vunpack.c.l.b16 %v10667
    %v10931 = vunpack.c.l.b16 %v10668
    %v10932 = vunpack.c.l.b16 %v10669
    %v10933 = vunpack.c.l.b16 %v10670
    %v10934 = vunpack.c.l.b16 %v10671
    %v10935 = vunpack.c.l.b16 %v10672
    %v10936 = vunpack.c.l.b16 %v10673
    %v10937 = vunpack.c.l.b16 %v10674
    %v10938 = vunpack.c.l.b16 %v10675
    %v10939 = vunpack.c.l.b16 %v10676
    %v10940 = vunpack.c.l.b16 %v10677
    %v10941 = vunpack.c.l.b16 %v10678
    %v10942 = vunpack.c.l.b16 %v10679
    %v10943 = vunpack.c.l.b16 %v10680
    %v10944 = vunpack.c.l.b16 %v10681
    %v10945 = vunpack.c.l.b16 %v10682
    %v10946 = vunpack.c.l.b16 %v10683
    %v10947 = vunpack.c.l.b16 %v10684
    %v10948 = vunpack.c.l.b16 %v10685
    %v10949 = vunpack.c.l.b16 %v10686
    %v10950 = vunpack.c.l.b16 %v10687
    %v10951 = vunpack.c.l.b16 %v10688
    %v10952 = vunpack.c.l.b16 %v10689
    %v10953 = vunpack.c.l.b16 %v10690
    %v10954 = vunpack.c.l.b16 %v10691
    %v10955 = vunpack.c.l.b16 %v10692
    %v10956 = vunpack.c.l.b16 %v10693
    %v10957 = vunpack.c.l.b16 %v10694
    %v10958 = vunpack.c.l.b16 %v10695
    %v10959 = vunpack.c.l.b16 %v10696
    %v10960 = vunpack.c.l.b16 %v10697
    %v10961 = vunpack.c.l.b16 %v10698
    %v10962 = vunpack.c.l.b16 %v10699
    %v10963 = vunpack.c.l.b16 %v10700
    %v10964 = vunpack.c.l.b16 %v10701
    %v10965 = vunpack.c.l.b16 %v10702
    %v10966 = vunpack.c.l.b16 %v10703
    %v10967 = vunpack.c.l.b16 %v10704
    %v10968 = vunpack.c.l.b16 %v10705
    %v10969 = vunpack.c.l.b16 %v10706
    %v10970 = vunpack.c.l.b16 %v10707
    %v10971 = vunpack.c.l.b16 %v10708
    %v10972 = vunpack.c.l.b16 %v10709
    %v10973 = vunpack.c.l.b16 %v10710
    %v10974 = vunpack.c.l.b16 %v10711
    %v10975 = vunpack.c.l.b16 %v10712
    %v10976 = vunpack.c.l.b16 %v10713
    %v10977 = vunpack.c.l.b16 %v10714
    %v10978 = vunpack.c.l.b16 %v10715
    %v10979 = vunpack.c.l.b16 %v10716
    %v10980 = vunpack.c.l.b16 %v10717
    %v10981 = vunpack.c.l.b16 %v10718
    %v10982 = vunpack.c.l.b16 %v10719
    %v10983 = vunpack.c.l.b16 %v10720
    %v10984 = vunpack.c.l.b16 %v10721
    %v10985 = vunpack.c.l.b16 %v10722
    %v10986 = vunpack.c.l.b16 %v10723
    %v10987 = vunpack.c.l.b16 %v10724
    %v10988 = vunpack.c.l.b16 %v10725
    %v10989 = vunpack.c.l.b16 %v10726
    %v10990 = vunpack.c.l.b16 %v10727
    %v10991 = vunpack.c.l.b16 %v10728
    %v10992 = vunpack.c.l.b16 %v10729
    %v10993 = vunpack.c.l.b16 %v10730
    %v10994 = vunpack.c.l.b16 %v10731
    %v10995 = vunpack.c.l.b16 %v10732
    %v10996 = vunpack.c.l.b16 %v10733
    %v10997 = vunpack.c.l.b16 %v10734
    %v10998 = vunpack.c.l.b16 %v10735
    %v10999 = vunpack.c.l.b16 %v10736
    %v11000 = vunpack.c.l.b16 %v10737
    %v11001 = vunpack.c.l.b16 %v10738
    %v11002 = vunpack.c.l.b16 %v10739
    %v11003 = vunpack.c.l.b16 %v10740
    %v11004 = vunpack.c.l.b16 %v10741
    %v11005 = vunpack.c.l.b16 %v10742
    %v11006 = vunpack.c.l.b16 %v10743
    %v11007 = vunpack.c.l.b16 %v10744
    %v11008 = vunpack.c.l.b16 %v10745
    %v11009 = vunpack.c.l.b16 %v10746
    %v11010 = vunpack.c.l.b16 %v10747
    %v11011 = vunpack.c.l.b16 %v10748
    %v11012 = vunpack.c.l.b16 %v10749
    %v11013 = vunpack.c.l.b16 %v10750
    %v11014 = vunpack.c.l.b16 %v10751
    %v11015 = vunpack.c.l.b16 %v10752
    %v11016 = vunpack.c.l.b16 %v10753
    %v11017 = vunpack.c.l.b16 %v10754
    %v11018 = vunpack.c.l.b16 %v10755
    %v11019 = vunpack.c.l.b16 %v10756
    %v11020 = vunpack.c.l.b16 %v10757
    %v11021 = vunpack.c.l.b16 %v10758
    %v11022 = vunpack.c.l.b16 %v10759
    %v11023 = vunpack.c.l.b16 %v10760
    %v11024 = vunpack.c.l.b16 %v10761
    %v11025 = vunpack.c.l.b16 %v10762
    %v11026 = vunpack.c.l.b16 %v10763
    %v11027 = vunpack.c.l.b16 %v10764
    %v11028 = vunpack.c.l.b16 %v10765
    %v11029 = vunpack.c.l.b16 %v10766
    %v11030 = vunpack.c.l.b16 %v10767
    %v11031 = vunpack.c.l.b16 %v10768
    %v11032 = vunpack.c.l.b16 %v10769
    %v11033 = vunpack.c.l.b16 %v10770
    %v11034 = vunpack.c.l.b16 %v10771
    %v11035 = vunpack.c.l.b16 %v10772
    %v11036 = vunpack.c.l.b16 %v10773
    %v11037 = vunpack.c.l.b16 %v10774
    %v11038 = vunpack.c.l.b16 %v10775
    %v11039 = vunpack.c.l.b16 %v10776
    %v11040 = vunpack.c.l.b16 %v10777
    %v11041 = vunpack.c.l.b16 %v10778
    %v11042 = vunpack.c.l.b16 %v10779
    %v11043 = vunpack.c.l.b16 %v10780
    %v11044 = vunpack.c.l.b16 %v10781
    %v11045 = vunpack.c.l.b16 %v10782
    %v11046 = vpack.c.b16 %v10919, %v10918
    %v11047 = vpack.c.b16 %v10921, %v10920
    %v11048 = vpack.c.b16 %v10923, %v10922
    %v11049 = vpack.c.b16 %v10925, %v10924
    %v11050 = vpack.c.b16 %v10927, %v10926
    %v11051 = vpack.c.b16 %v10929, %v10928
    %v11052 = vpack.c.b16 %v10931, %v10930
    %v11053 = vpack.c.b16 %v10933, %v10932
    %v11054 = vpack.c.b16 %v10935, %v10934
    %v11055 = vpack.c.b16 %v10937, %v10936
    %v11056 = vpack.c.b16 %v10939, %v10938
    %v11057 = vpack.c.b16 %v10941, %v10940
    %v11058 = vpack.c.b16 %v10943, %v10942
    %v11059 = vpack.c.b16 %v10945, %v10944
    %v11060 = vpack.c.b16 %v10947, %v10946
    %v11061 = vpack.c.b16 %v10949, %v10948
    %v11062 = vpack.c.b16 %v10951, %v10950
    %v11063 = vpack.c.b16 %v10953, %v10952
    %v11064 = vpack.c.b16 %v10955, %v10954
    %v11065 = vpack.c.b16 %v10957, %v10956
    %v11066 = vpack.c.b16 %v10959, %v10958
    %v11067 = vpack.c.b16 %v10961, %v10960
    %v11068 = vpack.c.b16 %v10963, %v10962
    %v11069 = vpack.c.b16 %v10965, %v10964
    %v11070 = vpack.c.b16 %v10967, %v10966
    %v11071 = vpack.c.b16 %v10969, %v10968
    %v11072 = vpack.c.b16 %v10971, %v10970
    %v11073 = vpack.c.b16 %v10973, %v10972
    %v11074 = vpack.c.b16 %v10975, %v10974
    %v11075 = vpack.c.b16 %v10977, %v10976
    %v11076 = vpack.c.b16 %v10979, %v10978
    %v11077 = vpack.c.b16 %v10981, %v10980
    %v11078 = vpack.c.b16 %v10983, %v10982
    %v11079 = vpack.c.b16 %v10985, %v10984
    %v11080 = vpack.c.b16 %v10987, %v10986
    %v11081 = vpack.c.b16 %v10989, %v10988
    %v11082 = vpack.c.b16 %v10991, %v10990
    %v11083 = vpack.c.b16 %v10993, %v10992
    %v11084 = vpack.c.b16 %v10995, %v10994
    %v11085 = vpack.c.b16 %v10997, %v10996
    %v11086 = vpack.c.b16 %v10999, %v10998
    %v11087 = vpack.c.b16 %v11001, %v11000
    %v11088 = vpack.c.b16 %v11003, %v11002
    %v11089 = vpack.c.b16 %v11005, %v11004
    %v11090 = vpack.c.b16 %v11007, %v11006
    %v11091 = vpack.c.b16 %v11009, %v11008
    %v11092 = vpack.c.b16 %v11011, %v11010
    %v11093 = vpack.c.b16 %v11013, %v11012
    %v11094 = vpack.c.b16 %v11015, %v11014
    %v11095 = vpack.c.b16 %v11017, %v11016
    %v11096 = vpack.c.b16 %v11019, %v11018
    %v11097 = vpack.c.b16 %v11021, %v11020
    %v11098 = vpack.c.b16 %v11023, %v11022
    %v11099 = vpack.c.b16 %v11025, %v11024
    %v11100 = vpack.c.b16 %v11027, %v11026
    %v11101 = vpack.c.b16 %v11029, %v11028
    %v11102 = vpack.c.b16 %v11031, %v11030
    %v11103 = vpack.c.b16 %v11033, %v11032
    %v11104 = vpack.c.b16 %v11035, %v11034
    %v11105 = vpack.c.b16 %v11037, %v11036
    %v11106 = vpack.c.b16 %v11039, %v11038
    %v11107 = vpack.c.b16 %v11041, %v11040
    %v11108 = vpack.c.b16 %v11043, %v11042
    %v11109 = vpack.c.b16 %v11045, %v11044
    %11174 = vmatprep.subr.bf16.mxu0 0
    %11175 = vmatpush1.bf16.msra.mxu0 %v11046
    %11176 = vmatprep.subr.bf16.mxu0 0
    %11177 = vmatpush1.bf16.msra.mxu0 %v11047
    %11178 = vmatprep.subr.bf16.mxu0 0
    %11179 = vmatpush1.bf16.msra.mxu0 %v11048
    %11180 = vmatprep.subr.bf16.mxu0 0
    %11181 = vmatpush1.bf16.msra.mxu0 %v11049
    %11182 = vmatprep.subr.bf16.mxu0 0
    %11183 = vmatpush1.bf16.msra.mxu0 %v11050
    %11184 = vmatprep.subr.bf16.mxu0 0
    %11185 = vmatpush1.bf16.msra.mxu0 %v11051
    %11186 = vmatprep.subr.bf16.mxu0 0
    %11187 = vmatpush1.bf16.msra.mxu0 %v11052
    %11188 = vmatprep.subr.bf16.mxu0 0
    %11189 = vmatpush1.bf16.msra.mxu0 %v11053
    %11190 = vmatprep.subr.bf16.mxu0 0
    %11191 = vmatpush1.bf16.msra.mxu0 %v11054
    %11192 = vmatprep.subr.bf16.mxu0 0
    %11193 = vmatpush1.bf16.msra.mxu0 %v11055
    %11194 = vmatprep.subr.bf16.mxu0 0
    %11195 = vmatpush1.bf16.msra.mxu0 %v11056
    %11196 = vmatprep.subr.bf16.mxu0 0
    %11197 = vmatpush1.bf16.msra.mxu0 %v11057
    %11198 = vmatprep.subr.bf16.mxu0 0
    %11199 = vmatpush1.bf16.msra.mxu0 %v11058
    %11200 = vmatprep.subr.bf16.mxu0 0
    %11201 = vmatpush1.bf16.msra.mxu0 %v11059
    %11202 = vmatprep.subr.bf16.mxu0 0
    %11203 = vmatpush1.bf16.msra.mxu0 %v11060
    %11204 = vmatprep.subr.bf16.mxu0 0
    %11205 = vmatpush1.bf16.msra.mxu0 %v11061
    %11206 = vmatprep.mubr.bf16.mxu0 %v10400
    %11207 = vmatmul.mubr.bf16.gmra.mrb[0].mxu0 %v10399
    %v11208 = vpop.f32.mrb[0].mxu0
    %v11209 = vadd.f32 %v10788, %v11208
    %v11210 = vpop.f32.mrb[0].mxu0
    %v11211 = vpop.f32.mrb[0].mxu0
    %v11212 = vadd.f32 %v10788, %v11211
    %v11213 = vpop.f32.mrb[0].mxu0
    %11214 = vmatprep.mubr.bf16.mxu0 %v10408
    %11215 = vmatmul.mubr.bf16.gmra.mrb[0].mxu0 %v10407
    %v11216 = vpop.f32.mrb[0].mxu0
    %v11217 = vadd.f32 %v10788, %v11216
    %v11218 = vpop.f32.mrb[0].mxu0
    %v11219 = vpop.f32.mrb[0].mxu0
    %v11220 = vadd.f32 %v10788, %v11219
    %v11221 = vpop.f32.mrb[0].mxu0
    %11222 = vmatprep.mubr.bf16.mxu0 %v10416
    %11223 = vmatmul.mubr.bf16.gmra.mrb[0].mxu0 %v10415
    %v11224 = vpop.f32.mrb[0].mxu0
    %v11225 = vadd.f32 %v10788, %v11224
    %v11226 = vpop.f32.mrb[0].mxu0
    %v11227 = vpop.f32.mrb[0].mxu0
    %v11228 = vadd.f32 %v10788, %v11227
    %v11229 = vpop.f32.mrb[0].mxu0
    %11230 = vmatprep.mubr.bf16.mxu0 %v10424
    %11231 = vmatmul.mubr.bf16.gmra.mrb[0].mxu0 %v10423
    %v11232 = vpop.f32.mrb[0].mxu0
    %v11233 = vadd.f32 %v10788, %v11232
    %v11234 = vpop.f32.mrb[0].mxu0
    %v11235 = vpop.f32.mrb[0].mxu0
    %v11236 = vadd.f32 %v10788, %v11235
    %v11237 = vpop.f32.mrb[0].mxu0
    %11238 = vmatprep.mubr.bf16.mxu0 %v10432
    %11239 = vmatmul.mubr.bf16.gmra.mrb[0].mxu0 %v10431
    %v11240 = vpop.f32.mrb[0].mxu0
    %v11241 = vadd.f32 %v10788, %v11240
    %v11242 = vpop.f32.mrb[0].mxu0
    %v11243 = vpop.f32.mrb[0].mxu0
    %v11244 = vadd.f32 %v10788, %v11243
    %v11245 = vpop.f32.mrb[0].mxu0
    %11246 = vmatprep.mubr.bf16.mxu0 %v10440
    %11247 = vmatmul.mubr.bf16.gmra.mrb[0].mxu0 %v10439
    %v11248 = vpop.f32.mrb[0].mxu0
    %v11249 = vadd.f32 %v10788, %v11248
    %v11250 = vpop.f32.mrb[0].mxu0
    %v11251 = vpop.f32.mrb[0].mxu0
    %v11252 = vadd.f32 %v10788, %v11251
    %v11253 = vpop.f32.mrb[0].mxu0
    %11254 = vmatprep.mubr.bf16.mxu0 %v10448
    %11255 = vmatmul.mubr.bf16.gmra.mrb[0].mxu0 %v10447
    %v11256 = vpop.f32.mrb[0].mxu0
    %v11257 = vadd.f32 %v10788, %v11256
    %v11258 = vpop.f32.mrb[0].mxu0
    %v11259 = vpop.f32.mrb[0].mxu0
    %v11260 = vadd.f32 %v10788, %v11259
    %v11261 = vpop.f32.mrb[0].mxu0
    %11262 = vmatprep.mubr.bf16.mxu0 %v10456
    %11263 = vmatmul.mubr.bf16.gmra.mrb[0].mxu0 %v10455
    %v11264 = vpop.f32.mrb[0].mxu0
    %v11265 = vadd.f32 %v10788, %v11264
    %v11266 = vpop.f32.mrb[0].mxu0
    %v11267 = vpop.f32.mrb[0].mxu0
    %v11268 = vadd.f32 %v10788, %v11267
    %v11269 = vpop.f32.mrb[0].mxu0
    %11270 = vmatprep.mubr.bf16.mxu0 %v10464
    %11271 = vmatmul.mubr.bf16.gmra.mrb[0].mxu0 %v10463
    %v11272 = vpop.f32.mrb[0].mxu0
    %v11273 = vadd.f32 %v10788, %v11272
    %v11274 = vpop.f32.mrb[0].mxu0
    %v11275 = vpop.f32.mrb[0].mxu0
    %v11276 = vadd.f32 %v10788, %v11275
    %v11277 = vpop.f32.mrb[0].mxu0
    %11278 = vmatprep.mubr.bf16.mxu0 %v10472
    %11279 = vmatmul.mubr.bf16.gmra.mrb[0].mxu0 %v10471
    %v11280 = vpop.f32.mrb[0].mxu0
    %v11281 = vadd.f32 %v10788, %v11280
    %v11282 = vpop.f32.mrb[0].mxu0
    %v11283 = vpop.f32.mrb[0].mxu0
    %v11284 = vadd.f32 %v10788, %v11283
    %v11285 = vpop.f32.mrb[0].mxu0
    %11286 = vmatprep.mubr.bf16.mxu0 %v10480
    %11287 = vmatmul.mubr.bf16.gmra.mrb[0].mxu0 %v10479
    %v11288 = vpop.f32.mrb[0].mxu0
    %v11289 = vadd.f32 %v10788, %v11288
    %v11290 = vpop.f32.mrb[0].mxu0
    %v11291 = vpop.f32.mrb[0].mxu0
    %v11292 = vadd.f32 %v10788, %v11291
    %v11293 = vpop.f32.mrb[0].mxu0
    %11294 = vmatprep.mubr.bf16.mxu0 %v10488
    %11295 = vmatmul.mubr.bf16.gmra.mrb[0].mxu0 %v10487
    %v11296 = vpop.f32.mrb[0].mxu0
    %v11297 = vadd.f32 %v10788, %v11296
    %v11298 = vpop.f32.mrb[0].mxu0
    %v11299 = vpop.f32.mrb[0].mxu0
    %v11300 = vadd.f32 %v10788, %v11299
    %v11301 = vpop.f32.mrb[0].mxu0
    %11302 = vmatprep.mubr.bf16.mxu0 %v10496
    %11303 = vmatmul.mubr.bf16.gmra.mrb[0].mxu0 %v10495
    %v11304 = vpop.f32.mrb[0].mxu0
    %v11305 = vadd.f32 %v10788, %v11304
    %v11306 = vpop.f32.mrb[0].mxu0
    %v11307 = vpop.f32.mrb[0].mxu0
    %v11308 = vadd.f32 %v10788, %v11307
    %v11309 = vpop.f32.mrb[0].mxu0
    %11310 = vmatprep.mubr.bf16.mxu0 %v10504
    %11311 = vmatmul.mubr.bf16.gmra.mrb[0].mxu0 %v10503
    %v11312 = vpop.f32.mrb[0].mxu0
    %v11313 = vadd.f32 %v10788, %v11312
    %v11314 = vpop.f32.mrb[0].mxu0
    %v11315 = vpop.f32.mrb[0].mxu0
    %v11316 = vadd.f32 %v10788, %v11315
    %v11317 = vpop.f32.mrb[0].mxu0
    %11318 = vmatprep.mubr.bf16.mxu0 %v10512
    %11319 = vmatmul.mubr.bf16.gmra.mrb[0].mxu0 %v10511
    %v11320 = vpop.f32.mrb[0].mxu0
    %v11321 = vadd.f32 %v10788, %v11320
    %v11322 = vpop.f32.mrb[0].mxu0
    %v11323 = vpop.f32.mrb[0].mxu0
    %v11324 = vadd.f32 %v10788, %v11323
    %v11325 = vpop.f32.mrb[0].mxu0
    %11326 = vmatprep.mubr.bf16.mxu0 %v10520
    %11327 = vmatmul.mubr.bf16.gmra.mrb[0].mxu0 %v10519
    %v11328 = vpop.f32.mrb[0].mxu0
    %v11329 = vadd.f32 %v10788, %v11328
    %v11330 = vpop.f32.mrb[0].mxu0
    %v11331 = vpop.f32.mrb[0].mxu0
    %v11332 = vadd.f32 %v10788, %v11331
    %v11333 = vpop.f32.mrb[0].mxu0
    %11334 = vmatprep.mubr.bf16.mxu0 %v10528
    %11335 = vmatmul.mubr.bf16.gmra.mrb[0].mxu0 %v10527
    %v11336 = vpop.f32.mrb[0].mxu0
    %v11337 = vadd.f32 %v10788, %v11336
    %v11338 = vpop.f32.mrb[0].mxu0
    %v11339 = vpop.f32.mrb[0].mxu0
    %v11340 = vadd.f32 %v10788, %v11339
    %v11341 = vpop.f32.mrb[0].mxu0
    %11342 = vmatprep.mubr.bf16.mxu0 %v10536
    %11343 = vmatmul.mubr.bf16.gmra.mrb[0].mxu0 %v10535
    %v11344 = vpop.f32.mrb[0].mxu0
    %v11345 = vadd.f32 %v10788, %v11344
    %v11346 = vpop.f32.mrb[0].mxu0
    %v11347 = vpop.f32.mrb[0].mxu0
    %v11348 = vadd.f32 %v10788, %v11347
    %v11349 = vpop.f32.mrb[0].mxu0
    %11350 = vmatprep.mubr.bf16.mxu0 %v10544
    %11351 = vmatmul.mubr.bf16.gmra.mrb[0].mxu0 %v10543
    %v11352 = vpop.f32.mrb[0].mxu0
    %v11353 = vadd.f32 %v10788, %v11352
    %v11354 = vpop.f32.mrb[0].mxu0
    %v11355 = vpop.f32.mrb[0].mxu0
    %v11356 = vadd.f32 %v10788, %v11355
    %v11357 = vpop.f32.mrb[0].mxu0
    %11358 = vmatprep.mubr.bf16.mxu0 %v10552
    %11359 = vmatmul.mubr.bf16.gmra.mrb[0].mxu0 %v10551
    %v11360 = vpop.f32.mrb[0].mxu0
    %v11361 = vadd.f32 %v10788, %v11360
    %v11362 = vpop.f32.mrb[0].mxu0
    %v11363 = vpop.f32.mrb[0].mxu0
    %v11364 = vadd.f32 %v10788, %v11363
    %v11365 = vpop.f32.mrb[0].mxu0
    %11366 = vmatprep.mubr.bf16.mxu0 %v10560
    %11367 = vmatmul.mubr.bf16.gmra.mrb[0].mxu0 %v10559
    %v11368 = vpop.f32.mrb[0].mxu0
    %v11369 = vadd.f32 %v10788, %v11368
    %v11370 = vpop.f32.mrb[0].mxu0
    %v11371 = vpop.f32.mrb[0].mxu0
    %v11372 = vadd.f32 %v10788, %v11371
    %v11373 = vpop.f32.mrb[0].mxu0
    %11374 = vmatprep.mubr.bf16.mxu0 %v10568
    %11375 = vmatmul.mubr.bf16.gmra.mrb[0].mxu0 %v10567
    %v11376 = vpop.f32.mrb[0].mxu0
    %v11377 = vadd.f32 %v10788, %v11376
    %v11378 = vpop.f32.mrb[0].mxu0
    %v11379 = vpop.f32.mrb[0].mxu0
    %v11380 = vadd.f32 %v10788, %v11379
    %v11381 = vpop.f32.mrb[0].mxu0
    %11382 = vmatprep.mubr.bf16.mxu0 %v10576
    %11383 = vmatmul.mubr.bf16.gmra.mrb[0].mxu0 %v10575
    %v11384 = vpop.f32.mrb[0].mxu0
    %v11385 = vadd.f32 %v10788, %v11384
    %v11386 = vpop.f32.mrb[0].mxu0
    %v11387 = vpop.f32.mrb[0].mxu0
    %v11388 = vadd.f32 %v10788, %v11387
    %v11389 = vpop.f32.mrb[0].mxu0
    %11390 = vmatprep.mubr.bf16.mxu0 %v10584
    %11391 = vmatmul.mubr.bf16.gmra.mrb[0].mxu0 %v10583
    %v11392 = vpop.f32.mrb[0].mxu0
    %v11393 = vadd.f32 %v10788, %v11392
    %v11394 = vpop.f32.mrb[0].mxu0
    %v11395 = vpop.f32.mrb[0].mxu0
    %v11396 = vadd.f32 %v10788, %v11395
    %v11397 = vpop.f32.mrb[0].mxu0
    %11398 = vmatprep.mubr.bf16.mxu0 %v10592
    %11399 = vmatmul.mubr.bf16.gmra.mrb[0].mxu0 %v10591
    %v11400 = vpop.f32.mrb[0].mxu0
    %v11401 = vadd.f32 %v10788, %v11400
    %v11402 = vpop.f32.mrb[0].mxu0
    %v11403 = vpop.f32.mrb[0].mxu0
    %v11404 = vadd.f32 %v10788, %v11403
    %v11405 = vpop.f32.mrb[0].mxu0
    %11406 = vmatprep.mubr.bf16.mxu0 %v10600
    %11407 = vmatmul.mubr.bf16.gmra.mrb[0].mxu0 %v10599
    %v11408 = vpop.f32.mrb[0].mxu0
    %v11409 = vadd.f32 %v10788, %v11408
    %v11410 = vpop.f32.mrb[0].mxu0
    %v11411 = vpop.f32.mrb[0].mxu0
    %v11412 = vadd.f32 %v10788, %v11411
    %v11413 = vpop.f32.mrb[0].mxu0
    %11414 = vmatprep.mubr.bf16.mxu0 %v10608
    %11415 = vmatmul.mubr.bf16.gmra.mrb[0].mxu0 %v10607
    %v11416 = vpop.f32.mrb[0].mxu0
    %v11417 = vadd.f32 %v10788, %v11416
    %v11418 = vpop.f32.mrb[0].mxu0
    %v11419 = vpop.f32.mrb[0].mxu0
    %v11420 = vadd.f32 %v10788, %v11419
    %v11421 = vpop.f32.mrb[0].mxu0
    %11422 = vmatprep.mubr.bf16.mxu0 %v10616
    %11423 = vmatmul.mubr.bf16.gmra.mrb[0].mxu0 %v10615
    %v11424 = vpop.f32.mrb[0].mxu0
    %v11425 = vadd.f32 %v10788, %v11424
    %v11426 = vpop.f32.mrb[0].mxu0
    %v11427 = vpop.f32.mrb[0].mxu0
    %v11428 = vadd.f32 %v10788, %v11427
    %v11429 = vpop.f32.mrb[0].mxu0
    %11430 = vmatprep.mubr.bf16.mxu0 %v10624
    %11431 = vmatmul.mubr.bf16.gmra.mrb[0].mxu0 %v10623
    %v11432 = vpop.f32.mrb[0].mxu0
    %v11433 = vadd.f32 %v10788, %v11432
    %v11434 = vpop.f32.mrb[0].mxu0
    %v11435 = vpop.f32.mrb[0].mxu0
    %v11436 = vadd.f32 %v10788, %v11435
    %v11437 = vpop.f32.mrb[0].mxu0
    %11438 = vmatprep.mubr.bf16.mxu0 %v10632
    %11439 = vmatmul.mubr.bf16.gmra.mrb[0].mxu0 %v10631
    %v11440 = vpop.f32.mrb[0].mxu0
    %v11441 = vadd.f32 %v10788, %v11440
    %v11442 = vpop.f32.mrb[0].mxu0
    %v11443 = vpop.f32.mrb[0].mxu0
    %v11444 = vadd.f32 %v10788, %v11443
    %v11445 = vpop.f32.mrb[0].mxu0
    %11446 = vmatprep.mubr.bf16.mxu0 %v10640
    %11447 = vmatmul.mubr.bf16.gmra.mrb[0].mxu0 %v10639
    %v11448 = vpop.f32.mrb[0].mxu0
    %v11449 = vadd.f32 %v10788, %v11448
    %v11450 = vpop.f32.mrb[0].mxu0
    %v11451 = vpop.f32.mrb[0].mxu0
    %v11452 = vadd.f32 %v10788, %v11451
    %v11453 = vpop.f32.mrb[0].mxu0
    %11454 = vmatprep.mubr.bf16.mxu0 %v10648
    %11455 = vmatmul.mubr.bf16.gmra.mrb[0].mxu0 %v10647
    %v11456 = vpop.f32.mrb[0].mxu0
    %v11457 = vadd.f32 %v10788, %v11456
    %v11458 = vpop.f32.mrb[0].mxu0
    %v11459 = vpop.f32.mrb[0].mxu0
    %v11460 = vadd.f32 %v10788, %v11459
    %v11461 = vpop.f32.mrb[0].mxu0
    %11462 = vdwg.mxu0
    %11463 = vmatprep.subr.bf16.mxu0 0
    %11464 = vmatpush1.bf16.msra.mxu0 %v11062
    %11465 = vmatprep.subr.bf16.mxu0 0
    %11466 = vmatpush1.bf16.msra.mxu0 %v11063
    %11467 = vmatprep.subr.bf16.mxu0 0
    %11468 = vmatpush1.bf16.msra.mxu0 %v11064
    %11469 = vmatprep.subr.bf16.mxu0 0
    %11470 = vmatpush1.bf16.msra.mxu0 %v11065
    %11471 = vmatprep.subr.bf16.mxu0 0
    %11472 = vmatpush1.bf16.msra.mxu0 %v11066
    %11473 = vmatprep.subr.bf16.mxu0 0
    %11474 = vmatpush1.bf16.msra.mxu0 %v11067
    %11475 = vmatprep.subr.bf16.mxu0 0
    %11476 = vmatpush1.bf16.msra.mxu0 %v11068
    %11477 = vmatprep.subr.bf16.mxu0 0
    %11478 = vmatpush1.bf16.msra.mxu0 %v11069
    %11479 = vmatprep.subr.bf16.mxu0 0
    %11480 = vmatpush1.bf16.msra.mxu0 %v11070
    %11481 = vmatprep.subr.bf16.mxu0 0
    %11482 = vmatpush1.bf16.msra.mxu0 %v11071
    %11483 = vmatprep.subr.bf16.mxu0 0
    %11484 = vmatpush1.bf16.msra.mxu0 %v11072
    %11485 = vmatprep.subr.bf16.mxu0 0
    %11486 = vmatpush1.bf16.msra.mxu0 %v11073
    %11487 = vmatprep.subr.bf16.mxu0 0
    %11488 = vmatpush1.bf16.msra.mxu0 %v11074
    %11489 = vmatprep.subr.bf16.mxu0 0
    %11490 = vmatpush1.bf16.msra.mxu0 %v11075
    %11491 = vmatprep.subr.bf16.mxu0 0
    %11492 = vmatpush1.bf16.msra.mxu0 %v11076
    %11493 = vmatprep.subr.bf16.mxu0 0
    %11494 = vmatpush1.bf16.msra.mxu0 %v11077
    %11495 = vmatprep.mubr.bf16.mxu0 %v10402
    %11496 = vmatmul.mubr.bf16.gmra.mrb[0].mxu0 %v10401
    %v11497 = vpop.f32.mrb[0].mxu0
    %v11498 = vadd.f32 %v11209, %v11497
    %v11499 = vpop.f32.mrb[0].mxu0
    %v11500 = vpop.f32.mrb[0].mxu0
    %v11501 = vadd.f32 %v11212, %v11500
    %v11502 = vpop.f32.mrb[0].mxu0
    %11503 = vmatprep.mubr.bf16.mxu0 %v10410
    %11504 = vmatmul.mubr.bf16.gmra.mrb[0].mxu0 %v10409
    %v11505 = vpop.f32.mrb[0].mxu0
    %v11506 = vadd.f32 %v11217, %v11505
    %v11507 = vpop.f32.mrb[0].mxu0
    %v11508 = vpop.f32.mrb[0].mxu0
    %v11509 = vadd.f32 %v11220, %v11508
    %v11510 = vpop.f32.mrb[0].mxu0
    %11511 = vmatprep.mubr.bf16.mxu0 %v10418
    %11512 = vmatmul.mubr.bf16.gmra.mrb[0].mxu0 %v10417
    %v11513 = vpop.f32.mrb[0].mxu0
    %v11514 = vadd.f32 %v11225, %v11513
    %v11515 = vpop.f32.mrb[0].mxu0
    %v11516 = vpop.f32.mrb[0].mxu0
    %v11517 = vadd.f32 %v11228, %v11516
    %v11518 = vpop.f32.mrb[0].mxu0
    %11519 = vmatprep.mubr.bf16.mxu0 %v10426
    %11520 = vmatmul.mubr.bf16.gmra.mrb[0].mxu0 %v10425
    %v11521 = vpop.f32.mrb[0].mxu0
    %v11522 = vadd.f32 %v11233, %v11521
    %v11523 = vpop.f32.mrb[0].mxu0
    %v11524 = vpop.f32.mrb[0].mxu0
    %v11525 = vadd.f32 %v11236, %v11524
    %v11526 = vpop.f32.mrb[0].mxu0
    %11527 = vmatprep.mubr.bf16.mxu0 %v10434
    %11528 = vmatmul.mubr.bf16.gmra.mrb[0].mxu0 %v10433
    %v11529 = vpop.f32.mrb[0].mxu0
    %v11530 = vadd.f32 %v11241, %v11529
    %v11531 = vpop.f32.mrb[0].mxu0
    %v11532 = vpop.f32.mrb[0].mxu0
    %v11533 = vadd.f32 %v11244, %v11532
    %v11534 = vpop.f32.mrb[0].mxu0
    %11535 = vmatprep.mubr.bf16.mxu0 %v10442
    %11536 = vmatmul.mubr.bf16.gmra.mrb[0].mxu0 %v10441
    %v11537 = vpop.f32.mrb[0].mxu0
    %v11538 = vadd.f32 %v11249, %v11537
    %v11539 = vpop.f32.mrb[0].mxu0
    %v11540 = vpop.f32.mrb[0].mxu0
    %v11541 = vadd.f32 %v11252, %v11540
    %v11542 = vpop.f32.mrb[0].mxu0
    %11543 = vmatprep.mubr.bf16.mxu0 %v10450
    %11544 = vmatmul.mubr.bf16.gmra.mrb[0].mxu0 %v10449
    %v11545 = vpop.f32.mrb[0].mxu0
    %v11546 = vadd.f32 %v11257, %v11545
    %v11547 = vpop.f32.mrb[0].mxu0
    %v11548 = vpop.f32.mrb[0].mxu0
    %v11549 = vadd.f32 %v11260, %v11548
    %v11550 = vpop.f32.mrb[0].mxu0
    %11551 = vmatprep.mubr.bf16.mxu0 %v10458
    %11552 = vmatmul.mubr.bf16.gmra.mrb[0].mxu0 %v10457
    %v11553 = vpop.f32.mrb[0].mxu0
    %v11554 = vadd.f32 %v11265, %v11553
    %v11555 = vpop.f32.mrb[0].mxu0
    %v11556 = vpop.f32.mrb[0].mxu0
    %v11557 = vadd.f32 %v11268, %v11556
    %v11558 = vpop.f32.mrb[0].mxu0
    %11559 = vmatprep.mubr.bf16.mxu0 %v10466
    %11560 = vmatmul.mubr.bf16.gmra.mrb[0].mxu0 %v10465
    %v11561 = vpop.f32.mrb[0].mxu0
    %v11562 = vadd.f32 %v11273, %v11561
    %v11563 = vpop.f32.mrb[0].mxu0
    %v11564 = vpop.f32.mrb[0].mxu0
    %v11565 = vadd.f32 %v11276, %v11564
    %v11566 = vpop.f32.mrb[0].mxu0
    %11567 = vmatprep.mubr.bf16.mxu0 %v10474
    %11568 = vmatmul.mubr.bf16.gmra.mrb[0].mxu0 %v10473
    %v11569 = vpop.f32.mrb[0].mxu0
    %v11570 = vadd.f32 %v11281, %v11569
    %v11571 = vpop.f32.mrb[0].mxu0
    %v11572 = vpop.f32.mrb[0].mxu0
    %v11573 = vadd.f32 %v11284, %v11572
    %v11574 = vpop.f32.mrb[0].mxu0
    %11575 = vmatprep.mubr.bf16.mxu0 %v10482
    %11576 = vmatmul.mubr.bf16.gmra.mrb[0].mxu0 %v10481
    %v11577 = vpop.f32.mrb[0].mxu0
    %v11578 = vadd.f32 %v11289, %v11577
    %v11579 = vpop.f32.mrb[0].mxu0
    %v11580 = vpop.f32.mrb[0].mxu0
    %v11581 = vadd.f32 %v11292, %v11580
    %v11582 = vpop.f32.mrb[0].mxu0
    %11583 = vmatprep.mubr.bf16.mxu0 %v10490
    %11584 = vmatmul.mubr.bf16.gmra.mrb[0].mxu0 %v10489
    %v11585 = vpop.f32.mrb[0].mxu0
    %v11586 = vadd.f32 %v11297, %v11585
    %v11587 = vpop.f32.mrb[0].mxu0
    %v11588 = vpop.f32.mrb[0].mxu0
    %v11589 = vadd.f32 %v11300, %v11588
    %v11590 = vpop.f32.mrb[0].mxu0
    %11591 = vmatprep.mubr.bf16.mxu0 %v10498
    %11592 = vmatmul.mubr.bf16.gmra.mrb[0].mxu0 %v10497
    %v11593 = vpop.f32.mrb[0].mxu0
    %v11594 = vadd.f32 %v11305, %v11593
    %v11595 = vpop.f32.mrb[0].mxu0
    %v11596 = vpop.f32.mrb[0].mxu0
    %v11597 = vadd.f32 %v11308, %v11596
    %v11598 = vpop.f32.mrb[0].mxu0
    %11599 = vmatprep.mubr.bf16.mxu0 %v10506
    %11600 = vmatmul.mubr.bf16.gmra.mrb[0].mxu0 %v10505
    %v11601 = vpop.f32.mrb[0].mxu0
    %v11602 = vadd.f32 %v11313, %v11601
    %v11603 = vpop.f32.mrb[0].mxu0
    %v11604 = vpop.f32.mrb[0].mxu0
    %v11605 = vadd.f32 %v11316, %v11604
    %v11606 = vpop.f32.mrb[0].mxu0
    %11607 = vmatprep.mubr.bf16.mxu0 %v10514
    %11608 = vmatmul.mubr.bf16.gmra.mrb[0].mxu0 %v10513
    %v11609 = vpop.f32.mrb[0].mxu0
    %v11610 = vadd.f32 %v11321, %v11609
    %v11611 = vpop.f32.mrb[0].mxu0
    %v11612 = vpop.f32.mrb[0].mxu0
    %v11613 = vadd.f32 %v11324, %v11612
    %v11614 = vpop.f32.mrb[0].mxu0
    %11615 = vmatprep.mubr.bf16.mxu0 %v10522
    %11616 = vmatmul.mubr.bf16.gmra.mrb[0].mxu0 %v10521
    %v11617 = vpop.f32.mrb[0].mxu0
    %v11618 = vadd.f32 %v11329, %v11617
    %v11619 = vpop.f32.mrb[0].mxu0
    %v11620 = vpop.f32.mrb[0].mxu0
    %v11621 = vadd.f32 %v11332, %v11620
    %v11622 = vpop.f32.mrb[0].mxu0
    %11623 = vmatprep.mubr.bf16.mxu0 %v10530
    %11624 = vmatmul.mubr.bf16.gmra.mrb[0].mxu0 %v10529
    %v11625 = vpop.f32.mrb[0].mxu0
    %v11626 = vadd.f32 %v11337, %v11625
    %v11627 = vpop.f32.mrb[0].mxu0
    %v11628 = vpop.f32.mrb[0].mxu0
    %v11629 = vadd.f32 %v11340, %v11628
    %v11630 = vpop.f32.mrb[0].mxu0
    %11631 = vmatprep.mubr.bf16.mxu0 %v10538
    %11632 = vmatmul.mubr.bf16.gmra.mrb[0].mxu0 %v10537
    %v11633 = vpop.f32.mrb[0].mxu0
    %v11634 = vadd.f32 %v11345, %v11633
    %v11635 = vpop.f32.mrb[0].mxu0
    %v11636 = vpop.f32.mrb[0].mxu0
    %v11637 = vadd.f32 %v11348, %v11636
    %v11638 = vpop.f32.mrb[0].mxu0
    %11639 = vmatprep.mubr.bf16.mxu0 %v10546
    %11640 = vmatmul.mubr.bf16.gmra.mrb[0].mxu0 %v10545
    %v11641 = vpop.f32.mrb[0].mxu0
    %v11642 = vadd.f32 %v11353, %v11641
    %v11643 = vpop.f32.mrb[0].mxu0
    %v11644 = vpop.f32.mrb[0].mxu0
    %v11645 = vadd.f32 %v11356, %v11644
    %v11646 = vpop.f32.mrb[0].mxu0
    %11647 = vmatprep.mubr.bf16.mxu0 %v10554
    %11648 = vmatmul.mubr.bf16.gmra.mrb[0].mxu0 %v10553
    %v11649 = vpop.f32.mrb[0].mxu0
    %v11650 = vadd.f32 %v11361, %v11649
    %v11651 = vpop.f32.mrb[0].mxu0
    %v11652 = vpop.f32.mrb[0].mxu0
    %v11653 = vadd.f32 %v11364, %v11652
    %v11654 = vpop.f32.mrb[0].mxu0
    %11655 = vmatprep.mubr.bf16.mxu0 %v10562
    %11656 = vmatmul.mubr.bf16.gmra.mrb[0].mxu0 %v10561
    %v11657 = vpop.f32.mrb[0].mxu0
    %v11658 = vadd.f32 %v11369, %v11657
    %v11659 = vpop.f32.mrb[0].mxu0
    %v11660 = vpop.f32.mrb[0].mxu0
    %v11661 = vadd.f32 %v11372, %v11660
    %v11662 = vpop.f32.mrb[0].mxu0
    %11663 = vmatprep.mubr.bf16.mxu0 %v10570
    %11664 = vmatmul.mubr.bf16.gmra.mrb[0].mxu0 %v10569
    %v11665 = vpop.f32.mrb[0].mxu0
    %v11666 = vadd.f32 %v11377, %v11665
    %v11667 = vpop.f32.mrb[0].mxu0
    %v11668 = vpop.f32.mrb[0].mxu0
    %v11669 = vadd.f32 %v11380, %v11668
    %v11670 = vpop.f32.mrb[0].mxu0
    %11671 = vmatprep.mubr.bf16.mxu0 %v10578
    %11672 = vmatmul.mubr.bf16.gmra.mrb[0].mxu0 %v10577
    %v11673 = vpop.f32.mrb[0].mxu0
    %v11674 = vadd.f32 %v11385, %v11673
    %v11675 = vpop.f32.mrb[0].mxu0
    %v11676 = vpop.f32.mrb[0].mxu0
    %v11677 = vadd.f32 %v11388, %v11676
    %v11678 = vpop.f32.mrb[0].mxu0
    %11679 = vmatprep.mubr.bf16.mxu0 %v10586
    %11680 = vmatmul.mubr.bf16.gmra.mrb[0].mxu0 %v10585
    %v11681 = vpop.f32.mrb[0].mxu0
    %v11682 = vadd.f32 %v11393, %v11681
    %v11683 = vpop.f32.mrb[0].mxu0
    %v11684 = vpop.f32.mrb[0].mxu0
    %v11685 = vadd.f32 %v11396, %v11684
    %v11686 = vpop.f32.mrb[0].mxu0
    %11687 = vmatprep.mubr.bf16.mxu0 %v10594
    %11688 = vmatmul.mubr.bf16.gmra.mrb[0].mxu0 %v10593
    %v11689 = vpop.f32.mrb[0].mxu0
    %v11690 = vadd.f32 %v11401, %v11689
    %v11691 = vpop.f32.mrb[0].mxu0
    %v11692 = vpop.f32.mrb[0].mxu0
    %v11693 = vadd.f32 %v11404, %v11692
    %v11694 = vpop.f32.mrb[0].mxu0
    %11695 = vmatprep.mubr.bf16.mxu0 %v10602
    %11696 = vmatmul.mubr.bf16.gmra.mrb[0].mxu0 %v10601
    %v11697 = vpop.f32.mrb[0].mxu0
    %v11698 = vadd.f32 %v11409, %v11697
    %v11699 = vpop.f32.mrb[0].mxu0
    %v11700 = vpop.f32.mrb[0].mxu0
    %v11701 = vadd.f32 %v11412, %v11700
    %v11702 = vpop.f32.mrb[0].mxu0
    %11703 = vmatprep.mubr.bf16.mxu0 %v10610
    %11704 = vmatmul.mubr.bf16.gmra.mrb[0].mxu0 %v10609
    %v11705 = vpop.f32.mrb[0].mxu0
    %v11706 = vadd.f32 %v11417, %v11705
    %v11707 = vpop.f32.mrb[0].mxu0
    %v11708 = vpop.f32.mrb[0].mxu0
    %v11709 = vadd.f32 %v11420, %v11708
    %v11710 = vpop.f32.mrb[0].mxu0
    %11711 = vmatprep.mubr.bf16.mxu0 %v10618
    %11712 = vmatmul.mubr.bf16.gmra.mrb[0].mxu0 %v10617
    %v11713 = vpop.f32.mrb[0].mxu0
    %v11714 = vadd.f32 %v11425, %v11713
    %v11715 = vpop.f32.mrb[0].mxu0
    %v11716 = vpop.f32.mrb[0].mxu0
    %v11717 = vadd.f32 %v11428, %v11716
    %v11718 = vpop.f32.mrb[0].mxu0
    %11719 = vmatprep.mubr.bf16.mxu0 %v10626
    %11720 = vmatmul.mubr.bf16.gmra.mrb[0].mxu0 %v10625
    %v11721 = vpop.f32.mrb[0].mxu0
    %v11722 = vadd.f32 %v11433, %v11721
    %v11723 = vpop.f32.mrb[0].mxu0
    %v11724 = vpop.f32.mrb[0].mxu0
    %v11725 = vadd.f32 %v11436, %v11724
    %v11726 = vpop.f32.mrb[0].mxu0
    %11727 = vmatprep.mubr.bf16.mxu0 %v10634
    %11728 = vmatmul.mubr.bf16.gmra.mrb[0].mxu0 %v10633
    %v11729 = vpop.f32.mrb[0].mxu0
    %v11730 = vadd.f32 %v11441, %v11729
    %v11731 = vpop.f32.mrb[0].mxu0
    %v11732 = vpop.f32.mrb[0].mxu0
    %v11733 = vadd.f32 %v11444, %v11732
    %v11734 = vpop.f32.mrb[0].mxu0
    %11735 = vmatprep.mubr.bf16.mxu0 %v10642
    %11736 = vmatmul.mubr.bf16.gmra.mrb[0].mxu0 %v10641
    %v11737 = vpop.f32.mrb[0].mxu0
    %v11738 = vadd.f32 %v11449, %v11737
    %v11739 = vpop.f32.mrb[0].mxu0
    %v11740 = vpop.f32.mrb[0].mxu0
    %v11741 = vadd.f32 %v11452, %v11740
    %v11742 = vpop.f32.mrb[0].mxu0
    %11743 = vmatprep.mubr.bf16.mxu0 %v10650
    %11744 = vmatmul.mubr.bf16.gmra.mrb[0].mxu0 %v10649
    %v11745 = vpop.f32.mrb[0].mxu0
    %v11746 = vadd.f32 %v11457, %v11745
    %v11747 = vpop.f32.mrb[0].mxu0
    %v11748 = vpop.f32.mrb[0].mxu0
    %v11749 = vadd.f32 %v11460, %v11748
    %v11750 = vpop.f32.mrb[0].mxu0
    %11751 = vdwg.mxu0
    %11752 = vmatprep.subr.bf16.mxu0 0
    %11753 = vmatpush1.bf16.msra.mxu0 %v11078
    %11754 = vmatprep.subr.bf16.mxu0 0
    %11755 = vmatpush1.bf16.msra.mxu0 %v11079
    %11756 = vmatprep.subr.bf16.mxu0 0
    %11757 = vmatpush1.bf16.msra.mxu0 %v11080
    %11758 = vmatprep.subr.bf16.mxu0 0
    %11759 = vmatpush1.bf16.msra.mxu0 %v11081
    %11760 = vmatprep.subr.bf16.mxu0 0
    %11761 = vmatpush1.bf16.msra.mxu0 %v11082
    %11762 = vmatprep.subr.bf16.mxu0 0
    %11763 = vmatpush1.bf16.msra.mxu0 %v11083
    %11764 = vmatprep.subr.bf16.mxu0 0
    %11765 = vmatpush1.bf16.msra.mxu0 %v11084
    %11766 = vmatprep.subr.bf16.mxu0 0
    %11767 = vmatpush1.bf16.msra.mxu0 %v11085
    %11768 = vmatprep.subr.bf16.mxu0 0
    %11769 = vmatpush1.bf16.msra.mxu0 %v11086
    %11770 = vmatprep.subr.bf16.mxu0 0
    %11771 = vmatpush1.bf16.msra.mxu0 %v11087
    %11772 = vmatprep.subr.bf16.mxu0 0
    %11773 = vmatpush1.bf16.msra.mxu0 %v11088
    %11774 = vmatprep.subr.bf16.mxu0 0
    %11775 = vmatpush1.bf16.msra.mxu0 %v11089
    %11776 = vmatprep.subr.bf16.mxu0 0
    %11777 = vmatpush1.bf16.msra.mxu0 %v11090
    %11778 = vmatprep.subr.bf16.mxu0 0
    %11779 = vmatpush1.bf16.msra.mxu0 %v11091
    %11780 = vmatprep.subr.bf16.mxu0 0
    %11781 = vmatpush1.bf16.msra.mxu0 %v11092
    %11782 = vmatprep.subr.bf16.mxu0 0
    %11783 = vmatpush1.bf16.msra.mxu0 %v11093
    %11784 = vmatprep.mubr.bf16.mxu0 %v10404
    %11785 = vmatmul.mubr.bf16.gmra.mrb[0].mxu0 %v10403
    %v11786 = vpop.f32.mrb[0].mxu0
    %v11787 = vadd.f32 %v11498, %v11786
    %v11788 = vpop.f32.mrb[0].mxu0
    %v11789 = vpop.f32.mrb[0].mxu0
    %v11790 = vadd.f32 %v11501, %v11789
    %v11791 = vpop.f32.mrb[0].mxu0
    %11792 = vmatprep.mubr.bf16.mxu0 %v10412
    %11793 = vmatmul.mubr.bf16.gmra.mrb[0].mxu0 %v10411
    %v11794 = vpop.f32.mrb[0].mxu0
    %v11795 = vadd.f32 %v11506, %v11794
    %v11796 = vpop.f32.mrb[0].mxu0
    %v11797 = vpop.f32.mrb[0].mxu0
    %v11798 = vadd.f32 %v11509, %v11797
    %v11799 = vpop.f32.mrb[0].mxu0
    %11800 = vmatprep.mubr.bf16.mxu0 %v10420
    %11801 = vmatmul.mubr.bf16.gmra.mrb[0].mxu0 %v10419
    %v11802 = vpop.f32.mrb[0].mxu0
    %v11803 = vadd.f32 %v11514, %v11802
    %v11804 = vpop.f32.mrb[0].mxu0
    %v11805 = vpop.f32.mrb[0].mxu0
    %v11806 = vadd.f32 %v11517, %v11805
    %v11807 = vpop.f32.mrb[0].mxu0
    %11808 = vmatprep.mubr.bf16.mxu0 %v10428
    %11809 = vmatmul.mubr.bf16.gmra.mrb[0].mxu0 %v10427
    %v11810 = vpop.f32.mrb[0].mxu0
    %v11811 = vadd.f32 %v11522, %v11810
    %v11812 = vpop.f32.mrb[0].mxu0
    %v11813 = vpop.f32.mrb[0].mxu0
    %v11814 = vadd.f32 %v11525, %v11813
    %v11815 = vpop.f32.mrb[0].mxu0
    %11816 = vmatprep.mubr.bf16.mxu0 %v10436
    %11817 = vmatmul.mubr.bf16.gmra.mrb[0].mxu0 %v10435
    %v11818 = vpop.f32.mrb[0].mxu0
    %v11819 = vadd.f32 %v11530, %v11818
    %v11820 = vpop.f32.mrb[0].mxu0
    %v11821 = vpop.f32.mrb[0].mxu0
    %v11822 = vadd.f32 %v11533, %v11821
    %v11823 = vpop.f32.mrb[0].mxu0
    %11824 = vmatprep.mubr.bf16.mxu0 %v10444
    %11825 = vmatmul.mubr.bf16.gmra.mrb[0].mxu0 %v10443
    %v11826 = vpop.f32.mrb[0].mxu0
    %v11827 = vadd.f32 %v11538, %v11826
    %v11828 = vpop.f32.mrb[0].mxu0
    %v11829 = vpop.f32.mrb[0].mxu0
    %v11830 = vadd.f32 %v11541, %v11829
    %v11831 = vpop.f32.mrb[0].mxu0
    %11832 = vmatprep.mubr.bf16.mxu0 %v10452
    %11833 = vmatmul.mubr.bf16.gmra.mrb[0].mxu0 %v10451
    %v11834 = vpop.f32.mrb[0].mxu0
    %v11835 = vadd.f32 %v11546, %v11834
    %v11836 = vpop.f32.mrb[0].mxu0
    %v11837 = vpop.f32.mrb[0].mxu0
    %v11838 = vadd.f32 %v11549, %v11837
    %v11839 = vpop.f32.mrb[0].mxu0
    %11840 = vmatprep.mubr.bf16.mxu0 %v10460
    %11841 = vmatmul.mubr.bf16.gmra.mrb[0].mxu0 %v10459
    %v11842 = vpop.f32.mrb[0].mxu0
    %v11843 = vadd.f32 %v11554, %v11842
    %v11844 = vpop.f32.mrb[0].mxu0
    %v11845 = vpop.f32.mrb[0].mxu0
    %v11846 = vadd.f32 %v11557, %v11845
    %v11847 = vpop.f32.mrb[0].mxu0
    %11848 = vmatprep.mubr.bf16.mxu0 %v10468
    %11849 = vmatmul.mubr.bf16.gmra.mrb[0].mxu0 %v10467
    %v11850 = vpop.f32.mrb[0].mxu0
    %v11851 = vadd.f32 %v11562, %v11850
    %v11852 = vpop.f32.mrb[0].mxu0
    %v11853 = vpop.f32.mrb[0].mxu0
    %v11854 = vadd.f32 %v11565, %v11853
    %v11855 = vpop.f32.mrb[0].mxu0
    %11856 = vmatprep.mubr.bf16.mxu0 %v10476
    %11857 = vmatmul.mubr.bf16.gmra.mrb[0].mxu0 %v10475
    %v11858 = vpop.f32.mrb[0].mxu0
    %v11859 = vadd.f32 %v11570, %v11858
    %v11860 = vpop.f32.mrb[0].mxu0
    %v11861 = vpop.f32.mrb[0].mxu0
    %v11862 = vadd.f32 %v11573, %v11861
    %v11863 = vpop.f32.mrb[0].mxu0
    %11864 = vmatprep.mubr.bf16.mxu0 %v10484
    %11865 = vmatmul.mubr.bf16.gmra.mrb[0].mxu0 %v10483
    %v11866 = vpop.f32.mrb[0].mxu0
    %v11867 = vadd.f32 %v11578, %v11866
    %v11868 = vpop.f32.mrb[0].mxu0
    %v11869 = vpop.f32.mrb[0].mxu0
    %v11870 = vadd.f32 %v11581, %v11869
    %v11871 = vpop.f32.mrb[0].mxu0
    %11872 = vmatprep.mubr.bf16.mxu0 %v10492
    %11873 = vmatmul.mubr.bf16.gmra.mrb[0].mxu0 %v10491
    %v11874 = vpop.f32.mrb[0].mxu0
    %v11875 = vadd.f32 %v11586, %v11874
    %v11876 = vpop.f32.mrb[0].mxu0
    %v11877 = vpop.f32.mrb[0].mxu0
    %v11878 = vadd.f32 %v11589, %v11877
    %v11879 = vpop.f32.mrb[0].mxu0
    %11880 = vmatprep.mubr.bf16.mxu0 %v10500
    %11881 = vmatmul.mubr.bf16.gmra.mrb[0].mxu0 %v10499
    %v11882 = vpop.f32.mrb[0].mxu0
    %v11883 = vadd.f32 %v11594, %v11882
    %v11884 = vpop.f32.mrb[0].mxu0
    %v11885 = vpop.f32.mrb[0].mxu0
    %v11886 = vadd.f32 %v11597, %v11885
    %v11887 = vpop.f32.mrb[0].mxu0
    %11888 = vmatprep.mubr.bf16.mxu0 %v10508
    %11889 = vmatmul.mubr.bf16.gmra.mrb[0].mxu0 %v10507
    %v11890 = vpop.f32.mrb[0].mxu0
    %v11891 = vadd.f32 %v11602, %v11890
    %v11892 = vpop.f32.mrb[0].mxu0
    %v11893 = vpop.f32.mrb[0].mxu0
    %v11894 = vadd.f32 %v11605, %v11893
    %v11895 = vpop.f32.mrb[0].mxu0
    %11896 = vmatprep.mubr.bf16.mxu0 %v10516
    %11897 = vmatmul.mubr.bf16.gmra.mrb[0].mxu0 %v10515
    %v11898 = vpop.f32.mrb[0].mxu0
    %v11899 = vadd.f32 %v11610, %v11898
    %v11900 = vpop.f32.mrb[0].mxu0
    %v11901 = vpop.f32.mrb[0].mxu0
    %v11902 = vadd.f32 %v11613, %v11901
    %v11903 = vpop.f32.mrb[0].mxu0
    %11904 = vmatprep.mubr.bf16.mxu0 %v10524
    %11905 = vmatmul.mubr.bf16.gmra.mrb[0].mxu0 %v10523
    %v11906 = vpop.f32.mrb[0].mxu0
    %v11907 = vadd.f32 %v11618, %v11906
    %v11908 = vpop.f32.mrb[0].mxu0
    %v11909 = vpop.f32.mrb[0].mxu0
    %v11910 = vadd.f32 %v11621, %v11909
    %v11911 = vpop.f32.mrb[0].mxu0
    %11912 = vmatprep.mubr.bf16.mxu0 %v10532
    %11913 = vmatmul.mubr.bf16.gmra.mrb[0].mxu0 %v10531
    %v11914 = vpop.f32.mrb[0].mxu0
    %v11915 = vadd.f32 %v11626, %v11914
    %v11916 = vpop.f32.mrb[0].mxu0
    %v11917 = vpop.f32.mrb[0].mxu0
    %v11918 = vadd.f32 %v11629, %v11917
    %v11919 = vpop.f32.mrb[0].mxu0
    %11920 = vmatprep.mubr.bf16.mxu0 %v10540
    %11921 = vmatmul.mubr.bf16.gmra.mrb[0].mxu0 %v10539
    %v11922 = vpop.f32.mrb[0].mxu0
    %v11923 = vadd.f32 %v11634, %v11922
    %v11924 = vpop.f32.mrb[0].mxu0
    %v11925 = vpop.f32.mrb[0].mxu0
    %v11926 = vadd.f32 %v11637, %v11925
    %v11927 = vpop.f32.mrb[0].mxu0
    %11928 = vmatprep.mubr.bf16.mxu0 %v10548
    %11929 = vmatmul.mubr.bf16.gmra.mrb[0].mxu0 %v10547
    %v11930 = vpop.f32.mrb[0].mxu0
    %v11931 = vadd.f32 %v11642, %v11930
    %v11932 = vpop.f32.mrb[0].mxu0
    %v11933 = vpop.f32.mrb[0].mxu0
    %v11934 = vadd.f32 %v11645, %v11933
    %v11935 = vpop.f32.mrb[0].mxu0
    %11936 = vmatprep.mubr.bf16.mxu0 %v10556
    %11937 = vmatmul.mubr.bf16.gmra.mrb[0].mxu0 %v10555
    %v11938 = vpop.f32.mrb[0].mxu0
    %v11939 = vadd.f32 %v11650, %v11938
    %v11940 = vpop.f32.mrb[0].mxu0
    %v11941 = vpop.f32.mrb[0].mxu0
    %v11942 = vadd.f32 %v11653, %v11941
    %v11943 = vpop.f32.mrb[0].mxu0
    %11944 = vmatprep.mubr.bf16.mxu0 %v10564
    %11945 = vmatmul.mubr.bf16.gmra.mrb[0].mxu0 %v10563
    %v11946 = vpop.f32.mrb[0].mxu0
    %v11947 = vadd.f32 %v11658, %v11946
    %v11948 = vpop.f32.mrb[0].mxu0
    %v11949 = vpop.f32.mrb[0].mxu0
    %v11950 = vadd.f32 %v11661, %v11949
    %v11951 = vpop.f32.mrb[0].mxu0
    %11952 = vmatprep.mubr.bf16.mxu0 %v10572
    %11953 = vmatmul.mubr.bf16.gmra.mrb[0].mxu0 %v10571
    %v11954 = vpop.f32.mrb[0].mxu0
    %v11955 = vadd.f32 %v11666, %v11954
    %v11956 = vpop.f32.mrb[0].mxu0
    %v11957 = vpop.f32.mrb[0].mxu0
    %v11958 = vadd.f32 %v11669, %v11957
    %v11959 = vpop.f32.mrb[0].mxu0
    %11960 = vmatprep.mubr.bf16.mxu0 %v10580
    %11961 = vmatmul.mubr.bf16.gmra.mrb[0].mxu0 %v10579
    %v11962 = vpop.f32.mrb[0].mxu0
    %v11963 = vadd.f32 %v11674, %v11962
    %v11964 = vpop.f32.mrb[0].mxu0
    %v11965 = vpop.f32.mrb[0].mxu0
    %v11966 = vadd.f32 %v11677, %v11965
    %v11967 = vpop.f32.mrb[0].mxu0
    %11968 = vmatprep.mubr.bf16.mxu0 %v10588
    %11969 = vmatmul.mubr.bf16.gmra.mrb[0].mxu0 %v10587
    %v11970 = vpop.f32.mrb[0].mxu0
    %v11971 = vadd.f32 %v11682, %v11970
    %v11972 = vpop.f32.mrb[0].mxu0
    %v11973 = vpop.f32.mrb[0].mxu0
    %v11974 = vadd.f32 %v11685, %v11973
    %v11975 = vpop.f32.mrb[0].mxu0
    %11976 = vmatprep.mubr.bf16.mxu0 %v10596
    %11977 = vmatmul.mubr.bf16.gmra.mrb[0].mxu0 %v10595
    %v11978 = vpop.f32.mrb[0].mxu0
    %v11979 = vadd.f32 %v11690, %v11978
    %v11980 = vpop.f32.mrb[0].mxu0
    %v11981 = vpop.f32.mrb[0].mxu0
    %v11982 = vadd.f32 %v11693, %v11981
    %v11983 = vpop.f32.mrb[0].mxu0
    %11984 = vmatprep.mubr.bf16.mxu0 %v10604
    %11985 = vmatmul.mubr.bf16.gmra.mrb[0].mxu0 %v10603
    %v11986 = vpop.f32.mrb[0].mxu0
    %v11987 = vadd.f32 %v11698, %v11986
    %v11988 = vpop.f32.mrb[0].mxu0
    %v11989 = vpop.f32.mrb[0].mxu0
    %v11990 = vadd.f32 %v11701, %v11989
    %v11991 = vpop.f32.mrb[0].mxu0
    %11992 = vmatprep.mubr.bf16.mxu0 %v10612
    %11993 = vmatmul.mubr.bf16.gmra.mrb[0].mxu0 %v10611
    %v11994 = vpop.f32.mrb[0].mxu0
    %v11995 = vadd.f32 %v11706, %v11994
    %v11996 = vpop.f32.mrb[0].mxu0
    %v11997 = vpop.f32.mrb[0].mxu0
    %v11998 = vadd.f32 %v11709, %v11997
    %v11999 = vpop.f32.mrb[0].mxu0
    %12000 = vmatprep.mubr.bf16.mxu0 %v10620
    %12001 = vmatmul.mubr.bf16.gmra.mrb[0].mxu0 %v10619
    %v12002 = vpop.f32.mrb[0].mxu0
    %v12003 = vadd.f32 %v11714, %v12002
    %v12004 = vpop.f32.mrb[0].mxu0
    %v12005 = vpop.f32.mrb[0].mxu0
    %v12006 = vadd.f32 %v11717, %v12005
    %v12007 = vpop.f32.mrb[0].mxu0
    %12008 = vmatprep.mubr.bf16.mxu0 %v10628
    %12009 = vmatmul.mubr.bf16.gmra.mrb[0].mxu0 %v10627
    %v12010 = vpop.f32.mrb[0].mxu0
    %v12011 = vadd.f32 %v11722, %v12010
    %v12012 = vpop.f32.mrb[0].mxu0
    %v12013 = vpop.f32.mrb[0].mxu0
    %v12014 = vadd.f32 %v11725, %v12013
    %v12015 = vpop.f32.mrb[0].mxu0
    %12016 = vmatprep.mubr.bf16.mxu0 %v10636
    %12017 = vmatmul.mubr.bf16.gmra.mrb[0].mxu0 %v10635
    %v12018 = vpop.f32.mrb[0].mxu0
    %v12019 = vadd.f32 %v11730, %v12018
    %v12020 = vpop.f32.mrb[0].mxu0
    %v12021 = vpop.f32.mrb[0].mxu0
    %v12022 = vadd.f32 %v11733, %v12021
    %v12023 = vpop.f32.mrb[0].mxu0
    %12024 = vmatprep.mubr.bf16.mxu0 %v10644
    %12025 = vmatmul.mubr.bf16.gmra.mrb[0].mxu0 %v10643
    %v12026 = vpop.f32.mrb[0].mxu0
    %v12027 = vadd.f32 %v11738, %v12026
    %v12028 = vpop.f32.mrb[0].mxu0
    %v12029 = vpop.f32.mrb[0].mxu0
    %v12030 = vadd.f32 %v11741, %v12029
    %v12031 = vpop.f32.mrb[0].mxu0
    %12032 = vmatprep.mubr.bf16.mxu0 %v10652
    %12033 = vmatmul.mubr.bf16.gmra.mrb[0].mxu0 %v10651
    %v12034 = vpop.f32.mrb[0].mxu0
    %v12035 = vadd.f32 %v11746, %v12034
    %v12036 = vpop.f32.mrb[0].mxu0
    %v12037 = vpop.f32.mrb[0].mxu0
    %v12038 = vadd.f32 %v11749, %v12037
    %v12039 = vpop.f32.mrb[0].mxu0
    %12040 = vdwg.mxu0
    %12041 = vmatprep.subr.bf16.mxu0 0
    %12042 = vmatpush1.bf16.msra.mxu0 %v11094
    %12043 = vmatprep.subr.bf16.mxu0 0
    %12044 = vmatpush1.bf16.msra.mxu0 %v11095
    %12045 = vmatprep.subr.bf16.mxu0 0
    %12046 = vmatpush1.bf16.msra.mxu0 %v11096
    %12047 = vmatprep.subr.bf16.mxu0 0
    %12048 = vmatpush1.bf16.msra.mxu0 %v11097
    %12049 = vmatprep.subr.bf16.mxu0 0
    %12050 = vmatpush1.bf16.msra.mxu0 %v11098
    %12051 = vmatprep.subr.bf16.mxu0 0
    %12052 = vmatpush1.bf16.msra.mxu0 %v11099
    %12053 = vmatprep.subr.bf16.mxu0 0
    %12054 = vmatpush1.bf16.msra.mxu0 %v11100
    %12055 = vmatprep.subr.bf16.mxu0 0
    %12056 = vmatpush1.bf16.msra.mxu0 %v11101
    %12057 = vmatprep.subr.bf16.mxu0 0
    %12058 = vmatpush1.bf16.msra.mxu0 %v11102
    %12059 = vmatprep.subr.bf16.mxu0 0
    %12060 = vmatpush1.bf16.msra.mxu0 %v11103
    %12061 = vmatprep.subr.bf16.mxu0 0
    %12062 = vmatpush1.bf16.msra.mxu0 %v11104
    %12063 = vmatprep.subr.bf16.mxu0 0
    %12064 = vmatpush1.bf16.msra.mxu0 %v11105
    %12065 = vmatprep.subr.bf16.mxu0 0
    %12066 = vmatpush1.bf16.msra.mxu0 %v11106
    %12067 = vmatprep.subr.bf16.mxu0 0
    %12068 = vmatpush1.bf16.msra.mxu0 %v11107
    %12069 = vmatprep.subr.bf16.mxu0 0
    %12070 = vmatpush1.bf16.msra.mxu0 %v11108
    %12071 = vmatprep.subr.bf16.mxu0 0
    %12072 = vmatpush1.bf16.msra.mxu0 %v11109
    %12073 = vmatprep.mubr.bf16.mxu0 %v10406
    %12074 = vmatmul.mubr.bf16.gmra.mrb[0].mxu0 %v10405
    %v12075 = vpop.f32.mrb[0].mxu0
    %v12076 = vadd.f32 %v11787, %v12075
    %v12077 = vpop.f32.mrb[0].mxu0
    %v12078 = vpop.f32.mrb[0].mxu0
    %v12079 = vadd.f32 %v11790, %v12078
    %v12080 = vpop.f32.mrb[0].mxu0
    %12081 = vmatprep.mubr.bf16.mxu0 %v10414
    %12082 = vmatmul.mubr.bf16.gmra.mrb[0].mxu0 %v10413
    %v12083 = vpop.f32.mrb[0].mxu0
    %v12084 = vadd.f32 %v11795, %v12083
    %v12085 = vpop.f32.mrb[0].mxu0
    %v12086 = vpop.f32.mrb[0].mxu0
    %v12087 = vadd.f32 %v11798, %v12086
    %v12088 = vpop.f32.mrb[0].mxu0
    %12089 = vmatprep.mubr.bf16.mxu0 %v10422
    %12090 = vmatmul.mubr.bf16.gmra.mrb[0].mxu0 %v10421
    %v12091 = vpop.f32.mrb[0].mxu0
    %v12092 = vadd.f32 %v11803, %v12091
    %v12093 = vpop.f32.mrb[0].mxu0
    %v12094 = vpop.f32.mrb[0].mxu0
    %v12095 = vadd.f32 %v11806, %v12094
    %v12096 = vpop.f32.mrb[0].mxu0
    %12097 = vmatprep.mubr.bf16.mxu0 %v10430
    %12098 = vmatmul.mubr.bf16.gmra.mrb[0].mxu0 %v10429
    %v12099 = vpop.f32.mrb[0].mxu0
    %v12100 = vadd.f32 %v11811, %v12099
    %v12101 = vpop.f32.mrb[0].mxu0
    %v12102 = vpop.f32.mrb[0].mxu0
    %v12103 = vadd.f32 %v11814, %v12102
    %v12104 = vpop.f32.mrb[0].mxu0
    %12105 = vmatprep.mubr.bf16.mxu0 %v10438
    %12106 = vmatmul.mubr.bf16.gmra.mrb[0].mxu0 %v10437
    %v12107 = vpop.f32.mrb[0].mxu0
    %v12108 = vadd.f32 %v11819, %v12107
    %v12109 = vpop.f32.mrb[0].mxu0
    %v12110 = vpop.f32.mrb[0].mxu0
    %v12111 = vadd.f32 %v11822, %v12110
    %v12112 = vpop.f32.mrb[0].mxu0
    %12113 = vmatprep.mubr.bf16.mxu0 %v10446
    %12114 = vmatmul.mubr.bf16.gmra.mrb[0].mxu0 %v10445
    %v12115 = vpop.f32.mrb[0].mxu0
    %v12116 = vadd.f32 %v11827, %v12115
    %v12117 = vpop.f32.mrb[0].mxu0
    %v12118 = vpop.f32.mrb[0].mxu0
    %v12119 = vadd.f32 %v11830, %v12118
    %v12120 = vpop.f32.mrb[0].mxu0
    %12121 = vmatprep.mubr.bf16.mxu0 %v10454
    %12122 = vmatmul.mubr.bf16.gmra.mrb[0].mxu0 %v10453
    %v12123 = vpop.f32.mrb[0].mxu0
    %v12124 = vadd.f32 %v11835, %v12123
    %v12125 = vpop.f32.mrb[0].mxu0
    %v12126 = vpop.f32.mrb[0].mxu0
    %v12127 = vadd.f32 %v11838, %v12126
    %v12128 = vpop.f32.mrb[0].mxu0
    %12129 = vmatprep.mubr.bf16.mxu0 %v10462
    %12130 = vmatmul.mubr.bf16.gmra.mrb[0].mxu0 %v10461
    %v12131 = vpop.f32.mrb[0].mxu0
    %v12132 = vadd.f32 %v11843, %v12131
    %v12133 = vpop.f32.mrb[0].mxu0
    %v12134 = vpop.f32.mrb[0].mxu0
    %v12135 = vadd.f32 %v11846, %v12134
    %v12136 = vpop.f32.mrb[0].mxu0
    %12137 = vmatprep.mubr.bf16.mxu0 %v10470
    %12138 = vmatmul.mubr.bf16.gmra.mrb[0].mxu0 %v10469
    %v12139 = vpop.f32.mrb[0].mxu0
    %v12140 = vadd.f32 %v11851, %v12139
    %v12141 = vpop.f32.mrb[0].mxu0
    %v12142 = vpop.f32.mrb[0].mxu0
    %v12143 = vadd.f32 %v11854, %v12142
    %v12144 = vpop.f32.mrb[0].mxu0
    %12145 = vmatprep.mubr.bf16.mxu0 %v10478
    %12146 = vmatmul.mubr.bf16.gmra.mrb[0].mxu0 %v10477
    %v12147 = vpop.f32.mrb[0].mxu0
    %v12148 = vadd.f32 %v11859, %v12147
    %v12149 = vpop.f32.mrb[0].mxu0
    %v12150 = vpop.f32.mrb[0].mxu0
    %v12151 = vadd.f32 %v11862, %v12150
    %v12152 = vpop.f32.mrb[0].mxu0
    %12153 = vmatprep.mubr.bf16.mxu0 %v10486
    %12154 = vmatmul.mubr.bf16.gmra.mrb[0].mxu0 %v10485
    %v12155 = vpop.f32.mrb[0].mxu0
    %v12156 = vadd.f32 %v11867, %v12155
    %v12157 = vpop.f32.mrb[0].mxu0
    %v12158 = vpop.f32.mrb[0].mxu0
    %v12159 = vadd.f32 %v11870, %v12158
    %v12160 = vpop.f32.mrb[0].mxu0
    %12161 = vmatprep.mubr.bf16.mxu0 %v10494
    %12162 = vmatmul.mubr.bf16.gmra.mrb[0].mxu0 %v10493
    %v12163 = vpop.f32.mrb[0].mxu0
    %v12164 = vadd.f32 %v11875, %v12163
    %v12165 = vpop.f32.mrb[0].mxu0
    %v12166 = vpop.f32.mrb[0].mxu0
    %v12167 = vadd.f32 %v11878, %v12166
    %v12168 = vpop.f32.mrb[0].mxu0
    %12169 = vmatprep.mubr.bf16.mxu0 %v10502
    %12170 = vmatmul.mubr.bf16.gmra.mrb[0].mxu0 %v10501
    %v12171 = vpop.f32.mrb[0].mxu0
    %v12172 = vadd.f32 %v11883, %v12171
    %v12173 = vpop.f32.mrb[0].mxu0
    %v12174 = vpop.f32.mrb[0].mxu0
    %v12175 = vadd.f32 %v11886, %v12174
    %v12176 = vpop.f32.mrb[0].mxu0
    %12177 = vmatprep.mubr.bf16.mxu0 %v10510
    %12178 = vmatmul.mubr.bf16.gmra.mrb[0].mxu0 %v10509
    %v12179 = vpop.f32.mrb[0].mxu0
    %v12180 = vadd.f32 %v11891, %v12179
    %v12181 = vpop.f32.mrb[0].mxu0
    %v12182 = vpop.f32.mrb[0].mxu0
    %v12183 = vadd.f32 %v11894, %v12182
    %v12184 = vpop.f32.mrb[0].mxu0
    %12185 = vmatprep.mubr.bf16.mxu0 %v10518
    %12186 = vmatmul.mubr.bf16.gmra.mrb[0].mxu0 %v10517
    %v12187 = vpop.f32.mrb[0].mxu0
    %v12188 = vadd.f32 %v11899, %v12187
    %v12189 = vpop.f32.mrb[0].mxu0
    %v12190 = vpop.f32.mrb[0].mxu0
    %v12191 = vadd.f32 %v11902, %v12190
    %v12192 = vpop.f32.mrb[0].mxu0
    %12193 = vmatprep.mubr.bf16.mxu0 %v10526
    %12194 = vmatmul.mubr.bf16.gmra.mrb[0].mxu0 %v10525
    %v12195 = vpop.f32.mrb[0].mxu0
    %v12196 = vadd.f32 %v11907, %v12195
    %v12197 = vpop.f32.mrb[0].mxu0
    %v12198 = vpop.f32.mrb[0].mxu0
    %v12199 = vadd.f32 %v11910, %v12198
    %v12200 = vpop.f32.mrb[0].mxu0
    %12201 = vmatprep.mubr.bf16.mxu0 %v10534
    %12202 = vmatmul.mubr.bf16.gmra.mrb[0].mxu0 %v10533
    %v12203 = vpop.f32.mrb[0].mxu0
    %v12204 = vadd.f32 %v11915, %v12203
    %v12205 = vpop.f32.mrb[0].mxu0
    %v12206 = vpop.f32.mrb[0].mxu0
    %v12207 = vadd.f32 %v11918, %v12206
    %v12208 = vpop.f32.mrb[0].mxu0
    %12209 = vmatprep.mubr.bf16.mxu0 %v10542
    %12210 = vmatmul.mubr.bf16.gmra.mrb[0].mxu0 %v10541
    %v12211 = vpop.f32.mrb[0].mxu0
    %v12212 = vadd.f32 %v11923, %v12211
    %v12213 = vpop.f32.mrb[0].mxu0
    %v12214 = vpop.f32.mrb[0].mxu0
    %v12215 = vadd.f32 %v11926, %v12214
    %v12216 = vpop.f32.mrb[0].mxu0
    %12217 = vmatprep.mubr.bf16.mxu0 %v10550
    %12218 = vmatmul.mubr.bf16.gmra.mrb[0].mxu0 %v10549
    %v12219 = vpop.f32.mrb[0].mxu0
    %v12220 = vadd.f32 %v11931, %v12219
    %v12221 = vpop.f32.mrb[0].mxu0
    %v12222 = vpop.f32.mrb[0].mxu0
    %v12223 = vadd.f32 %v11934, %v12222
    %v12224 = vpop.f32.mrb[0].mxu0
    %12225 = vmatprep.mubr.bf16.mxu0 %v10558
    %12226 = vmatmul.mubr.bf16.gmra.mrb[0].mxu0 %v10557
    %v12227 = vpop.f32.mrb[0].mxu0
    %v12228 = vadd.f32 %v11939, %v12227
    %v12229 = vpop.f32.mrb[0].mxu0
    %v12230 = vpop.f32.mrb[0].mxu0
    %v12231 = vadd.f32 %v11942, %v12230
    %v12232 = vpop.f32.mrb[0].mxu0
    %12233 = vmatprep.mubr.bf16.mxu0 %v10566
    %12234 = vmatmul.mubr.bf16.gmra.mrb[0].mxu0 %v10565
    %v12235 = vpop.f32.mrb[0].mxu0
    %v12236 = vadd.f32 %v11947, %v12235
    %v12237 = vpop.f32.mrb[0].mxu0
    %v12238 = vpop.f32.mrb[0].mxu0
    %v12239 = vadd.f32 %v11950, %v12238
    %v12240 = vpop.f32.mrb[0].mxu0
    %12241 = vmatprep.mubr.bf16.mxu0 %v10574
    %12242 = vmatmul.mubr.bf16.gmra.mrb[0].mxu0 %v10573
    %v12243 = vpop.f32.mrb[0].mxu0
    %v12244 = vadd.f32 %v11955, %v12243
    %v12245 = vpop.f32.mrb[0].mxu0
    %v12246 = vpop.f32.mrb[0].mxu0
    %v12247 = vadd.f32 %v11958, %v12246
    %v12248 = vpop.f32.mrb[0].mxu0
    %12249 = vmatprep.mubr.bf16.mxu0 %v10582
    %12250 = vmatmul.mubr.bf16.gmra.mrb[0].mxu0 %v10581
    %v12251 = vpop.f32.mrb[0].mxu0
    %v12252 = vadd.f32 %v11963, %v12251
    %v12253 = vpop.f32.mrb[0].mxu0
    %v12254 = vpop.f32.mrb[0].mxu0
    %v12255 = vadd.f32 %v11966, %v12254
    %v12256 = vpop.f32.mrb[0].mxu0
    %12257 = vmatprep.mubr.bf16.mxu0 %v10590
    %12258 = vmatmul.mubr.bf16.gmra.mrb[0].mxu0 %v10589
    %v12259 = vpop.f32.mrb[0].mxu0
    %v12260 = vadd.f32 %v11971, %v12259
    %v12261 = vpop.f32.mrb[0].mxu0
    %v12262 = vpop.f32.mrb[0].mxu0
    %v12263 = vadd.f32 %v11974, %v12262
    %v12264 = vpop.f32.mrb[0].mxu0
    %12265 = vmatprep.mubr.bf16.mxu0 %v10598
    %12266 = vmatmul.mubr.bf16.gmra.mrb[0].mxu0 %v10597
    %v12267 = vpop.f32.mrb[0].mxu0
    %v12268 = vadd.f32 %v11979, %v12267
    %v12269 = vpop.f32.mrb[0].mxu0
    %v12270 = vpop.f32.mrb[0].mxu0
    %v12271 = vadd.f32 %v11982, %v12270
    %v12272 = vpop.f32.mrb[0].mxu0
    %12273 = vmatprep.mubr.bf16.mxu0 %v10606
    %12274 = vmatmul.mubr.bf16.gmra.mrb[0].mxu0 %v10605
    %v12275 = vpop.f32.mrb[0].mxu0
    %v12276 = vadd.f32 %v11987, %v12275
    %v12277 = vpop.f32.mrb[0].mxu0
    %v12278 = vpop.f32.mrb[0].mxu0
    %v12279 = vadd.f32 %v11990, %v12278
    %v12280 = vpop.f32.mrb[0].mxu0
    %12281 = vmatprep.mubr.bf16.mxu0 %v10614
    %12282 = vmatmul.mubr.bf16.gmra.mrb[0].mxu0 %v10613
    %v12283 = vpop.f32.mrb[0].mxu0
    %v12284 = vadd.f32 %v11995, %v12283
    %v12285 = vpop.f32.mrb[0].mxu0
    %v12286 = vpop.f32.mrb[0].mxu0
    %v12287 = vadd.f32 %v11998, %v12286
    %v12288 = vpop.f32.mrb[0].mxu0
    %12289 = vmatprep.mubr.bf16.mxu0 %v10622
    %12290 = vmatmul.mubr.bf16.gmra.mrb[0].mxu0 %v10621
    %v12291 = vpop.f32.mrb[0].mxu0
    %v12292 = vadd.f32 %v12003, %v12291
    %v12293 = vpop.f32.mrb[0].mxu0
    %v12294 = vpop.f32.mrb[0].mxu0
    %v12295 = vadd.f32 %v12006, %v12294
    %v12296 = vpop.f32.mrb[0].mxu0
    %12297 = vmatprep.mubr.bf16.mxu0 %v10630
    %12298 = vmatmul.mubr.bf16.gmra.mrb[0].mxu0 %v10629
    %v12299 = vpop.f32.mrb[0].mxu0
    %v12300 = vadd.f32 %v12011, %v12299
    %v12301 = vpop.f32.mrb[0].mxu0
    %v12302 = vpop.f32.mrb[0].mxu0
    %v12303 = vadd.f32 %v12014, %v12302
    %v12304 = vpop.f32.mrb[0].mxu0
    %12305 = vmatprep.mubr.bf16.mxu0 %v10638
    %12306 = vmatmul.mubr.bf16.gmra.mrb[0].mxu0 %v10637
    %v12307 = vpop.f32.mrb[0].mxu0
    %v12308 = vadd.f32 %v12019, %v12307
    %v12309 = vpop.f32.mrb[0].mxu0
    %v12310 = vpop.f32.mrb[0].mxu0
    %v12311 = vadd.f32 %v12022, %v12310
    %v12312 = vpop.f32.mrb[0].mxu0
    %12313 = vmatprep.mubr.bf16.mxu0 %v10646
    %12314 = vmatmul.mubr.bf16.gmra.mrb[0].mxu0 %v10645
    %v12315 = vpop.f32.mrb[0].mxu0
    %v12316 = vadd.f32 %v12027, %v12315
    %v12317 = vpop.f32.mrb[0].mxu0
    %v12318 = vpop.f32.mrb[0].mxu0
    %v12319 = vadd.f32 %v12030, %v12318
    %v12320 = vpop.f32.mrb[0].mxu0
    %12321 = vmatprep.mubr.bf16.mxu0 %v10654
    %12322 = vmatmul.mubr.bf16.gmra.mrb[0].mxu0 %v10653
    %v12323 = vpop.f32.mrb[0].mxu0
    %v12324 = vadd.f32 %v12035, %v12323
    %v12325 = vpop.f32.mrb[0].mxu0
    %v12326 = vpop.f32.mrb[0].mxu0
    %v12327 = vadd.f32 %v12038, %v12326
    %v12328 = vpop.f32.mrb[0].mxu0
    %12329 = vdwg.mxu0
    %v12330 = vtanh.pop %v12076
    %v12331 = vtanh.pop %v12079
    %v12332 = vtanh.pop %v12084
    %v12333 = vtanh.pop %v12087
    %v12334 = vtanh.pop %v12092
    %v12335 = vtanh.pop %v12095
    %v12336 = vtanh.pop %v12100
    %v12337 = vtanh.pop %v12103
    %v12338 = vtanh.pop %v12108
    %v12339 = vtanh.pop %v12111
    %v12340 = vtanh.pop %v12116
    %v12341 = vtanh.pop %v12119
    %v12342 = vtanh.pop %v12124
    %v12343 = vtanh.pop %v12127
    %v12344 = vtanh.pop %v12132
    %v12345 = vtanh.pop %v12135
    %v12346 = vtanh.pop %v12140
    %v12347 = vtanh.pop %v12143
    %v12348 = vtanh.pop %v12148
    %v12349 = vtanh.pop %v12151
    %v12350 = vtanh.pop %v12156
    %v12351 = vtanh.pop %v12159
    %v12352 = vtanh.pop %v12164
    %v12353 = vtanh.pop %v12167
    %v12354 = vtanh.pop %v12172
    %v12355 = vtanh.pop %v12175
    %v12356 = vtanh.pop %v12180
    %v12357 = vtanh.pop %v12183
    %v12358 = vtanh.pop %v12188
    %v12359 = vtanh.pop %v12191
    %v12360 = vtanh.pop %v12196
    %v12361 = vtanh.pop %v12199
    %v12362 = vtanh.pop %v12204
    %v12363 = vtanh.pop %v12207
    %v12364 = vtanh.pop %v12212
    %v12365 = vtanh.pop %v12215
    %v12366 = vtanh.pop %v12220
    %v12367 = vtanh.pop %v12223
    %v12368 = vtanh.pop %v12228
    %v12369 = vtanh.pop %v12231
    %v12370 = vtanh.pop %v12236
    %v12371 = vtanh.pop %v12239
    %v12372 = vtanh.pop %v12244
    %v12373 = vtanh.pop %v12247
    %v12374 = vtanh.pop %v12252
    %v12375 = vtanh.pop %v12255
    %v12376 = vtanh.pop %v12260
    %v12377 = vtanh.pop %v12263
    %v12378 = vtanh.pop %v12268
    %v12379 = vtanh.pop %v12271
    %v12380 = vtanh.pop %v12276
    %v12381 = vtanh.pop %v12279
    %v12382 = vtanh.pop %v12284
    %v12383 = vtanh.pop %v12287
    %v12384 = vtanh.pop %v12292
    %v12385 = vtanh.pop %v12295
    %v12386 = vtanh.pop %v12300
    %v12387 = vtanh.pop %v12303
    %v12388 = vtanh.pop %v12308
    %v12389 = vtanh.pop %v12311
    %v12390 = vtanh.pop %v12316
    %v12391 = vtanh.pop %v12319
    %v12392 = vtanh.pop %v12324
    %v12393 = vtanh.pop %v12327
    %v12394 = vpack.c.bf16 %v12331, %v12330
    %v12395 = vpack.c.bf16 %v12333, %v12332
    %v12396 = vpack.c.bf16 %v12335, %v12334
    %v12397 = vpack.c.bf16 %v12337, %v12336
    %v12398 = vpack.c.bf16 %v12339, %v12338
    %v12399 = vpack.c.bf16 %v12341, %v12340
    %v12400 = vpack.c.bf16 %v12343, %v12342
    %v12401 = vpack.c.bf16 %v12345, %v12344
    %v12402 = vpack.c.bf16 %v12347, %v12346
    %v12403 = vpack.c.bf16 %v12349, %v12348
    %v12404 = vpack.c.bf16 %v12351, %v12350
    %v12405 = vpack.c.bf16 %v12353, %v12352
    %v12406 = vpack.c.bf16 %v12355, %v12354
    %v12407 = vpack.c.bf16 %v12357, %v12356
    %v12408 = vpack.c.bf16 %v12359, %v12358
    %v12409 = vpack.c.bf16 %v12361, %v12360
    %v12410 = vpack.c.bf16 %v12363, %v12362
    %v12411 = vpack.c.bf16 %v12365, %v12364
    %v12412 = vpack.c.bf16 %v12367, %v12366
    %v12413 = vpack.c.bf16 %v12369, %v12368
    %v12414 = vpack.c.bf16 %v12371, %v12370
    %v12415 = vpack.c.bf16 %v12373, %v12372
    %v12416 = vpack.c.bf16 %v12375, %v12374
    %v12417 = vpack.c.bf16 %v12377, %v12376
    %v12418 = vpack.c.bf16 %v12379, %v12378
    %v12419 = vpack.c.bf16 %v12381, %v12380
    %v12420 = vpack.c.bf16 %v12383, %v12382
    %v12421 = vpack.c.bf16 %v12385, %v12384
    %v12422 = vpack.c.bf16 %v12387, %v12386
    %v12423 = vpack.c.bf16 %v12389, %v12388
    %v12424 = vpack.c.bf16 %v12391, %v12390
    %v12425 = vpack.c.bf16 %v12393, %v12392
    %v12458 = vunpack.c.l.b16 %v12394
    %v12459 = vunpack.c.h.b16 %v12394
    %v12460 = vunpack.c.l.b16 %v12395
    %v12461 = vunpack.c.h.b16 %v12395
    %v12462 = vunpack.c.l.b16 %v12396
    %v12463 = vunpack.c.h.b16 %v12396
    %v12464 = vunpack.c.l.b16 %v12397
    %v12465 = vunpack.c.h.b16 %v12397
    %v12466 = vunpack.c.l.b16 %v12398
    %v12467 = vunpack.c.h.b16 %v12398
    %v12468 = vunpack.c.l.b16 %v12399
    %v12469 = vunpack.c.h.b16 %v12399
    %v12470 = vunpack.c.l.b16 %v12400
    %v12471 = vunpack.c.h.b16 %v12400
    %v12472 = vunpack.c.l.b16 %v12401
    %v12473 = vunpack.c.h.b16 %v12401
    %v12474 = vunpack.c.l.b16 %v12402
    %v12475 = vunpack.c.h.b16 %v12402
    %v12476 = vunpack.c.l.b16 %v12403
    %v12477 = vunpack.c.h.b16 %v12403
    %v12478 = vunpack.c.l.b16 %v12404
    %v12479 = vunpack.c.h.b16 %v12404
    %v12480 = vunpack.c.l.b16 %v12405
    %v12481 = vunpack.c.h.b16 %v12405
    %v12482 = vunpack.c.l.b16 %v12406
    %v12483 = vunpack.c.h.b16 %v12406
    %v12484 = vunpack.c.l.b16 %v12407
    %v12485 = vunpack.c.h.b16 %v12407
    %v12486 = vunpack.c.l.b16 %v12408
    %v12487 = vunpack.c.h.b16 %v12408
    %v12488 = vunpack.c.l.b16 %v12409
    %v12489 = vunpack.c.h.b16 %v12409
    %v12490 = vunpack.c.l.b16 %v12410
    %v12491 = vunpack.c.h.b16 %v12410
    %v12492 = vunpack.c.l.b16 %v12411
    %v12493 = vunpack.c.h.b16 %v12411
    %v12494 = vunpack.c.l.b16 %v12412
    %v12495 = vunpack.c.h.b16 %v12412
    %v12496 = vunpack.c.l.b16 %v12413
    %v12497 = vunpack.c.h.b16 %v12413
    %v12498 = vunpack.c.l.b16 %v12414
    %v12499 = vunpack.c.h.b16 %v12414
    %v12500 = vunpack.c.l.b16 %v12415
    %v12501 = vunpack.c.h.b16 %v12415
    %v12502 = vunpack.c.l.b16 %v12416
    %v12503 = vunpack.c.h.b16 %v12416
    %v12504 = vunpack.c.l.b16 %v12417
    %v12505 = vunpack.c.h.b16 %v12417
    %v12506 = vunpack.c.l.b16 %v12418
    %v12507 = vunpack.c.h.b16 %v12418
    %v12508 = vunpack.c.l.b16 %v12419
    %v12509 = vunpack.c.h.b16 %v12419
    %v12510 = vunpack.c.l.b16 %v12420
    %v12511 = vunpack.c.h.b16 %v12420
    %v12512 = vunpack.c.l.b16 %v12421
    %v12513 = vunpack.c.h.b16 %v12421
    %v12514 = vunpack.c.l.b16 %v12422
    %v12515 = vunpack.c.h.b16 %v12422
    %v12516 = vunpack.c.l.b16 %v12423
    %v12517 = vunpack.c.h.b16 %v12423
    %v12518 = vunpack.c.l.b16 %v12424
    %v12519 = vunpack.c.h.b16 %v12424
    %v12520 = vunpack.c.l.b16 %v12425
    %v12521 = vunpack.c.h.b16 %v12425
    %v12522 = vpack.c.b16 %v12458, %v12458
    %v12523 = vpack.c.b16 %v12459, %v12459
    %v12524 = vpack.c.b16 %v12460, %v12460
    %v12525 = vpack.c.b16 %v12461, %v12461
    %v12526 = vpack.c.b16 %v12462, %v12462
    %v12527 = vpack.c.b16 %v12463, %v12463
    %v12528 = vpack.c.b16 %v12464, %v12464
    %v12529 = vpack.c.b16 %v12465, %v12465
    %v12530 = vpack.c.b16 %v12466, %v12466
    %v12531 = vpack.c.b16 %v12467, %v12467
    %v12532 = vpack.c.b16 %v12468, %v12468
    %v12533 = vpack.c.b16 %v12469, %v12469
    %v12534 = vpack.c.b16 %v12470, %v12470
    %v12535 = vpack.c.b16 %v12471, %v12471
    %v12536 = vpack.c.b16 %v12472, %v12472
    %v12537 = vpack.c.b16 %v12473, %v12473
    %v12538 = vpack.c.b16 %v12474, %v12474
    %v12539 = vpack.c.b16 %v12475, %v12475
    %v12540 = vpack.c.b16 %v12476, %v12476
    %v12541 = vpack.c.b16 %v12477, %v12477
    %v12542 = vpack.c.b16 %v12478, %v12478
    %v12543 = vpack.c.b16 %v12479, %v12479
    %v12544 = vpack.c.b16 %v12480, %v12480
    %v12545 = vpack.c.b16 %v12481, %v12481
    %v12546 = vpack.c.b16 %v12482, %v12482
    %v12547 = vpack.c.b16 %v12483, %v12483
    %v12548 = vpack.c.b16 %v12484, %v12484
    %v12549 = vpack.c.b16 %v12485, %v12485
    %v12550 = vpack.c.b16 %v12486, %v12486
    %v12551 = vpack.c.b16 %v12487, %v12487
    %v12552 = vpack.c.b16 %v12488, %v12488
    %v12553 = vpack.c.b16 %v12489, %v12489
    %v12554 = vpack.c.b16 %v12490, %v12490
    %v12555 = vpack.c.b16 %v12491, %v12491
    %v12556 = vpack.c.b16 %v12492, %v12492
    %v12557 = vpack.c.b16 %v12493, %v12493
    %v12558 = vpack.c.b16 %v12494, %v12494
    %v12559 = vpack.c.b16 %v12495, %v12495
    %v12560 = vpack.c.b16 %v12496, %v12496
    %v12561 = vpack.c.b16 %v12497, %v12497
    %v12562 = vpack.c.b16 %v12498, %v12498
    %v12563 = vpack.c.b16 %v12499, %v12499
    %v12564 = vpack.c.b16 %v12500, %v12500
    %v12565 = vpack.c.b16 %v12501, %v12501
    %v12566 = vpack.c.b16 %v12502, %v12502
    %v12567 = vpack.c.b16 %v12503, %v12503
    %v12568 = vpack.c.b16 %v12504, %v12504
    %v12569 = vpack.c.b16 %v12505, %v12505
    %v12570 = vpack.c.b16 %v12506, %v12506
    %v12571 = vpack.c.b16 %v12507, %v12507
    %v12572 = vpack.c.b16 %v12508, %v12508
    %v12573 = vpack.c.b16 %v12509, %v12509
    %v12574 = vpack.c.b16 %v12510, %v12510
    %v12575 = vpack.c.b16 %v12511, %v12511
    %v12576 = vpack.c.b16 %v12512, %v12512
    %v12577 = vpack.c.b16 %v12513, %v12513
    %v12578 = vpack.c.b16 %v12514, %v12514
    %v12579 = vpack.c.b16 %v12515, %v12515
    %v12580 = vpack.c.b16 %v12516, %v12516
    %v12581 = vpack.c.b16 %v12517, %v12517
    %v12582 = vpack.c.b16 %v12518, %v12518
    %v12583 = vpack.c.b16 %v12519, %v12519
    %v12584 = vpack.c.b16 %v12520, %v12520
    %v12585 = vpack.c.b16 %v12521, %v12521
    %12650 = vst [vmem:[#allocation11] sm:$0xf] %v12522
    %12651 = vst [vmem:[#allocation11 + $0x4] sm:$0xf] %v12523
    %12652 = vst [vmem:[#allocation11 + $0x8] sm:$0xf] %v12524
    %12653 = vst [vmem:[#allocation11 + $0xc] sm:$0xf] %v12525
    %12654 = vst [vmem:[#allocation11 + $0x10] sm:$0xf] %v12526
    %12655 = vst [vmem:[#allocation11 + $0x14] sm:$0xf] %v12527
    %12656 = vst [vmem:[#allocation11 + $0x18] sm:$0xf] %v12528
    %12657 = vst [vmem:[#allocation11 + $0x1c] sm:$0xf] %v12529
    %12658 = vst [vmem:[#allocation11 + $0x20] sm:$0xf] %v12530
    %12659 = vst [vmem:[#allocation11 + $0x24] sm:$0xf] %v12531
    %12660 = vst [vmem:[#allocation11 + $0x28] sm:$0xf] %v12532
    %12661 = vst [vmem:[#allocation11 + $0x2c] sm:$0xf] %v12533
    %12662 = vst [vmem:[#allocation11 + $0x30] sm:$0xf] %v12534
    %12663 = vst [vmem:[#allocation11 + $0x34] sm:$0xf] %v12535
    %12664 = vst [vmem:[#allocation11 + $0x38] sm:$0xf] %v12536
    %12665 = vst [vmem:[#allocation11 + $0x3c] sm:$0xf] %v12537
    %12666 = vst [vmem:[#allocation11 + $0x40] sm:$0xf] %v12538
    %12667 = vst [vmem:[#allocation11 + $0x44] sm:$0xf] %v12539
    %12668 = vst [vmem:[#allocation11 + $0x48] sm:$0xf] %v12540
    %12669 = vst [vmem:[#allocation11 + $0x4c] sm:$0xf] %v12541
    %12670 = vst [vmem:[#allocation11 + $0x50] sm:$0xf] %v12542
    %12671 = vst [vmem:[#allocation11 + $0x54] sm:$0xf] %v12543
    %12672 = vst [vmem:[#allocation11 + $0x58] sm:$0xf] %v12544
    %12673 = vst [vmem:[#allocation11 + $0x5c] sm:$0xf] %v12545
    %12674 = vst [vmem:[#allocation11 + $0x60] sm:$0xf] %v12546
    %12675 = vst [vmem:[#allocation11 + $0x64] sm:$0xf] %v12547
    %12676 = vst [vmem:[#allocation11 + $0x68] sm:$0xf] %v12548
    %12677 = vst [vmem:[#allocation11 + $0x6c] sm:$0xf] %v12549
    %12678 = vst [vmem:[#allocation11 + $0x70] sm:$0xf] %v12550
    %12679 = vst [vmem:[#allocation11 + $0x74] sm:$0xf] %v12551
    %12680 = vst [vmem:[#allocation11 + $0x78] sm:$0xf] %v12552
    %12681 = vst [vmem:[#allocation11 + $0x7c] sm:$0xf] %v12553
    %12682 = vst [vmem:[#allocation11 + $0x80] sm:$0xf] %v12554
    %12683 = vst [vmem:[#allocation11 + $0x84] sm:$0xf] %v12555
    %12684 = vst [vmem:[#allocation11 + $0x88] sm:$0xf] %v12556
    %12685 = vst [vmem:[#allocation11 + $0x8c] sm:$0xf] %v12557
    %12686 = vst [vmem:[#allocation11 + $0x90] sm:$0xf] %v12558
    %12687 = vst [vmem:[#allocation11 + $0x94] sm:$0xf] %v12559
    %12688 = vst [vmem:[#allocation11 + $0x98] sm:$0xf] %v12560
    %12689 = vst [vmem:[#allocation11 + $0x9c] sm:$0xf] %v12561
    %12690 = vst [vmem:[#allocation11 + $0xa0] sm:$0xf] %v12562
    %12691 = vst [vmem:[#allocation11 + $0xa4] sm:$0xf] %v12563
    %12692 = vst [vmem:[#allocation11 + $0xa8] sm:$0xf] %v12564
    %12693 = vst [vmem:[#allocation11 + $0xac] sm:$0xf] %v12565
    %12694 = vst [vmem:[#allocation11 + $0xb0] sm:$0xf] %v12566
    %12695 = vst [vmem:[#allocation11 + $0xb4] sm:$0xf] %v12567
    %12696 = vst [vmem:[#allocation11 + $0xb8] sm:$0xf] %v12568
    %12697 = vst [vmem:[#allocation11 + $0xbc] sm:$0xf] %v12569
    %12698 = vst [vmem:[#allocation11 + $0xc0] sm:$0xf] %v12570
    %12699 = vst [vmem:[#allocation11 + $0xc4] sm:$0xf] %v12571
    %12700 = vst [vmem:[#allocation11 + $0xc8] sm:$0xf] %v12572
    %12701 = vst [vmem:[#allocation11 + $0xcc] sm:$0xf] %v12573
    %12702 = vst [vmem:[#allocation11 + $0xd0] sm:$0xf] %v12574
    %12703 = vst [vmem:[#allocation11 + $0xd4] sm:$0xf] %v12575
    %12704 = vst [vmem:[#allocation11 + $0xd8] sm:$0xf] %v12576
    %12705 = vst [vmem:[#allocation11 + $0xdc] sm:$0xf] %v12577
    %12706 = vst [vmem:[#allocation11 + $0xe0] sm:$0xf] %v12578
    %12707 = vst [vmem:[#allocation11 + $0xe4] sm:$0xf] %v12579
    %12708 = vst [vmem:[#allocation11 + $0xe8] sm:$0xf] %v12580
    %12709 = vst [vmem:[#allocation11 + $0xec] sm:$0xf] %v12581
    %12710 = vst [vmem:[#allocation11 + $0xf0] sm:$0xf] %v12582
    %12711 = vst [vmem:[#allocation11 + $0xf4] sm:$0xf] %v12583
    %12712 = vst [vmem:[#allocation11 + $0xf8] sm:$0xf] %v12584
    %12713 = vst [vmem:[#allocation11 + $0xfc] sm:$0xf] %v12585
    // Predicated region
    $region58: #{tpu_custom_call.1} parent=1 // pred_check
      _
    $region59: #{tpu_custom_call.1} parent=1 // pred_check_branch
      %12715 = sbr.rel (0) target = $region61
    $region60: #{tpu_custom_call.1} parent=1 // pred_region
      %s12717 = ssub.s32 4096, 4096
      %12718 = vsyncadd [#allocation4], %s12717
      %s12719 = sshll.u32 [#allocation11], 4
      %s12720 = int_to_ptr.vmem [resolvable:$true] %s12719
      %12725 = dma.vmem_to_hbm [thread:$0]  %s12720, 4096, %s9, [#allocation4], 64, 64, 4
    $region61: #{tpu_custom_call.1} parent=1 // pred_fallthru
      _
    // Predicated region
    $region62: #{tpu_custom_call.1} parent=1 // pred_check
      _
    $region63: #{tpu_custom_call.1} parent=1 // pred_check_branch
      %12727 = sbr.rel (0) target = $region65
    $region64: #{tpu_custom_call.1} parent=1 // pred_region
      %12728 = dma.done [#allocation4], 4096
    $region65: #{tpu_custom_call.1} parent=1 // pred_fallthru
      _
    %12729 = vsyncpa [#allocation3], 1
    %12730 = vsyncpa [#allocation6], 1
    %12731 = vsyncpa [#allocation9], 1
    %12732 = vsyncpa [#allocation4], 1

</llo_original>
